<compile_context>
chip_gen: v7x
topology: tpu7x:2x2x1
jax: 0.10.0
libtpu: 0.0.40
codegen_flags: <defaults>
</compile_context>

<pallas_src>
import jax
import jax.numpy as jnp
from jax.experimental import pallas as pl
from jax.experimental.pallas import tpu as pltpu

INPUT_SIZE = 10
HIDDEN_SIZE = 20
OUTPUT_SIZE = 1

_LANE = 128      # vreg lane grain (last dim)
_SUBLANE = 8     # vreg sublane grain (second-to-last dim)
# Deterministic f32 MXU lowering (multi-pass); matches the f32 PyTorch module.
_PRECISION = jax.lax.Precision.HIGHEST


def _round_up(n, m):
    return ((n + m - 1) // m) * m


def rnn_kernel(x_ref, wih_ref, whh_ref, b_ref, wfc_ref, bfc_ref, out_ref):
    """Single-invocation RNN forward (no grid, no scratch).

    x_ref   : (T, Bp, Ip)  time-major, zero-padded input
    wih_ref : (Ip, Hp)     W_ih^T (zero-padded)
    whh_ref : (Hp, Hp)     W_hh^T (zero-padded)
    b_ref   : (1, Hp)      b_ih + b_hh (zero-padded)
    wfc_ref : (Hp, Op)     W_fc^T (zero-padded)
    bfc_ref : (1, Op)      b_fc (zero-padded)
    out_ref : (Bp, Op)
    """
    T, Bp, Ip = x_ref.shape
    Hp = whh_ref.shape[0]

    # ---- Prologue: input projection hoisted off the recurrent chain. ----
    # One (T*Bp, Ip) x (Ip, Hp) MXU matmul instead of T tiny ones.
    # NOTE: Bp is a multiple of 8, so (T, Bp, Ip) -> (T*Bp, Ip) is a layout
    # no-op (no VMEM copy across (8,128) tiles).
    x_flat = x_ref[...].reshape(T * Bp, Ip)
    u = jnp.dot(x_flat, wih_ref[...], precision=_PRECISION,
                preferred_element_type=jnp.float32) + b_ref[...]
    # Keep U live in vregs (T*Bp*Hp f32 = 8 vregs here): no VMEM scratch.
    u = u.reshape(T, Bp, Hp)

    # Loop-invariant recurrent weight held in vregs (16 vregs at Hp=128).
    whh = whh_ref[...]

    # ---- Recurrence: serial chain, one MXU dot + one EUP tanh per step. ----
    # T is small and static -> fully unrolled with static slices of U.
    # For large T, switch to a bounded-unroll fori_loop with a tiled U buffer.
    h = jnp.zeros((Bp, Hp), jnp.float32)
    for t in range(T):
        h = jnp.tanh(
            u[t]
            + jnp.dot(h, whh, precision=_PRECISION,
                      preferred_element_type=jnp.float32))

    # ---- Epilogue: final FC. Op padded to 128 lanes -> one clean MXU dot
    # and an unmasked, lane-dense output store. ----
    out_ref[...] = (
        jnp.dot(h, wfc_ref[...], precision=_PRECISION,
                preferred_element_type=jnp.float32)
        + bfc_ref[...]
    )


def prepare_padded_params(w_ih, w_hh, b_ih, b_hh, w_fc, b_fc):
    """One-time weight prep (transpose + zero-pad to the (8,128) grain).

    Called once at model init so the per-call path does no weight-side work.
    """
    f32 = jnp.float32
    H, I = w_ih.shape
    O = w_fc.shape[0]
    Ip = _round_up(I, _LANE)
    Hp = _round_up(H, _LANE)
    Op = _round_up(O, _LANE)

    wih_pad = jnp.zeros((Ip, Hp), f32).at[:I, :H].set(w_ih.T.astype(f32))
    whh_pad = jnp.zeros((Hp, Hp), f32).at[:H, :H].set(w_hh.T.astype(f32))
    b_pad = jnp.zeros((1, Hp), f32).at[0, :H].set((b_ih + b_hh).astype(f32))
    wfc_pad = jnp.zeros((Hp, Op), f32).at[:H, :O].set(w_fc.T.astype(f32))
    bfc_pad = jnp.zeros((1, Op), f32).at[0, :O].set(b_fc.astype(f32))
    return (wih_pad, whh_pad, b_pad, wfc_pad, bfc_pad), (I, H, O)


def make_rnn_forward(w_ih, w_hh, b_ih, b_hh, w_fc, b_fc):
    """Build a jitted forward. Padded weights are constants closed over by jit."""
    params, (I, _H, O) = prepare_padded_params(w_ih, w_hh, b_ih, b_hh,
                                               w_fc, b_fc)
    Ip = params[0].shape[0]
    Op = params[3].shape[1]

    @jax.jit
    def forward(x_btI):
        """x_btI: (B, T, I) float32 (batch_first, like PyTorch)."""
        B, T, I_in = x_btI.shape
        Bp = _round_up(max(B, 1), _SUBLANE)

        # Per-call input prep: one transpose + one pad (no zeros+scatter).
        x_tbI = jnp.transpose(x_btI.astype(jnp.float32), (1, 0, 2))
        x_pad = jnp.pad(x_tbI, ((0, 0), (0, Bp - B), (0, Ip - I_in)))

        vmem = pl.BlockSpec(memory_space=pltpu.MemorySpace.VMEM)
        out_pad = pl.pallas_call(
            rnn_kernel,
            out_shape=jax.ShapeDtypeStruct((Bp, Op), jnp.float32),
            in_specs=[vmem] * 6,
            out_specs=vmem,
        )(x_pad, *params)
        return out_pad[:B, :O]

    return forward


def reference_forward(x_btI, w_ih, w_hh, b_ih, b_hh, w_fc, b_fc):
    B = x_btI.shape[0]
    H = w_ih.shape[0]

    def step(h, x_t):
        h_new = jnp.tanh(
            jnp.dot(x_t, w_ih.T, precision=_PRECISION) + b_ih
            + jnp.dot(h, w_hh.T, precision=_PRECISION) + b_hh)
        return h_new, None

    h0 = jnp.zeros((B, H), jnp.float32)
    x_tbI = jnp.transpose(x_btI, (1, 0, 2))
    h_last, _ = jax.lax.scan(step, h0, x_tbI)
    return jnp.dot(h_last, w_fc.T, precision=_PRECISION) + b_fc


if __name__ == "__main__":
    key = jax.random.PRNGKey(0)
    kx, k1, k2, k3, k4, k5, k6 = jax.random.split(key, 7)

    B, T = 2, 8
    scale = 1.0 / jnp.sqrt(HIDDEN_SIZE)

    x = jax.random.normal(kx, (B, T, INPUT_SIZE), dtype=jnp.float32)

    # PyTorch-style uniform(-1/sqrt(H), 1/sqrt(H)) init.
    w_ih = jax.random.uniform(k1, (HIDDEN_SIZE, INPUT_SIZE), jnp.float32, -scale, scale)
    w_hh = jax.random.uniform(k2, (HIDDEN_SIZE, HIDDEN_SIZE), jnp.float32, -scale, scale)
    b_ih = jax.random.uniform(k3, (HIDDEN_SIZE,), jnp.float32, -scale, scale)
    b_hh = jax.random.uniform(k4, (HIDDEN_SIZE,), jnp.float32, -scale, scale)
    w_fc = jax.random.uniform(k5, (OUTPUT_SIZE, HIDDEN_SIZE), jnp.float32, -scale, scale)
    b_fc = jax.random.uniform(k6, (OUTPUT_SIZE,), jnp.float32, -scale, scale)

    # One-time weight prep + jitted forward (weights closed over as constants).
    rnn_forward = make_rnn_forward(w_ih, w_hh, b_ih, b_hh, w_fc, b_fc)

    out = rnn_forward(x)
    out = jax.block_until_ready(out)

    ref = reference_forward(x, w_ih, w_hh, b_ih, b_hh, w_fc, b_fc)
    ref = jax.block_until_ready(ref)

    assert out.shape == (B, OUTPUT_SIZE)
    assert jnp.allclose(out, ref, rtol=1e-4, atol=1e-4), (out, ref)

    print("KERNEL_OK")
</pallas_src>

<mosaic_0001>
module attributes {stable_mosaic.version = 11 : i64} {
  func.func @rnn_kernel(%arg0: memref<8x8x128xf32, #tpu.memory_space<vmem>>, %arg1: memref<128x128xf32, #tpu.memory_space<vmem>>, %arg2: memref<128x128xf32, #tpu.memory_space<vmem>>, %arg3: memref<1x128xf32, #tpu.memory_space<vmem>>, %arg4: memref<128x128xf32, #tpu.memory_space<vmem>>, %arg5: memref<1x128xf32, #tpu.memory_space<vmem>>, %arg6: memref<8x128xf32, #tpu.memory_space<vmem>>) attributes {dimension_semantics = [], scalar_prefetch = 0 : i64, scratch_operands = 0 : i64, tpu.core_type = #tpu.core_type<tc>} {
    %c0 = arith.constant 0 : index
    %c0_0 = arith.constant 0 : index
    %c0_1 = arith.constant 0 : index
    %0 = vector.load %arg0[%c0, %c0_0, %c0_1] : memref<8x8x128xf32, #tpu.memory_space<vmem>>, vector<8x8x128xf32>
    %1 = vector.shape_cast %0 : vector<8x8x128xf32> to vector<64x128xf32>
    %c0_2 = arith.constant 0 : index
    %c0_3 = arith.constant 0 : index
    %2 = vector.load %arg1[%c0_2, %c0_3] : memref<128x128xf32, #tpu.memory_space<vmem>>, vector<128x128xf32>
    %cst = arith.constant dense<0.000000e+00> : vector<64x128xf32>
    %3 = tpu.matmul %1, %2, %cst {dimension_numbers = #tpu.dot_dimension_numbers<[1], [0], [0], [1], [0, 0, 1, 1], [], []>, precision = #tpu.contract_precision<fp32>} : vector<64x128xf32>, vector<128x128xf32>, vector<64x128xf32> -> vector<64x128xf32>
    %c0_4 = arith.constant 0 : index
    %c0_5 = arith.constant 0 : index
    %4 = vector.load %arg3[%c0_4, %c0_5] : memref<1x128xf32, #tpu.memory_space<vmem>>, vector<1x128xf32>
    %5 = vector.broadcast %4 : vector<1x128xf32> to vector<64x128xf32>
    %6 = arith.addf %3, %5 : vector<64x128xf32>
    %7 = vector.shape_cast %6 : vector<64x128xf32> to vector<8x8x128xf32>
    %c0_6 = arith.constant 0 : index
    %c0_7 = arith.constant 0 : index
    %8 = vector.load %arg2[%c0_6, %c0_7] : memref<128x128xf32, #tpu.memory_space<vmem>>, vector<128x128xf32>
    %cst_8 = arith.constant 0.000000e+00 : f32
    %9 = vector.broadcast %cst_8 : f32 to vector<8x128xf32>
    %10 = vector.extract_strided_slice %7 {offsets = [0, 0, 0], sizes = [1, 8, 128], strides = [1, 1, 1]} : vector<8x8x128xf32> to vector<1x8x128xf32>
    %11 = vector.shape_cast %10 : vector<1x8x128xf32> to vector<8x128xf32>
    %cst_9 = arith.constant dense<0.000000e+00> : vector<8x128xf32>
    %12 = tpu.matmul %9, %8, %cst_9 {dimension_numbers = #tpu.dot_dimension_numbers<[1], [0], [0], [1], [0, 0, 1, 1], [], []>, precision = #tpu.contract_precision<fp32>} : vector<8x128xf32>, vector<128x128xf32>, vector<8x128xf32> -> vector<8x128xf32>
    %13 = arith.addf %11, %12 : vector<8x128xf32>
    %14 = math.tanh %13 : vector<8x128xf32>
    %15 = vector.extract_strided_slice %7 {offsets = [1, 0, 0], sizes = [1, 8, 128], strides = [1, 1, 1]} : vector<8x8x128xf32> to vector<1x8x128xf32>
    %16 = vector.shape_cast %15 : vector<1x8x128xf32> to vector<8x128xf32>
    %cst_10 = arith.constant dense<0.000000e+00> : vector<8x128xf32>
    %17 = tpu.matmul %14, %8, %cst_10 {dimension_numbers = #tpu.dot_dimension_numbers<[1], [0], [0], [1], [0, 0, 1, 1], [], []>, precision = #tpu.contract_precision<fp32>} : vector<8x128xf32>, vector<128x128xf32>, vector<8x128xf32> -> vector<8x128xf32>
    %18 = arith.addf %16, %17 : vector<8x128xf32>
    %19 = math.tanh %18 : vector<8x128xf32>
    %20 = vector.extract_strided_slice %7 {offsets = [2, 0, 0], sizes = [1, 8, 128], strides = [1, 1, 1]} : vector<8x8x128xf32> to vector<1x8x128xf32>
    %21 = vector.shape_cast %20 : vector<1x8x128xf32> to vector<8x128xf32>
    %cst_11 = arith.constant dense<0.000000e+00> : vector<8x128xf32>
    %22 = tpu.matmul %19, %8, %cst_11 {dimension_numbers = #tpu.dot_dimension_numbers<[1], [0], [0], [1], [0, 0, 1, 1], [], []>, precision = #tpu.contract_precision<fp32>} : vector<8x128xf32>, vector<128x128xf32>, vector<8x128xf32> -> vector<8x128xf32>
    %23 = arith.addf %21, %22 : vector<8x128xf32>
    %24 = math.tanh %23 : vector<8x128xf32>
    %25 = vector.extract_strided_slice %7 {offsets = [3, 0, 0], sizes = [1, 8, 128], strides = [1, 1, 1]} : vector<8x8x128xf32> to vector<1x8x128xf32>
    %26 = vector.shape_cast %25 : vector<1x8x128xf32> to vector<8x128xf32>
    %cst_12 = arith.constant dense<0.000000e+00> : vector<8x128xf32>
    %27 = tpu.matmul %24, %8, %cst_12 {dimension_numbers = #tpu.dot_dimension_numbers<[1], [0], [0], [1], [0, 0, 1, 1], [], []>, precision = #tpu.contract_precision<fp32>} : vector<8x128xf32>, vector<128x128xf32>, vector<8x128xf32> -> vector<8x128xf32>
    %28 = arith.addf %26, %27 : vector<8x128xf32>
    %29 = math.tanh %28 : vector<8x128xf32>
    %30 = vector.extract_strided_slice %7 {offsets = [4, 0, 0], sizes = [1, 8, 128], strides = [1, 1, 1]} : vector<8x8x128xf32> to vector<1x8x128xf32>
    %31 = vector.shape_cast %30 : vector<1x8x128xf32> to vector<8x128xf32>
    %cst_13 = arith.constant dense<0.000000e+00> : vector<8x128xf32>
    %32 = tpu.matmul %29, %8, %cst_13 {dimension_numbers = #tpu.dot_dimension_numbers<[1], [0], [0], [1], [0, 0, 1, 1], [], []>, precision = #tpu.contract_precision<fp32>} : vector<8x128xf32>, vector<128x128xf32>, vector<8x128xf32> -> vector<8x128xf32>
    %33 = arith.addf %31, %32 : vector<8x128xf32>
    %34 = math.tanh %33 : vector<8x128xf32>
    %35 = vector.extract_strided_slice %7 {offsets = [5, 0, 0], sizes = [1, 8, 128], strides = [1, 1, 1]} : vector<8x8x128xf32> to vector<1x8x128xf32>
    %36 = vector.shape_cast %35 : vector<1x8x128xf32> to vector<8x128xf32>
    %cst_14 = arith.constant dense<0.000000e+00> : vector<8x128xf32>
    %37 = tpu.matmul %34, %8, %cst_14 {dimension_numbers = #tpu.dot_dimension_numbers<[1], [0], [0], [1], [0, 0, 1, 1], [], []>, precision = #tpu.contract_precision<fp32>} : vector<8x128xf32>, vector<128x128xf32>, vector<8x128xf32> -> vector<8x128xf32>
    %38 = arith.addf %36, %37 : vector<8x128xf32>
    %39 = math.tanh %38 : vector<8x128xf32>
    %40 = vector.extract_strided_slice %7 {offsets = [6, 0, 0], sizes = [1, 8, 128], strides = [1, 1, 1]} : vector<8x8x128xf32> to vector<1x8x128xf32>
    %41 = vector.shape_cast %40 : vector<1x8x128xf32> to vector<8x128xf32>
    %cst_15 = arith.constant dense<0.000000e+00> : vector<8x128xf32>
    %42 = tpu.matmul %39, %8, %cst_15 {dimension_numbers = #tpu.dot_dimension_numbers<[1], [0], [0], [1], [0, 0, 1, 1], [], []>, precision = #tpu.contract_precision<fp32>} : vector<8x128xf32>, vector<128x128xf32>, vector<8x128xf32> -> vector<8x128xf32>
    %43 = arith.addf %41, %42 : vector<8x128xf32>
    %44 = math.tanh %43 : vector<8x128xf32>
    %45 = vector.extract_strided_slice %7 {offsets = [7, 0, 0], sizes = [1, 8, 128], strides = [1, 1, 1]} : vector<8x8x128xf32> to vector<1x8x128xf32>
    %46 = vector.shape_cast %45 : vector<1x8x128xf32> to vector<8x128xf32>
    %cst_16 = arith.constant dense<0.000000e+00> : vector<8x128xf32>
    %47 = tpu.matmul %44, %8, %cst_16 {dimension_numbers = #tpu.dot_dimension_numbers<[1], [0], [0], [1], [0, 0, 1, 1], [], []>, precision = #tpu.contract_precision<fp32>} : vector<8x128xf32>, vector<128x128xf32>, vector<8x128xf32> -> vector<8x128xf32>
    %48 = arith.addf %46, %47 : vector<8x128xf32>
    %49 = math.tanh %48 : vector<8x128xf32>
    %c0_17 = arith.constant 0 : index
    %c0_18 = arith.constant 0 : index
    %50 = vector.load %arg4[%c0_17, %c0_18] : memref<128x128xf32, #tpu.memory_space<vmem>>, vector<128x128xf32>
    %cst_19 = arith.constant dense<0.000000e+00> : vector<8x128xf32>
    %51 = tpu.matmul %49, %50, %cst_19 {dimension_numbers = #tpu.dot_dimension_numbers<[1], [0], [0], [1], [0, 0, 1, 1], [], []>, precision = #tpu.contract_precision<fp32>} : vector<8x128xf32>, vector<128x128xf32>, vector<8x128xf32> -> vector<8x128xf32>
    %c0_20 = arith.constant 0 : index
    %c0_21 = arith.constant 0 : index
    %52 = vector.load %arg5[%c0_20, %c0_21] : memref<1x128xf32, #tpu.memory_space<vmem>>, vector<1x128xf32>
    %53 = vector.broadcast %52 : vector<1x128xf32> to vector<8x128xf32>
    %54 = arith.addf %51, %53 : vector<8x128xf32>
    %c0_22 = arith.constant 0 : index
    %c0_23 = arith.constant 0 : index
    %55 = vector.load %arg6[%c0_22, %c0_23] : memref<8x128xf32, #tpu.memory_space<vmem>>, vector<8x128xf32>
    tpu.vector_store %arg6[%c0_22, %c0_23], %54 {strides = array<i32>} : memref<8x128xf32, #tpu.memory_space<vmem>>, vector<8x128xf32>,
    return
  }
}

</mosaic_0001>

<llo_original>
// kernel: forward.1
$region0: #{forward.1}
  #allocation0 [shape = 'u32[]', space=smem, size = 0x4, offset = 0x4, fixed_abs, tag = 'smem constant byte address 0x4 - core index']
  #allocation1 [shape = 'u32[144,128]{1,0:T(1,128)}', space=vmem, size = 0x12000, scoped, tag = 'internal scratch']
  %s0 = inlined_call_operand.vmem [shape: f32[8,8,128], index: 0, kind: input, shape index: {}]
  %s1 = inlined_call_operand.hbm [shape: f32[128,128], index: 1, kind: input, shape index: {}]
  %s2 = inlined_call_operand.hbm [shape: f32[128,128], index: 2, kind: input, shape index: {}]
  %s3 = inlined_call_operand.hbm [shape: f32[1,128], index: 3, kind: input, shape index: {}]
  %s4 = inlined_call_operand.vmem [shape: f32[128,128], index: 4, kind: input, shape index: {}]
  %s5 = inlined_call_operand.vmem [shape: f32[1,128], index: 5, kind: input, shape index: {}]
  %s6 = inlined_call_operand.vmem [shape: f32[8,128], index: 6, kind: output, shape index: {}]
  %s7 = sld [smem:[#allocation0]]
  $region46: #{forward.1} parent=0
    _
  %s9 = ssub.s32 1, %s7
  %s10 = scalar_select 0, %s9, %s7
  $region1: #{forward.1} parent=0
    #allocation2 [shape = 'u8[65536]{0}', space=vmem, size = 0x10000, scoped, tag = 'input window, operand 1, single buffered']
    #allocation3 [shape = 's32[1]{0}', space=sflag, size = 0x4, scoped, tag = 'scoped memory for forward.1']
    #allocation4 [shape = 'u8[65536]{0}', space=vmem, size = 0x10000, scoped, tag = 'input window, operand 2, single buffered']
    #allocation5 [shape = 's32[1]{0}', space=sflag, size = 0x4, scoped, tag = 'scoped memory for forward.1']
    #allocation6 [shape = 'u8[512]{0}', space=vmem, size = 0x400, scoped, tag = 'input window, operand 3, single buffered']
    %11 = vsyncpa [#allocation3], 0
    %12 = vsyncpa [#allocation5], 0
    // Predicated region
    $region2: #{forward.1} parent=1 // pred_check
      _
    $region3: #{forward.1} parent=1 // pred_check_branch
      %14 = sbr.rel (0) target = $region5
    $region4: #{forward.1} parent=1 // pred_region
      _
    $region5: #{forward.1} parent=1 // pred_fallthru
      _
    // Predicated region
    $region6: #{forward.1} parent=1 // pred_check
      _
    $region7: #{forward.1} parent=1 // pred_check_branch
      %16 = sbr.rel (0) target = $region9
    $region8: #{forward.1} parent=1 // pred_region
      %s18 = ssub.s32 2048, 2048
      %19 = vsyncadd [#allocation3], %s18
      %s20 = sshll.u32 [#allocation2], 4
      %s21 = int_to_ptr.vmem [resolvable:$true] %s20
      %26 = dma.hbm_to_vmem [thread:$0]  %s1, 2048, %s21, [#allocation3], 128, 128, 8
    $region9: #{forward.1} parent=1 // pred_fallthru
      _
    // Predicated region
    $region10: #{forward.1} parent=1 // pred_check
      _
    $region11: #{forward.1} parent=1 // pred_check_branch
      %28 = sbr.rel (0) target = $region13
    $region12: #{forward.1} parent=1 // pred_region
      %s30 = ssub.s32 2048, 2048
      %31 = vsyncadd [#allocation5], %s30
      %s32 = sshll.u32 [#allocation4], 4
      %s33 = int_to_ptr.vmem [resolvable:$true] %s32
      %38 = dma.hbm_to_vmem [thread:$0]  %s2, 2048, %s33, [#allocation5], 128, 128, 8
    $region13: #{forward.1} parent=1 // pred_fallthru
      _
    // Predicated region
    $region14: #{forward.1} parent=1 // pred_check
      _
    $region15: #{forward.1} parent=1 // pred_check_branch
      %40 = sbr.rel (0) target = $region17
    $region16: #{forward.1} parent=1 // pred_region
      %s42 = ssub.s32 16, 16
      %43 = vsyncadd [#allocation5], %s42
      %s45 = sshll.u32 [#allocation6], 4
      %s46 = int_to_ptr.vmem [resolvable:$true] %s45
      %48 = dma.hbm_to_vmem [thread:$0]  %s3, 16, %s46, [#allocation5]
    $region17: #{forward.1} parent=1 // pred_fallthru
      _
    // Predicated region
    $region18: #{forward.1} parent=1 // pred_check
      _
    $region19: #{forward.1} parent=1 // pred_check_branch
      %50 = sbr.rel (0) target = $region21
    $region20: #{forward.1} parent=1 // pred_region
      _
    $region21: #{forward.1} parent=1 // pred_fallthru
      _
    // Predicated region
    $region22: #{forward.1} parent=1 // pred_check
      _
    $region23: #{forward.1} parent=1 // pred_check_branch
      %52 = sbr.rel (0) target = $region25
    $region24: #{forward.1} parent=1 // pred_region
      _
    $region25: #{forward.1} parent=1 // pred_fallthru
      _
    // Predicated region
    $region26: #{forward.1} parent=1 // pred_check
      _
    $region27: #{forward.1} parent=1 // pred_check_branch
      %54 = sbr.rel (0) target = $region29
    $region28: #{forward.1} parent=1 // pred_region
      %55 = dma.done [#allocation3], 2048
    $region29: #{forward.1} parent=1 // pred_fallthru
      _
    // Predicated region
    $region30: #{forward.1} parent=1 // pred_check
      _
    $region31: #{forward.1} parent=1 // pred_check_branch
      %57 = sbr.rel (0) target = $region33
    $region32: #{forward.1} parent=1 // pred_region
      %58 = dma.done [#allocation5], 2048
    $region33: #{forward.1} parent=1 // pred_fallthru
      _
    // Predicated region
    $region34: #{forward.1} parent=1 // pred_check
      _
    $region35: #{forward.1} parent=1 // pred_check_branch
      %60 = sbr.rel (0) target = $region37
    $region36: #{forward.1} parent=1 // pred_region
      %61 = dma.done [#allocation5], 16
    $region37: #{forward.1} parent=1 // pred_fallthru
      _
    %v62 = vld [vmem:[%s0] sm:$0xff]
    %v63 = vld [vmem:[%s0 + $0x8] sm:$0xff]
    %v64 = vld [vmem:[%s0 + $0x10] sm:$0xff]
    %v65 = vld [vmem:[%s0 + $0x18] sm:$0xff]
    %v66 = vld [vmem:[%s0 + $0x20] sm:$0xff]
    %v67 = vld [vmem:[%s0 + $0x28] sm:$0xff]
    %v68 = vld [vmem:[%s0 + $0x30] sm:$0xff]
    %v69 = vld [vmem:[%s0 + $0x38] sm:$0xff]
    %v70 = vld [vmem:[#allocation2] sm:$0xff]
    %v71 = vld [vmem:[#allocation2 + $0x8] sm:$0xff]
    %v72 = vld [vmem:[#allocation2 + $0x10] sm:$0xff]
    %v73 = vld [vmem:[#allocation2 + $0x18] sm:$0xff]
    %v74 = vld [vmem:[#allocation2 + $0x20] sm:$0xff]
    %v75 = vld [vmem:[#allocation2 + $0x28] sm:$0xff]
    %v76 = vld [vmem:[#allocation2 + $0x30] sm:$0xff]
    %v77 = vld [vmem:[#allocation2 + $0x38] sm:$0xff]
    %v78 = vld [vmem:[#allocation2 + $0x40] sm:$0xff]
    %v79 = vld [vmem:[#allocation2 + $0x48] sm:$0xff]
    %v80 = vld [vmem:[#allocation2 + $0x50] sm:$0xff]
    %v81 = vld [vmem:[#allocation2 + $0x58] sm:$0xff]
    %v82 = vld [vmem:[#allocation2 + $0x60] sm:$0xff]
    %v83 = vld [vmem:[#allocation2 + $0x68] sm:$0xff]
    %v84 = vld [vmem:[#allocation2 + $0x70] sm:$0xff]
    %v85 = vld [vmem:[#allocation2 + $0x78] sm:$0xff]
    %v86 = vld [vmem:[#allocation6] sm:$0x1]
    %v88 = vlaneseq
    %v89 = vshrl.u32 %v88, 7
    %v90 = vsub.s32 0, %v89
    %v91 = vrot.slane %v86, %v90
    %93 = vmatprep.subr.mxu0 0.0
    %v94 = vand.u32 %v70, 4294901760
    %95 = vmatpush1.msra.mxu0 %v94
    %96 = vmatprep.subr.mxu0 0.0
    %v97 = vand.u32 %v71, 4294901760
    %98 = vmatpush1.msra.mxu0 %v97
    %99 = vmatprep.subr.mxu0 0.0
    %v100 = vand.u32 %v72, 4294901760
    %101 = vmatpush1.msra.mxu0 %v100
    %102 = vmatprep.subr.mxu0 0.0
    %v103 = vand.u32 %v73, 4294901760
    %104 = vmatpush1.msra.mxu0 %v103
    %105 = vmatprep.subr.mxu0 0.0
    %v106 = vand.u32 %v74, 4294901760
    %107 = vmatpush1.msra.mxu0 %v106
    %108 = vmatprep.subr.mxu0 0.0
    %v109 = vand.u32 %v75, 4294901760
    %110 = vmatpush1.msra.mxu0 %v109
    %111 = vmatprep.subr.mxu0 0.0
    %v112 = vand.u32 %v76, 4294901760
    %113 = vmatpush1.msra.mxu0 %v112
    %114 = vmatprep.subr.mxu0 0.0
    %v115 = vand.u32 %v77, 4294901760
    %116 = vmatpush1.msra.mxu0 %v115
    %117 = vmatprep.subr.mxu0 0.0
    %v118 = vand.u32 %v78, 4294901760
    %119 = vmatpush1.msra.mxu0 %v118
    %120 = vmatprep.subr.mxu0 0.0
    %v121 = vand.u32 %v79, 4294901760
    %122 = vmatpush1.msra.mxu0 %v121
    %123 = vmatprep.subr.mxu0 0.0
    %v124 = vand.u32 %v80, 4294901760
    %125 = vmatpush1.msra.mxu0 %v124
    %126 = vmatprep.subr.mxu0 0.0
    %v127 = vand.u32 %v81, 4294901760
    %128 = vmatpush1.msra.mxu0 %v127
    %129 = vmatprep.subr.mxu0 0.0
    %v130 = vand.u32 %v82, 4294901760
    %131 = vmatpush1.msra.mxu0 %v130
    %132 = vmatprep.subr.mxu0 0.0
    %v133 = vand.u32 %v83, 4294901760
    %134 = vmatpush1.msra.mxu0 %v133
    %135 = vmatprep.subr.mxu0 0.0
    %v136 = vand.u32 %v84, 4294901760
    %137 = vmatpush1.msra.mxu0 %v136
    %138 = vmatprep.subr.mxu0 0.0
    %v139 = vand.u32 %v85, 4294901760
    %140 = vmatpush1.msra.mxu0 %v139
    %141 = vmatprep.subr.mxu0 0.0
    %142 = vmatpush1.msra.mxu0 0.0
    %143 = vmatprep.subr.mxu0 0.0
    %144 = vmatpush1.msra.mxu0 0.0
    %145 = vmatprep.subr.mxu0 0.0
    %146 = vmatpush1.msra.mxu0 0.0
    %147 = vmatprep.subr.mxu0 0.0
    %148 = vmatpush1.msra.mxu0 0.0
    %149 = vmatprep.subr.mxu0 0.0
    %150 = vmatpush1.msra.mxu0 0.0
    %151 = vmatprep.subr.mxu0 0.0
    %152 = vmatpush1.msra.mxu0 0.0
    %153 = vmatprep.subr.mxu0 0.0
    %154 = vmatpush1.msra.mxu0 0.0
    %155 = vmatprep.subr.mxu0 0.0
    %156 = vmatpush1.msra.mxu0 0.0
    %157 = vmatprep.subr.mxu0 0.0
    %158 = vmatpush1.msra.mxu0 0.0
    %159 = vmatprep.subr.mxu0 0.0
    %160 = vmatpush1.msra.mxu0 0.0
    %161 = vmatprep.subr.mxu0 0.0
    %162 = vmatpush1.msra.mxu0 0.0
    %163 = vmatprep.subr.mxu0 0.0
    %164 = vmatpush1.msra.mxu0 0.0
    %165 = vmatprep.subr.mxu0 0.0
    %166 = vmatpush1.msra.mxu0 0.0
    %167 = vmatprep.subr.mxu0 0.0
    %168 = vmatpush1.msra.mxu0 0.0
    %169 = vmatprep.subr.mxu0 0.0
    %170 = vmatpush1.msra.mxu0 0.0
    %171 = vmatprep.subr.mxu0 0.0
    %172 = vmatpush1.msra.mxu0 0.0
    %173 = vmatprep.mubr.f32.mxu0 0.0
    %v174 = vand.u32 %v62, 4294901760
    %v175 = vsub.f32 %v62, %v174
    %v176 = vand.u32 %v175, 4294901760
    %v177 = vsub.f32 %v175, %v176
    %v178 = vand.u32 %v177, 4294901760
    %179 = vmatmul.mubr.f32.gmra.mrb[0].mxu0 %v178
    %v180 = vpop.f32.mrb[0].mxu0
    %v181 = vadd.f32 %v91, %v180
    %v182 = vpop.f32.mrb[0].mxu0
    %183 = vmatprep.mubr.f32.mxu0 0.0
    %v184 = vand.u32 %v63, 4294901760
    %v185 = vsub.f32 %v63, %v184
    %v186 = vand.u32 %v185, 4294901760
    %v187 = vsub.f32 %v185, %v186
    %v188 = vand.u32 %v187, 4294901760
    %189 = vmatmul.mubr.f32.gmra.mrb[0].mxu0 %v188
    %v190 = vpop.f32.mrb[0].mxu0
    %v191 = vadd.f32 %v91, %v190
    %v192 = vpop.f32.mrb[0].mxu0
    %193 = vmatprep.mubr.f32.mxu0 0.0
    %v194 = vand.u32 %v64, 4294901760
    %v195 = vsub.f32 %v64, %v194
    %v196 = vand.u32 %v195, 4294901760
    %v197 = vsub.f32 %v195, %v196
    %v198 = vand.u32 %v197, 4294901760
    %199 = vmatmul.mubr.f32.gmra.mrb[0].mxu0 %v198
    %v200 = vpop.f32.mrb[0].mxu0
    %v201 = vadd.f32 %v91, %v200
    %v202 = vpop.f32.mrb[0].mxu0
    %203 = vmatprep.mubr.f32.mxu0 0.0
    %v204 = vand.u32 %v65, 4294901760
    %v205 = vsub.f32 %v65, %v204
    %v206 = vand.u32 %v205, 4294901760
    %v207 = vsub.f32 %v205, %v206
    %v208 = vand.u32 %v207, 4294901760
    %209 = vmatmul.mubr.f32.gmra.mrb[0].mxu0 %v208
    %v210 = vpop.f32.mrb[0].mxu0
    %v211 = vadd.f32 %v91, %v210
    %v212 = vpop.f32.mrb[0].mxu0
    %213 = vmatprep.mubr.f32.mxu0 0.0
    %v214 = vand.u32 %v66, 4294901760
    %v215 = vsub.f32 %v66, %v214
    %v216 = vand.u32 %v215, 4294901760
    %v217 = vsub.f32 %v215, %v216
    %v218 = vand.u32 %v217, 4294901760
    %219 = vmatmul.mubr.f32.gmra.mrb[0].mxu0 %v218
    %v220 = vpop.f32.mrb[0].mxu0
    %v221 = vadd.f32 %v91, %v220
    %v222 = vpop.f32.mrb[0].mxu0
    %223 = vmatprep.mubr.f32.mxu0 0.0
    %v224 = vand.u32 %v67, 4294901760
    %v225 = vsub.f32 %v67, %v224
    %v226 = vand.u32 %v225, 4294901760
    %v227 = vsub.f32 %v225, %v226
    %v228 = vand.u32 %v227, 4294901760
    %229 = vmatmul.mubr.f32.gmra.mrb[0].mxu0 %v228
    %v230 = vpop.f32.mrb[0].mxu0
    %v231 = vadd.f32 %v91, %v230
    %v232 = vpop.f32.mrb[0].mxu0
    %233 = vmatprep.mubr.f32.mxu0 0.0
    %v234 = vand.u32 %v68, 4294901760
    %v235 = vsub.f32 %v68, %v234
    %v236 = vand.u32 %v235, 4294901760
    %v237 = vsub.f32 %v235, %v236
    %v238 = vand.u32 %v237, 4294901760
    %239 = vmatmul.mubr.f32.gmra.mrb[0].mxu0 %v238
    %v240 = vpop.f32.mrb[0].mxu0
    %v241 = vadd.f32 %v91, %v240
    %v242 = vpop.f32.mrb[0].mxu0
    %243 = vmatprep.mubr.f32.mxu0 0.0
    %v244 = vand.u32 %v69, 4294901760
    %v245 = vsub.f32 %v69, %v244
    %v246 = vand.u32 %v245, 4294901760
    %v247 = vsub.f32 %v245, %v246
    %v248 = vand.u32 %v247, 4294901760
    %249 = vmatmul.mubr.f32.gmra.mrb[0].mxu0 %v248
    %v250 = vpop.f32.mrb[0].mxu0
    %v251 = vadd.f32 %v91, %v250
    %v252 = vpop.f32.mrb[0].mxu0
    %253 = vdwg.mxu0
    %254 = vmatprep.subr.mxu0 0.0
    %v255 = vand.u32 %v70, 4294901760
    %v256 = vsub.f32 %v70, %v255
    %v257 = vand.u32 %v256, 4294901760
    %v258 = vsub.f32 %v256, %v257
    %v259 = vand.u32 %v258, 4294901760
    %260 = vmatpush1.msra.mxu0 %v259
    %261 = vmatprep.subr.mxu0 0.0
    %v262 = vand.u32 %v71, 4294901760
    %v263 = vsub.f32 %v71, %v262
    %v264 = vand.u32 %v263, 4294901760
    %v265 = vsub.f32 %v263, %v264
    %v266 = vand.u32 %v265, 4294901760
    %267 = vmatpush1.msra.mxu0 %v266
    %268 = vmatprep.subr.mxu0 0.0
    %v269 = vand.u32 %v72, 4294901760
    %v270 = vsub.f32 %v72, %v269
    %v271 = vand.u32 %v270, 4294901760
    %v272 = vsub.f32 %v270, %v271
    %v273 = vand.u32 %v272, 4294901760
    %274 = vmatpush1.msra.mxu0 %v273
    %275 = vmatprep.subr.mxu0 0.0
    %v276 = vand.u32 %v73, 4294901760
    %v277 = vsub.f32 %v73, %v276
    %v278 = vand.u32 %v277, 4294901760
    %v279 = vsub.f32 %v277, %v278
    %v280 = vand.u32 %v279, 4294901760
    %281 = vmatpush1.msra.mxu0 %v280
    %282 = vmatprep.subr.mxu0 0.0
    %v283 = vand.u32 %v74, 4294901760
    %v284 = vsub.f32 %v74, %v283
    %v285 = vand.u32 %v284, 4294901760
    %v286 = vsub.f32 %v284, %v285
    %v287 = vand.u32 %v286, 4294901760
    %288 = vmatpush1.msra.mxu0 %v287
    %289 = vmatprep.subr.mxu0 0.0
    %v290 = vand.u32 %v75, 4294901760
    %v291 = vsub.f32 %v75, %v290
    %v292 = vand.u32 %v291, 4294901760
    %v293 = vsub.f32 %v291, %v292
    %v294 = vand.u32 %v293, 4294901760
    %295 = vmatpush1.msra.mxu0 %v294
    %296 = vmatprep.subr.mxu0 0.0
    %v297 = vand.u32 %v76, 4294901760
    %v298 = vsub.f32 %v76, %v297
    %v299 = vand.u32 %v298, 4294901760
    %v300 = vsub.f32 %v298, %v299
    %v301 = vand.u32 %v300, 4294901760
    %302 = vmatpush1.msra.mxu0 %v301
    %303 = vmatprep.subr.mxu0 0.0
    %v304 = vand.u32 %v77, 4294901760
    %v305 = vsub.f32 %v77, %v304
    %v306 = vand.u32 %v305, 4294901760
    %v307 = vsub.f32 %v305, %v306
    %v308 = vand.u32 %v307, 4294901760
    %309 = vmatpush1.msra.mxu0 %v308
    %310 = vmatprep.subr.mxu0 0.0
    %v311 = vand.u32 %v78, 4294901760
    %v312 = vsub.f32 %v78, %v311
    %v313 = vand.u32 %v312, 4294901760
    %v314 = vsub.f32 %v312, %v313
    %v315 = vand.u32 %v314, 4294901760
    %316 = vmatpush1.msra.mxu0 %v315
    %317 = vmatprep.subr.mxu0 0.0
    %v318 = vand.u32 %v79, 4294901760
    %v319 = vsub.f32 %v79, %v318
    %v320 = vand.u32 %v319, 4294901760
    %v321 = vsub.f32 %v319, %v320
    %v322 = vand.u32 %v321, 4294901760
    %323 = vmatpush1.msra.mxu0 %v322
    %324 = vmatprep.subr.mxu0 0.0
    %v325 = vand.u32 %v80, 4294901760
    %v326 = vsub.f32 %v80, %v325
    %v327 = vand.u32 %v326, 4294901760
    %v328 = vsub.f32 %v326, %v327
    %v329 = vand.u32 %v328, 4294901760
    %330 = vmatpush1.msra.mxu0 %v329
    %331 = vmatprep.subr.mxu0 0.0
    %v332 = vand.u32 %v81, 4294901760
    %v333 = vsub.f32 %v81, %v332
    %v334 = vand.u32 %v333, 4294901760
    %v335 = vsub.f32 %v333, %v334
    %v336 = vand.u32 %v335, 4294901760
    %337 = vmatpush1.msra.mxu0 %v336
    %338 = vmatprep.subr.mxu0 0.0
    %v339 = vand.u32 %v82, 4294901760
    %v340 = vsub.f32 %v82, %v339
    %v341 = vand.u32 %v340, 4294901760
    %v342 = vsub.f32 %v340, %v341
    %v343 = vand.u32 %v342, 4294901760
    %344 = vmatpush1.msra.mxu0 %v343
    %345 = vmatprep.subr.mxu0 0.0
    %v346 = vand.u32 %v83, 4294901760
    %v347 = vsub.f32 %v83, %v346
    %v348 = vand.u32 %v347, 4294901760
    %v349 = vsub.f32 %v347, %v348
    %v350 = vand.u32 %v349, 4294901760
    %351 = vmatpush1.msra.mxu0 %v350
    %352 = vmatprep.subr.mxu0 0.0
    %v353 = vand.u32 %v84, 4294901760
    %v354 = vsub.f32 %v84, %v353
    %v355 = vand.u32 %v354, 4294901760
    %v356 = vsub.f32 %v354, %v355
    %v357 = vand.u32 %v356, 4294901760
    %358 = vmatpush1.msra.mxu0 %v357
    %359 = vmatprep.subr.mxu0 0.0
    %v360 = vand.u32 %v85, 4294901760
    %v361 = vsub.f32 %v85, %v360
    %v362 = vand.u32 %v361, 4294901760
    %v363 = vsub.f32 %v361, %v362
    %v364 = vand.u32 %v363, 4294901760
    %365 = vmatpush1.msra.mxu0 %v364
    %366 = vmatprep.subr.mxu0 0.0
    %367 = vmatpush1.msra.mxu0 0.0
    %368 = vmatprep.subr.mxu0 0.0
    %369 = vmatpush1.msra.mxu0 0.0
    %370 = vmatprep.subr.mxu0 0.0
    %371 = vmatpush1.msra.mxu0 0.0
    %372 = vmatprep.subr.mxu0 0.0
    %373 = vmatpush1.msra.mxu0 0.0
    %374 = vmatprep.subr.mxu0 0.0
    %375 = vmatpush1.msra.mxu0 0.0
    %376 = vmatprep.subr.mxu0 0.0
    %377 = vmatpush1.msra.mxu0 0.0
    %378 = vmatprep.subr.mxu0 0.0
    %379 = vmatpush1.msra.mxu0 0.0
    %380 = vmatprep.subr.mxu0 0.0
    %381 = vmatpush1.msra.mxu0 0.0
    %382 = vmatprep.subr.mxu0 0.0
    %383 = vmatpush1.msra.mxu0 0.0
    %384 = vmatprep.subr.mxu0 0.0
    %385 = vmatpush1.msra.mxu0 0.0
    %386 = vmatprep.subr.mxu0 0.0
    %387 = vmatpush1.msra.mxu0 0.0
    %388 = vmatprep.subr.mxu0 0.0
    %389 = vmatpush1.msra.mxu0 0.0
    %390 = vmatprep.subr.mxu0 0.0
    %391 = vmatpush1.msra.mxu0 0.0
    %392 = vmatprep.subr.mxu0 0.0
    %393 = vmatpush1.msra.mxu0 0.0
    %394 = vmatprep.subr.mxu0 0.0
    %395 = vmatpush1.msra.mxu0 0.0
    %396 = vmatprep.subr.mxu0 0.0
    %397 = vmatpush1.msra.mxu0 0.0
    %398 = vmatprep.mubr.f32.mxu0 0.0
    %v399 = vand.u32 %v62, 4294901760
    %400 = vmatmul.mubr.f32.gmra.mrb[0].mxu0 %v399
    %v401 = vpop.f32.mrb[0].mxu0
    %v402 = vadd.f32 %v181, %v401
    %v403 = vpop.f32.mrb[0].mxu0
    %404 = vmatprep.mubr.f32.mxu0 0.0
    %v405 = vand.u32 %v63, 4294901760
    %406 = vmatmul.mubr.f32.gmra.mrb[0].mxu0 %v405
    %v407 = vpop.f32.mrb[0].mxu0
    %v408 = vadd.f32 %v191, %v407
    %v409 = vpop.f32.mrb[0].mxu0
    %410 = vmatprep.mubr.f32.mxu0 0.0
    %v411 = vand.u32 %v64, 4294901760
    %412 = vmatmul.mubr.f32.gmra.mrb[0].mxu0 %v411
    %v413 = vpop.f32.mrb[0].mxu0
    %v414 = vadd.f32 %v201, %v413
    %v415 = vpop.f32.mrb[0].mxu0
    %416 = vmatprep.mubr.f32.mxu0 0.0
    %v417 = vand.u32 %v65, 4294901760
    %418 = vmatmul.mubr.f32.gmra.mrb[0].mxu0 %v417
    %v419 = vpop.f32.mrb[0].mxu0
    %v420 = vadd.f32 %v211, %v419
    %v421 = vpop.f32.mrb[0].mxu0
    %422 = vmatprep.mubr.f32.mxu0 0.0
    %v423 = vand.u32 %v66, 4294901760
    %424 = vmatmul.mubr.f32.gmra.mrb[0].mxu0 %v423
    %v425 = vpop.f32.mrb[0].mxu0
    %v426 = vadd.f32 %v221, %v425
    %v427 = vpop.f32.mrb[0].mxu0
    %428 = vmatprep.mubr.f32.mxu0 0.0
    %v429 = vand.u32 %v67, 4294901760
    %430 = vmatmul.mubr.f32.gmra.mrb[0].mxu0 %v429
    %v431 = vpop.f32.mrb[0].mxu0
    %v432 = vadd.f32 %v231, %v431
    %v433 = vpop.f32.mrb[0].mxu0
    %434 = vmatprep.mubr.f32.mxu0 0.0
    %v435 = vand.u32 %v68, 4294901760
    %436 = vmatmul.mubr.f32.gmra.mrb[0].mxu0 %v435
    %v437 = vpop.f32.mrb[0].mxu0
    %v438 = vadd.f32 %v241, %v437
    %v439 = vpop.f32.mrb[0].mxu0
    %440 = vmatprep.mubr.f32.mxu0 0.0
    %v441 = vand.u32 %v69, 4294901760
    %442 = vmatmul.mubr.f32.gmra.mrb[0].mxu0 %v441
    %v443 = vpop.f32.mrb[0].mxu0
    %v444 = vadd.f32 %v251, %v443
    %v445 = vpop.f32.mrb[0].mxu0
    %446 = vdwg.mxu0
    %447 = vmatprep.subr.mxu0 0.0
    %v448 = vand.u32 %v70, 4294901760
    %v449 = vsub.f32 %v70, %v448
    %450 = vmatpush1.msra.mxu0 %v449
    %451 = vmatprep.subr.mxu0 0.0
    %v452 = vand.u32 %v71, 4294901760
    %v453 = vsub.f32 %v71, %v452
    %454 = vmatpush1.msra.mxu0 %v453
    %455 = vmatprep.subr.mxu0 0.0
    %v456 = vand.u32 %v72, 4294901760
    %v457 = vsub.f32 %v72, %v456
    %458 = vmatpush1.msra.mxu0 %v457
    %459 = vmatprep.subr.mxu0 0.0
    %v460 = vand.u32 %v73, 4294901760
    %v461 = vsub.f32 %v73, %v460
    %462 = vmatpush1.msra.mxu0 %v461
    %463 = vmatprep.subr.mxu0 0.0
    %v464 = vand.u32 %v74, 4294901760
    %v465 = vsub.f32 %v74, %v464
    %466 = vmatpush1.msra.mxu0 %v465
    %467 = vmatprep.subr.mxu0 0.0
    %v468 = vand.u32 %v75, 4294901760
    %v469 = vsub.f32 %v75, %v468
    %470 = vmatpush1.msra.mxu0 %v469
    %471 = vmatprep.subr.mxu0 0.0
    %v472 = vand.u32 %v76, 4294901760
    %v473 = vsub.f32 %v76, %v472
    %474 = vmatpush1.msra.mxu0 %v473
    %475 = vmatprep.subr.mxu0 0.0
    %v476 = vand.u32 %v77, 4294901760
    %v477 = vsub.f32 %v77, %v476
    %478 = vmatpush1.msra.mxu0 %v477
    %479 = vmatprep.subr.mxu0 0.0
    %v480 = vand.u32 %v78, 4294901760
    %v481 = vsub.f32 %v78, %v480
    %482 = vmatpush1.msra.mxu0 %v481
    %483 = vmatprep.subr.mxu0 0.0
    %v484 = vand.u32 %v79, 4294901760
    %v485 = vsub.f32 %v79, %v484
    %486 = vmatpush1.msra.mxu0 %v485
    %487 = vmatprep.subr.mxu0 0.0
    %v488 = vand.u32 %v80, 4294901760
    %v489 = vsub.f32 %v80, %v488
    %490 = vmatpush1.msra.mxu0 %v489
    %491 = vmatprep.subr.mxu0 0.0
    %v492 = vand.u32 %v81, 4294901760
    %v493 = vsub.f32 %v81, %v492
    %494 = vmatpush1.msra.mxu0 %v493
    %495 = vmatprep.subr.mxu0 0.0
    %v496 = vand.u32 %v82, 4294901760
    %v497 = vsub.f32 %v82, %v496
    %498 = vmatpush1.msra.mxu0 %v497
    %499 = vmatprep.subr.mxu0 0.0
    %v500 = vand.u32 %v83, 4294901760
    %v501 = vsub.f32 %v83, %v500
    %502 = vmatpush1.msra.mxu0 %v501
    %503 = vmatprep.subr.mxu0 0.0
    %v504 = vand.u32 %v84, 4294901760
    %v505 = vsub.f32 %v84, %v504
    %506 = vmatpush1.msra.mxu0 %v505
    %507 = vmatprep.subr.mxu0 0.0
    %v508 = vand.u32 %v85, 4294901760
    %v509 = vsub.f32 %v85, %v508
    %510 = vmatpush1.msra.mxu0 %v509
    %511 = vmatprep.subr.mxu0 0.0
    %512 = vmatpush1.msra.mxu0 0.0
    %513 = vmatprep.subr.mxu0 0.0
    %514 = vmatpush1.msra.mxu0 0.0
    %515 = vmatprep.subr.mxu0 0.0
    %516 = vmatpush1.msra.mxu0 0.0
    %517 = vmatprep.subr.mxu0 0.0
    %518 = vmatpush1.msra.mxu0 0.0
    %519 = vmatprep.subr.mxu0 0.0
    %520 = vmatpush1.msra.mxu0 0.0
    %521 = vmatprep.subr.mxu0 0.0
    %522 = vmatpush1.msra.mxu0 0.0
    %523 = vmatprep.subr.mxu0 0.0
    %524 = vmatpush1.msra.mxu0 0.0
    %525 = vmatprep.subr.mxu0 0.0
    %526 = vmatpush1.msra.mxu0 0.0
    %527 = vmatprep.subr.mxu0 0.0
    %528 = vmatpush1.msra.mxu0 0.0
    %529 = vmatprep.subr.mxu0 0.0
    %530 = vmatpush1.msra.mxu0 0.0
    %531 = vmatprep.subr.mxu0 0.0
    %532 = vmatpush1.msra.mxu0 0.0
    %533 = vmatprep.subr.mxu0 0.0
    %534 = vmatpush1.msra.mxu0 0.0
    %535 = vmatprep.subr.mxu0 0.0
    %536 = vmatpush1.msra.mxu0 0.0
    %537 = vmatprep.subr.mxu0 0.0
    %538 = vmatpush1.msra.mxu0 0.0
    %539 = vmatprep.subr.mxu0 0.0
    %540 = vmatpush1.msra.mxu0 0.0
    %541 = vmatprep.subr.mxu0 0.0
    %542 = vmatpush1.msra.mxu0 0.0
    %543 = vmatprep.mubr.f32.mxu0 0.0
    %v544 = vand.u32 %v62, 4294901760
    %v545 = vsub.f32 %v62, %v544
    %546 = vmatmul.mubr.f32.gmra.mrb[0].mxu0 %v545
    %v547 = vpop.f32.mrb[0].mxu0
    %v548 = vadd.f32 %v402, %v547
    %v549 = vpop.f32.mrb[0].mxu0
    %550 = vmatprep.mubr.f32.mxu0 0.0
    %v551 = vand.u32 %v63, 4294901760
    %v552 = vsub.f32 %v63, %v551
    %553 = vmatmul.mubr.f32.gmra.mrb[0].mxu0 %v552
    %v554 = vpop.f32.mrb[0].mxu0
    %v555 = vadd.f32 %v408, %v554
    %v556 = vpop.f32.mrb[0].mxu0
    %557 = vmatprep.mubr.f32.mxu0 0.0
    %v558 = vand.u32 %v64, 4294901760
    %v559 = vsub.f32 %v64, %v558
    %560 = vmatmul.mubr.f32.gmra.mrb[0].mxu0 %v559
    %v561 = vpop.f32.mrb[0].mxu0
    %v562 = vadd.f32 %v414, %v561
    %v563 = vpop.f32.mrb[0].mxu0
    %564 = vmatprep.mubr.f32.mxu0 0.0
    %v565 = vand.u32 %v65, 4294901760
    %v566 = vsub.f32 %v65, %v565
    %567 = vmatmul.mubr.f32.gmra.mrb[0].mxu0 %v566
    %v568 = vpop.f32.mrb[0].mxu0
    %v569 = vadd.f32 %v420, %v568
    %v570 = vpop.f32.mrb[0].mxu0
    %571 = vmatprep.mubr.f32.mxu0 0.0
    %v572 = vand.u32 %v66, 4294901760
    %v573 = vsub.f32 %v66, %v572
    %574 = vmatmul.mubr.f32.gmra.mrb[0].mxu0 %v573
    %v575 = vpop.f32.mrb[0].mxu0
    %v576 = vadd.f32 %v426, %v575
    %v577 = vpop.f32.mrb[0].mxu0
    %578 = vmatprep.mubr.f32.mxu0 0.0
    %v579 = vand.u32 %v67, 4294901760
    %v580 = vsub.f32 %v67, %v579
    %581 = vmatmul.mubr.f32.gmra.mrb[0].mxu0 %v580
    %v582 = vpop.f32.mrb[0].mxu0
    %v583 = vadd.f32 %v432, %v582
    %v584 = vpop.f32.mrb[0].mxu0
    %585 = vmatprep.mubr.f32.mxu0 0.0
    %v586 = vand.u32 %v68, 4294901760
    %v587 = vsub.f32 %v68, %v586
    %588 = vmatmul.mubr.f32.gmra.mrb[0].mxu0 %v587
    %v589 = vpop.f32.mrb[0].mxu0
    %v590 = vadd.f32 %v438, %v589
    %v591 = vpop.f32.mrb[0].mxu0
    %592 = vmatprep.mubr.f32.mxu0 0.0
    %v593 = vand.u32 %v69, 4294901760
    %v594 = vsub.f32 %v69, %v593
    %595 = vmatmul.mubr.f32.gmra.mrb[0].mxu0 %v594
    %v596 = vpop.f32.mrb[0].mxu0
    %v597 = vadd.f32 %v444, %v596
    %v598 = vpop.f32.mrb[0].mxu0
    %599 = vdwg.mxu0
    %600 = vmatprep.subr.mxu0 0.0
    %v601 = vand.u32 %v70, 4294901760
    %602 = vmatpush1.msra.mxu0 %v601
    %603 = vmatprep.subr.mxu0 0.0
    %v604 = vand.u32 %v71, 4294901760
    %605 = vmatpush1.msra.mxu0 %v604
    %606 = vmatprep.subr.mxu0 0.0
    %v607 = vand.u32 %v72, 4294901760
    %608 = vmatpush1.msra.mxu0 %v607
    %609 = vmatprep.subr.mxu0 0.0
    %v610 = vand.u32 %v73, 4294901760
    %611 = vmatpush1.msra.mxu0 %v610
    %612 = vmatprep.subr.mxu0 0.0
    %v613 = vand.u32 %v74, 4294901760
    %614 = vmatpush1.msra.mxu0 %v613
    %615 = vmatprep.subr.mxu0 0.0
    %v616 = vand.u32 %v75, 4294901760
    %617 = vmatpush1.msra.mxu0 %v616
    %618 = vmatprep.subr.mxu0 0.0
    %v619 = vand.u32 %v76, 4294901760
    %620 = vmatpush1.msra.mxu0 %v619
    %621 = vmatprep.subr.mxu0 0.0
    %v622 = vand.u32 %v77, 4294901760
    %623 = vmatpush1.msra.mxu0 %v622
    %624 = vmatprep.subr.mxu0 0.0
    %v625 = vand.u32 %v78, 4294901760
    %626 = vmatpush1.msra.mxu0 %v625
    %627 = vmatprep.subr.mxu0 0.0
    %v628 = vand.u32 %v79, 4294901760
    %629 = vmatpush1.msra.mxu0 %v628
    %630 = vmatprep.subr.mxu0 0.0
    %v631 = vand.u32 %v80, 4294901760
    %632 = vmatpush1.msra.mxu0 %v631
    %633 = vmatprep.subr.mxu0 0.0
    %v634 = vand.u32 %v81, 4294901760
    %635 = vmatpush1.msra.mxu0 %v634
    %636 = vmatprep.subr.mxu0 0.0
    %v637 = vand.u32 %v82, 4294901760
    %638 = vmatpush1.msra.mxu0 %v637
    %639 = vmatprep.subr.mxu0 0.0
    %v640 = vand.u32 %v83, 4294901760
    %641 = vmatpush1.msra.mxu0 %v640
    %642 = vmatprep.subr.mxu0 0.0
    %v643 = vand.u32 %v84, 4294901760
    %644 = vmatpush1.msra.mxu0 %v643
    %645 = vmatprep.subr.mxu0 0.0
    %v646 = vand.u32 %v85, 4294901760
    %647 = vmatpush1.msra.mxu0 %v646
    %648 = vmatprep.subr.mxu0 0.0
    %649 = vmatpush1.msra.mxu0 0.0
    %650 = vmatprep.subr.mxu0 0.0
    %651 = vmatpush1.msra.mxu0 0.0
    %652 = vmatprep.subr.mxu0 0.0
    %653 = vmatpush1.msra.mxu0 0.0
    %654 = vmatprep.subr.mxu0 0.0
    %655 = vmatpush1.msra.mxu0 0.0
    %656 = vmatprep.subr.mxu0 0.0
    %657 = vmatpush1.msra.mxu0 0.0
    %658 = vmatprep.subr.mxu0 0.0
    %659 = vmatpush1.msra.mxu0 0.0
    %660 = vmatprep.subr.mxu0 0.0
    %661 = vmatpush1.msra.mxu0 0.0
    %662 = vmatprep.subr.mxu0 0.0
    %663 = vmatpush1.msra.mxu0 0.0
    %664 = vmatprep.subr.mxu0 0.0
    %665 = vmatpush1.msra.mxu0 0.0
    %666 = vmatprep.subr.mxu0 0.0
    %667 = vmatpush1.msra.mxu0 0.0
    %668 = vmatprep.subr.mxu0 0.0
    %669 = vmatpush1.msra.mxu0 0.0
    %670 = vmatprep.subr.mxu0 0.0
    %671 = vmatpush1.msra.mxu0 0.0
    %672 = vmatprep.subr.mxu0 0.0
    %673 = vmatpush1.msra.mxu0 0.0
    %674 = vmatprep.subr.mxu0 0.0
    %675 = vmatpush1.msra.mxu0 0.0
    %676 = vmatprep.subr.mxu0 0.0
    %677 = vmatpush1.msra.mxu0 0.0
    %678 = vmatprep.subr.mxu0 0.0
    %679 = vmatpush1.msra.mxu0 0.0
    %680 = vmatprep.mubr.f32.mxu0 0.0
    %v681 = vand.u32 %v62, 4294901760
    %v682 = vsub.f32 %v62, %v681
    %v683 = vand.u32 %v682, 4294901760
    %684 = vmatmul.mubr.f32.gmra.mrb[0].mxu0 %v683
    %v685 = vpop.f32.mrb[0].mxu0
    %v686 = vadd.f32 %v548, %v685
    %v687 = vpop.f32.mrb[0].mxu0
    %688 = vmatprep.mubr.f32.mxu0 0.0
    %v689 = vand.u32 %v63, 4294901760
    %v690 = vsub.f32 %v63, %v689
    %v691 = vand.u32 %v690, 4294901760
    %692 = vmatmul.mubr.f32.gmra.mrb[0].mxu0 %v691
    %v693 = vpop.f32.mrb[0].mxu0
    %v694 = vadd.f32 %v555, %v693
    %v695 = vpop.f32.mrb[0].mxu0
    %696 = vmatprep.mubr.f32.mxu0 0.0
    %v697 = vand.u32 %v64, 4294901760
    %v698 = vsub.f32 %v64, %v697
    %v699 = vand.u32 %v698, 4294901760
    %700 = vmatmul.mubr.f32.gmra.mrb[0].mxu0 %v699
    %v701 = vpop.f32.mrb[0].mxu0
    %v702 = vadd.f32 %v562, %v701
    %v703 = vpop.f32.mrb[0].mxu0
    %704 = vmatprep.mubr.f32.mxu0 0.0
    %v705 = vand.u32 %v65, 4294901760
    %v706 = vsub.f32 %v65, %v705
    %v707 = vand.u32 %v706, 4294901760
    %708 = vmatmul.mubr.f32.gmra.mrb[0].mxu0 %v707
    %v709 = vpop.f32.mrb[0].mxu0
    %v710 = vadd.f32 %v569, %v709
    %v711 = vpop.f32.mrb[0].mxu0
    %712 = vmatprep.mubr.f32.mxu0 0.0
    %v713 = vand.u32 %v66, 4294901760
    %v714 = vsub.f32 %v66, %v713
    %v715 = vand.u32 %v714, 4294901760
    %716 = vmatmul.mubr.f32.gmra.mrb[0].mxu0 %v715
    %v717 = vpop.f32.mrb[0].mxu0
    %v718 = vadd.f32 %v576, %v717
    %v719 = vpop.f32.mrb[0].mxu0
    %720 = vmatprep.mubr.f32.mxu0 0.0
    %v721 = vand.u32 %v67, 4294901760
    %v722 = vsub.f32 %v67, %v721
    %v723 = vand.u32 %v722, 4294901760
    %724 = vmatmul.mubr.f32.gmra.mrb[0].mxu0 %v723
    %v725 = vpop.f32.mrb[0].mxu0
    %v726 = vadd.f32 %v583, %v725
    %v727 = vpop.f32.mrb[0].mxu0
    %728 = vmatprep.mubr.f32.mxu0 0.0
    %v729 = vand.u32 %v68, 4294901760
    %v730 = vsub.f32 %v68, %v729
    %v731 = vand.u32 %v730, 4294901760
    %732 = vmatmul.mubr.f32.gmra.mrb[0].mxu0 %v731
    %v733 = vpop.f32.mrb[0].mxu0
    %v734 = vadd.f32 %v590, %v733
    %v735 = vpop.f32.mrb[0].mxu0
    %736 = vmatprep.mubr.f32.mxu0 0.0
    %v737 = vand.u32 %v69, 4294901760
    %v738 = vsub.f32 %v69, %v737
    %v739 = vand.u32 %v738, 4294901760
    %740 = vmatmul.mubr.f32.gmra.mrb[0].mxu0 %v739
    %v741 = vpop.f32.mrb[0].mxu0
    %v742 = vadd.f32 %v597, %v741
    %v743 = vpop.f32.mrb[0].mxu0
    %744 = vdwg.mxu0
    %745 = vmatprep.subr.mxu0 0.0
    %v746 = vand.u32 %v70, 4294901760
    %v747 = vsub.f32 %v70, %v746
    %v748 = vand.u32 %v747, 4294901760
    %749 = vmatpush1.msra.mxu0 %v748
    %750 = vmatprep.subr.mxu0 0.0
    %v751 = vand.u32 %v71, 4294901760
    %v752 = vsub.f32 %v71, %v751
    %v753 = vand.u32 %v752, 4294901760
    %754 = vmatpush1.msra.mxu0 %v753
    %755 = vmatprep.subr.mxu0 0.0
    %v756 = vand.u32 %v72, 4294901760
    %v757 = vsub.f32 %v72, %v756
    %v758 = vand.u32 %v757, 4294901760
    %759 = vmatpush1.msra.mxu0 %v758
    %760 = vmatprep.subr.mxu0 0.0
    %v761 = vand.u32 %v73, 4294901760
    %v762 = vsub.f32 %v73, %v761
    %v763 = vand.u32 %v762, 4294901760
    %764 = vmatpush1.msra.mxu0 %v763
    %765 = vmatprep.subr.mxu0 0.0
    %v766 = vand.u32 %v74, 4294901760
    %v767 = vsub.f32 %v74, %v766
    %v768 = vand.u32 %v767, 4294901760
    %769 = vmatpush1.msra.mxu0 %v768
    %770 = vmatprep.subr.mxu0 0.0
    %v771 = vand.u32 %v75, 4294901760
    %v772 = vsub.f32 %v75, %v771
    %v773 = vand.u32 %v772, 4294901760
    %774 = vmatpush1.msra.mxu0 %v773
    %775 = vmatprep.subr.mxu0 0.0
    %v776 = vand.u32 %v76, 4294901760
    %v777 = vsub.f32 %v76, %v776
    %v778 = vand.u32 %v777, 4294901760
    %779 = vmatpush1.msra.mxu0 %v778
    %780 = vmatprep.subr.mxu0 0.0
    %v781 = vand.u32 %v77, 4294901760
    %v782 = vsub.f32 %v77, %v781
    %v783 = vand.u32 %v782, 4294901760
    %784 = vmatpush1.msra.mxu0 %v783
    %785 = vmatprep.subr.mxu0 0.0
    %v786 = vand.u32 %v78, 4294901760
    %v787 = vsub.f32 %v78, %v786
    %v788 = vand.u32 %v787, 4294901760
    %789 = vmatpush1.msra.mxu0 %v788
    %790 = vmatprep.subr.mxu0 0.0
    %v791 = vand.u32 %v79, 4294901760
    %v792 = vsub.f32 %v79, %v791
    %v793 = vand.u32 %v792, 4294901760
    %794 = vmatpush1.msra.mxu0 %v793
    %795 = vmatprep.subr.mxu0 0.0
    %v796 = vand.u32 %v80, 4294901760
    %v797 = vsub.f32 %v80, %v796
    %v798 = vand.u32 %v797, 4294901760
    %799 = vmatpush1.msra.mxu0 %v798
    %800 = vmatprep.subr.mxu0 0.0
    %v801 = vand.u32 %v81, 4294901760
    %v802 = vsub.f32 %v81, %v801
    %v803 = vand.u32 %v802, 4294901760
    %804 = vmatpush1.msra.mxu0 %v803
    %805 = vmatprep.subr.mxu0 0.0
    %v806 = vand.u32 %v82, 4294901760
    %v807 = vsub.f32 %v82, %v806
    %v808 = vand.u32 %v807, 4294901760
    %809 = vmatpush1.msra.mxu0 %v808
    %810 = vmatprep.subr.mxu0 0.0
    %v811 = vand.u32 %v83, 4294901760
    %v812 = vsub.f32 %v83, %v811
    %v813 = vand.u32 %v812, 4294901760
    %814 = vmatpush1.msra.mxu0 %v813
    %815 = vmatprep.subr.mxu0 0.0
    %v816 = vand.u32 %v84, 4294901760
    %v817 = vsub.f32 %v84, %v816
    %v818 = vand.u32 %v817, 4294901760
    %819 = vmatpush1.msra.mxu0 %v818
    %820 = vmatprep.subr.mxu0 0.0
    %v821 = vand.u32 %v85, 4294901760
    %v822 = vsub.f32 %v85, %v821
    %v823 = vand.u32 %v822, 4294901760
    %824 = vmatpush1.msra.mxu0 %v823
    %825 = vmatprep.subr.mxu0 0.0
    %826 = vmatpush1.msra.mxu0 0.0
    %827 = vmatprep.subr.mxu0 0.0
    %828 = vmatpush1.msra.mxu0 0.0
    %829 = vmatprep.subr.mxu0 0.0
    %830 = vmatpush1.msra.mxu0 0.0
    %831 = vmatprep.subr.mxu0 0.0
    %832 = vmatpush1.msra.mxu0 0.0
    %833 = vmatprep.subr.mxu0 0.0
    %834 = vmatpush1.msra.mxu0 0.0
    %835 = vmatprep.subr.mxu0 0.0
    %836 = vmatpush1.msra.mxu0 0.0
    %837 = vmatprep.subr.mxu0 0.0
    %838 = vmatpush1.msra.mxu0 0.0
    %839 = vmatprep.subr.mxu0 0.0
    %840 = vmatpush1.msra.mxu0 0.0
    %841 = vmatprep.subr.mxu0 0.0
    %842 = vmatpush1.msra.mxu0 0.0
    %843 = vmatprep.subr.mxu0 0.0
    %844 = vmatpush1.msra.mxu0 0.0
    %845 = vmatprep.subr.mxu0 0.0
    %846 = vmatpush1.msra.mxu0 0.0
    %847 = vmatprep.subr.mxu0 0.0
    %848 = vmatpush1.msra.mxu0 0.0
    %849 = vmatprep.subr.mxu0 0.0
    %850 = vmatpush1.msra.mxu0 0.0
    %851 = vmatprep.subr.mxu0 0.0
    %852 = vmatpush1.msra.mxu0 0.0
    %853 = vmatprep.subr.mxu0 0.0
    %854 = vmatpush1.msra.mxu0 0.0
    %855 = vmatprep.subr.mxu0 0.0
    %856 = vmatpush1.msra.mxu0 0.0
    %857 = vmatprep.mubr.f32.mxu0 0.0
    %v858 = vand.u32 %v62, 4294901760
    %859 = vmatmul.mubr.f32.gmra.mrb[0].mxu0 %v858
    %v860 = vpop.f32.mrb[0].mxu0
    %v861 = vadd.f32 %v686, %v860
    %v862 = vpop.f32.mrb[0].mxu0
    %863 = vmatprep.mubr.f32.mxu0 0.0
    %v864 = vand.u32 %v63, 4294901760
    %865 = vmatmul.mubr.f32.gmra.mrb[0].mxu0 %v864
    %v866 = vpop.f32.mrb[0].mxu0
    %v867 = vadd.f32 %v694, %v866
    %v868 = vpop.f32.mrb[0].mxu0
    %869 = vmatprep.mubr.f32.mxu0 0.0
    %v870 = vand.u32 %v64, 4294901760
    %871 = vmatmul.mubr.f32.gmra.mrb[0].mxu0 %v870
    %v872 = vpop.f32.mrb[0].mxu0
    %v873 = vadd.f32 %v702, %v872
    %v874 = vpop.f32.mrb[0].mxu0
    %875 = vmatprep.mubr.f32.mxu0 0.0
    %v876 = vand.u32 %v65, 4294901760
    %877 = vmatmul.mubr.f32.gmra.mrb[0].mxu0 %v876
    %v878 = vpop.f32.mrb[0].mxu0
    %v879 = vadd.f32 %v710, %v878
    %v880 = vpop.f32.mrb[0].mxu0
    %881 = vmatprep.mubr.f32.mxu0 0.0
    %v882 = vand.u32 %v66, 4294901760
    %883 = vmatmul.mubr.f32.gmra.mrb[0].mxu0 %v882
    %v884 = vpop.f32.mrb[0].mxu0
    %v885 = vadd.f32 %v718, %v884
    %v886 = vpop.f32.mrb[0].mxu0
    %887 = vmatprep.mubr.f32.mxu0 0.0
    %v888 = vand.u32 %v67, 4294901760
    %889 = vmatmul.mubr.f32.gmra.mrb[0].mxu0 %v888
    %v890 = vpop.f32.mrb[0].mxu0
    %v891 = vadd.f32 %v726, %v890
    %v892 = vpop.f32.mrb[0].mxu0
    %893 = vmatprep.mubr.f32.mxu0 0.0
    %v894 = vand.u32 %v68, 4294901760
    %895 = vmatmul.mubr.f32.gmra.mrb[0].mxu0 %v894
    %v896 = vpop.f32.mrb[0].mxu0
    %v897 = vadd.f32 %v734, %v896
    %v898 = vpop.f32.mrb[0].mxu0
    %899 = vmatprep.mubr.f32.mxu0 0.0
    %v900 = vand.u32 %v69, 4294901760
    %901 = vmatmul.mubr.f32.gmra.mrb[0].mxu0 %v900
    %v902 = vpop.f32.mrb[0].mxu0
    %v903 = vadd.f32 %v742, %v902
    %v904 = vpop.f32.mrb[0].mxu0
    %905 = vdwg.mxu0
    %906 = vmatprep.subr.mxu0 0.0
    %v907 = vand.u32 %v70, 4294901760
    %908 = vmatpush1.msra.mxu0 %v907
    %909 = vmatprep.subr.mxu0 0.0
    %v910 = vand.u32 %v71, 4294901760
    %911 = vmatpush1.msra.mxu0 %v910
    %912 = vmatprep.subr.mxu0 0.0
    %v913 = vand.u32 %v72, 4294901760
    %914 = vmatpush1.msra.mxu0 %v913
    %915 = vmatprep.subr.mxu0 0.0
    %v916 = vand.u32 %v73, 4294901760
    %917 = vmatpush1.msra.mxu0 %v916
    %918 = vmatprep.subr.mxu0 0.0
    %v919 = vand.u32 %v74, 4294901760
    %920 = vmatpush1.msra.mxu0 %v919
    %921 = vmatprep.subr.mxu0 0.0
    %v922 = vand.u32 %v75, 4294901760
    %923 = vmatpush1.msra.mxu0 %v922
    %924 = vmatprep.subr.mxu0 0.0
    %v925 = vand.u32 %v76, 4294901760
    %926 = vmatpush1.msra.mxu0 %v925
    %927 = vmatprep.subr.mxu0 0.0
    %v928 = vand.u32 %v77, 4294901760
    %929 = vmatpush1.msra.mxu0 %v928
    %930 = vmatprep.subr.mxu0 0.0
    %v931 = vand.u32 %v78, 4294901760
    %932 = vmatpush1.msra.mxu0 %v931
    %933 = vmatprep.subr.mxu0 0.0
    %v934 = vand.u32 %v79, 4294901760
    %935 = vmatpush1.msra.mxu0 %v934
    %936 = vmatprep.subr.mxu0 0.0
    %v937 = vand.u32 %v80, 4294901760
    %938 = vmatpush1.msra.mxu0 %v937
    %939 = vmatprep.subr.mxu0 0.0
    %v940 = vand.u32 %v81, 4294901760
    %941 = vmatpush1.msra.mxu0 %v940
    %942 = vmatprep.subr.mxu0 0.0
    %v943 = vand.u32 %v82, 4294901760
    %944 = vmatpush1.msra.mxu0 %v943
    %945 = vmatprep.subr.mxu0 0.0
    %v946 = vand.u32 %v83, 4294901760
    %947 = vmatpush1.msra.mxu0 %v946
    %948 = vmatprep.subr.mxu0 0.0
    %v949 = vand.u32 %v84, 4294901760
    %950 = vmatpush1.msra.mxu0 %v949
    %951 = vmatprep.subr.mxu0 0.0
    %v952 = vand.u32 %v85, 4294901760
    %953 = vmatpush1.msra.mxu0 %v952
    %954 = vmatprep.subr.mxu0 0.0
    %955 = vmatpush1.msra.mxu0 0.0
    %956 = vmatprep.subr.mxu0 0.0
    %957 = vmatpush1.msra.mxu0 0.0
    %958 = vmatprep.subr.mxu0 0.0
    %959 = vmatpush1.msra.mxu0 0.0
    %960 = vmatprep.subr.mxu0 0.0
    %961 = vmatpush1.msra.mxu0 0.0
    %962 = vmatprep.subr.mxu0 0.0
    %963 = vmatpush1.msra.mxu0 0.0
    %964 = vmatprep.subr.mxu0 0.0
    %965 = vmatpush1.msra.mxu0 0.0
    %966 = vmatprep.subr.mxu0 0.0
    %967 = vmatpush1.msra.mxu0 0.0
    %968 = vmatprep.subr.mxu0 0.0
    %969 = vmatpush1.msra.mxu0 0.0
    %970 = vmatprep.subr.mxu0 0.0
    %971 = vmatpush1.msra.mxu0 0.0
    %972 = vmatprep.subr.mxu0 0.0
    %973 = vmatpush1.msra.mxu0 0.0
    %974 = vmatprep.subr.mxu0 0.0
    %975 = vmatpush1.msra.mxu0 0.0
    %976 = vmatprep.subr.mxu0 0.0
    %977 = vmatpush1.msra.mxu0 0.0
    %978 = vmatprep.subr.mxu0 0.0
    %979 = vmatpush1.msra.mxu0 0.0
    %980 = vmatprep.subr.mxu0 0.0
    %981 = vmatpush1.msra.mxu0 0.0
    %982 = vmatprep.subr.mxu0 0.0
    %983 = vmatpush1.msra.mxu0 0.0
    %984 = vmatprep.subr.mxu0 0.0
    %985 = vmatpush1.msra.mxu0 0.0
    %986 = vmatprep.mubr.f32.mxu0 0.0
    %v987 = vand.u32 %v62, 4294901760
    %988 = vmatmul.mubr.f32.gmra.mrb[0].mxu0 %v987
    %v989 = vpop.f32.mrb[0].mxu0
    %v990 = vadd.f32 %v861, %v989
    %v991 = vpop.f32.mrb[0].mxu0
    %992 = vmatprep.mubr.f32.mxu0 0.0
    %v993 = vand.u32 %v63, 4294901760
    %994 = vmatmul.mubr.f32.gmra.mrb[0].mxu0 %v993
    %v995 = vpop.f32.mrb[0].mxu0
    %v996 = vadd.f32 %v867, %v995
    %v997 = vpop.f32.mrb[0].mxu0
    %998 = vmatprep.mubr.f32.mxu0 0.0
    %v999 = vand.u32 %v64, 4294901760
    %1000 = vmatmul.mubr.f32.gmra.mrb[0].mxu0 %v999
    %v1001 = vpop.f32.mrb[0].mxu0
    %v1002 = vadd.f32 %v873, %v1001
    %v1003 = vpop.f32.mrb[0].mxu0
    %1004 = vmatprep.mubr.f32.mxu0 0.0
    %v1005 = vand.u32 %v65, 4294901760
    %1006 = vmatmul.mubr.f32.gmra.mrb[0].mxu0 %v1005
    %v1007 = vpop.f32.mrb[0].mxu0
    %v1008 = vadd.f32 %v879, %v1007
    %v1009 = vpop.f32.mrb[0].mxu0
    %1010 = vmatprep.mubr.f32.mxu0 0.0
    %v1011 = vand.u32 %v66, 4294901760
    %1012 = vmatmul.mubr.f32.gmra.mrb[0].mxu0 %v1011
    %v1013 = vpop.f32.mrb[0].mxu0
    %v1014 = vadd.f32 %v885, %v1013
    %v1015 = vpop.f32.mrb[0].mxu0
    %1016 = vmatprep.mubr.f32.mxu0 0.0
    %v1017 = vand.u32 %v67, 4294901760
    %1018 = vmatmul.mubr.f32.gmra.mrb[0].mxu0 %v1017
    %v1019 = vpop.f32.mrb[0].mxu0
    %v1020 = vadd.f32 %v891, %v1019
    %v1021 = vpop.f32.mrb[0].mxu0
    %1022 = vmatprep.mubr.f32.mxu0 0.0
    %v1023 = vand.u32 %v68, 4294901760
    %1024 = vmatmul.mubr.f32.gmra.mrb[0].mxu0 %v1023
    %v1025 = vpop.f32.mrb[0].mxu0
    %v1026 = vadd.f32 %v897, %v1025
    %v1027 = vpop.f32.mrb[0].mxu0
    %1028 = vmatprep.mubr.f32.mxu0 0.0
    %v1029 = vand.u32 %v69, 4294901760
    %1030 = vmatmul.mubr.f32.gmra.mrb[0].mxu0 %v1029
    %v1031 = vpop.f32.mrb[0].mxu0
    %v1032 = vadd.f32 %v903, %v1031
    %v1033 = vpop.f32.mrb[0].mxu0
    %1034 = vdwg.mxu0
    %v1035 = vld [vmem:[#allocation4] sm:$0xff]
    %v1036 = vld [vmem:[#allocation4 + $0x8] sm:$0xff]
    %v1037 = vld [vmem:[#allocation4 + $0x10] sm:$0xff]
    %v1038 = vld [vmem:[#allocation4 + $0x18] sm:$0xff]
    %v1039 = vld [vmem:[#allocation4 + $0x20] sm:$0xff]
    %v1040 = vld [vmem:[#allocation4 + $0x28] sm:$0xff]
    %v1041 = vld [vmem:[#allocation4 + $0x30] sm:$0xff]
    %v1042 = vld [vmem:[#allocation4 + $0x38] sm:$0xff]
    %v1043 = vld [vmem:[#allocation4 + $0x40] sm:$0xff]
    %v1044 = vld [vmem:[#allocation4 + $0x48] sm:$0xff]
    %v1045 = vld [vmem:[#allocation4 + $0x50] sm:$0xff]
    %v1046 = vld [vmem:[#allocation4 + $0x58] sm:$0xff]
    %v1047 = vld [vmem:[#allocation4 + $0x60] sm:$0xff]
    %v1048 = vld [vmem:[#allocation4 + $0x68] sm:$0xff]
    %v1049 = vld [vmem:[#allocation4 + $0x70] sm:$0xff]
    %v1050 = vld [vmem:[#allocation4 + $0x78] sm:$0xff]
    %1051 = vmatprep.subr.mxu0 0.0
    %v1052 = vand.u32 %v1035, 4294901760
    %1053 = vmatpush1.msra.mxu0 %v1052
    %1054 = vmatprep.subr.mxu0 0.0
    %v1055 = vand.u32 %v1036, 4294901760
    %1056 = vmatpush1.msra.mxu0 %v1055
    %1057 = vmatprep.subr.mxu0 0.0
    %v1058 = vand.u32 %v1037, 4294901760
    %1059 = vmatpush1.msra.mxu0 %v1058
    %1060 = vmatprep.subr.mxu0 0.0
    %v1061 = vand.u32 %v1038, 4294901760
    %1062 = vmatpush1.msra.mxu0 %v1061
    %1063 = vmatprep.subr.mxu0 0.0
    %v1064 = vand.u32 %v1039, 4294901760
    %1065 = vmatpush1.msra.mxu0 %v1064
    %1066 = vmatprep.subr.mxu0 0.0
    %v1067 = vand.u32 %v1040, 4294901760
    %1068 = vmatpush1.msra.mxu0 %v1067
    %1069 = vmatprep.subr.mxu0 0.0
    %v1070 = vand.u32 %v1041, 4294901760
    %1071 = vmatpush1.msra.mxu0 %v1070
    %1072 = vmatprep.subr.mxu0 0.0
    %v1073 = vand.u32 %v1042, 4294901760
    %1074 = vmatpush1.msra.mxu0 %v1073
    %1075 = vmatprep.subr.mxu0 0.0
    %v1076 = vand.u32 %v1043, 4294901760
    %1077 = vmatpush1.msra.mxu0 %v1076
    %1078 = vmatprep.subr.mxu0 0.0
    %v1079 = vand.u32 %v1044, 4294901760
    %1080 = vmatpush1.msra.mxu0 %v1079
    %1081 = vmatprep.subr.mxu0 0.0
    %v1082 = vand.u32 %v1045, 4294901760
    %1083 = vmatpush1.msra.mxu0 %v1082
    %1084 = vmatprep.subr.mxu0 0.0
    %v1085 = vand.u32 %v1046, 4294901760
    %1086 = vmatpush1.msra.mxu0 %v1085
    %1087 = vmatprep.subr.mxu0 0.0
    %v1088 = vand.u32 %v1047, 4294901760
    %1089 = vmatpush1.msra.mxu0 %v1088
    %1090 = vmatprep.subr.mxu0 0.0
    %v1091 = vand.u32 %v1048, 4294901760
    %1092 = vmatpush1.msra.mxu0 %v1091
    %1093 = vmatprep.subr.mxu0 0.0
    %v1094 = vand.u32 %v1049, 4294901760
    %1095 = vmatpush1.msra.mxu0 %v1094
    %1096 = vmatprep.subr.mxu0 0.0
    %v1097 = vand.u32 %v1050, 4294901760
    %1098 = vmatpush1.msra.mxu0 %v1097
    %1099 = vmatprep.subr.mxu0 0.0
    %1100 = vmatpush1.msra.mxu0 0.0
    %1101 = vmatprep.subr.mxu0 0.0
    %1102 = vmatpush1.msra.mxu0 0.0
    %1103 = vmatprep.subr.mxu0 0.0
    %1104 = vmatpush1.msra.mxu0 0.0
    %1105 = vmatprep.subr.mxu0 0.0
    %1106 = vmatpush1.msra.mxu0 0.0
    %1107 = vmatprep.subr.mxu0 0.0
    %1108 = vmatpush1.msra.mxu0 0.0
    %1109 = vmatprep.subr.mxu0 0.0
    %1110 = vmatpush1.msra.mxu0 0.0
    %1111 = vmatprep.subr.mxu0 0.0
    %1112 = vmatpush1.msra.mxu0 0.0
    %1113 = vmatprep.subr.mxu0 0.0
    %1114 = vmatpush1.msra.mxu0 0.0
    %1115 = vmatprep.subr.mxu0 0.0
    %1116 = vmatpush1.msra.mxu0 0.0
    %1117 = vmatprep.subr.mxu0 0.0
    %1118 = vmatpush1.msra.mxu0 0.0
    %1119 = vmatprep.subr.mxu0 0.0
    %1120 = vmatpush1.msra.mxu0 0.0
    %1121 = vmatprep.subr.mxu0 0.0
    %1122 = vmatpush1.msra.mxu0 0.0
    %1123 = vmatprep.subr.mxu0 0.0
    %1124 = vmatpush1.msra.mxu0 0.0
    %1125 = vmatprep.subr.mxu0 0.0
    %1126 = vmatpush1.msra.mxu0 0.0
    %1127 = vmatprep.subr.mxu0 0.0
    %1128 = vmatpush1.msra.mxu0 0.0
    %1129 = vmatprep.subr.mxu0 0.0
    %1130 = vmatpush1.msra.mxu0 0.0
    %1131 = vmatprep.mubr.f32.mxu0 0.0
    %1132 = vmatmul.mubr.f32.gmra.mrb[0].mxu0 0.0
    %v1133 = vpop.f32.mrb[0].mxu0
    %v1134 = vadd.f32 0.0, %v1133
    %v1135 = vpop.f32.mrb[0].mxu0
    %1136 = vdwg.mxu0
    %1137 = vmatprep.subr.mxu0 0.0
    %v1138 = vand.u32 %v1035, 4294901760
    %v1139 = vsub.f32 %v1035, %v1138
    %v1140 = vand.u32 %v1139, 4294901760
    %v1141 = vsub.f32 %v1139, %v1140
    %v1142 = vand.u32 %v1141, 4294901760
    %1143 = vmatpush1.msra.mxu0 %v1142
    %1144 = vmatprep.subr.mxu0 0.0
    %v1145 = vand.u32 %v1036, 4294901760
    %v1146 = vsub.f32 %v1036, %v1145
    %v1147 = vand.u32 %v1146, 4294901760
    %v1148 = vsub.f32 %v1146, %v1147
    %v1149 = vand.u32 %v1148, 4294901760
    %1150 = vmatpush1.msra.mxu0 %v1149
    %1151 = vmatprep.subr.mxu0 0.0
    %v1152 = vand.u32 %v1037, 4294901760
    %v1153 = vsub.f32 %v1037, %v1152
    %v1154 = vand.u32 %v1153, 4294901760
    %v1155 = vsub.f32 %v1153, %v1154
    %v1156 = vand.u32 %v1155, 4294901760
    %1157 = vmatpush1.msra.mxu0 %v1156
    %1158 = vmatprep.subr.mxu0 0.0
    %v1159 = vand.u32 %v1038, 4294901760
    %v1160 = vsub.f32 %v1038, %v1159
    %v1161 = vand.u32 %v1160, 4294901760
    %v1162 = vsub.f32 %v1160, %v1161
    %v1163 = vand.u32 %v1162, 4294901760
    %1164 = vmatpush1.msra.mxu0 %v1163
    %1165 = vmatprep.subr.mxu0 0.0
    %v1166 = vand.u32 %v1039, 4294901760
    %v1167 = vsub.f32 %v1039, %v1166
    %v1168 = vand.u32 %v1167, 4294901760
    %v1169 = vsub.f32 %v1167, %v1168
    %v1170 = vand.u32 %v1169, 4294901760
    %1171 = vmatpush1.msra.mxu0 %v1170
    %1172 = vmatprep.subr.mxu0 0.0
    %v1173 = vand.u32 %v1040, 4294901760
    %v1174 = vsub.f32 %v1040, %v1173
    %v1175 = vand.u32 %v1174, 4294901760
    %v1176 = vsub.f32 %v1174, %v1175
    %v1177 = vand.u32 %v1176, 4294901760
    %1178 = vmatpush1.msra.mxu0 %v1177
    %1179 = vmatprep.subr.mxu0 0.0
    %v1180 = vand.u32 %v1041, 4294901760
    %v1181 = vsub.f32 %v1041, %v1180
    %v1182 = vand.u32 %v1181, 4294901760
    %v1183 = vsub.f32 %v1181, %v1182
    %v1184 = vand.u32 %v1183, 4294901760
    %1185 = vmatpush1.msra.mxu0 %v1184
    %1186 = vmatprep.subr.mxu0 0.0
    %v1187 = vand.u32 %v1042, 4294901760
    %v1188 = vsub.f32 %v1042, %v1187
    %v1189 = vand.u32 %v1188, 4294901760
    %v1190 = vsub.f32 %v1188, %v1189
    %v1191 = vand.u32 %v1190, 4294901760
    %1192 = vmatpush1.msra.mxu0 %v1191
    %1193 = vmatprep.subr.mxu0 0.0
    %v1194 = vand.u32 %v1043, 4294901760
    %v1195 = vsub.f32 %v1043, %v1194
    %v1196 = vand.u32 %v1195, 4294901760
    %v1197 = vsub.f32 %v1195, %v1196
    %v1198 = vand.u32 %v1197, 4294901760
    %1199 = vmatpush1.msra.mxu0 %v1198
    %1200 = vmatprep.subr.mxu0 0.0
    %v1201 = vand.u32 %v1044, 4294901760
    %v1202 = vsub.f32 %v1044, %v1201
    %v1203 = vand.u32 %v1202, 4294901760
    %v1204 = vsub.f32 %v1202, %v1203
    %v1205 = vand.u32 %v1204, 4294901760
    %1206 = vmatpush1.msra.mxu0 %v1205
    %1207 = vmatprep.subr.mxu0 0.0
    %v1208 = vand.u32 %v1045, 4294901760
    %v1209 = vsub.f32 %v1045, %v1208
    %v1210 = vand.u32 %v1209, 4294901760
    %v1211 = vsub.f32 %v1209, %v1210
    %v1212 = vand.u32 %v1211, 4294901760
    %1213 = vmatpush1.msra.mxu0 %v1212
    %1214 = vmatprep.subr.mxu0 0.0
    %v1215 = vand.u32 %v1046, 4294901760
    %v1216 = vsub.f32 %v1046, %v1215
    %v1217 = vand.u32 %v1216, 4294901760
    %v1218 = vsub.f32 %v1216, %v1217
    %v1219 = vand.u32 %v1218, 4294901760
    %1220 = vmatpush1.msra.mxu0 %v1219
    %1221 = vmatprep.subr.mxu0 0.0
    %v1222 = vand.u32 %v1047, 4294901760
    %v1223 = vsub.f32 %v1047, %v1222
    %v1224 = vand.u32 %v1223, 4294901760
    %v1225 = vsub.f32 %v1223, %v1224
    %v1226 = vand.u32 %v1225, 4294901760
    %1227 = vmatpush1.msra.mxu0 %v1226
    %1228 = vmatprep.subr.mxu0 0.0
    %v1229 = vand.u32 %v1048, 4294901760
    %v1230 = vsub.f32 %v1048, %v1229
    %v1231 = vand.u32 %v1230, 4294901760
    %v1232 = vsub.f32 %v1230, %v1231
    %v1233 = vand.u32 %v1232, 4294901760
    %1234 = vmatpush1.msra.mxu0 %v1233
    %1235 = vmatprep.subr.mxu0 0.0
    %v1236 = vand.u32 %v1049, 4294901760
    %v1237 = vsub.f32 %v1049, %v1236
    %v1238 = vand.u32 %v1237, 4294901760
    %v1239 = vsub.f32 %v1237, %v1238
    %v1240 = vand.u32 %v1239, 4294901760
    %1241 = vmatpush1.msra.mxu0 %v1240
    %1242 = vmatprep.subr.mxu0 0.0
    %v1243 = vand.u32 %v1050, 4294901760
    %v1244 = vsub.f32 %v1050, %v1243
    %v1245 = vand.u32 %v1244, 4294901760
    %v1246 = vsub.f32 %v1244, %v1245
    %v1247 = vand.u32 %v1246, 4294901760
    %1248 = vmatpush1.msra.mxu0 %v1247
    %1249 = vmatprep.subr.mxu0 0.0
    %1250 = vmatpush1.msra.mxu0 0.0
    %1251 = vmatprep.subr.mxu0 0.0
    %1252 = vmatpush1.msra.mxu0 0.0
    %1253 = vmatprep.subr.mxu0 0.0
    %1254 = vmatpush1.msra.mxu0 0.0
    %1255 = vmatprep.subr.mxu0 0.0
    %1256 = vmatpush1.msra.mxu0 0.0
    %1257 = vmatprep.subr.mxu0 0.0
    %1258 = vmatpush1.msra.mxu0 0.0
    %1259 = vmatprep.subr.mxu0 0.0
    %1260 = vmatpush1.msra.mxu0 0.0
    %1261 = vmatprep.subr.mxu0 0.0
    %1262 = vmatpush1.msra.mxu0 0.0
    %1263 = vmatprep.subr.mxu0 0.0
    %1264 = vmatpush1.msra.mxu0 0.0
    %1265 = vmatprep.subr.mxu0 0.0
    %1266 = vmatpush1.msra.mxu0 0.0
    %1267 = vmatprep.subr.mxu0 0.0
    %1268 = vmatpush1.msra.mxu0 0.0
    %1269 = vmatprep.subr.mxu0 0.0
    %1270 = vmatpush1.msra.mxu0 0.0
    %1271 = vmatprep.subr.mxu0 0.0
    %1272 = vmatpush1.msra.mxu0 0.0
    %1273 = vmatprep.subr.mxu0 0.0
    %1274 = vmatpush1.msra.mxu0 0.0
    %1275 = vmatprep.subr.mxu0 0.0
    %1276 = vmatpush1.msra.mxu0 0.0
    %1277 = vmatprep.subr.mxu0 0.0
    %1278 = vmatpush1.msra.mxu0 0.0
    %1279 = vmatprep.subr.mxu0 0.0
    %1280 = vmatpush1.msra.mxu0 0.0
    %1281 = vmatprep.mubr.f32.mxu0 0.0
    %1282 = vmatmul.mubr.f32.gmra.mrb[0].mxu0 0.0
    %v1283 = vpop.f32.mrb[0].mxu0
    %v1284 = vadd.f32 %v1134, %v1283
    %v1285 = vpop.f32.mrb[0].mxu0
    %1286 = vdwg.mxu0
    %1287 = vmatprep.subr.mxu0 0.0
    %v1288 = vand.u32 %v1035, 4294901760
    %v1289 = vsub.f32 %v1035, %v1288
    %1290 = vmatpush1.msra.mxu0 %v1289
    %1291 = vmatprep.subr.mxu0 0.0
    %v1292 = vand.u32 %v1036, 4294901760
    %v1293 = vsub.f32 %v1036, %v1292
    %1294 = vmatpush1.msra.mxu0 %v1293
    %1295 = vmatprep.subr.mxu0 0.0
    %v1296 = vand.u32 %v1037, 4294901760
    %v1297 = vsub.f32 %v1037, %v1296
    %1298 = vmatpush1.msra.mxu0 %v1297
    %1299 = vmatprep.subr.mxu0 0.0
    %v1300 = vand.u32 %v1038, 4294901760
    %v1301 = vsub.f32 %v1038, %v1300
    %1302 = vmatpush1.msra.mxu0 %v1301
    %1303 = vmatprep.subr.mxu0 0.0
    %v1304 = vand.u32 %v1039, 4294901760
    %v1305 = vsub.f32 %v1039, %v1304
    %1306 = vmatpush1.msra.mxu0 %v1305
    %1307 = vmatprep.subr.mxu0 0.0
    %v1308 = vand.u32 %v1040, 4294901760
    %v1309 = vsub.f32 %v1040, %v1308
    %1310 = vmatpush1.msra.mxu0 %v1309
    %1311 = vmatprep.subr.mxu0 0.0
    %v1312 = vand.u32 %v1041, 4294901760
    %v1313 = vsub.f32 %v1041, %v1312
    %1314 = vmatpush1.msra.mxu0 %v1313
    %1315 = vmatprep.subr.mxu0 0.0
    %v1316 = vand.u32 %v1042, 4294901760
    %v1317 = vsub.f32 %v1042, %v1316
    %1318 = vmatpush1.msra.mxu0 %v1317
    %1319 = vmatprep.subr.mxu0 0.0
    %v1320 = vand.u32 %v1043, 4294901760
    %v1321 = vsub.f32 %v1043, %v1320
    %1322 = vmatpush1.msra.mxu0 %v1321
    %1323 = vmatprep.subr.mxu0 0.0
    %v1324 = vand.u32 %v1044, 4294901760
    %v1325 = vsub.f32 %v1044, %v1324
    %1326 = vmatpush1.msra.mxu0 %v1325
    %1327 = vmatprep.subr.mxu0 0.0
    %v1328 = vand.u32 %v1045, 4294901760
    %v1329 = vsub.f32 %v1045, %v1328
    %1330 = vmatpush1.msra.mxu0 %v1329
    %1331 = vmatprep.subr.mxu0 0.0
    %v1332 = vand.u32 %v1046, 4294901760
    %v1333 = vsub.f32 %v1046, %v1332
    %1334 = vmatpush1.msra.mxu0 %v1333
    %1335 = vmatprep.subr.mxu0 0.0
    %v1336 = vand.u32 %v1047, 4294901760
    %v1337 = vsub.f32 %v1047, %v1336
    %1338 = vmatpush1.msra.mxu0 %v1337
    %1339 = vmatprep.subr.mxu0 0.0
    %v1340 = vand.u32 %v1048, 4294901760
    %v1341 = vsub.f32 %v1048, %v1340
    %1342 = vmatpush1.msra.mxu0 %v1341
    %1343 = vmatprep.subr.mxu0 0.0
    %v1344 = vand.u32 %v1049, 4294901760
    %v1345 = vsub.f32 %v1049, %v1344
    %1346 = vmatpush1.msra.mxu0 %v1345
    %1347 = vmatprep.subr.mxu0 0.0
    %v1348 = vand.u32 %v1050, 4294901760
    %v1349 = vsub.f32 %v1050, %v1348
    %1350 = vmatpush1.msra.mxu0 %v1349
    %1351 = vmatprep.subr.mxu0 0.0
    %1352 = vmatpush1.msra.mxu0 0.0
    %1353 = vmatprep.subr.mxu0 0.0
    %1354 = vmatpush1.msra.mxu0 0.0
    %1355 = vmatprep.subr.mxu0 0.0
    %1356 = vmatpush1.msra.mxu0 0.0
    %1357 = vmatprep.subr.mxu0 0.0
    %1358 = vmatpush1.msra.mxu0 0.0
    %1359 = vmatprep.subr.mxu0 0.0
    %1360 = vmatpush1.msra.mxu0 0.0
    %1361 = vmatprep.subr.mxu0 0.0
    %1362 = vmatpush1.msra.mxu0 0.0
    %1363 = vmatprep.subr.mxu0 0.0
    %1364 = vmatpush1.msra.mxu0 0.0
    %1365 = vmatprep.subr.mxu0 0.0
    %1366 = vmatpush1.msra.mxu0 0.0
    %1367 = vmatprep.subr.mxu0 0.0
    %1368 = vmatpush1.msra.mxu0 0.0
    %1369 = vmatprep.subr.mxu0 0.0
    %1370 = vmatpush1.msra.mxu0 0.0
    %1371 = vmatprep.subr.mxu0 0.0
    %1372 = vmatpush1.msra.mxu0 0.0
    %1373 = vmatprep.subr.mxu0 0.0
    %1374 = vmatpush1.msra.mxu0 0.0
    %1375 = vmatprep.subr.mxu0 0.0
    %1376 = vmatpush1.msra.mxu0 0.0
    %1377 = vmatprep.subr.mxu0 0.0
    %1378 = vmatpush1.msra.mxu0 0.0
    %1379 = vmatprep.subr.mxu0 0.0
    %1380 = vmatpush1.msra.mxu0 0.0
    %1381 = vmatprep.subr.mxu0 0.0
    %1382 = vmatpush1.msra.mxu0 0.0
    %1383 = vmatprep.mubr.f32.mxu0 0.0
    %1384 = vmatmul.mubr.f32.gmra.mrb[0].mxu0 0.0
    %v1385 = vpop.f32.mrb[0].mxu0
    %v1386 = vadd.f32 %v1284, %v1385
    %v1387 = vpop.f32.mrb[0].mxu0
    %1388 = vdwg.mxu0
    %1389 = vmatprep.subr.mxu0 0.0
    %v1390 = vand.u32 %v1035, 4294901760
    %1391 = vmatpush1.msra.mxu0 %v1390
    %1392 = vmatprep.subr.mxu0 0.0
    %v1393 = vand.u32 %v1036, 4294901760
    %1394 = vmatpush1.msra.mxu0 %v1393
    %1395 = vmatprep.subr.mxu0 0.0
    %v1396 = vand.u32 %v1037, 4294901760
    %1397 = vmatpush1.msra.mxu0 %v1396
    %1398 = vmatprep.subr.mxu0 0.0
    %v1399 = vand.u32 %v1038, 4294901760
    %1400 = vmatpush1.msra.mxu0 %v1399
    %1401 = vmatprep.subr.mxu0 0.0
    %v1402 = vand.u32 %v1039, 4294901760
    %1403 = vmatpush1.msra.mxu0 %v1402
    %1404 = vmatprep.subr.mxu0 0.0
    %v1405 = vand.u32 %v1040, 4294901760
    %1406 = vmatpush1.msra.mxu0 %v1405
    %1407 = vmatprep.subr.mxu0 0.0
    %v1408 = vand.u32 %v1041, 4294901760
    %1409 = vmatpush1.msra.mxu0 %v1408
    %1410 = vmatprep.subr.mxu0 0.0
    %v1411 = vand.u32 %v1042, 4294901760
    %1412 = vmatpush1.msra.mxu0 %v1411
    %1413 = vmatprep.subr.mxu0 0.0
    %v1414 = vand.u32 %v1043, 4294901760
    %1415 = vmatpush1.msra.mxu0 %v1414
    %1416 = vmatprep.subr.mxu0 0.0
    %v1417 = vand.u32 %v1044, 4294901760
    %1418 = vmatpush1.msra.mxu0 %v1417
    %1419 = vmatprep.subr.mxu0 0.0
    %v1420 = vand.u32 %v1045, 4294901760
    %1421 = vmatpush1.msra.mxu0 %v1420
    %1422 = vmatprep.subr.mxu0 0.0
    %v1423 = vand.u32 %v1046, 4294901760
    %1424 = vmatpush1.msra.mxu0 %v1423
    %1425 = vmatprep.subr.mxu0 0.0
    %v1426 = vand.u32 %v1047, 4294901760
    %1427 = vmatpush1.msra.mxu0 %v1426
    %1428 = vmatprep.subr.mxu0 0.0
    %v1429 = vand.u32 %v1048, 4294901760
    %1430 = vmatpush1.msra.mxu0 %v1429
    %1431 = vmatprep.subr.mxu0 0.0
    %v1432 = vand.u32 %v1049, 4294901760
    %1433 = vmatpush1.msra.mxu0 %v1432
    %1434 = vmatprep.subr.mxu0 0.0
    %v1435 = vand.u32 %v1050, 4294901760
    %1436 = vmatpush1.msra.mxu0 %v1435
    %1437 = vmatprep.subr.mxu0 0.0
    %1438 = vmatpush1.msra.mxu0 0.0
    %1439 = vmatprep.subr.mxu0 0.0
    %1440 = vmatpush1.msra.mxu0 0.0
    %1441 = vmatprep.subr.mxu0 0.0
    %1442 = vmatpush1.msra.mxu0 0.0
    %1443 = vmatprep.subr.mxu0 0.0
    %1444 = vmatpush1.msra.mxu0 0.0
    %1445 = vmatprep.subr.mxu0 0.0
    %1446 = vmatpush1.msra.mxu0 0.0
    %1447 = vmatprep.subr.mxu0 0.0
    %1448 = vmatpush1.msra.mxu0 0.0
    %1449 = vmatprep.subr.mxu0 0.0
    %1450 = vmatpush1.msra.mxu0 0.0
    %1451 = vmatprep.subr.mxu0 0.0
    %1452 = vmatpush1.msra.mxu0 0.0
    %1453 = vmatprep.subr.mxu0 0.0
    %1454 = vmatpush1.msra.mxu0 0.0
    %1455 = vmatprep.subr.mxu0 0.0
    %1456 = vmatpush1.msra.mxu0 0.0
    %1457 = vmatprep.subr.mxu0 0.0
    %1458 = vmatpush1.msra.mxu0 0.0
    %1459 = vmatprep.subr.mxu0 0.0
    %1460 = vmatpush1.msra.mxu0 0.0
    %1461 = vmatprep.subr.mxu0 0.0
    %1462 = vmatpush1.msra.mxu0 0.0
    %1463 = vmatprep.subr.mxu0 0.0
    %1464 = vmatpush1.msra.mxu0 0.0
    %1465 = vmatprep.subr.mxu0 0.0
    %1466 = vmatpush1.msra.mxu0 0.0
    %1467 = vmatprep.subr.mxu0 0.0
    %1468 = vmatpush1.msra.mxu0 0.0
    %1469 = vmatprep.mubr.f32.mxu0 0.0
    %1470 = vmatmul.mubr.f32.gmra.mrb[0].mxu0 0.0
    %v1471 = vpop.f32.mrb[0].mxu0
    %v1472 = vadd.f32 %v1386, %v1471
    %v1473 = vpop.f32.mrb[0].mxu0
    %1474 = vdwg.mxu0
    %1475 = vmatprep.subr.mxu0 0.0
    %v1476 = vand.u32 %v1035, 4294901760
    %v1477 = vsub.f32 %v1035, %v1476
    %v1478 = vand.u32 %v1477, 4294901760
    %1479 = vmatpush1.msra.mxu0 %v1478
    %1480 = vmatprep.subr.mxu0 0.0
    %v1481 = vand.u32 %v1036, 4294901760
    %v1482 = vsub.f32 %v1036, %v1481
    %v1483 = vand.u32 %v1482, 4294901760
    %1484 = vmatpush1.msra.mxu0 %v1483
    %1485 = vmatprep.subr.mxu0 0.0
    %v1486 = vand.u32 %v1037, 4294901760
    %v1487 = vsub.f32 %v1037, %v1486
    %v1488 = vand.u32 %v1487, 4294901760
    %1489 = vmatpush1.msra.mxu0 %v1488
    %1490 = vmatprep.subr.mxu0 0.0
    %v1491 = vand.u32 %v1038, 4294901760
    %v1492 = vsub.f32 %v1038, %v1491
    %v1493 = vand.u32 %v1492, 4294901760
    %1494 = vmatpush1.msra.mxu0 %v1493
    %1495 = vmatprep.subr.mxu0 0.0
    %v1496 = vand.u32 %v1039, 4294901760
    %v1497 = vsub.f32 %v1039, %v1496
    %v1498 = vand.u32 %v1497, 4294901760
    %1499 = vmatpush1.msra.mxu0 %v1498
    %1500 = vmatprep.subr.mxu0 0.0
    %v1501 = vand.u32 %v1040, 4294901760
    %v1502 = vsub.f32 %v1040, %v1501
    %v1503 = vand.u32 %v1502, 4294901760
    %1504 = vmatpush1.msra.mxu0 %v1503
    %1505 = vmatprep.subr.mxu0 0.0
    %v1506 = vand.u32 %v1041, 4294901760
    %v1507 = vsub.f32 %v1041, %v1506
    %v1508 = vand.u32 %v1507, 4294901760
    %1509 = vmatpush1.msra.mxu0 %v1508
    %1510 = vmatprep.subr.mxu0 0.0
    %v1511 = vand.u32 %v1042, 4294901760
    %v1512 = vsub.f32 %v1042, %v1511
    %v1513 = vand.u32 %v1512, 4294901760
    %1514 = vmatpush1.msra.mxu0 %v1513
    %1515 = vmatprep.subr.mxu0 0.0
    %v1516 = vand.u32 %v1043, 4294901760
    %v1517 = vsub.f32 %v1043, %v1516
    %v1518 = vand.u32 %v1517, 4294901760
    %1519 = vmatpush1.msra.mxu0 %v1518
    %1520 = vmatprep.subr.mxu0 0.0
    %v1521 = vand.u32 %v1044, 4294901760
    %v1522 = vsub.f32 %v1044, %v1521
    %v1523 = vand.u32 %v1522, 4294901760
    %1524 = vmatpush1.msra.mxu0 %v1523
    %1525 = vmatprep.subr.mxu0 0.0
    %v1526 = vand.u32 %v1045, 4294901760
    %v1527 = vsub.f32 %v1045, %v1526
    %v1528 = vand.u32 %v1527, 4294901760
    %1529 = vmatpush1.msra.mxu0 %v1528
    %1530 = vmatprep.subr.mxu0 0.0
    %v1531 = vand.u32 %v1046, 4294901760
    %v1532 = vsub.f32 %v1046, %v1531
    %v1533 = vand.u32 %v1532, 4294901760
    %1534 = vmatpush1.msra.mxu0 %v1533
    %1535 = vmatprep.subr.mxu0 0.0
    %v1536 = vand.u32 %v1047, 4294901760
    %v1537 = vsub.f32 %v1047, %v1536
    %v1538 = vand.u32 %v1537, 4294901760
    %1539 = vmatpush1.msra.mxu0 %v1538
    %1540 = vmatprep.subr.mxu0 0.0
    %v1541 = vand.u32 %v1048, 4294901760
    %v1542 = vsub.f32 %v1048, %v1541
    %v1543 = vand.u32 %v1542, 4294901760
    %1544 = vmatpush1.msra.mxu0 %v1543
    %1545 = vmatprep.subr.mxu0 0.0
    %v1546 = vand.u32 %v1049, 4294901760
    %v1547 = vsub.f32 %v1049, %v1546
    %v1548 = vand.u32 %v1547, 4294901760
    %1549 = vmatpush1.msra.mxu0 %v1548
    %1550 = vmatprep.subr.mxu0 0.0
    %v1551 = vand.u32 %v1050, 4294901760
    %v1552 = vsub.f32 %v1050, %v1551
    %v1553 = vand.u32 %v1552, 4294901760
    %1554 = vmatpush1.msra.mxu0 %v1553
    %1555 = vmatprep.subr.mxu0 0.0
    %1556 = vmatpush1.msra.mxu0 0.0
    %1557 = vmatprep.subr.mxu0 0.0
    %1558 = vmatpush1.msra.mxu0 0.0
    %1559 = vmatprep.subr.mxu0 0.0
    %1560 = vmatpush1.msra.mxu0 0.0
    %1561 = vmatprep.subr.mxu0 0.0
    %1562 = vmatpush1.msra.mxu0 0.0
    %1563 = vmatprep.subr.mxu0 0.0
    %1564 = vmatpush1.msra.mxu0 0.0
    %1565 = vmatprep.subr.mxu0 0.0
    %1566 = vmatpush1.msra.mxu0 0.0
    %1567 = vmatprep.subr.mxu0 0.0
    %1568 = vmatpush1.msra.mxu0 0.0
    %1569 = vmatprep.subr.mxu0 0.0
    %1570 = vmatpush1.msra.mxu0 0.0
    %1571 = vmatprep.subr.mxu0 0.0
    %1572 = vmatpush1.msra.mxu0 0.0
    %1573 = vmatprep.subr.mxu0 0.0
    %1574 = vmatpush1.msra.mxu0 0.0
    %1575 = vmatprep.subr.mxu0 0.0
    %1576 = vmatpush1.msra.mxu0 0.0
    %1577 = vmatprep.subr.mxu0 0.0
    %1578 = vmatpush1.msra.mxu0 0.0
    %1579 = vmatprep.subr.mxu0 0.0
    %1580 = vmatpush1.msra.mxu0 0.0
    %1581 = vmatprep.subr.mxu0 0.0
    %1582 = vmatpush1.msra.mxu0 0.0
    %1583 = vmatprep.subr.mxu0 0.0
    %1584 = vmatpush1.msra.mxu0 0.0
    %1585 = vmatprep.subr.mxu0 0.0
    %1586 = vmatpush1.msra.mxu0 0.0
    %1587 = vmatprep.mubr.f32.mxu0 0.0
    %1588 = vmatmul.mubr.f32.gmra.mrb[0].mxu0 0.0
    %v1589 = vpop.f32.mrb[0].mxu0
    %v1590 = vadd.f32 %v1472, %v1589
    %v1591 = vpop.f32.mrb[0].mxu0
    %1592 = vdwg.mxu0
    %1593 = vmatprep.subr.mxu0 0.0
    %v1594 = vand.u32 %v1035, 4294901760
    %1595 = vmatpush1.msra.mxu0 %v1594
    %1596 = vmatprep.subr.mxu0 0.0
    %v1597 = vand.u32 %v1036, 4294901760
    %1598 = vmatpush1.msra.mxu0 %v1597
    %1599 = vmatprep.subr.mxu0 0.0
    %v1600 = vand.u32 %v1037, 4294901760
    %1601 = vmatpush1.msra.mxu0 %v1600
    %1602 = vmatprep.subr.mxu0 0.0
    %v1603 = vand.u32 %v1038, 4294901760
    %1604 = vmatpush1.msra.mxu0 %v1603
    %1605 = vmatprep.subr.mxu0 0.0
    %v1606 = vand.u32 %v1039, 4294901760
    %1607 = vmatpush1.msra.mxu0 %v1606
    %1608 = vmatprep.subr.mxu0 0.0
    %v1609 = vand.u32 %v1040, 4294901760
    %1610 = vmatpush1.msra.mxu0 %v1609
    %1611 = vmatprep.subr.mxu0 0.0
    %v1612 = vand.u32 %v1041, 4294901760
    %1613 = vmatpush1.msra.mxu0 %v1612
    %1614 = vmatprep.subr.mxu0 0.0
    %v1615 = vand.u32 %v1042, 4294901760
    %1616 = vmatpush1.msra.mxu0 %v1615
    %1617 = vmatprep.subr.mxu0 0.0
    %v1618 = vand.u32 %v1043, 4294901760
    %1619 = vmatpush1.msra.mxu0 %v1618
    %1620 = vmatprep.subr.mxu0 0.0
    %v1621 = vand.u32 %v1044, 4294901760
    %1622 = vmatpush1.msra.mxu0 %v1621
    %1623 = vmatprep.subr.mxu0 0.0
    %v1624 = vand.u32 %v1045, 4294901760
    %1625 = vmatpush1.msra.mxu0 %v1624
    %1626 = vmatprep.subr.mxu0 0.0
    %v1627 = vand.u32 %v1046, 4294901760
    %1628 = vmatpush1.msra.mxu0 %v1627
    %1629 = vmatprep.subr.mxu0 0.0
    %v1630 = vand.u32 %v1047, 4294901760
    %1631 = vmatpush1.msra.mxu0 %v1630
    %1632 = vmatprep.subr.mxu0 0.0
    %v1633 = vand.u32 %v1048, 4294901760
    %1634 = vmatpush1.msra.mxu0 %v1633
    %1635 = vmatprep.subr.mxu0 0.0
    %v1636 = vand.u32 %v1049, 4294901760
    %1637 = vmatpush1.msra.mxu0 %v1636
    %1638 = vmatprep.subr.mxu0 0.0
    %v1639 = vand.u32 %v1050, 4294901760
    %1640 = vmatpush1.msra.mxu0 %v1639
    %1641 = vmatprep.subr.mxu0 0.0
    %1642 = vmatpush1.msra.mxu0 0.0
    %1643 = vmatprep.subr.mxu0 0.0
    %1644 = vmatpush1.msra.mxu0 0.0
    %1645 = vmatprep.subr.mxu0 0.0
    %1646 = vmatpush1.msra.mxu0 0.0
    %1647 = vmatprep.subr.mxu0 0.0
    %1648 = vmatpush1.msra.mxu0 0.0
    %1649 = vmatprep.subr.mxu0 0.0
    %1650 = vmatpush1.msra.mxu0 0.0
    %1651 = vmatprep.subr.mxu0 0.0
    %1652 = vmatpush1.msra.mxu0 0.0
    %1653 = vmatprep.subr.mxu0 0.0
    %1654 = vmatpush1.msra.mxu0 0.0
    %1655 = vmatprep.subr.mxu0 0.0
    %1656 = vmatpush1.msra.mxu0 0.0
    %1657 = vmatprep.subr.mxu0 0.0
    %1658 = vmatpush1.msra.mxu0 0.0
    %1659 = vmatprep.subr.mxu0 0.0
    %1660 = vmatpush1.msra.mxu0 0.0
    %1661 = vmatprep.subr.mxu0 0.0
    %1662 = vmatpush1.msra.mxu0 0.0
    %1663 = vmatprep.subr.mxu0 0.0
    %1664 = vmatpush1.msra.mxu0 0.0
    %1665 = vmatprep.subr.mxu0 0.0
    %1666 = vmatpush1.msra.mxu0 0.0
    %1667 = vmatprep.subr.mxu0 0.0
    %1668 = vmatpush1.msra.mxu0 0.0
    %1669 = vmatprep.subr.mxu0 0.0
    %1670 = vmatpush1.msra.mxu0 0.0
    %1671 = vmatprep.subr.mxu0 0.0
    %1672 = vmatpush1.msra.mxu0 0.0
    %1673 = vmatprep.mubr.f32.mxu0 0.0
    %1674 = vmatmul.mubr.f32.gmra.mrb[0].mxu0 0.0
    %v1675 = vpop.f32.mrb[0].mxu0
    %v1676 = vadd.f32 %v1590, %v1675
    %v1677 = vpop.f32.mrb[0].mxu0
    %1678 = vdwg.mxu0
    %v1679 = vadd.f32 %v990, %v1676
    %v1680 = vtanh.pop %v1679
    %1681 = vmatprep.subr.mxu0 0.0
    %v1682 = vand.u32 %v1035, 4294901760
    %1683 = vmatpush1.msra.mxu0 %v1682
    %1684 = vmatprep.subr.mxu0 0.0
    %v1685 = vand.u32 %v1036, 4294901760
    %1686 = vmatpush1.msra.mxu0 %v1685
    %1687 = vmatprep.subr.mxu0 0.0
    %v1688 = vand.u32 %v1037, 4294901760
    %1689 = vmatpush1.msra.mxu0 %v1688
    %1690 = vmatprep.subr.mxu0 0.0
    %v1691 = vand.u32 %v1038, 4294901760
    %1692 = vmatpush1.msra.mxu0 %v1691
    %1693 = vmatprep.subr.mxu0 0.0
    %v1694 = vand.u32 %v1039, 4294901760
    %1695 = vmatpush1.msra.mxu0 %v1694
    %1696 = vmatprep.subr.mxu0 0.0
    %v1697 = vand.u32 %v1040, 4294901760
    %1698 = vmatpush1.msra.mxu0 %v1697
    %1699 = vmatprep.subr.mxu0 0.0
    %v1700 = vand.u32 %v1041, 4294901760
    %1701 = vmatpush1.msra.mxu0 %v1700
    %1702 = vmatprep.subr.mxu0 0.0
    %v1703 = vand.u32 %v1042, 4294901760
    %1704 = vmatpush1.msra.mxu0 %v1703
    %1705 = vmatprep.subr.mxu0 0.0
    %v1706 = vand.u32 %v1043, 4294901760
    %1707 = vmatpush1.msra.mxu0 %v1706
    %1708 = vmatprep.subr.mxu0 0.0
    %v1709 = vand.u32 %v1044, 4294901760
    %1710 = vmatpush1.msra.mxu0 %v1709
    %1711 = vmatprep.subr.mxu0 0.0
    %v1712 = vand.u32 %v1045, 4294901760
    %1713 = vmatpush1.msra.mxu0 %v1712
    %1714 = vmatprep.subr.mxu0 0.0
    %v1715 = vand.u32 %v1046, 4294901760
    %1716 = vmatpush1.msra.mxu0 %v1715
    %1717 = vmatprep.subr.mxu0 0.0
    %v1718 = vand.u32 %v1047, 4294901760
    %1719 = vmatpush1.msra.mxu0 %v1718
    %1720 = vmatprep.subr.mxu0 0.0
    %v1721 = vand.u32 %v1048, 4294901760
    %1722 = vmatpush1.msra.mxu0 %v1721
    %1723 = vmatprep.subr.mxu0 0.0
    %v1724 = vand.u32 %v1049, 4294901760
    %1725 = vmatpush1.msra.mxu0 %v1724
    %1726 = vmatprep.subr.mxu0 0.0
    %v1727 = vand.u32 %v1050, 4294901760
    %1728 = vmatpush1.msra.mxu0 %v1727
    %1729 = vmatprep.subr.mxu0 0.0
    %1730 = vmatpush1.msra.mxu0 0.0
    %1731 = vmatprep.subr.mxu0 0.0
    %1732 = vmatpush1.msra.mxu0 0.0
    %1733 = vmatprep.subr.mxu0 0.0
    %1734 = vmatpush1.msra.mxu0 0.0
    %1735 = vmatprep.subr.mxu0 0.0
    %1736 = vmatpush1.msra.mxu0 0.0
    %1737 = vmatprep.subr.mxu0 0.0
    %1738 = vmatpush1.msra.mxu0 0.0
    %1739 = vmatprep.subr.mxu0 0.0
    %1740 = vmatpush1.msra.mxu0 0.0
    %1741 = vmatprep.subr.mxu0 0.0
    %1742 = vmatpush1.msra.mxu0 0.0
    %1743 = vmatprep.subr.mxu0 0.0
    %1744 = vmatpush1.msra.mxu0 0.0
    %1745 = vmatprep.subr.mxu0 0.0
    %1746 = vmatpush1.msra.mxu0 0.0
    %1747 = vmatprep.subr.mxu0 0.0
    %1748 = vmatpush1.msra.mxu0 0.0
    %1749 = vmatprep.subr.mxu0 0.0
    %1750 = vmatpush1.msra.mxu0 0.0
    %1751 = vmatprep.subr.mxu0 0.0
    %1752 = vmatpush1.msra.mxu0 0.0
    %1753 = vmatprep.subr.mxu0 0.0
    %1754 = vmatpush1.msra.mxu0 0.0
    %1755 = vmatprep.subr.mxu0 0.0
    %1756 = vmatpush1.msra.mxu0 0.0
    %1757 = vmatprep.subr.mxu0 0.0
    %1758 = vmatpush1.msra.mxu0 0.0
    %1759 = vmatprep.subr.mxu0 0.0
    %1760 = vmatpush1.msra.mxu0 0.0
    %1761 = vmatprep.mubr.f32.mxu0 0.0
    %v1762 = vand.u32 %v1680, 4294901760
    %v1763 = vsub.f32 %v1680, %v1762
    %v1764 = vand.u32 %v1763, 4294901760
    %v1765 = vsub.f32 %v1763, %v1764
    %v1766 = vand.u32 %v1765, 4294901760
    %1767 = vmatmul.mubr.f32.gmra.mrb[0].mxu0 %v1766
    %v1768 = vpop.f32.mrb[0].mxu0
    %v1769 = vadd.f32 0.0, %v1768
    %v1770 = vpop.f32.mrb[0].mxu0
    %1771 = vdwg.mxu0
    %1772 = vmatprep.subr.mxu0 0.0
    %v1773 = vand.u32 %v1035, 4294901760
    %v1774 = vsub.f32 %v1035, %v1773
    %v1775 = vand.u32 %v1774, 4294901760
    %v1776 = vsub.f32 %v1774, %v1775
    %v1777 = vand.u32 %v1776, 4294901760
    %1778 = vmatpush1.msra.mxu0 %v1777
    %1779 = vmatprep.subr.mxu0 0.0
    %v1780 = vand.u32 %v1036, 4294901760
    %v1781 = vsub.f32 %v1036, %v1780
    %v1782 = vand.u32 %v1781, 4294901760
    %v1783 = vsub.f32 %v1781, %v1782
    %v1784 = vand.u32 %v1783, 4294901760
    %1785 = vmatpush1.msra.mxu0 %v1784
    %1786 = vmatprep.subr.mxu0 0.0
    %v1787 = vand.u32 %v1037, 4294901760
    %v1788 = vsub.f32 %v1037, %v1787
    %v1789 = vand.u32 %v1788, 4294901760
    %v1790 = vsub.f32 %v1788, %v1789
    %v1791 = vand.u32 %v1790, 4294901760
    %1792 = vmatpush1.msra.mxu0 %v1791
    %1793 = vmatprep.subr.mxu0 0.0
    %v1794 = vand.u32 %v1038, 4294901760
    %v1795 = vsub.f32 %v1038, %v1794
    %v1796 = vand.u32 %v1795, 4294901760
    %v1797 = vsub.f32 %v1795, %v1796
    %v1798 = vand.u32 %v1797, 4294901760
    %1799 = vmatpush1.msra.mxu0 %v1798
    %1800 = vmatprep.subr.mxu0 0.0
    %v1801 = vand.u32 %v1039, 4294901760
    %v1802 = vsub.f32 %v1039, %v1801
    %v1803 = vand.u32 %v1802, 4294901760
    %v1804 = vsub.f32 %v1802, %v1803
    %v1805 = vand.u32 %v1804, 4294901760
    %1806 = vmatpush1.msra.mxu0 %v1805
    %1807 = vmatprep.subr.mxu0 0.0
    %v1808 = vand.u32 %v1040, 4294901760
    %v1809 = vsub.f32 %v1040, %v1808
    %v1810 = vand.u32 %v1809, 4294901760
    %v1811 = vsub.f32 %v1809, %v1810
    %v1812 = vand.u32 %v1811, 4294901760
    %1813 = vmatpush1.msra.mxu0 %v1812
    %1814 = vmatprep.subr.mxu0 0.0
    %v1815 = vand.u32 %v1041, 4294901760
    %v1816 = vsub.f32 %v1041, %v1815
    %v1817 = vand.u32 %v1816, 4294901760
    %v1818 = vsub.f32 %v1816, %v1817
    %v1819 = vand.u32 %v1818, 4294901760
    %1820 = vmatpush1.msra.mxu0 %v1819
    %1821 = vmatprep.subr.mxu0 0.0
    %v1822 = vand.u32 %v1042, 4294901760
    %v1823 = vsub.f32 %v1042, %v1822
    %v1824 = vand.u32 %v1823, 4294901760
    %v1825 = vsub.f32 %v1823, %v1824
    %v1826 = vand.u32 %v1825, 4294901760
    %1827 = vmatpush1.msra.mxu0 %v1826
    %1828 = vmatprep.subr.mxu0 0.0
    %v1829 = vand.u32 %v1043, 4294901760
    %v1830 = vsub.f32 %v1043, %v1829
    %v1831 = vand.u32 %v1830, 4294901760
    %v1832 = vsub.f32 %v1830, %v1831
    %v1833 = vand.u32 %v1832, 4294901760
    %1834 = vmatpush1.msra.mxu0 %v1833
    %1835 = vmatprep.subr.mxu0 0.0
    %v1836 = vand.u32 %v1044, 4294901760
    %v1837 = vsub.f32 %v1044, %v1836
    %v1838 = vand.u32 %v1837, 4294901760
    %v1839 = vsub.f32 %v1837, %v1838
    %v1840 = vand.u32 %v1839, 4294901760
    %1841 = vmatpush1.msra.mxu0 %v1840
    %1842 = vmatprep.subr.mxu0 0.0
    %v1843 = vand.u32 %v1045, 4294901760
    %v1844 = vsub.f32 %v1045, %v1843
    %v1845 = vand.u32 %v1844, 4294901760
    %v1846 = vsub.f32 %v1844, %v1845
    %v1847 = vand.u32 %v1846, 4294901760
    %1848 = vmatpush1.msra.mxu0 %v1847
    %1849 = vmatprep.subr.mxu0 0.0
    %v1850 = vand.u32 %v1046, 4294901760
    %v1851 = vsub.f32 %v1046, %v1850
    %v1852 = vand.u32 %v1851, 4294901760
    %v1853 = vsub.f32 %v1851, %v1852
    %v1854 = vand.u32 %v1853, 4294901760
    %1855 = vmatpush1.msra.mxu0 %v1854
    %1856 = vmatprep.subr.mxu0 0.0
    %v1857 = vand.u32 %v1047, 4294901760
    %v1858 = vsub.f32 %v1047, %v1857
    %v1859 = vand.u32 %v1858, 4294901760
    %v1860 = vsub.f32 %v1858, %v1859
    %v1861 = vand.u32 %v1860, 4294901760
    %1862 = vmatpush1.msra.mxu0 %v1861
    %1863 = vmatprep.subr.mxu0 0.0
    %v1864 = vand.u32 %v1048, 4294901760
    %v1865 = vsub.f32 %v1048, %v1864
    %v1866 = vand.u32 %v1865, 4294901760
    %v1867 = vsub.f32 %v1865, %v1866
    %v1868 = vand.u32 %v1867, 4294901760
    %1869 = vmatpush1.msra.mxu0 %v1868
    %1870 = vmatprep.subr.mxu0 0.0
    %v1871 = vand.u32 %v1049, 4294901760
    %v1872 = vsub.f32 %v1049, %v1871
    %v1873 = vand.u32 %v1872, 4294901760
    %v1874 = vsub.f32 %v1872, %v1873
    %v1875 = vand.u32 %v1874, 4294901760
    %1876 = vmatpush1.msra.mxu0 %v1875
    %1877 = vmatprep.subr.mxu0 0.0
    %v1878 = vand.u32 %v1050, 4294901760
    %v1879 = vsub.f32 %v1050, %v1878
    %v1880 = vand.u32 %v1879, 4294901760
    %v1881 = vsub.f32 %v1879, %v1880
    %v1882 = vand.u32 %v1881, 4294901760
    %1883 = vmatpush1.msra.mxu0 %v1882
    %1884 = vmatprep.subr.mxu0 0.0
    %1885 = vmatpush1.msra.mxu0 0.0
    %1886 = vmatprep.subr.mxu0 0.0
    %1887 = vmatpush1.msra.mxu0 0.0
    %1888 = vmatprep.subr.mxu0 0.0
    %1889 = vmatpush1.msra.mxu0 0.0
    %1890 = vmatprep.subr.mxu0 0.0
    %1891 = vmatpush1.msra.mxu0 0.0
    %1892 = vmatprep.subr.mxu0 0.0
    %1893 = vmatpush1.msra.mxu0 0.0
    %1894 = vmatprep.subr.mxu0 0.0
    %1895 = vmatpush1.msra.mxu0 0.0
    %1896 = vmatprep.subr.mxu0 0.0
    %1897 = vmatpush1.msra.mxu0 0.0
    %1898 = vmatprep.subr.mxu0 0.0
    %1899 = vmatpush1.msra.mxu0 0.0
    %1900 = vmatprep.subr.mxu0 0.0
    %1901 = vmatpush1.msra.mxu0 0.0
    %1902 = vmatprep.subr.mxu0 0.0
    %1903 = vmatpush1.msra.mxu0 0.0
    %1904 = vmatprep.subr.mxu0 0.0
    %1905 = vmatpush1.msra.mxu0 0.0
    %1906 = vmatprep.subr.mxu0 0.0
    %1907 = vmatpush1.msra.mxu0 0.0
    %1908 = vmatprep.subr.mxu0 0.0
    %1909 = vmatpush1.msra.mxu0 0.0
    %1910 = vmatprep.subr.mxu0 0.0
    %1911 = vmatpush1.msra.mxu0 0.0
    %1912 = vmatprep.subr.mxu0 0.0
    %1913 = vmatpush1.msra.mxu0 0.0
    %1914 = vmatprep.subr.mxu0 0.0
    %1915 = vmatpush1.msra.mxu0 0.0
    %1916 = vmatprep.mubr.f32.mxu0 0.0
    %v1917 = vand.u32 %v1680, 4294901760
    %1918 = vmatmul.mubr.f32.gmra.mrb[0].mxu0 %v1917
    %v1919 = vpop.f32.mrb[0].mxu0
    %v1920 = vadd.f32 %v1769, %v1919
    %v1921 = vpop.f32.mrb[0].mxu0
    %1922 = vdwg.mxu0
    %1923 = vmatprep.subr.mxu0 0.0
    %v1924 = vand.u32 %v1035, 4294901760
    %v1925 = vsub.f32 %v1035, %v1924
    %1926 = vmatpush1.msra.mxu0 %v1925
    %1927 = vmatprep.subr.mxu0 0.0
    %v1928 = vand.u32 %v1036, 4294901760
    %v1929 = vsub.f32 %v1036, %v1928
    %1930 = vmatpush1.msra.mxu0 %v1929
    %1931 = vmatprep.subr.mxu0 0.0
    %v1932 = vand.u32 %v1037, 4294901760
    %v1933 = vsub.f32 %v1037, %v1932
    %1934 = vmatpush1.msra.mxu0 %v1933
    %1935 = vmatprep.subr.mxu0 0.0
    %v1936 = vand.u32 %v1038, 4294901760
    %v1937 = vsub.f32 %v1038, %v1936
    %1938 = vmatpush1.msra.mxu0 %v1937
    %1939 = vmatprep.subr.mxu0 0.0
    %v1940 = vand.u32 %v1039, 4294901760
    %v1941 = vsub.f32 %v1039, %v1940
    %1942 = vmatpush1.msra.mxu0 %v1941
    %1943 = vmatprep.subr.mxu0 0.0
    %v1944 = vand.u32 %v1040, 4294901760
    %v1945 = vsub.f32 %v1040, %v1944
    %1946 = vmatpush1.msra.mxu0 %v1945
    %1947 = vmatprep.subr.mxu0 0.0
    %v1948 = vand.u32 %v1041, 4294901760
    %v1949 = vsub.f32 %v1041, %v1948
    %1950 = vmatpush1.msra.mxu0 %v1949
    %1951 = vmatprep.subr.mxu0 0.0
    %v1952 = vand.u32 %v1042, 4294901760
    %v1953 = vsub.f32 %v1042, %v1952
    %1954 = vmatpush1.msra.mxu0 %v1953
    %1955 = vmatprep.subr.mxu0 0.0
    %v1956 = vand.u32 %v1043, 4294901760
    %v1957 = vsub.f32 %v1043, %v1956
    %1958 = vmatpush1.msra.mxu0 %v1957
    %1959 = vmatprep.subr.mxu0 0.0
    %v1960 = vand.u32 %v1044, 4294901760
    %v1961 = vsub.f32 %v1044, %v1960
    %1962 = vmatpush1.msra.mxu0 %v1961
    %1963 = vmatprep.subr.mxu0 0.0
    %v1964 = vand.u32 %v1045, 4294901760
    %v1965 = vsub.f32 %v1045, %v1964
    %1966 = vmatpush1.msra.mxu0 %v1965
    %1967 = vmatprep.subr.mxu0 0.0
    %v1968 = vand.u32 %v1046, 4294901760
    %v1969 = vsub.f32 %v1046, %v1968
    %1970 = vmatpush1.msra.mxu0 %v1969
    %1971 = vmatprep.subr.mxu0 0.0
    %v1972 = vand.u32 %v1047, 4294901760
    %v1973 = vsub.f32 %v1047, %v1972
    %1974 = vmatpush1.msra.mxu0 %v1973
    %1975 = vmatprep.subr.mxu0 0.0
    %v1976 = vand.u32 %v1048, 4294901760
    %v1977 = vsub.f32 %v1048, %v1976
    %1978 = vmatpush1.msra.mxu0 %v1977
    %1979 = vmatprep.subr.mxu0 0.0
    %v1980 = vand.u32 %v1049, 4294901760
    %v1981 = vsub.f32 %v1049, %v1980
    %1982 = vmatpush1.msra.mxu0 %v1981
    %1983 = vmatprep.subr.mxu0 0.0
    %v1984 = vand.u32 %v1050, 4294901760
    %v1985 = vsub.f32 %v1050, %v1984
    %1986 = vmatpush1.msra.mxu0 %v1985
    %1987 = vmatprep.subr.mxu0 0.0
    %1988 = vmatpush1.msra.mxu0 0.0
    %1989 = vmatprep.subr.mxu0 0.0
    %1990 = vmatpush1.msra.mxu0 0.0
    %1991 = vmatprep.subr.mxu0 0.0
    %1992 = vmatpush1.msra.mxu0 0.0
    %1993 = vmatprep.subr.mxu0 0.0
    %1994 = vmatpush1.msra.mxu0 0.0
    %1995 = vmatprep.subr.mxu0 0.0
    %1996 = vmatpush1.msra.mxu0 0.0
    %1997 = vmatprep.subr.mxu0 0.0
    %1998 = vmatpush1.msra.mxu0 0.0
    %1999 = vmatprep.subr.mxu0 0.0
    %2000 = vmatpush1.msra.mxu0 0.0
    %2001 = vmatprep.subr.mxu0 0.0
    %2002 = vmatpush1.msra.mxu0 0.0
    %2003 = vmatprep.subr.mxu0 0.0
    %2004 = vmatpush1.msra.mxu0 0.0
    %2005 = vmatprep.subr.mxu0 0.0
    %2006 = vmatpush1.msra.mxu0 0.0
    %2007 = vmatprep.subr.mxu0 0.0
    %2008 = vmatpush1.msra.mxu0 0.0
    %2009 = vmatprep.subr.mxu0 0.0
    %2010 = vmatpush1.msra.mxu0 0.0
    %2011 = vmatprep.subr.mxu0 0.0
    %2012 = vmatpush1.msra.mxu0 0.0
    %2013 = vmatprep.subr.mxu0 0.0
    %2014 = vmatpush1.msra.mxu0 0.0
    %2015 = vmatprep.subr.mxu0 0.0
    %2016 = vmatpush1.msra.mxu0 0.0
    %2017 = vmatprep.subr.mxu0 0.0
    %2018 = vmatpush1.msra.mxu0 0.0
    %2019 = vmatprep.mubr.f32.mxu0 0.0
    %v2020 = vand.u32 %v1680, 4294901760
    %v2021 = vsub.f32 %v1680, %v2020
    %2022 = vmatmul.mubr.f32.gmra.mrb[0].mxu0 %v2021
    %v2023 = vpop.f32.mrb[0].mxu0
    %v2024 = vadd.f32 %v1920, %v2023
    %v2025 = vpop.f32.mrb[0].mxu0
    %2026 = vdwg.mxu0
    %2027 = vmatprep.subr.mxu0 0.0
    %v2028 = vand.u32 %v1035, 4294901760
    %2029 = vmatpush1.msra.mxu0 %v2028
    %2030 = vmatprep.subr.mxu0 0.0
    %v2031 = vand.u32 %v1036, 4294901760
    %2032 = vmatpush1.msra.mxu0 %v2031
    %2033 = vmatprep.subr.mxu0 0.0
    %v2034 = vand.u32 %v1037, 4294901760
    %2035 = vmatpush1.msra.mxu0 %v2034
    %2036 = vmatprep.subr.mxu0 0.0
    %v2037 = vand.u32 %v1038, 4294901760
    %2038 = vmatpush1.msra.mxu0 %v2037
    %2039 = vmatprep.subr.mxu0 0.0
    %v2040 = vand.u32 %v1039, 4294901760
    %2041 = vmatpush1.msra.mxu0 %v2040
    %2042 = vmatprep.subr.mxu0 0.0
    %v2043 = vand.u32 %v1040, 4294901760
    %2044 = vmatpush1.msra.mxu0 %v2043
    %2045 = vmatprep.subr.mxu0 0.0
    %v2046 = vand.u32 %v1041, 4294901760
    %2047 = vmatpush1.msra.mxu0 %v2046
    %2048 = vmatprep.subr.mxu0 0.0
    %v2049 = vand.u32 %v1042, 4294901760
    %2050 = vmatpush1.msra.mxu0 %v2049
    %2051 = vmatprep.subr.mxu0 0.0
    %v2052 = vand.u32 %v1043, 4294901760
    %2053 = vmatpush1.msra.mxu0 %v2052
    %2054 = vmatprep.subr.mxu0 0.0
    %v2055 = vand.u32 %v1044, 4294901760
    %2056 = vmatpush1.msra.mxu0 %v2055
    %2057 = vmatprep.subr.mxu0 0.0
    %v2058 = vand.u32 %v1045, 4294901760
    %2059 = vmatpush1.msra.mxu0 %v2058
    %2060 = vmatprep.subr.mxu0 0.0
    %v2061 = vand.u32 %v1046, 4294901760
    %2062 = vmatpush1.msra.mxu0 %v2061
    %2063 = vmatprep.subr.mxu0 0.0
    %v2064 = vand.u32 %v1047, 4294901760
    %2065 = vmatpush1.msra.mxu0 %v2064
    %2066 = vmatprep.subr.mxu0 0.0
    %v2067 = vand.u32 %v1048, 4294901760
    %2068 = vmatpush1.msra.mxu0 %v2067
    %2069 = vmatprep.subr.mxu0 0.0
    %v2070 = vand.u32 %v1049, 4294901760
    %2071 = vmatpush1.msra.mxu0 %v2070
    %2072 = vmatprep.subr.mxu0 0.0
    %v2073 = vand.u32 %v1050, 4294901760
    %2074 = vmatpush1.msra.mxu0 %v2073
    %2075 = vmatprep.subr.mxu0 0.0
    %2076 = vmatpush1.msra.mxu0 0.0
    %2077 = vmatprep.subr.mxu0 0.0
    %2078 = vmatpush1.msra.mxu0 0.0
    %2079 = vmatprep.subr.mxu0 0.0
    %2080 = vmatpush1.msra.mxu0 0.0
    %2081 = vmatprep.subr.mxu0 0.0
    %2082 = vmatpush1.msra.mxu0 0.0
    %2083 = vmatprep.subr.mxu0 0.0
    %2084 = vmatpush1.msra.mxu0 0.0
    %2085 = vmatprep.subr.mxu0 0.0
    %2086 = vmatpush1.msra.mxu0 0.0
    %2087 = vmatprep.subr.mxu0 0.0
    %2088 = vmatpush1.msra.mxu0 0.0
    %2089 = vmatprep.subr.mxu0 0.0
    %2090 = vmatpush1.msra.mxu0 0.0
    %2091 = vmatprep.subr.mxu0 0.0
    %2092 = vmatpush1.msra.mxu0 0.0
    %2093 = vmatprep.subr.mxu0 0.0
    %2094 = vmatpush1.msra.mxu0 0.0
    %2095 = vmatprep.subr.mxu0 0.0
    %2096 = vmatpush1.msra.mxu0 0.0
    %2097 = vmatprep.subr.mxu0 0.0
    %2098 = vmatpush1.msra.mxu0 0.0
    %2099 = vmatprep.subr.mxu0 0.0
    %2100 = vmatpush1.msra.mxu0 0.0
    %2101 = vmatprep.subr.mxu0 0.0
    %2102 = vmatpush1.msra.mxu0 0.0
    %2103 = vmatprep.subr.mxu0 0.0
    %2104 = vmatpush1.msra.mxu0 0.0
    %2105 = vmatprep.subr.mxu0 0.0
    %2106 = vmatpush1.msra.mxu0 0.0
    %2107 = vmatprep.mubr.f32.mxu0 0.0
    %v2108 = vand.u32 %v1680, 4294901760
    %v2109 = vsub.f32 %v1680, %v2108
    %v2110 = vand.u32 %v2109, 4294901760
    %2111 = vmatmul.mubr.f32.gmra.mrb[0].mxu0 %v2110
    %v2112 = vpop.f32.mrb[0].mxu0
    %v2113 = vadd.f32 %v2024, %v2112
    %v2114 = vpop.f32.mrb[0].mxu0
    %2115 = vdwg.mxu0
    %2116 = vmatprep.subr.mxu0 0.0
    %v2117 = vand.u32 %v1035, 4294901760
    %v2118 = vsub.f32 %v1035, %v2117
    %v2119 = vand.u32 %v2118, 4294901760
    %2120 = vmatpush1.msra.mxu0 %v2119
    %2121 = vmatprep.subr.mxu0 0.0
    %v2122 = vand.u32 %v1036, 4294901760
    %v2123 = vsub.f32 %v1036, %v2122
    %v2124 = vand.u32 %v2123, 4294901760
    %2125 = vmatpush1.msra.mxu0 %v2124
    %2126 = vmatprep.subr.mxu0 0.0
    %v2127 = vand.u32 %v1037, 4294901760
    %v2128 = vsub.f32 %v1037, %v2127
    %v2129 = vand.u32 %v2128, 4294901760
    %2130 = vmatpush1.msra.mxu0 %v2129
    %2131 = vmatprep.subr.mxu0 0.0
    %v2132 = vand.u32 %v1038, 4294901760
    %v2133 = vsub.f32 %v1038, %v2132
    %v2134 = vand.u32 %v2133, 4294901760
    %2135 = vmatpush1.msra.mxu0 %v2134
    %2136 = vmatprep.subr.mxu0 0.0
    %v2137 = vand.u32 %v1039, 4294901760
    %v2138 = vsub.f32 %v1039, %v2137
    %v2139 = vand.u32 %v2138, 4294901760
    %2140 = vmatpush1.msra.mxu0 %v2139
    %2141 = vmatprep.subr.mxu0 0.0
    %v2142 = vand.u32 %v1040, 4294901760
    %v2143 = vsub.f32 %v1040, %v2142
    %v2144 = vand.u32 %v2143, 4294901760
    %2145 = vmatpush1.msra.mxu0 %v2144
    %2146 = vmatprep.subr.mxu0 0.0
    %v2147 = vand.u32 %v1041, 4294901760
    %v2148 = vsub.f32 %v1041, %v2147
    %v2149 = vand.u32 %v2148, 4294901760
    %2150 = vmatpush1.msra.mxu0 %v2149
    %2151 = vmatprep.subr.mxu0 0.0
    %v2152 = vand.u32 %v1042, 4294901760
    %v2153 = vsub.f32 %v1042, %v2152
    %v2154 = vand.u32 %v2153, 4294901760
    %2155 = vmatpush1.msra.mxu0 %v2154
    %2156 = vmatprep.subr.mxu0 0.0
    %v2157 = vand.u32 %v1043, 4294901760
    %v2158 = vsub.f32 %v1043, %v2157
    %v2159 = vand.u32 %v2158, 4294901760
    %2160 = vmatpush1.msra.mxu0 %v2159
    %2161 = vmatprep.subr.mxu0 0.0
    %v2162 = vand.u32 %v1044, 4294901760
    %v2163 = vsub.f32 %v1044, %v2162
    %v2164 = vand.u32 %v2163, 4294901760
    %2165 = vmatpush1.msra.mxu0 %v2164
    %2166 = vmatprep.subr.mxu0 0.0
    %v2167 = vand.u32 %v1045, 4294901760
    %v2168 = vsub.f32 %v1045, %v2167
    %v2169 = vand.u32 %v2168, 4294901760
    %2170 = vmatpush1.msra.mxu0 %v2169
    %2171 = vmatprep.subr.mxu0 0.0
    %v2172 = vand.u32 %v1046, 4294901760
    %v2173 = vsub.f32 %v1046, %v2172
    %v2174 = vand.u32 %v2173, 4294901760
    %2175 = vmatpush1.msra.mxu0 %v2174
    %2176 = vmatprep.subr.mxu0 0.0
    %v2177 = vand.u32 %v1047, 4294901760
    %v2178 = vsub.f32 %v1047, %v2177
    %v2179 = vand.u32 %v2178, 4294901760
    %2180 = vmatpush1.msra.mxu0 %v2179
    %2181 = vmatprep.subr.mxu0 0.0
    %v2182 = vand.u32 %v1048, 4294901760
    %v2183 = vsub.f32 %v1048, %v2182
    %v2184 = vand.u32 %v2183, 4294901760
    %2185 = vmatpush1.msra.mxu0 %v2184
    %2186 = vmatprep.subr.mxu0 0.0
    %v2187 = vand.u32 %v1049, 4294901760
    %v2188 = vsub.f32 %v1049, %v2187
    %v2189 = vand.u32 %v2188, 4294901760
    %2190 = vmatpush1.msra.mxu0 %v2189
    %2191 = vmatprep.subr.mxu0 0.0
    %v2192 = vand.u32 %v1050, 4294901760
    %v2193 = vsub.f32 %v1050, %v2192
    %v2194 = vand.u32 %v2193, 4294901760
    %2195 = vmatpush1.msra.mxu0 %v2194
    %2196 = vmatprep.subr.mxu0 0.0
    %2197 = vmatpush1.msra.mxu0 0.0
    %2198 = vmatprep.subr.mxu0 0.0
    %2199 = vmatpush1.msra.mxu0 0.0
    %2200 = vmatprep.subr.mxu0 0.0
    %2201 = vmatpush1.msra.mxu0 0.0
    %2202 = vmatprep.subr.mxu0 0.0
    %2203 = vmatpush1.msra.mxu0 0.0
    %2204 = vmatprep.subr.mxu0 0.0
    %2205 = vmatpush1.msra.mxu0 0.0
    %2206 = vmatprep.subr.mxu0 0.0
    %2207 = vmatpush1.msra.mxu0 0.0
    %2208 = vmatprep.subr.mxu0 0.0
    %2209 = vmatpush1.msra.mxu0 0.0
    %2210 = vmatprep.subr.mxu0 0.0
    %2211 = vmatpush1.msra.mxu0 0.0
    %2212 = vmatprep.subr.mxu0 0.0
    %2213 = vmatpush1.msra.mxu0 0.0
    %2214 = vmatprep.subr.mxu0 0.0
    %2215 = vmatpush1.msra.mxu0 0.0
    %2216 = vmatprep.subr.mxu0 0.0
    %2217 = vmatpush1.msra.mxu0 0.0
    %2218 = vmatprep.subr.mxu0 0.0
    %2219 = vmatpush1.msra.mxu0 0.0
    %2220 = vmatprep.subr.mxu0 0.0
    %2221 = vmatpush1.msra.mxu0 0.0
    %2222 = vmatprep.subr.mxu0 0.0
    %2223 = vmatpush1.msra.mxu0 0.0
    %2224 = vmatprep.subr.mxu0 0.0
    %2225 = vmatpush1.msra.mxu0 0.0
    %2226 = vmatprep.subr.mxu0 0.0
    %2227 = vmatpush1.msra.mxu0 0.0
    %2228 = vmatprep.mubr.f32.mxu0 0.0
    %v2229 = vand.u32 %v1680, 4294901760
    %2230 = vmatmul.mubr.f32.gmra.mrb[0].mxu0 %v2229
    %v2231 = vpop.f32.mrb[0].mxu0
    %v2232 = vadd.f32 %v2113, %v2231
    %v2233 = vpop.f32.mrb[0].mxu0
    %2234 = vdwg.mxu0
    %2235 = vmatprep.subr.mxu0 0.0
    %v2236 = vand.u32 %v1035, 4294901760
    %2237 = vmatpush1.msra.mxu0 %v2236
    %2238 = vmatprep.subr.mxu0 0.0
    %v2239 = vand.u32 %v1036, 4294901760
    %2240 = vmatpush1.msra.mxu0 %v2239
    %2241 = vmatprep.subr.mxu0 0.0
    %v2242 = vand.u32 %v1037, 4294901760
    %2243 = vmatpush1.msra.mxu0 %v2242
    %2244 = vmatprep.subr.mxu0 0.0
    %v2245 = vand.u32 %v1038, 4294901760
    %2246 = vmatpush1.msra.mxu0 %v2245
    %2247 = vmatprep.subr.mxu0 0.0
    %v2248 = vand.u32 %v1039, 4294901760
    %2249 = vmatpush1.msra.mxu0 %v2248
    %2250 = vmatprep.subr.mxu0 0.0
    %v2251 = vand.u32 %v1040, 4294901760
    %2252 = vmatpush1.msra.mxu0 %v2251
    %2253 = vmatprep.subr.mxu0 0.0
    %v2254 = vand.u32 %v1041, 4294901760
    %2255 = vmatpush1.msra.mxu0 %v2254
    %2256 = vmatprep.subr.mxu0 0.0
    %v2257 = vand.u32 %v1042, 4294901760
    %2258 = vmatpush1.msra.mxu0 %v2257
    %2259 = vmatprep.subr.mxu0 0.0
    %v2260 = vand.u32 %v1043, 4294901760
    %2261 = vmatpush1.msra.mxu0 %v2260
    %2262 = vmatprep.subr.mxu0 0.0
    %v2263 = vand.u32 %v1044, 4294901760
    %2264 = vmatpush1.msra.mxu0 %v2263
    %2265 = vmatprep.subr.mxu0 0.0
    %v2266 = vand.u32 %v1045, 4294901760
    %2267 = vmatpush1.msra.mxu0 %v2266
    %2268 = vmatprep.subr.mxu0 0.0
    %v2269 = vand.u32 %v1046, 4294901760
    %2270 = vmatpush1.msra.mxu0 %v2269
    %2271 = vmatprep.subr.mxu0 0.0
    %v2272 = vand.u32 %v1047, 4294901760
    %2273 = vmatpush1.msra.mxu0 %v2272
    %2274 = vmatprep.subr.mxu0 0.0
    %v2275 = vand.u32 %v1048, 4294901760
    %2276 = vmatpush1.msra.mxu0 %v2275
    %2277 = vmatprep.subr.mxu0 0.0
    %v2278 = vand.u32 %v1049, 4294901760
    %2279 = vmatpush1.msra.mxu0 %v2278
    %2280 = vmatprep.subr.mxu0 0.0
    %v2281 = vand.u32 %v1050, 4294901760
    %2282 = vmatpush1.msra.mxu0 %v2281
    %2283 = vmatprep.subr.mxu0 0.0
    %2284 = vmatpush1.msra.mxu0 0.0
    %2285 = vmatprep.subr.mxu0 0.0
    %2286 = vmatpush1.msra.mxu0 0.0
    %2287 = vmatprep.subr.mxu0 0.0
    %2288 = vmatpush1.msra.mxu0 0.0
    %2289 = vmatprep.subr.mxu0 0.0
    %2290 = vmatpush1.msra.mxu0 0.0
    %2291 = vmatprep.subr.mxu0 0.0
    %2292 = vmatpush1.msra.mxu0 0.0
    %2293 = vmatprep.subr.mxu0 0.0
    %2294 = vmatpush1.msra.mxu0 0.0
    %2295 = vmatprep.subr.mxu0 0.0
    %2296 = vmatpush1.msra.mxu0 0.0
    %2297 = vmatprep.subr.mxu0 0.0
    %2298 = vmatpush1.msra.mxu0 0.0
    %2299 = vmatprep.subr.mxu0 0.0
    %2300 = vmatpush1.msra.mxu0 0.0
    %2301 = vmatprep.subr.mxu0 0.0
    %2302 = vmatpush1.msra.mxu0 0.0
    %2303 = vmatprep.subr.mxu0 0.0
    %2304 = vmatpush1.msra.mxu0 0.0
    %2305 = vmatprep.subr.mxu0 0.0
    %2306 = vmatpush1.msra.mxu0 0.0
    %2307 = vmatprep.subr.mxu0 0.0
    %2308 = vmatpush1.msra.mxu0 0.0
    %2309 = vmatprep.subr.mxu0 0.0
    %2310 = vmatpush1.msra.mxu0 0.0
    %2311 = vmatprep.subr.mxu0 0.0
    %2312 = vmatpush1.msra.mxu0 0.0
    %2313 = vmatprep.subr.mxu0 0.0
    %2314 = vmatpush1.msra.mxu0 0.0
    %2315 = vmatprep.mubr.f32.mxu0 0.0
    %v2316 = vand.u32 %v1680, 4294901760
    %2317 = vmatmul.mubr.f32.gmra.mrb[0].mxu0 %v2316
    %v2318 = vpop.f32.mrb[0].mxu0
    %v2319 = vadd.f32 %v2232, %v2318
    %v2320 = vpop.f32.mrb[0].mxu0
    %2321 = vdwg.mxu0
    %v2322 = vadd.f32 %v996, %v2319
    %v2323 = vtanh.pop %v2322
    %2324 = vmatprep.subr.mxu0 0.0
    %v2325 = vand.u32 %v1035, 4294901760
    %2326 = vmatpush1.msra.mxu0 %v2325
    %2327 = vmatprep.subr.mxu0 0.0
    %v2328 = vand.u32 %v1036, 4294901760
    %2329 = vmatpush1.msra.mxu0 %v2328
    %2330 = vmatprep.subr.mxu0 0.0
    %v2331 = vand.u32 %v1037, 4294901760
    %2332 = vmatpush1.msra.mxu0 %v2331
    %2333 = vmatprep.subr.mxu0 0.0
    %v2334 = vand.u32 %v1038, 4294901760
    %2335 = vmatpush1.msra.mxu0 %v2334
    %2336 = vmatprep.subr.mxu0 0.0
    %v2337 = vand.u32 %v1039, 4294901760
    %2338 = vmatpush1.msra.mxu0 %v2337
    %2339 = vmatprep.subr.mxu0 0.0
    %v2340 = vand.u32 %v1040, 4294901760
    %2341 = vmatpush1.msra.mxu0 %v2340
    %2342 = vmatprep.subr.mxu0 0.0
    %v2343 = vand.u32 %v1041, 4294901760
    %2344 = vmatpush1.msra.mxu0 %v2343
    %2345 = vmatprep.subr.mxu0 0.0
    %v2346 = vand.u32 %v1042, 4294901760
    %2347 = vmatpush1.msra.mxu0 %v2346
    %2348 = vmatprep.subr.mxu0 0.0
    %v2349 = vand.u32 %v1043, 4294901760
    %2350 = vmatpush1.msra.mxu0 %v2349
    %2351 = vmatprep.subr.mxu0 0.0
    %v2352 = vand.u32 %v1044, 4294901760
    %2353 = vmatpush1.msra.mxu0 %v2352
    %2354 = vmatprep.subr.mxu0 0.0
    %v2355 = vand.u32 %v1045, 4294901760
    %2356 = vmatpush1.msra.mxu0 %v2355
    %2357 = vmatprep.subr.mxu0 0.0
    %v2358 = vand.u32 %v1046, 4294901760
    %2359 = vmatpush1.msra.mxu0 %v2358
    %2360 = vmatprep.subr.mxu0 0.0
    %v2361 = vand.u32 %v1047, 4294901760
    %2362 = vmatpush1.msra.mxu0 %v2361
    %2363 = vmatprep.subr.mxu0 0.0
    %v2364 = vand.u32 %v1048, 4294901760
    %2365 = vmatpush1.msra.mxu0 %v2364
    %2366 = vmatprep.subr.mxu0 0.0
    %v2367 = vand.u32 %v1049, 4294901760
    %2368 = vmatpush1.msra.mxu0 %v2367
    %2369 = vmatprep.subr.mxu0 0.0
    %v2370 = vand.u32 %v1050, 4294901760
    %2371 = vmatpush1.msra.mxu0 %v2370
    %2372 = vmatprep.subr.mxu0 0.0
    %2373 = vmatpush1.msra.mxu0 0.0
    %2374 = vmatprep.subr.mxu0 0.0
    %2375 = vmatpush1.msra.mxu0 0.0
    %2376 = vmatprep.subr.mxu0 0.0
    %2377 = vmatpush1.msra.mxu0 0.0
    %2378 = vmatprep.subr.mxu0 0.0
    %2379 = vmatpush1.msra.mxu0 0.0
    %2380 = vmatprep.subr.mxu0 0.0
    %2381 = vmatpush1.msra.mxu0 0.0
    %2382 = vmatprep.subr.mxu0 0.0
    %2383 = vmatpush1.msra.mxu0 0.0
    %2384 = vmatprep.subr.mxu0 0.0
    %2385 = vmatpush1.msra.mxu0 0.0
    %2386 = vmatprep.subr.mxu0 0.0
    %2387 = vmatpush1.msra.mxu0 0.0
    %2388 = vmatprep.subr.mxu0 0.0
    %2389 = vmatpush1.msra.mxu0 0.0
    %2390 = vmatprep.subr.mxu0 0.0
    %2391 = vmatpush1.msra.mxu0 0.0
    %2392 = vmatprep.subr.mxu0 0.0
    %2393 = vmatpush1.msra.mxu0 0.0
    %2394 = vmatprep.subr.mxu0 0.0
    %2395 = vmatpush1.msra.mxu0 0.0
    %2396 = vmatprep.subr.mxu0 0.0
    %2397 = vmatpush1.msra.mxu0 0.0
    %2398 = vmatprep.subr.mxu0 0.0
    %2399 = vmatpush1.msra.mxu0 0.0
    %2400 = vmatprep.subr.mxu0 0.0
    %2401 = vmatpush1.msra.mxu0 0.0
    %2402 = vmatprep.subr.mxu0 0.0
    %2403 = vmatpush1.msra.mxu0 0.0
    %2404 = vmatprep.mubr.f32.mxu0 0.0
    %v2405 = vand.u32 %v2323, 4294901760
    %v2406 = vsub.f32 %v2323, %v2405
    %v2407 = vand.u32 %v2406, 4294901760
    %v2408 = vsub.f32 %v2406, %v2407
    %v2409 = vand.u32 %v2408, 4294901760
    %2410 = vmatmul.mubr.f32.gmra.mrb[0].mxu0 %v2409
    %v2411 = vpop.f32.mrb[0].mxu0
    %v2412 = vadd.f32 0.0, %v2411
    %v2413 = vpop.f32.mrb[0].mxu0
    %2414 = vdwg.mxu0
    %2415 = vmatprep.subr.mxu0 0.0
    %v2416 = vand.u32 %v1035, 4294901760
    %v2417 = vsub.f32 %v1035, %v2416
    %v2418 = vand.u32 %v2417, 4294901760
    %v2419 = vsub.f32 %v2417, %v2418
    %v2420 = vand.u32 %v2419, 4294901760
    %2421 = vmatpush1.msra.mxu0 %v2420
    %2422 = vmatprep.subr.mxu0 0.0
    %v2423 = vand.u32 %v1036, 4294901760
    %v2424 = vsub.f32 %v1036, %v2423
    %v2425 = vand.u32 %v2424, 4294901760
    %v2426 = vsub.f32 %v2424, %v2425
    %v2427 = vand.u32 %v2426, 4294901760
    %2428 = vmatpush1.msra.mxu0 %v2427
    %2429 = vmatprep.subr.mxu0 0.0
    %v2430 = vand.u32 %v1037, 4294901760
    %v2431 = vsub.f32 %v1037, %v2430
    %v2432 = vand.u32 %v2431, 4294901760
    %v2433 = vsub.f32 %v2431, %v2432
    %v2434 = vand.u32 %v2433, 4294901760
    %2435 = vmatpush1.msra.mxu0 %v2434
    %2436 = vmatprep.subr.mxu0 0.0
    %v2437 = vand.u32 %v1038, 4294901760
    %v2438 = vsub.f32 %v1038, %v2437
    %v2439 = vand.u32 %v2438, 4294901760
    %v2440 = vsub.f32 %v2438, %v2439
    %v2441 = vand.u32 %v2440, 4294901760
    %2442 = vmatpush1.msra.mxu0 %v2441
    %2443 = vmatprep.subr.mxu0 0.0
    %v2444 = vand.u32 %v1039, 4294901760
    %v2445 = vsub.f32 %v1039, %v2444
    %v2446 = vand.u32 %v2445, 4294901760
    %v2447 = vsub.f32 %v2445, %v2446
    %v2448 = vand.u32 %v2447, 4294901760
    %2449 = vmatpush1.msra.mxu0 %v2448
    %2450 = vmatprep.subr.mxu0 0.0
    %v2451 = vand.u32 %v1040, 4294901760
    %v2452 = vsub.f32 %v1040, %v2451
    %v2453 = vand.u32 %v2452, 4294901760
    %v2454 = vsub.f32 %v2452, %v2453
    %v2455 = vand.u32 %v2454, 4294901760
    %2456 = vmatpush1.msra.mxu0 %v2455
    %2457 = vmatprep.subr.mxu0 0.0
    %v2458 = vand.u32 %v1041, 4294901760
    %v2459 = vsub.f32 %v1041, %v2458
    %v2460 = vand.u32 %v2459, 4294901760
    %v2461 = vsub.f32 %v2459, %v2460
    %v2462 = vand.u32 %v2461, 4294901760
    %2463 = vmatpush1.msra.mxu0 %v2462
    %2464 = vmatprep.subr.mxu0 0.0
    %v2465 = vand.u32 %v1042, 4294901760
    %v2466 = vsub.f32 %v1042, %v2465
    %v2467 = vand.u32 %v2466, 4294901760
    %v2468 = vsub.f32 %v2466, %v2467
    %v2469 = vand.u32 %v2468, 4294901760
    %2470 = vmatpush1.msra.mxu0 %v2469
    %2471 = vmatprep.subr.mxu0 0.0
    %v2472 = vand.u32 %v1043, 4294901760
    %v2473 = vsub.f32 %v1043, %v2472
    %v2474 = vand.u32 %v2473, 4294901760
    %v2475 = vsub.f32 %v2473, %v2474
    %v2476 = vand.u32 %v2475, 4294901760
    %2477 = vmatpush1.msra.mxu0 %v2476
    %2478 = vmatprep.subr.mxu0 0.0
    %v2479 = vand.u32 %v1044, 4294901760
    %v2480 = vsub.f32 %v1044, %v2479
    %v2481 = vand.u32 %v2480, 4294901760
    %v2482 = vsub.f32 %v2480, %v2481
    %v2483 = vand.u32 %v2482, 4294901760
    %2484 = vmatpush1.msra.mxu0 %v2483
    %2485 = vmatprep.subr.mxu0 0.0
    %v2486 = vand.u32 %v1045, 4294901760
    %v2487 = vsub.f32 %v1045, %v2486
    %v2488 = vand.u32 %v2487, 4294901760
    %v2489 = vsub.f32 %v2487, %v2488
    %v2490 = vand.u32 %v2489, 4294901760
    %2491 = vmatpush1.msra.mxu0 %v2490
    %2492 = vmatprep.subr.mxu0 0.0
    %v2493 = vand.u32 %v1046, 4294901760
    %v2494 = vsub.f32 %v1046, %v2493
    %v2495 = vand.u32 %v2494, 4294901760
    %v2496 = vsub.f32 %v2494, %v2495
    %v2497 = vand.u32 %v2496, 4294901760
    %2498 = vmatpush1.msra.mxu0 %v2497
    %2499 = vmatprep.subr.mxu0 0.0
    %v2500 = vand.u32 %v1047, 4294901760
    %v2501 = vsub.f32 %v1047, %v2500
    %v2502 = vand.u32 %v2501, 4294901760
    %v2503 = vsub.f32 %v2501, %v2502
    %v2504 = vand.u32 %v2503, 4294901760
    %2505 = vmatpush1.msra.mxu0 %v2504
    %2506 = vmatprep.subr.mxu0 0.0
    %v2507 = vand.u32 %v1048, 4294901760
    %v2508 = vsub.f32 %v1048, %v2507
    %v2509 = vand.u32 %v2508, 4294901760
    %v2510 = vsub.f32 %v2508, %v2509
    %v2511 = vand.u32 %v2510, 4294901760
    %2512 = vmatpush1.msra.mxu0 %v2511
    %2513 = vmatprep.subr.mxu0 0.0
    %v2514 = vand.u32 %v1049, 4294901760
    %v2515 = vsub.f32 %v1049, %v2514
    %v2516 = vand.u32 %v2515, 4294901760
    %v2517 = vsub.f32 %v2515, %v2516
    %v2518 = vand.u32 %v2517, 4294901760
    %2519 = vmatpush1.msra.mxu0 %v2518
    %2520 = vmatprep.subr.mxu0 0.0
    %v2521 = vand.u32 %v1050, 4294901760
    %v2522 = vsub.f32 %v1050, %v2521
    %v2523 = vand.u32 %v2522, 4294901760
    %v2524 = vsub.f32 %v2522, %v2523
    %v2525 = vand.u32 %v2524, 4294901760
    %2526 = vmatpush1.msra.mxu0 %v2525
    %2527 = vmatprep.subr.mxu0 0.0
    %2528 = vmatpush1.msra.mxu0 0.0
    %2529 = vmatprep.subr.mxu0 0.0
    %2530 = vmatpush1.msra.mxu0 0.0
    %2531 = vmatprep.subr.mxu0 0.0
    %2532 = vmatpush1.msra.mxu0 0.0
    %2533 = vmatprep.subr.mxu0 0.0
    %2534 = vmatpush1.msra.mxu0 0.0
    %2535 = vmatprep.subr.mxu0 0.0
    %2536 = vmatpush1.msra.mxu0 0.0
    %2537 = vmatprep.subr.mxu0 0.0
    %2538 = vmatpush1.msra.mxu0 0.0
    %2539 = vmatprep.subr.mxu0 0.0
    %2540 = vmatpush1.msra.mxu0 0.0
    %2541 = vmatprep.subr.mxu0 0.0
    %2542 = vmatpush1.msra.mxu0 0.0
    %2543 = vmatprep.subr.mxu0 0.0
    %2544 = vmatpush1.msra.mxu0 0.0
    %2545 = vmatprep.subr.mxu0 0.0
    %2546 = vmatpush1.msra.mxu0 0.0
    %2547 = vmatprep.subr.mxu0 0.0
    %2548 = vmatpush1.msra.mxu0 0.0
    %2549 = vmatprep.subr.mxu0 0.0
    %2550 = vmatpush1.msra.mxu0 0.0
    %2551 = vmatprep.subr.mxu0 0.0
    %2552 = vmatpush1.msra.mxu0 0.0
    %2553 = vmatprep.subr.mxu0 0.0
    %2554 = vmatpush1.msra.mxu0 0.0
    %2555 = vmatprep.subr.mxu0 0.0
    %2556 = vmatpush1.msra.mxu0 0.0
    %2557 = vmatprep.subr.mxu0 0.0
    %2558 = vmatpush1.msra.mxu0 0.0
    %2559 = vmatprep.mubr.f32.mxu0 0.0
    %v2560 = vand.u32 %v2323, 4294901760
    %2561 = vmatmul.mubr.f32.gmra.mrb[0].mxu0 %v2560
    %v2562 = vpop.f32.mrb[0].mxu0
    %v2563 = vadd.f32 %v2412, %v2562
    %v2564 = vpop.f32.mrb[0].mxu0
    %2565 = vdwg.mxu0
    %2566 = vmatprep.subr.mxu0 0.0
    %v2567 = vand.u32 %v1035, 4294901760
    %v2568 = vsub.f32 %v1035, %v2567
    %2569 = vmatpush1.msra.mxu0 %v2568
    %2570 = vmatprep.subr.mxu0 0.0
    %v2571 = vand.u32 %v1036, 4294901760
    %v2572 = vsub.f32 %v1036, %v2571
    %2573 = vmatpush1.msra.mxu0 %v2572
    %2574 = vmatprep.subr.mxu0 0.0
    %v2575 = vand.u32 %v1037, 4294901760
    %v2576 = vsub.f32 %v1037, %v2575
    %2577 = vmatpush1.msra.mxu0 %v2576
    %2578 = vmatprep.subr.mxu0 0.0
    %v2579 = vand.u32 %v1038, 4294901760
    %v2580 = vsub.f32 %v1038, %v2579
    %2581 = vmatpush1.msra.mxu0 %v2580
    %2582 = vmatprep.subr.mxu0 0.0
    %v2583 = vand.u32 %v1039, 4294901760
    %v2584 = vsub.f32 %v1039, %v2583
    %2585 = vmatpush1.msra.mxu0 %v2584
    %2586 = vmatprep.subr.mxu0 0.0
    %v2587 = vand.u32 %v1040, 4294901760
    %v2588 = vsub.f32 %v1040, %v2587
    %2589 = vmatpush1.msra.mxu0 %v2588
    %2590 = vmatprep.subr.mxu0 0.0
    %v2591 = vand.u32 %v1041, 4294901760
    %v2592 = vsub.f32 %v1041, %v2591
    %2593 = vmatpush1.msra.mxu0 %v2592
    %2594 = vmatprep.subr.mxu0 0.0
    %v2595 = vand.u32 %v1042, 4294901760
    %v2596 = vsub.f32 %v1042, %v2595
    %2597 = vmatpush1.msra.mxu0 %v2596
    %2598 = vmatprep.subr.mxu0 0.0
    %v2599 = vand.u32 %v1043, 4294901760
    %v2600 = vsub.f32 %v1043, %v2599
    %2601 = vmatpush1.msra.mxu0 %v2600
    %2602 = vmatprep.subr.mxu0 0.0
    %v2603 = vand.u32 %v1044, 4294901760
    %v2604 = vsub.f32 %v1044, %v2603
    %2605 = vmatpush1.msra.mxu0 %v2604
    %2606 = vmatprep.subr.mxu0 0.0
    %v2607 = vand.u32 %v1045, 4294901760
    %v2608 = vsub.f32 %v1045, %v2607
    %2609 = vmatpush1.msra.mxu0 %v2608
    %2610 = vmatprep.subr.mxu0 0.0
    %v2611 = vand.u32 %v1046, 4294901760
    %v2612 = vsub.f32 %v1046, %v2611
    %2613 = vmatpush1.msra.mxu0 %v2612
    %2614 = vmatprep.subr.mxu0 0.0
    %v2615 = vand.u32 %v1047, 4294901760
    %v2616 = vsub.f32 %v1047, %v2615
    %2617 = vmatpush1.msra.mxu0 %v2616
    %2618 = vmatprep.subr.mxu0 0.0
    %v2619 = vand.u32 %v1048, 4294901760
    %v2620 = vsub.f32 %v1048, %v2619
    %2621 = vmatpush1.msra.mxu0 %v2620
    %2622 = vmatprep.subr.mxu0 0.0
    %v2623 = vand.u32 %v1049, 4294901760
    %v2624 = vsub.f32 %v1049, %v2623
    %2625 = vmatpush1.msra.mxu0 %v2624
    %2626 = vmatprep.subr.mxu0 0.0
    %v2627 = vand.u32 %v1050, 4294901760
    %v2628 = vsub.f32 %v1050, %v2627
    %2629 = vmatpush1.msra.mxu0 %v2628
    %2630 = vmatprep.subr.mxu0 0.0
    %2631 = vmatpush1.msra.mxu0 0.0
    %2632 = vmatprep.subr.mxu0 0.0
    %2633 = vmatpush1.msra.mxu0 0.0
    %2634 = vmatprep.subr.mxu0 0.0
    %2635 = vmatpush1.msra.mxu0 0.0
    %2636 = vmatprep.subr.mxu0 0.0
    %2637 = vmatpush1.msra.mxu0 0.0
    %2638 = vmatprep.subr.mxu0 0.0
    %2639 = vmatpush1.msra.mxu0 0.0
    %2640 = vmatprep.subr.mxu0 0.0
    %2641 = vmatpush1.msra.mxu0 0.0
    %2642 = vmatprep.subr.mxu0 0.0
    %2643 = vmatpush1.msra.mxu0 0.0
    %2644 = vmatprep.subr.mxu0 0.0
    %2645 = vmatpush1.msra.mxu0 0.0
    %2646 = vmatprep.subr.mxu0 0.0
    %2647 = vmatpush1.msra.mxu0 0.0
    %2648 = vmatprep.subr.mxu0 0.0
    %2649 = vmatpush1.msra.mxu0 0.0
    %2650 = vmatprep.subr.mxu0 0.0
    %2651 = vmatpush1.msra.mxu0 0.0
    %2652 = vmatprep.subr.mxu0 0.0
    %2653 = vmatpush1.msra.mxu0 0.0
    %2654 = vmatprep.subr.mxu0 0.0
    %2655 = vmatpush1.msra.mxu0 0.0
    %2656 = vmatprep.subr.mxu0 0.0
    %2657 = vmatpush1.msra.mxu0 0.0
    %2658 = vmatprep.subr.mxu0 0.0
    %2659 = vmatpush1.msra.mxu0 0.0
    %2660 = vmatprep.subr.mxu0 0.0
    %2661 = vmatpush1.msra.mxu0 0.0
    %2662 = vmatprep.mubr.f32.mxu0 0.0
    %v2663 = vand.u32 %v2323, 4294901760
    %v2664 = vsub.f32 %v2323, %v2663
    %2665 = vmatmul.mubr.f32.gmra.mrb[0].mxu0 %v2664
    %v2666 = vpop.f32.mrb[0].mxu0
    %v2667 = vadd.f32 %v2563, %v2666
    %v2668 = vpop.f32.mrb[0].mxu0
    %2669 = vdwg.mxu0
    %2670 = vmatprep.subr.mxu0 0.0
    %v2671 = vand.u32 %v1035, 4294901760
    %2672 = vmatpush1.msra.mxu0 %v2671
    %2673 = vmatprep.subr.mxu0 0.0
    %v2674 = vand.u32 %v1036, 4294901760
    %2675 = vmatpush1.msra.mxu0 %v2674
    %2676 = vmatprep.subr.mxu0 0.0
    %v2677 = vand.u32 %v1037, 4294901760
    %2678 = vmatpush1.msra.mxu0 %v2677
    %2679 = vmatprep.subr.mxu0 0.0
    %v2680 = vand.u32 %v1038, 4294901760
    %2681 = vmatpush1.msra.mxu0 %v2680
    %2682 = vmatprep.subr.mxu0 0.0
    %v2683 = vand.u32 %v1039, 4294901760
    %2684 = vmatpush1.msra.mxu0 %v2683
    %2685 = vmatprep.subr.mxu0 0.0
    %v2686 = vand.u32 %v1040, 4294901760
    %2687 = vmatpush1.msra.mxu0 %v2686
    %2688 = vmatprep.subr.mxu0 0.0
    %v2689 = vand.u32 %v1041, 4294901760
    %2690 = vmatpush1.msra.mxu0 %v2689
    %2691 = vmatprep.subr.mxu0 0.0
    %v2692 = vand.u32 %v1042, 4294901760
    %2693 = vmatpush1.msra.mxu0 %v2692
    %2694 = vmatprep.subr.mxu0 0.0
    %v2695 = vand.u32 %v1043, 4294901760
    %2696 = vmatpush1.msra.mxu0 %v2695
    %2697 = vmatprep.subr.mxu0 0.0
    %v2698 = vand.u32 %v1044, 4294901760
    %2699 = vmatpush1.msra.mxu0 %v2698
    %2700 = vmatprep.subr.mxu0 0.0
    %v2701 = vand.u32 %v1045, 4294901760
    %2702 = vmatpush1.msra.mxu0 %v2701
    %2703 = vmatprep.subr.mxu0 0.0
    %v2704 = vand.u32 %v1046, 4294901760
    %2705 = vmatpush1.msra.mxu0 %v2704
    %2706 = vmatprep.subr.mxu0 0.0
    %v2707 = vand.u32 %v1047, 4294901760
    %2708 = vmatpush1.msra.mxu0 %v2707
    %2709 = vmatprep.subr.mxu0 0.0
    %v2710 = vand.u32 %v1048, 4294901760
    %2711 = vmatpush1.msra.mxu0 %v2710
    %2712 = vmatprep.subr.mxu0 0.0
    %v2713 = vand.u32 %v1049, 4294901760
    %2714 = vmatpush1.msra.mxu0 %v2713
    %2715 = vmatprep.subr.mxu0 0.0
    %v2716 = vand.u32 %v1050, 4294901760
    %2717 = vmatpush1.msra.mxu0 %v2716
    %2718 = vmatprep.subr.mxu0 0.0
    %2719 = vmatpush1.msra.mxu0 0.0
    %2720 = vmatprep.subr.mxu0 0.0
    %2721 = vmatpush1.msra.mxu0 0.0
    %2722 = vmatprep.subr.mxu0 0.0
    %2723 = vmatpush1.msra.mxu0 0.0
    %2724 = vmatprep.subr.mxu0 0.0
    %2725 = vmatpush1.msra.mxu0 0.0
    %2726 = vmatprep.subr.mxu0 0.0
    %2727 = vmatpush1.msra.mxu0 0.0
    %2728 = vmatprep.subr.mxu0 0.0
    %2729 = vmatpush1.msra.mxu0 0.0
    %2730 = vmatprep.subr.mxu0 0.0
    %2731 = vmatpush1.msra.mxu0 0.0
    %2732 = vmatprep.subr.mxu0 0.0
    %2733 = vmatpush1.msra.mxu0 0.0
    %2734 = vmatprep.subr.mxu0 0.0
    %2735 = vmatpush1.msra.mxu0 0.0
    %2736 = vmatprep.subr.mxu0 0.0
    %2737 = vmatpush1.msra.mxu0 0.0
    %2738 = vmatprep.subr.mxu0 0.0
    %2739 = vmatpush1.msra.mxu0 0.0
    %2740 = vmatprep.subr.mxu0 0.0
    %2741 = vmatpush1.msra.mxu0 0.0
    %2742 = vmatprep.subr.mxu0 0.0
    %2743 = vmatpush1.msra.mxu0 0.0
    %2744 = vmatprep.subr.mxu0 0.0
    %2745 = vmatpush1.msra.mxu0 0.0
    %2746 = vmatprep.subr.mxu0 0.0
    %2747 = vmatpush1.msra.mxu0 0.0
    %2748 = vmatprep.subr.mxu0 0.0
    %2749 = vmatpush1.msra.mxu0 0.0
    %2750 = vmatprep.mubr.f32.mxu0 0.0
    %v2751 = vand.u32 %v2323, 4294901760
    %v2752 = vsub.f32 %v2323, %v2751
    %v2753 = vand.u32 %v2752, 4294901760
    %2754 = vmatmul.mubr.f32.gmra.mrb[0].mxu0 %v2753
    %v2755 = vpop.f32.mrb[0].mxu0
    %v2756 = vadd.f32 %v2667, %v2755
    %v2757 = vpop.f32.mrb[0].mxu0
    %2758 = vdwg.mxu0
    %2759 = vmatprep.subr.mxu0 0.0
    %v2760 = vand.u32 %v1035, 4294901760
    %v2761 = vsub.f32 %v1035, %v2760
    %v2762 = vand.u32 %v2761, 4294901760
    %2763 = vmatpush1.msra.mxu0 %v2762
    %2764 = vmatprep.subr.mxu0 0.0
    %v2765 = vand.u32 %v1036, 4294901760
    %v2766 = vsub.f32 %v1036, %v2765
    %v2767 = vand.u32 %v2766, 4294901760
    %2768 = vmatpush1.msra.mxu0 %v2767
    %2769 = vmatprep.subr.mxu0 0.0
    %v2770 = vand.u32 %v1037, 4294901760
    %v2771 = vsub.f32 %v1037, %v2770
    %v2772 = vand.u32 %v2771, 4294901760
    %2773 = vmatpush1.msra.mxu0 %v2772
    %2774 = vmatprep.subr.mxu0 0.0
    %v2775 = vand.u32 %v1038, 4294901760
    %v2776 = vsub.f32 %v1038, %v2775
    %v2777 = vand.u32 %v2776, 4294901760
    %2778 = vmatpush1.msra.mxu0 %v2777
    %2779 = vmatprep.subr.mxu0 0.0
    %v2780 = vand.u32 %v1039, 4294901760
    %v2781 = vsub.f32 %v1039, %v2780
    %v2782 = vand.u32 %v2781, 4294901760
    %2783 = vmatpush1.msra.mxu0 %v2782
    %2784 = vmatprep.subr.mxu0 0.0
    %v2785 = vand.u32 %v1040, 4294901760
    %v2786 = vsub.f32 %v1040, %v2785
    %v2787 = vand.u32 %v2786, 4294901760
    %2788 = vmatpush1.msra.mxu0 %v2787
    %2789 = vmatprep.subr.mxu0 0.0
    %v2790 = vand.u32 %v1041, 4294901760
    %v2791 = vsub.f32 %v1041, %v2790
    %v2792 = vand.u32 %v2791, 4294901760
    %2793 = vmatpush1.msra.mxu0 %v2792
    %2794 = vmatprep.subr.mxu0 0.0
    %v2795 = vand.u32 %v1042, 4294901760
    %v2796 = vsub.f32 %v1042, %v2795
    %v2797 = vand.u32 %v2796, 4294901760
    %2798 = vmatpush1.msra.mxu0 %v2797
    %2799 = vmatprep.subr.mxu0 0.0
    %v2800 = vand.u32 %v1043, 4294901760
    %v2801 = vsub.f32 %v1043, %v2800
    %v2802 = vand.u32 %v2801, 4294901760
    %2803 = vmatpush1.msra.mxu0 %v2802
    %2804 = vmatprep.subr.mxu0 0.0
    %v2805 = vand.u32 %v1044, 4294901760
    %v2806 = vsub.f32 %v1044, %v2805
    %v2807 = vand.u32 %v2806, 4294901760
    %2808 = vmatpush1.msra.mxu0 %v2807
    %2809 = vmatprep.subr.mxu0 0.0
    %v2810 = vand.u32 %v1045, 4294901760
    %v2811 = vsub.f32 %v1045, %v2810
    %v2812 = vand.u32 %v2811, 4294901760
    %2813 = vmatpush1.msra.mxu0 %v2812
    %2814 = vmatprep.subr.mxu0 0.0
    %v2815 = vand.u32 %v1046, 4294901760
    %v2816 = vsub.f32 %v1046, %v2815
    %v2817 = vand.u32 %v2816, 4294901760
    %2818 = vmatpush1.msra.mxu0 %v2817
    %2819 = vmatprep.subr.mxu0 0.0
    %v2820 = vand.u32 %v1047, 4294901760
    %v2821 = vsub.f32 %v1047, %v2820
    %v2822 = vand.u32 %v2821, 4294901760
    %2823 = vmatpush1.msra.mxu0 %v2822
    %2824 = vmatprep.subr.mxu0 0.0
    %v2825 = vand.u32 %v1048, 4294901760
    %v2826 = vsub.f32 %v1048, %v2825
    %v2827 = vand.u32 %v2826, 4294901760
    %2828 = vmatpush1.msra.mxu0 %v2827
    %2829 = vmatprep.subr.mxu0 0.0
    %v2830 = vand.u32 %v1049, 4294901760
    %v2831 = vsub.f32 %v1049, %v2830
    %v2832 = vand.u32 %v2831, 4294901760
    %2833 = vmatpush1.msra.mxu0 %v2832
    %2834 = vmatprep.subr.mxu0 0.0
    %v2835 = vand.u32 %v1050, 4294901760
    %v2836 = vsub.f32 %v1050, %v2835
    %v2837 = vand.u32 %v2836, 4294901760
    %2838 = vmatpush1.msra.mxu0 %v2837
    %2839 = vmatprep.subr.mxu0 0.0
    %2840 = vmatpush1.msra.mxu0 0.0
    %2841 = vmatprep.subr.mxu0 0.0
    %2842 = vmatpush1.msra.mxu0 0.0
    %2843 = vmatprep.subr.mxu0 0.0
    %2844 = vmatpush1.msra.mxu0 0.0
    %2845 = vmatprep.subr.mxu0 0.0
    %2846 = vmatpush1.msra.mxu0 0.0
    %2847 = vmatprep.subr.mxu0 0.0
    %2848 = vmatpush1.msra.mxu0 0.0
    %2849 = vmatprep.subr.mxu0 0.0
    %2850 = vmatpush1.msra.mxu0 0.0
    %2851 = vmatprep.subr.mxu0 0.0
    %2852 = vmatpush1.msra.mxu0 0.0
    %2853 = vmatprep.subr.mxu0 0.0
    %2854 = vmatpush1.msra.mxu0 0.0
    %2855 = vmatprep.subr.mxu0 0.0
    %2856 = vmatpush1.msra.mxu0 0.0
    %2857 = vmatprep.subr.mxu0 0.0
    %2858 = vmatpush1.msra.mxu0 0.0
    %2859 = vmatprep.subr.mxu0 0.0
    %2860 = vmatpush1.msra.mxu0 0.0
    %2861 = vmatprep.subr.mxu0 0.0
    %2862 = vmatpush1.msra.mxu0 0.0
    %2863 = vmatprep.subr.mxu0 0.0
    %2864 = vmatpush1.msra.mxu0 0.0
    %2865 = vmatprep.subr.mxu0 0.0
    %2866 = vmatpush1.msra.mxu0 0.0
    %2867 = vmatprep.subr.mxu0 0.0
    %2868 = vmatpush1.msra.mxu0 0.0
    %2869 = vmatprep.subr.mxu0 0.0
    %2870 = vmatpush1.msra.mxu0 0.0
    %2871 = vmatprep.mubr.f32.mxu0 0.0
    %v2872 = vand.u32 %v2323, 4294901760
    %2873 = vmatmul.mubr.f32.gmra.mrb[0].mxu0 %v2872
    %v2874 = vpop.f32.mrb[0].mxu0
    %v2875 = vadd.f32 %v2756, %v2874
    %v2876 = vpop.f32.mrb[0].mxu0
    %2877 = vdwg.mxu0
    %2878 = vmatprep.subr.mxu0 0.0
    %v2879 = vand.u32 %v1035, 4294901760
    %2880 = vmatpush1.msra.mxu0 %v2879
    %2881 = vmatprep.subr.mxu0 0.0
    %v2882 = vand.u32 %v1036, 4294901760
    %2883 = vmatpush1.msra.mxu0 %v2882
    %2884 = vmatprep.subr.mxu0 0.0
    %v2885 = vand.u32 %v1037, 4294901760
    %2886 = vmatpush1.msra.mxu0 %v2885
    %2887 = vmatprep.subr.mxu0 0.0
    %v2888 = vand.u32 %v1038, 4294901760
    %2889 = vmatpush1.msra.mxu0 %v2888
    %2890 = vmatprep.subr.mxu0 0.0
    %v2891 = vand.u32 %v1039, 4294901760
    %2892 = vmatpush1.msra.mxu0 %v2891
    %2893 = vmatprep.subr.mxu0 0.0
    %v2894 = vand.u32 %v1040, 4294901760
    %2895 = vmatpush1.msra.mxu0 %v2894
    %2896 = vmatprep.subr.mxu0 0.0
    %v2897 = vand.u32 %v1041, 4294901760
    %2898 = vmatpush1.msra.mxu0 %v2897
    %2899 = vmatprep.subr.mxu0 0.0
    %v2900 = vand.u32 %v1042, 4294901760
    %2901 = vmatpush1.msra.mxu0 %v2900
    %2902 = vmatprep.subr.mxu0 0.0
    %v2903 = vand.u32 %v1043, 4294901760
    %2904 = vmatpush1.msra.mxu0 %v2903
    %2905 = vmatprep.subr.mxu0 0.0
    %v2906 = vand.u32 %v1044, 4294901760
    %2907 = vmatpush1.msra.mxu0 %v2906
    %2908 = vmatprep.subr.mxu0 0.0
    %v2909 = vand.u32 %v1045, 4294901760
    %2910 = vmatpush1.msra.mxu0 %v2909
    %2911 = vmatprep.subr.mxu0 0.0
    %v2912 = vand.u32 %v1046, 4294901760
    %2913 = vmatpush1.msra.mxu0 %v2912
    %2914 = vmatprep.subr.mxu0 0.0
    %v2915 = vand.u32 %v1047, 4294901760
    %2916 = vmatpush1.msra.mxu0 %v2915
    %2917 = vmatprep.subr.mxu0 0.0
    %v2918 = vand.u32 %v1048, 4294901760
    %2919 = vmatpush1.msra.mxu0 %v2918
    %2920 = vmatprep.subr.mxu0 0.0
    %v2921 = vand.u32 %v1049, 4294901760
    %2922 = vmatpush1.msra.mxu0 %v2921
    %2923 = vmatprep.subr.mxu0 0.0
    %v2924 = vand.u32 %v1050, 4294901760
    %2925 = vmatpush1.msra.mxu0 %v2924
    %2926 = vmatprep.subr.mxu0 0.0
    %2927 = vmatpush1.msra.mxu0 0.0
    %2928 = vmatprep.subr.mxu0 0.0
    %2929 = vmatpush1.msra.mxu0 0.0
    %2930 = vmatprep.subr.mxu0 0.0
    %2931 = vmatpush1.msra.mxu0 0.0
    %2932 = vmatprep.subr.mxu0 0.0
    %2933 = vmatpush1.msra.mxu0 0.0
    %2934 = vmatprep.subr.mxu0 0.0
    %2935 = vmatpush1.msra.mxu0 0.0
    %2936 = vmatprep.subr.mxu0 0.0
    %2937 = vmatpush1.msra.mxu0 0.0
    %2938 = vmatprep.subr.mxu0 0.0
    %2939 = vmatpush1.msra.mxu0 0.0
    %2940 = vmatprep.subr.mxu0 0.0
    %2941 = vmatpush1.msra.mxu0 0.0
    %2942 = vmatprep.subr.mxu0 0.0
    %2943 = vmatpush1.msra.mxu0 0.0
    %2944 = vmatprep.subr.mxu0 0.0
    %2945 = vmatpush1.msra.mxu0 0.0
    %2946 = vmatprep.subr.mxu0 0.0
    %2947 = vmatpush1.msra.mxu0 0.0
    %2948 = vmatprep.subr.mxu0 0.0
    %2949 = vmatpush1.msra.mxu0 0.0
    %2950 = vmatprep.subr.mxu0 0.0
    %2951 = vmatpush1.msra.mxu0 0.0
    %2952 = vmatprep.subr.mxu0 0.0
    %2953 = vmatpush1.msra.mxu0 0.0
    %2954 = vmatprep.subr.mxu0 0.0
    %2955 = vmatpush1.msra.mxu0 0.0
    %2956 = vmatprep.subr.mxu0 0.0
    %2957 = vmatpush1.msra.mxu0 0.0
    %2958 = vmatprep.mubr.f32.mxu0 0.0
    %v2959 = vand.u32 %v2323, 4294901760
    %2960 = vmatmul.mubr.f32.gmra.mrb[0].mxu0 %v2959
    %v2961 = vpop.f32.mrb[0].mxu0
    %v2962 = vadd.f32 %v2875, %v2961
    %v2963 = vpop.f32.mrb[0].mxu0
    %2964 = vdwg.mxu0
    %v2965 = vadd.f32 %v1002, %v2962
    %v2966 = vtanh.pop %v2965
    %2967 = vmatprep.subr.mxu0 0.0
    %v2968 = vand.u32 %v1035, 4294901760
    %2969 = vmatpush1.msra.mxu0 %v2968
    %2970 = vmatprep.subr.mxu0 0.0
    %v2971 = vand.u32 %v1036, 4294901760
    %2972 = vmatpush1.msra.mxu0 %v2971
    %2973 = vmatprep.subr.mxu0 0.0
    %v2974 = vand.u32 %v1037, 4294901760
    %2975 = vmatpush1.msra.mxu0 %v2974
    %2976 = vmatprep.subr.mxu0 0.0
    %v2977 = vand.u32 %v1038, 4294901760
    %2978 = vmatpush1.msra.mxu0 %v2977
    %2979 = vmatprep.subr.mxu0 0.0
    %v2980 = vand.u32 %v1039, 4294901760
    %2981 = vmatpush1.msra.mxu0 %v2980
    %2982 = vmatprep.subr.mxu0 0.0
    %v2983 = vand.u32 %v1040, 4294901760
    %2984 = vmatpush1.msra.mxu0 %v2983
    %2985 = vmatprep.subr.mxu0 0.0
    %v2986 = vand.u32 %v1041, 4294901760
    %2987 = vmatpush1.msra.mxu0 %v2986
    %2988 = vmatprep.subr.mxu0 0.0
    %v2989 = vand.u32 %v1042, 4294901760
    %2990 = vmatpush1.msra.mxu0 %v2989
    %2991 = vmatprep.subr.mxu0 0.0
    %v2992 = vand.u32 %v1043, 4294901760
    %2993 = vmatpush1.msra.mxu0 %v2992
    %2994 = vmatprep.subr.mxu0 0.0
    %v2995 = vand.u32 %v1044, 4294901760
    %2996 = vmatpush1.msra.mxu0 %v2995
    %2997 = vmatprep.subr.mxu0 0.0
    %v2998 = vand.u32 %v1045, 4294901760
    %2999 = vmatpush1.msra.mxu0 %v2998
    %3000 = vmatprep.subr.mxu0 0.0
    %v3001 = vand.u32 %v1046, 4294901760
    %3002 = vmatpush1.msra.mxu0 %v3001
    %3003 = vmatprep.subr.mxu0 0.0
    %v3004 = vand.u32 %v1047, 4294901760
    %3005 = vmatpush1.msra.mxu0 %v3004
    %3006 = vmatprep.subr.mxu0 0.0
    %v3007 = vand.u32 %v1048, 4294901760
    %3008 = vmatpush1.msra.mxu0 %v3007
    %3009 = vmatprep.subr.mxu0 0.0
    %v3010 = vand.u32 %v1049, 4294901760
    %3011 = vmatpush1.msra.mxu0 %v3010
    %3012 = vmatprep.subr.mxu0 0.0
    %v3013 = vand.u32 %v1050, 4294901760
    %3014 = vmatpush1.msra.mxu0 %v3013
    %3015 = vmatprep.subr.mxu0 0.0
    %3016 = vmatpush1.msra.mxu0 0.0
    %3017 = vmatprep.subr.mxu0 0.0
    %3018 = vmatpush1.msra.mxu0 0.0
    %3019 = vmatprep.subr.mxu0 0.0
    %3020 = vmatpush1.msra.mxu0 0.0
    %3021 = vmatprep.subr.mxu0 0.0
    %3022 = vmatpush1.msra.mxu0 0.0
    %3023 = vmatprep.subr.mxu0 0.0
    %3024 = vmatpush1.msra.mxu0 0.0
    %3025 = vmatprep.subr.mxu0 0.0
    %3026 = vmatpush1.msra.mxu0 0.0
    %3027 = vmatprep.subr.mxu0 0.0
    %3028 = vmatpush1.msra.mxu0 0.0
    %3029 = vmatprep.subr.mxu0 0.0
    %3030 = vmatpush1.msra.mxu0 0.0
    %3031 = vmatprep.subr.mxu0 0.0
    %3032 = vmatpush1.msra.mxu0 0.0
    %3033 = vmatprep.subr.mxu0 0.0
    %3034 = vmatpush1.msra.mxu0 0.0
    %3035 = vmatprep.subr.mxu0 0.0
    %3036 = vmatpush1.msra.mxu0 0.0
    %3037 = vmatprep.subr.mxu0 0.0
    %3038 = vmatpush1.msra.mxu0 0.0
    %3039 = vmatprep.subr.mxu0 0.0
    %3040 = vmatpush1.msra.mxu0 0.0
    %3041 = vmatprep.subr.mxu0 0.0
    %3042 = vmatpush1.msra.mxu0 0.0
    %3043 = vmatprep.subr.mxu0 0.0
    %3044 = vmatpush1.msra.mxu0 0.0
    %3045 = vmatprep.subr.mxu0 0.0
    %3046 = vmatpush1.msra.mxu0 0.0
    %3047 = vmatprep.mubr.f32.mxu0 0.0
    %v3048 = vand.u32 %v2966, 4294901760
    %v3049 = vsub.f32 %v2966, %v3048
    %v3050 = vand.u32 %v3049, 4294901760
    %v3051 = vsub.f32 %v3049, %v3050
    %v3052 = vand.u32 %v3051, 4294901760
    %3053 = vmatmul.mubr.f32.gmra.mrb[0].mxu0 %v3052
    %v3054 = vpop.f32.mrb[0].mxu0
    %v3055 = vadd.f32 0.0, %v3054
    %v3056 = vpop.f32.mrb[0].mxu0
    %3057 = vdwg.mxu0
    %3058 = vmatprep.subr.mxu0 0.0
    %v3059 = vand.u32 %v1035, 4294901760
    %v3060 = vsub.f32 %v1035, %v3059
    %v3061 = vand.u32 %v3060, 4294901760
    %v3062 = vsub.f32 %v3060, %v3061
    %v3063 = vand.u32 %v3062, 4294901760
    %3064 = vmatpush1.msra.mxu0 %v3063
    %3065 = vmatprep.subr.mxu0 0.0
    %v3066 = vand.u32 %v1036, 4294901760
    %v3067 = vsub.f32 %v1036, %v3066
    %v3068 = vand.u32 %v3067, 4294901760
    %v3069 = vsub.f32 %v3067, %v3068
    %v3070 = vand.u32 %v3069, 4294901760
    %3071 = vmatpush1.msra.mxu0 %v3070
    %3072 = vmatprep.subr.mxu0 0.0
    %v3073 = vand.u32 %v1037, 4294901760
    %v3074 = vsub.f32 %v1037, %v3073
    %v3075 = vand.u32 %v3074, 4294901760
    %v3076 = vsub.f32 %v3074, %v3075
    %v3077 = vand.u32 %v3076, 4294901760
    %3078 = vmatpush1.msra.mxu0 %v3077
    %3079 = vmatprep.subr.mxu0 0.0
    %v3080 = vand.u32 %v1038, 4294901760
    %v3081 = vsub.f32 %v1038, %v3080
    %v3082 = vand.u32 %v3081, 4294901760
    %v3083 = vsub.f32 %v3081, %v3082
    %v3084 = vand.u32 %v3083, 4294901760
    %3085 = vmatpush1.msra.mxu0 %v3084
    %3086 = vmatprep.subr.mxu0 0.0
    %v3087 = vand.u32 %v1039, 4294901760
    %v3088 = vsub.f32 %v1039, %v3087
    %v3089 = vand.u32 %v3088, 4294901760
    %v3090 = vsub.f32 %v3088, %v3089
    %v3091 = vand.u32 %v3090, 4294901760
    %3092 = vmatpush1.msra.mxu0 %v3091
    %3093 = vmatprep.subr.mxu0 0.0
    %v3094 = vand.u32 %v1040, 4294901760
    %v3095 = vsub.f32 %v1040, %v3094
    %v3096 = vand.u32 %v3095, 4294901760
    %v3097 = vsub.f32 %v3095, %v3096
    %v3098 = vand.u32 %v3097, 4294901760
    %3099 = vmatpush1.msra.mxu0 %v3098
    %3100 = vmatprep.subr.mxu0 0.0
    %v3101 = vand.u32 %v1041, 4294901760
    %v3102 = vsub.f32 %v1041, %v3101
    %v3103 = vand.u32 %v3102, 4294901760
    %v3104 = vsub.f32 %v3102, %v3103
    %v3105 = vand.u32 %v3104, 4294901760
    %3106 = vmatpush1.msra.mxu0 %v3105
    %3107 = vmatprep.subr.mxu0 0.0
    %v3108 = vand.u32 %v1042, 4294901760
    %v3109 = vsub.f32 %v1042, %v3108
    %v3110 = vand.u32 %v3109, 4294901760
    %v3111 = vsub.f32 %v3109, %v3110
    %v3112 = vand.u32 %v3111, 4294901760
    %3113 = vmatpush1.msra.mxu0 %v3112
    %3114 = vmatprep.subr.mxu0 0.0
    %v3115 = vand.u32 %v1043, 4294901760
    %v3116 = vsub.f32 %v1043, %v3115
    %v3117 = vand.u32 %v3116, 4294901760
    %v3118 = vsub.f32 %v3116, %v3117
    %v3119 = vand.u32 %v3118, 4294901760
    %3120 = vmatpush1.msra.mxu0 %v3119
    %3121 = vmatprep.subr.mxu0 0.0
    %v3122 = vand.u32 %v1044, 4294901760
    %v3123 = vsub.f32 %v1044, %v3122
    %v3124 = vand.u32 %v3123, 4294901760
    %v3125 = vsub.f32 %v3123, %v3124
    %v3126 = vand.u32 %v3125, 4294901760
    %3127 = vmatpush1.msra.mxu0 %v3126
    %3128 = vmatprep.subr.mxu0 0.0
    %v3129 = vand.u32 %v1045, 4294901760
    %v3130 = vsub.f32 %v1045, %v3129
    %v3131 = vand.u32 %v3130, 4294901760
    %v3132 = vsub.f32 %v3130, %v3131
    %v3133 = vand.u32 %v3132, 4294901760
    %3134 = vmatpush1.msra.mxu0 %v3133
    %3135 = vmatprep.subr.mxu0 0.0
    %v3136 = vand.u32 %v1046, 4294901760
    %v3137 = vsub.f32 %v1046, %v3136
    %v3138 = vand.u32 %v3137, 4294901760
    %v3139 = vsub.f32 %v3137, %v3138
    %v3140 = vand.u32 %v3139, 4294901760
    %3141 = vmatpush1.msra.mxu0 %v3140
    %3142 = vmatprep.subr.mxu0 0.0
    %v3143 = vand.u32 %v1047, 4294901760
    %v3144 = vsub.f32 %v1047, %v3143
    %v3145 = vand.u32 %v3144, 4294901760
    %v3146 = vsub.f32 %v3144, %v3145
    %v3147 = vand.u32 %v3146, 4294901760
    %3148 = vmatpush1.msra.mxu0 %v3147
    %3149 = vmatprep.subr.mxu0 0.0
    %v3150 = vand.u32 %v1048, 4294901760
    %v3151 = vsub.f32 %v1048, %v3150
    %v3152 = vand.u32 %v3151, 4294901760
    %v3153 = vsub.f32 %v3151, %v3152
    %v3154 = vand.u32 %v3153, 4294901760
    %3155 = vmatpush1.msra.mxu0 %v3154
    %3156 = vmatprep.subr.mxu0 0.0
    %v3157 = vand.u32 %v1049, 4294901760
    %v3158 = vsub.f32 %v1049, %v3157
    %v3159 = vand.u32 %v3158, 4294901760
    %v3160 = vsub.f32 %v3158, %v3159
    %v3161 = vand.u32 %v3160, 4294901760
    %3162 = vmatpush1.msra.mxu0 %v3161
    %3163 = vmatprep.subr.mxu0 0.0
    %v3164 = vand.u32 %v1050, 4294901760
    %v3165 = vsub.f32 %v1050, %v3164
    %v3166 = vand.u32 %v3165, 4294901760
    %v3167 = vsub.f32 %v3165, %v3166
    %v3168 = vand.u32 %v3167, 4294901760
    %3169 = vmatpush1.msra.mxu0 %v3168
    %3170 = vmatprep.subr.mxu0 0.0
    %3171 = vmatpush1.msra.mxu0 0.0
    %3172 = vmatprep.subr.mxu0 0.0
    %3173 = vmatpush1.msra.mxu0 0.0
    %3174 = vmatprep.subr.mxu0 0.0
    %3175 = vmatpush1.msra.mxu0 0.0
    %3176 = vmatprep.subr.mxu0 0.0
    %3177 = vmatpush1.msra.mxu0 0.0
    %3178 = vmatprep.subr.mxu0 0.0
    %3179 = vmatpush1.msra.mxu0 0.0
    %3180 = vmatprep.subr.mxu0 0.0
    %3181 = vmatpush1.msra.mxu0 0.0
    %3182 = vmatprep.subr.mxu0 0.0
    %3183 = vmatpush1.msra.mxu0 0.0
    %3184 = vmatprep.subr.mxu0 0.0
    %3185 = vmatpush1.msra.mxu0 0.0
    %3186 = vmatprep.subr.mxu0 0.0
    %3187 = vmatpush1.msra.mxu0 0.0
    %3188 = vmatprep.subr.mxu0 0.0
    %3189 = vmatpush1.msra.mxu0 0.0
    %3190 = vmatprep.subr.mxu0 0.0
    %3191 = vmatpush1.msra.mxu0 0.0
    %3192 = vmatprep.subr.mxu0 0.0
    %3193 = vmatpush1.msra.mxu0 0.0
    %3194 = vmatprep.subr.mxu0 0.0
    %3195 = vmatpush1.msra.mxu0 0.0
    %3196 = vmatprep.subr.mxu0 0.0
    %3197 = vmatpush1.msra.mxu0 0.0
    %3198 = vmatprep.subr.mxu0 0.0
    %3199 = vmatpush1.msra.mxu0 0.0
    %3200 = vmatprep.subr.mxu0 0.0
    %3201 = vmatpush1.msra.mxu0 0.0
    %3202 = vmatprep.mubr.f32.mxu0 0.0
    %v3203 = vand.u32 %v2966, 4294901760
    %3204 = vmatmul.mubr.f32.gmra.mrb[0].mxu0 %v3203
    %v3205 = vpop.f32.mrb[0].mxu0
    %v3206 = vadd.f32 %v3055, %v3205
    %v3207 = vpop.f32.mrb[0].mxu0
    %3208 = vdwg.mxu0
    %3209 = vmatprep.subr.mxu0 0.0
    %v3210 = vand.u32 %v1035, 4294901760
    %v3211 = vsub.f32 %v1035, %v3210
    %3212 = vmatpush1.msra.mxu0 %v3211
    %3213 = vmatprep.subr.mxu0 0.0
    %v3214 = vand.u32 %v1036, 4294901760
    %v3215 = vsub.f32 %v1036, %v3214
    %3216 = vmatpush1.msra.mxu0 %v3215
    %3217 = vmatprep.subr.mxu0 0.0
    %v3218 = vand.u32 %v1037, 4294901760
    %v3219 = vsub.f32 %v1037, %v3218
    %3220 = vmatpush1.msra.mxu0 %v3219
    %3221 = vmatprep.subr.mxu0 0.0
    %v3222 = vand.u32 %v1038, 4294901760
    %v3223 = vsub.f32 %v1038, %v3222
    %3224 = vmatpush1.msra.mxu0 %v3223
    %3225 = vmatprep.subr.mxu0 0.0
    %v3226 = vand.u32 %v1039, 4294901760
    %v3227 = vsub.f32 %v1039, %v3226
    %3228 = vmatpush1.msra.mxu0 %v3227
    %3229 = vmatprep.subr.mxu0 0.0
    %v3230 = vand.u32 %v1040, 4294901760
    %v3231 = vsub.f32 %v1040, %v3230
    %3232 = vmatpush1.msra.mxu0 %v3231
    %3233 = vmatprep.subr.mxu0 0.0
    %v3234 = vand.u32 %v1041, 4294901760
    %v3235 = vsub.f32 %v1041, %v3234
    %3236 = vmatpush1.msra.mxu0 %v3235
    %3237 = vmatprep.subr.mxu0 0.0
    %v3238 = vand.u32 %v1042, 4294901760
    %v3239 = vsub.f32 %v1042, %v3238
    %3240 = vmatpush1.msra.mxu0 %v3239
    %3241 = vmatprep.subr.mxu0 0.0
    %v3242 = vand.u32 %v1043, 4294901760
    %v3243 = vsub.f32 %v1043, %v3242
    %3244 = vmatpush1.msra.mxu0 %v3243
    %3245 = vmatprep.subr.mxu0 0.0
    %v3246 = vand.u32 %v1044, 4294901760
    %v3247 = vsub.f32 %v1044, %v3246
    %3248 = vmatpush1.msra.mxu0 %v3247
    %3249 = vmatprep.subr.mxu0 0.0
    %v3250 = vand.u32 %v1045, 4294901760
    %v3251 = vsub.f32 %v1045, %v3250
    %3252 = vmatpush1.msra.mxu0 %v3251
    %3253 = vmatprep.subr.mxu0 0.0
    %v3254 = vand.u32 %v1046, 4294901760
    %v3255 = vsub.f32 %v1046, %v3254
    %3256 = vmatpush1.msra.mxu0 %v3255
    %3257 = vmatprep.subr.mxu0 0.0
    %v3258 = vand.u32 %v1047, 4294901760
    %v3259 = vsub.f32 %v1047, %v3258
    %3260 = vmatpush1.msra.mxu0 %v3259
    %3261 = vmatprep.subr.mxu0 0.0
    %v3262 = vand.u32 %v1048, 4294901760
    %v3263 = vsub.f32 %v1048, %v3262
    %3264 = vmatpush1.msra.mxu0 %v3263
    %3265 = vmatprep.subr.mxu0 0.0
    %v3266 = vand.u32 %v1049, 4294901760
    %v3267 = vsub.f32 %v1049, %v3266
    %3268 = vmatpush1.msra.mxu0 %v3267
    %3269 = vmatprep.subr.mxu0 0.0
    %v3270 = vand.u32 %v1050, 4294901760
    %v3271 = vsub.f32 %v1050, %v3270
    %3272 = vmatpush1.msra.mxu0 %v3271
    %3273 = vmatprep.subr.mxu0 0.0
    %3274 = vmatpush1.msra.mxu0 0.0
    %3275 = vmatprep.subr.mxu0 0.0
    %3276 = vmatpush1.msra.mxu0 0.0
    %3277 = vmatprep.subr.mxu0 0.0
    %3278 = vmatpush1.msra.mxu0 0.0
    %3279 = vmatprep.subr.mxu0 0.0
    %3280 = vmatpush1.msra.mxu0 0.0
    %3281 = vmatprep.subr.mxu0 0.0
    %3282 = vmatpush1.msra.mxu0 0.0
    %3283 = vmatprep.subr.mxu0 0.0
    %3284 = vmatpush1.msra.mxu0 0.0
    %3285 = vmatprep.subr.mxu0 0.0
    %3286 = vmatpush1.msra.mxu0 0.0
    %3287 = vmatprep.subr.mxu0 0.0
    %3288 = vmatpush1.msra.mxu0 0.0
    %3289 = vmatprep.subr.mxu0 0.0
    %3290 = vmatpush1.msra.mxu0 0.0
    %3291 = vmatprep.subr.mxu0 0.0
    %3292 = vmatpush1.msra.mxu0 0.0
    %3293 = vmatprep.subr.mxu0 0.0
    %3294 = vmatpush1.msra.mxu0 0.0
    %3295 = vmatprep.subr.mxu0 0.0
    %3296 = vmatpush1.msra.mxu0 0.0
    %3297 = vmatprep.subr.mxu0 0.0
    %3298 = vmatpush1.msra.mxu0 0.0
    %3299 = vmatprep.subr.mxu0 0.0
    %3300 = vmatpush1.msra.mxu0 0.0
    %3301 = vmatprep.subr.mxu0 0.0
    %3302 = vmatpush1.msra.mxu0 0.0
    %3303 = vmatprep.subr.mxu0 0.0
    %3304 = vmatpush1.msra.mxu0 0.0
    %3305 = vmatprep.mubr.f32.mxu0 0.0
    %v3306 = vand.u32 %v2966, 4294901760
    %v3307 = vsub.f32 %v2966, %v3306
    %3308 = vmatmul.mubr.f32.gmra.mrb[0].mxu0 %v3307
    %v3309 = vpop.f32.mrb[0].mxu0
    %v3310 = vadd.f32 %v3206, %v3309
    %v3311 = vpop.f32.mrb[0].mxu0
    %3312 = vdwg.mxu0
    %3313 = vmatprep.subr.mxu0 0.0
    %v3314 = vand.u32 %v1035, 4294901760
    %3315 = vmatpush1.msra.mxu0 %v3314
    %3316 = vmatprep.subr.mxu0 0.0
    %v3317 = vand.u32 %v1036, 4294901760
    %3318 = vmatpush1.msra.mxu0 %v3317
    %3319 = vmatprep.subr.mxu0 0.0
    %v3320 = vand.u32 %v1037, 4294901760
    %3321 = vmatpush1.msra.mxu0 %v3320
    %3322 = vmatprep.subr.mxu0 0.0
    %v3323 = vand.u32 %v1038, 4294901760
    %3324 = vmatpush1.msra.mxu0 %v3323
    %3325 = vmatprep.subr.mxu0 0.0
    %v3326 = vand.u32 %v1039, 4294901760
    %3327 = vmatpush1.msra.mxu0 %v3326
    %3328 = vmatprep.subr.mxu0 0.0
    %v3329 = vand.u32 %v1040, 4294901760
    %3330 = vmatpush1.msra.mxu0 %v3329
    %3331 = vmatprep.subr.mxu0 0.0
    %v3332 = vand.u32 %v1041, 4294901760
    %3333 = vmatpush1.msra.mxu0 %v3332
    %3334 = vmatprep.subr.mxu0 0.0
    %v3335 = vand.u32 %v1042, 4294901760
    %3336 = vmatpush1.msra.mxu0 %v3335
    %3337 = vmatprep.subr.mxu0 0.0
    %v3338 = vand.u32 %v1043, 4294901760
    %3339 = vmatpush1.msra.mxu0 %v3338
    %3340 = vmatprep.subr.mxu0 0.0
    %v3341 = vand.u32 %v1044, 4294901760
    %3342 = vmatpush1.msra.mxu0 %v3341
    %3343 = vmatprep.subr.mxu0 0.0
    %v3344 = vand.u32 %v1045, 4294901760
    %3345 = vmatpush1.msra.mxu0 %v3344
    %3346 = vmatprep.subr.mxu0 0.0
    %v3347 = vand.u32 %v1046, 4294901760
    %3348 = vmatpush1.msra.mxu0 %v3347
    %3349 = vmatprep.subr.mxu0 0.0
    %v3350 = vand.u32 %v1047, 4294901760
    %3351 = vmatpush1.msra.mxu0 %v3350
    %3352 = vmatprep.subr.mxu0 0.0
    %v3353 = vand.u32 %v1048, 4294901760
    %3354 = vmatpush1.msra.mxu0 %v3353
    %3355 = vmatprep.subr.mxu0 0.0
    %v3356 = vand.u32 %v1049, 4294901760
    %3357 = vmatpush1.msra.mxu0 %v3356
    %3358 = vmatprep.subr.mxu0 0.0
    %v3359 = vand.u32 %v1050, 4294901760
    %3360 = vmatpush1.msra.mxu0 %v3359
    %3361 = vmatprep.subr.mxu0 0.0
    %3362 = vmatpush1.msra.mxu0 0.0
    %3363 = vmatprep.subr.mxu0 0.0
    %3364 = vmatpush1.msra.mxu0 0.0
    %3365 = vmatprep.subr.mxu0 0.0
    %3366 = vmatpush1.msra.mxu0 0.0
    %3367 = vmatprep.subr.mxu0 0.0
    %3368 = vmatpush1.msra.mxu0 0.0
    %3369 = vmatprep.subr.mxu0 0.0
    %3370 = vmatpush1.msra.mxu0 0.0
    %3371 = vmatprep.subr.mxu0 0.0
    %3372 = vmatpush1.msra.mxu0 0.0
    %3373 = vmatprep.subr.mxu0 0.0
    %3374 = vmatpush1.msra.mxu0 0.0
    %3375 = vmatprep.subr.mxu0 0.0
    %3376 = vmatpush1.msra.mxu0 0.0
    %3377 = vmatprep.subr.mxu0 0.0
    %3378 = vmatpush1.msra.mxu0 0.0
    %3379 = vmatprep.subr.mxu0 0.0
    %3380 = vmatpush1.msra.mxu0 0.0
    %3381 = vmatprep.subr.mxu0 0.0
    %3382 = vmatpush1.msra.mxu0 0.0
    %3383 = vmatprep.subr.mxu0 0.0
    %3384 = vmatpush1.msra.mxu0 0.0
    %3385 = vmatprep.subr.mxu0 0.0
    %3386 = vmatpush1.msra.mxu0 0.0
    %3387 = vmatprep.subr.mxu0 0.0
    %3388 = vmatpush1.msra.mxu0 0.0
    %3389 = vmatprep.subr.mxu0 0.0
    %3390 = vmatpush1.msra.mxu0 0.0
    %3391 = vmatprep.subr.mxu0 0.0
    %3392 = vmatpush1.msra.mxu0 0.0
    %3393 = vmatprep.mubr.f32.mxu0 0.0
    %v3394 = vand.u32 %v2966, 4294901760
    %v3395 = vsub.f32 %v2966, %v3394
    %v3396 = vand.u32 %v3395, 4294901760
    %3397 = vmatmul.mubr.f32.gmra.mrb[0].mxu0 %v3396
    %v3398 = vpop.f32.mrb[0].mxu0
    %v3399 = vadd.f32 %v3310, %v3398
    %v3400 = vpop.f32.mrb[0].mxu0
    %3401 = vdwg.mxu0
    %3402 = vmatprep.subr.mxu0 0.0
    %v3403 = vand.u32 %v1035, 4294901760
    %v3404 = vsub.f32 %v1035, %v3403
    %v3405 = vand.u32 %v3404, 4294901760
    %3406 = vmatpush1.msra.mxu0 %v3405
    %3407 = vmatprep.subr.mxu0 0.0
    %v3408 = vand.u32 %v1036, 4294901760
    %v3409 = vsub.f32 %v1036, %v3408
    %v3410 = vand.u32 %v3409, 4294901760
    %3411 = vmatpush1.msra.mxu0 %v3410
    %3412 = vmatprep.subr.mxu0 0.0
    %v3413 = vand.u32 %v1037, 4294901760
    %v3414 = vsub.f32 %v1037, %v3413
    %v3415 = vand.u32 %v3414, 4294901760
    %3416 = vmatpush1.msra.mxu0 %v3415
    %3417 = vmatprep.subr.mxu0 0.0
    %v3418 = vand.u32 %v1038, 4294901760
    %v3419 = vsub.f32 %v1038, %v3418
    %v3420 = vand.u32 %v3419, 4294901760
    %3421 = vmatpush1.msra.mxu0 %v3420
    %3422 = vmatprep.subr.mxu0 0.0
    %v3423 = vand.u32 %v1039, 4294901760
    %v3424 = vsub.f32 %v1039, %v3423
    %v3425 = vand.u32 %v3424, 4294901760
    %3426 = vmatpush1.msra.mxu0 %v3425
    %3427 = vmatprep.subr.mxu0 0.0
    %v3428 = vand.u32 %v1040, 4294901760
    %v3429 = vsub.f32 %v1040, %v3428
    %v3430 = vand.u32 %v3429, 4294901760
    %3431 = vmatpush1.msra.mxu0 %v3430
    %3432 = vmatprep.subr.mxu0 0.0
    %v3433 = vand.u32 %v1041, 4294901760
    %v3434 = vsub.f32 %v1041, %v3433
    %v3435 = vand.u32 %v3434, 4294901760
    %3436 = vmatpush1.msra.mxu0 %v3435
    %3437 = vmatprep.subr.mxu0 0.0
    %v3438 = vand.u32 %v1042, 4294901760
    %v3439 = vsub.f32 %v1042, %v3438
    %v3440 = vand.u32 %v3439, 4294901760
    %3441 = vmatpush1.msra.mxu0 %v3440
    %3442 = vmatprep.subr.mxu0 0.0
    %v3443 = vand.u32 %v1043, 4294901760
    %v3444 = vsub.f32 %v1043, %v3443
    %v3445 = vand.u32 %v3444, 4294901760
    %3446 = vmatpush1.msra.mxu0 %v3445
    %3447 = vmatprep.subr.mxu0 0.0
    %v3448 = vand.u32 %v1044, 4294901760
    %v3449 = vsub.f32 %v1044, %v3448
    %v3450 = vand.u32 %v3449, 4294901760
    %3451 = vmatpush1.msra.mxu0 %v3450
    %3452 = vmatprep.subr.mxu0 0.0
    %v3453 = vand.u32 %v1045, 4294901760
    %v3454 = vsub.f32 %v1045, %v3453
    %v3455 = vand.u32 %v3454, 4294901760
    %3456 = vmatpush1.msra.mxu0 %v3455
    %3457 = vmatprep.subr.mxu0 0.0
    %v3458 = vand.u32 %v1046, 4294901760
    %v3459 = vsub.f32 %v1046, %v3458
    %v3460 = vand.u32 %v3459, 4294901760
    %3461 = vmatpush1.msra.mxu0 %v3460
    %3462 = vmatprep.subr.mxu0 0.0
    %v3463 = vand.u32 %v1047, 4294901760
    %v3464 = vsub.f32 %v1047, %v3463
    %v3465 = vand.u32 %v3464, 4294901760
    %3466 = vmatpush1.msra.mxu0 %v3465
    %3467 = vmatprep.subr.mxu0 0.0
    %v3468 = vand.u32 %v1048, 4294901760
    %v3469 = vsub.f32 %v1048, %v3468
    %v3470 = vand.u32 %v3469, 4294901760
    %3471 = vmatpush1.msra.mxu0 %v3470
    %3472 = vmatprep.subr.mxu0 0.0
    %v3473 = vand.u32 %v1049, 4294901760
    %v3474 = vsub.f32 %v1049, %v3473
    %v3475 = vand.u32 %v3474, 4294901760
    %3476 = vmatpush1.msra.mxu0 %v3475
    %3477 = vmatprep.subr.mxu0 0.0
    %v3478 = vand.u32 %v1050, 4294901760
    %v3479 = vsub.f32 %v1050, %v3478
    %v3480 = vand.u32 %v3479, 4294901760
    %3481 = vmatpush1.msra.mxu0 %v3480
    %3482 = vmatprep.subr.mxu0 0.0
    %3483 = vmatpush1.msra.mxu0 0.0
    %3484 = vmatprep.subr.mxu0 0.0
    %3485 = vmatpush1.msra.mxu0 0.0
    %3486 = vmatprep.subr.mxu0 0.0
    %3487 = vmatpush1.msra.mxu0 0.0
    %3488 = vmatprep.subr.mxu0 0.0
    %3489 = vmatpush1.msra.mxu0 0.0
    %3490 = vmatprep.subr.mxu0 0.0
    %3491 = vmatpush1.msra.mxu0 0.0
    %3492 = vmatprep.subr.mxu0 0.0
    %3493 = vmatpush1.msra.mxu0 0.0
    %3494 = vmatprep.subr.mxu0 0.0
    %3495 = vmatpush1.msra.mxu0 0.0
    %3496 = vmatprep.subr.mxu0 0.0
    %3497 = vmatpush1.msra.mxu0 0.0
    %3498 = vmatprep.subr.mxu0 0.0
    %3499 = vmatpush1.msra.mxu0 0.0
    %3500 = vmatprep.subr.mxu0 0.0
    %3501 = vmatpush1.msra.mxu0 0.0
    %3502 = vmatprep.subr.mxu0 0.0
    %3503 = vmatpush1.msra.mxu0 0.0
    %3504 = vmatprep.subr.mxu0 0.0
    %3505 = vmatpush1.msra.mxu0 0.0
    %3506 = vmatprep.subr.mxu0 0.0
    %3507 = vmatpush1.msra.mxu0 0.0
    %3508 = vmatprep.subr.mxu0 0.0
    %3509 = vmatpush1.msra.mxu0 0.0
    %3510 = vmatprep.subr.mxu0 0.0
    %3511 = vmatpush1.msra.mxu0 0.0
    %3512 = vmatprep.subr.mxu0 0.0
    %3513 = vmatpush1.msra.mxu0 0.0
    %3514 = vmatprep.mubr.f32.mxu0 0.0
    %v3515 = vand.u32 %v2966, 4294901760
    %3516 = vmatmul.mubr.f32.gmra.mrb[0].mxu0 %v3515
    %v3517 = vpop.f32.mrb[0].mxu0
    %v3518 = vadd.f32 %v3399, %v3517
    %v3519 = vpop.f32.mrb[0].mxu0
    %3520 = vdwg.mxu0
    %3521 = vmatprep.subr.mxu0 0.0
    %v3522 = vand.u32 %v1035, 4294901760
    %3523 = vmatpush1.msra.mxu0 %v3522
    %3524 = vmatprep.subr.mxu0 0.0
    %v3525 = vand.u32 %v1036, 4294901760
    %3526 = vmatpush1.msra.mxu0 %v3525
    %3527 = vmatprep.subr.mxu0 0.0
    %v3528 = vand.u32 %v1037, 4294901760
    %3529 = vmatpush1.msra.mxu0 %v3528
    %3530 = vmatprep.subr.mxu0 0.0
    %v3531 = vand.u32 %v1038, 4294901760
    %3532 = vmatpush1.msra.mxu0 %v3531
    %3533 = vmatprep.subr.mxu0 0.0
    %v3534 = vand.u32 %v1039, 4294901760
    %3535 = vmatpush1.msra.mxu0 %v3534
    %3536 = vmatprep.subr.mxu0 0.0
    %v3537 = vand.u32 %v1040, 4294901760
    %3538 = vmatpush1.msra.mxu0 %v3537
    %3539 = vmatprep.subr.mxu0 0.0
    %v3540 = vand.u32 %v1041, 4294901760
    %3541 = vmatpush1.msra.mxu0 %v3540
    %3542 = vmatprep.subr.mxu0 0.0
    %v3543 = vand.u32 %v1042, 4294901760
    %3544 = vmatpush1.msra.mxu0 %v3543
    %3545 = vmatprep.subr.mxu0 0.0
    %v3546 = vand.u32 %v1043, 4294901760
    %3547 = vmatpush1.msra.mxu0 %v3546
    %3548 = vmatprep.subr.mxu0 0.0
    %v3549 = vand.u32 %v1044, 4294901760
    %3550 = vmatpush1.msra.mxu0 %v3549
    %3551 = vmatprep.subr.mxu0 0.0
    %v3552 = vand.u32 %v1045, 4294901760
    %3553 = vmatpush1.msra.mxu0 %v3552
    %3554 = vmatprep.subr.mxu0 0.0
    %v3555 = vand.u32 %v1046, 4294901760
    %3556 = vmatpush1.msra.mxu0 %v3555
    %3557 = vmatprep.subr.mxu0 0.0
    %v3558 = vand.u32 %v1047, 4294901760
    %3559 = vmatpush1.msra.mxu0 %v3558
    %3560 = vmatprep.subr.mxu0 0.0
    %v3561 = vand.u32 %v1048, 4294901760
    %3562 = vmatpush1.msra.mxu0 %v3561
    %3563 = vmatprep.subr.mxu0 0.0
    %v3564 = vand.u32 %v1049, 4294901760
    %3565 = vmatpush1.msra.mxu0 %v3564
    %3566 = vmatprep.subr.mxu0 0.0
    %v3567 = vand.u32 %v1050, 4294901760
    %3568 = vmatpush1.msra.mxu0 %v3567
    %3569 = vmatprep.subr.mxu0 0.0
    %3570 = vmatpush1.msra.mxu0 0.0
    %3571 = vmatprep.subr.mxu0 0.0
    %3572 = vmatpush1.msra.mxu0 0.0
    %3573 = vmatprep.subr.mxu0 0.0
    %3574 = vmatpush1.msra.mxu0 0.0
    %3575 = vmatprep.subr.mxu0 0.0
    %3576 = vmatpush1.msra.mxu0 0.0
    %3577 = vmatprep.subr.mxu0 0.0
    %3578 = vmatpush1.msra.mxu0 0.0
    %3579 = vmatprep.subr.mxu0 0.0
    %3580 = vmatpush1.msra.mxu0 0.0
    %3581 = vmatprep.subr.mxu0 0.0
    %3582 = vmatpush1.msra.mxu0 0.0
    %3583 = vmatprep.subr.mxu0 0.0
    %3584 = vmatpush1.msra.mxu0 0.0
    %3585 = vmatprep.subr.mxu0 0.0
    %3586 = vmatpush1.msra.mxu0 0.0
    %3587 = vmatprep.subr.mxu0 0.0
    %3588 = vmatpush1.msra.mxu0 0.0
    %3589 = vmatprep.subr.mxu0 0.0
    %3590 = vmatpush1.msra.mxu0 0.0
    %3591 = vmatprep.subr.mxu0 0.0
    %3592 = vmatpush1.msra.mxu0 0.0
    %3593 = vmatprep.subr.mxu0 0.0
    %3594 = vmatpush1.msra.mxu0 0.0
    %3595 = vmatprep.subr.mxu0 0.0
    %3596 = vmatpush1.msra.mxu0 0.0
    %3597 = vmatprep.subr.mxu0 0.0
    %3598 = vmatpush1.msra.mxu0 0.0
    %3599 = vmatprep.subr.mxu0 0.0
    %3600 = vmatpush1.msra.mxu0 0.0
    %3601 = vmatprep.mubr.f32.mxu0 0.0
    %v3602 = vand.u32 %v2966, 4294901760
    %3603 = vmatmul.mubr.f32.gmra.mrb[0].mxu0 %v3602
    %v3604 = vpop.f32.mrb[0].mxu0
    %v3605 = vadd.f32 %v3518, %v3604
    %v3606 = vpop.f32.mrb[0].mxu0
    %3607 = vdwg.mxu0
    %v3608 = vadd.f32 %v1008, %v3605
    %v3609 = vtanh.pop %v3608
    %3610 = vmatprep.subr.mxu0 0.0
    %v3611 = vand.u32 %v1035, 4294901760
    %3612 = vmatpush1.msra.mxu0 %v3611
    %3613 = vmatprep.subr.mxu0 0.0
    %v3614 = vand.u32 %v1036, 4294901760
    %3615 = vmatpush1.msra.mxu0 %v3614
    %3616 = vmatprep.subr.mxu0 0.0
    %v3617 = vand.u32 %v1037, 4294901760
    %3618 = vmatpush1.msra.mxu0 %v3617
    %3619 = vmatprep.subr.mxu0 0.0
    %v3620 = vand.u32 %v1038, 4294901760
    %3621 = vmatpush1.msra.mxu0 %v3620
    %3622 = vmatprep.subr.mxu0 0.0
    %v3623 = vand.u32 %v1039, 4294901760
    %3624 = vmatpush1.msra.mxu0 %v3623
    %3625 = vmatprep.subr.mxu0 0.0
    %v3626 = vand.u32 %v1040, 4294901760
    %3627 = vmatpush1.msra.mxu0 %v3626
    %3628 = vmatprep.subr.mxu0 0.0
    %v3629 = vand.u32 %v1041, 4294901760
    %3630 = vmatpush1.msra.mxu0 %v3629
    %3631 = vmatprep.subr.mxu0 0.0
    %v3632 = vand.u32 %v1042, 4294901760
    %3633 = vmatpush1.msra.mxu0 %v3632
    %3634 = vmatprep.subr.mxu0 0.0
    %v3635 = vand.u32 %v1043, 4294901760
    %3636 = vmatpush1.msra.mxu0 %v3635
    %3637 = vmatprep.subr.mxu0 0.0
    %v3638 = vand.u32 %v1044, 4294901760
    %3639 = vmatpush1.msra.mxu0 %v3638
    %3640 = vmatprep.subr.mxu0 0.0
    %v3641 = vand.u32 %v1045, 4294901760
    %3642 = vmatpush1.msra.mxu0 %v3641
    %3643 = vmatprep.subr.mxu0 0.0
    %v3644 = vand.u32 %v1046, 4294901760
    %3645 = vmatpush1.msra.mxu0 %v3644
    %3646 = vmatprep.subr.mxu0 0.0
    %v3647 = vand.u32 %v1047, 4294901760
    %3648 = vmatpush1.msra.mxu0 %v3647
    %3649 = vmatprep.subr.mxu0 0.0
    %v3650 = vand.u32 %v1048, 4294901760
    %3651 = vmatpush1.msra.mxu0 %v3650
    %3652 = vmatprep.subr.mxu0 0.0
    %v3653 = vand.u32 %v1049, 4294901760
    %3654 = vmatpush1.msra.mxu0 %v3653
    %3655 = vmatprep.subr.mxu0 0.0
    %v3656 = vand.u32 %v1050, 4294901760
    %3657 = vmatpush1.msra.mxu0 %v3656
    %3658 = vmatprep.subr.mxu0 0.0
    %3659 = vmatpush1.msra.mxu0 0.0
    %3660 = vmatprep.subr.mxu0 0.0
    %3661 = vmatpush1.msra.mxu0 0.0
    %3662 = vmatprep.subr.mxu0 0.0
    %3663 = vmatpush1.msra.mxu0 0.0
    %3664 = vmatprep.subr.mxu0 0.0
    %3665 = vmatpush1.msra.mxu0 0.0
    %3666 = vmatprep.subr.mxu0 0.0
    %3667 = vmatpush1.msra.mxu0 0.0
    %3668 = vmatprep.subr.mxu0 0.0
    %3669 = vmatpush1.msra.mxu0 0.0
    %3670 = vmatprep.subr.mxu0 0.0
    %3671 = vmatpush1.msra.mxu0 0.0
    %3672 = vmatprep.subr.mxu0 0.0
    %3673 = vmatpush1.msra.mxu0 0.0
    %3674 = vmatprep.subr.mxu0 0.0
    %3675 = vmatpush1.msra.mxu0 0.0
    %3676 = vmatprep.subr.mxu0 0.0
    %3677 = vmatpush1.msra.mxu0 0.0
    %3678 = vmatprep.subr.mxu0 0.0
    %3679 = vmatpush1.msra.mxu0 0.0
    %3680 = vmatprep.subr.mxu0 0.0
    %3681 = vmatpush1.msra.mxu0 0.0
    %3682 = vmatprep.subr.mxu0 0.0
    %3683 = vmatpush1.msra.mxu0 0.0
    %3684 = vmatprep.subr.mxu0 0.0
    %3685 = vmatpush1.msra.mxu0 0.0
    %3686 = vmatprep.subr.mxu0 0.0
    %3687 = vmatpush1.msra.mxu0 0.0
    %3688 = vmatprep.subr.mxu0 0.0
    %3689 = vmatpush1.msra.mxu0 0.0
    %3690 = vmatprep.mubr.f32.mxu0 0.0
    %v3691 = vand.u32 %v3609, 4294901760
    %v3692 = vsub.f32 %v3609, %v3691
    %v3693 = vand.u32 %v3692, 4294901760
    %v3694 = vsub.f32 %v3692, %v3693
    %v3695 = vand.u32 %v3694, 4294901760
    %3696 = vmatmul.mubr.f32.gmra.mrb[0].mxu0 %v3695
    %v3697 = vpop.f32.mrb[0].mxu0
    %v3698 = vadd.f32 0.0, %v3697
    %v3699 = vpop.f32.mrb[0].mxu0
    %3700 = vdwg.mxu0
    %3701 = vmatprep.subr.mxu0 0.0
    %v3702 = vand.u32 %v1035, 4294901760
    %v3703 = vsub.f32 %v1035, %v3702
    %v3704 = vand.u32 %v3703, 4294901760
    %v3705 = vsub.f32 %v3703, %v3704
    %v3706 = vand.u32 %v3705, 4294901760
    %3707 = vmatpush1.msra.mxu0 %v3706
    %3708 = vmatprep.subr.mxu0 0.0
    %v3709 = vand.u32 %v1036, 4294901760
    %v3710 = vsub.f32 %v1036, %v3709
    %v3711 = vand.u32 %v3710, 4294901760
    %v3712 = vsub.f32 %v3710, %v3711
    %v3713 = vand.u32 %v3712, 4294901760
    %3714 = vmatpush1.msra.mxu0 %v3713
    %3715 = vmatprep.subr.mxu0 0.0
    %v3716 = vand.u32 %v1037, 4294901760
    %v3717 = vsub.f32 %v1037, %v3716
    %v3718 = vand.u32 %v3717, 4294901760
    %v3719 = vsub.f32 %v3717, %v3718
    %v3720 = vand.u32 %v3719, 4294901760
    %3721 = vmatpush1.msra.mxu0 %v3720
    %3722 = vmatprep.subr.mxu0 0.0
    %v3723 = vand.u32 %v1038, 4294901760
    %v3724 = vsub.f32 %v1038, %v3723
    %v3725 = vand.u32 %v3724, 4294901760
    %v3726 = vsub.f32 %v3724, %v3725
    %v3727 = vand.u32 %v3726, 4294901760
    %3728 = vmatpush1.msra.mxu0 %v3727
    %3729 = vmatprep.subr.mxu0 0.0
    %v3730 = vand.u32 %v1039, 4294901760
    %v3731 = vsub.f32 %v1039, %v3730
    %v3732 = vand.u32 %v3731, 4294901760
    %v3733 = vsub.f32 %v3731, %v3732
    %v3734 = vand.u32 %v3733, 4294901760
    %3735 = vmatpush1.msra.mxu0 %v3734
    %3736 = vmatprep.subr.mxu0 0.0
    %v3737 = vand.u32 %v1040, 4294901760
    %v3738 = vsub.f32 %v1040, %v3737
    %v3739 = vand.u32 %v3738, 4294901760
    %v3740 = vsub.f32 %v3738, %v3739
    %v3741 = vand.u32 %v3740, 4294901760
    %3742 = vmatpush1.msra.mxu0 %v3741
    %3743 = vmatprep.subr.mxu0 0.0
    %v3744 = vand.u32 %v1041, 4294901760
    %v3745 = vsub.f32 %v1041, %v3744
    %v3746 = vand.u32 %v3745, 4294901760
    %v3747 = vsub.f32 %v3745, %v3746
    %v3748 = vand.u32 %v3747, 4294901760
    %3749 = vmatpush1.msra.mxu0 %v3748
    %3750 = vmatprep.subr.mxu0 0.0
    %v3751 = vand.u32 %v1042, 4294901760
    %v3752 = vsub.f32 %v1042, %v3751
    %v3753 = vand.u32 %v3752, 4294901760
    %v3754 = vsub.f32 %v3752, %v3753
    %v3755 = vand.u32 %v3754, 4294901760
    %3756 = vmatpush1.msra.mxu0 %v3755
    %3757 = vmatprep.subr.mxu0 0.0
    %v3758 = vand.u32 %v1043, 4294901760
    %v3759 = vsub.f32 %v1043, %v3758
    %v3760 = vand.u32 %v3759, 4294901760
    %v3761 = vsub.f32 %v3759, %v3760
    %v3762 = vand.u32 %v3761, 4294901760
    %3763 = vmatpush1.msra.mxu0 %v3762
    %3764 = vmatprep.subr.mxu0 0.0
    %v3765 = vand.u32 %v1044, 4294901760
    %v3766 = vsub.f32 %v1044, %v3765
    %v3767 = vand.u32 %v3766, 4294901760
    %v3768 = vsub.f32 %v3766, %v3767
    %v3769 = vand.u32 %v3768, 4294901760
    %3770 = vmatpush1.msra.mxu0 %v3769
    %3771 = vmatprep.subr.mxu0 0.0
    %v3772 = vand.u32 %v1045, 4294901760
    %v3773 = vsub.f32 %v1045, %v3772
    %v3774 = vand.u32 %v3773, 4294901760
    %v3775 = vsub.f32 %v3773, %v3774
    %v3776 = vand.u32 %v3775, 4294901760
    %3777 = vmatpush1.msra.mxu0 %v3776
    %3778 = vmatprep.subr.mxu0 0.0
    %v3779 = vand.u32 %v1046, 4294901760
    %v3780 = vsub.f32 %v1046, %v3779
    %v3781 = vand.u32 %v3780, 4294901760
    %v3782 = vsub.f32 %v3780, %v3781
    %v3783 = vand.u32 %v3782, 4294901760
    %3784 = vmatpush1.msra.mxu0 %v3783
    %3785 = vmatprep.subr.mxu0 0.0
    %v3786 = vand.u32 %v1047, 4294901760
    %v3787 = vsub.f32 %v1047, %v3786
    %v3788 = vand.u32 %v3787, 4294901760
    %v3789 = vsub.f32 %v3787, %v3788
    %v3790 = vand.u32 %v3789, 4294901760
    %3791 = vmatpush1.msra.mxu0 %v3790
    %3792 = vmatprep.subr.mxu0 0.0
    %v3793 = vand.u32 %v1048, 4294901760
    %v3794 = vsub.f32 %v1048, %v3793
    %v3795 = vand.u32 %v3794, 4294901760
    %v3796 = vsub.f32 %v3794, %v3795
    %v3797 = vand.u32 %v3796, 4294901760
    %3798 = vmatpush1.msra.mxu0 %v3797
    %3799 = vmatprep.subr.mxu0 0.0
    %v3800 = vand.u32 %v1049, 4294901760
    %v3801 = vsub.f32 %v1049, %v3800
    %v3802 = vand.u32 %v3801, 4294901760
    %v3803 = vsub.f32 %v3801, %v3802
    %v3804 = vand.u32 %v3803, 4294901760
    %3805 = vmatpush1.msra.mxu0 %v3804
    %3806 = vmatprep.subr.mxu0 0.0
    %v3807 = vand.u32 %v1050, 4294901760
    %v3808 = vsub.f32 %v1050, %v3807
    %v3809 = vand.u32 %v3808, 4294901760
    %v3810 = vsub.f32 %v3808, %v3809
    %v3811 = vand.u32 %v3810, 4294901760
    %3812 = vmatpush1.msra.mxu0 %v3811
    %3813 = vmatprep.subr.mxu0 0.0
    %3814 = vmatpush1.msra.mxu0 0.0
    %3815 = vmatprep.subr.mxu0 0.0
    %3816 = vmatpush1.msra.mxu0 0.0
    %3817 = vmatprep.subr.mxu0 0.0
    %3818 = vmatpush1.msra.mxu0 0.0
    %3819 = vmatprep.subr.mxu0 0.0
    %3820 = vmatpush1.msra.mxu0 0.0
    %3821 = vmatprep.subr.mxu0 0.0
    %3822 = vmatpush1.msra.mxu0 0.0
    %3823 = vmatprep.subr.mxu0 0.0
    %3824 = vmatpush1.msra.mxu0 0.0
    %3825 = vmatprep.subr.mxu0 0.0
    %3826 = vmatpush1.msra.mxu0 0.0
    %3827 = vmatprep.subr.mxu0 0.0
    %3828 = vmatpush1.msra.mxu0 0.0
    %3829 = vmatprep.subr.mxu0 0.0
    %3830 = vmatpush1.msra.mxu0 0.0
    %3831 = vmatprep.subr.mxu0 0.0
    %3832 = vmatpush1.msra.mxu0 0.0
    %3833 = vmatprep.subr.mxu0 0.0
    %3834 = vmatpush1.msra.mxu0 0.0
    %3835 = vmatprep.subr.mxu0 0.0
    %3836 = vmatpush1.msra.mxu0 0.0
    %3837 = vmatprep.subr.mxu0 0.0
    %3838 = vmatpush1.msra.mxu0 0.0
    %3839 = vmatprep.subr.mxu0 0.0
    %3840 = vmatpush1.msra.mxu0 0.0
    %3841 = vmatprep.subr.mxu0 0.0
    %3842 = vmatpush1.msra.mxu0 0.0
    %3843 = vmatprep.subr.mxu0 0.0
    %3844 = vmatpush1.msra.mxu0 0.0
    %3845 = vmatprep.mubr.f32.mxu0 0.0
    %v3846 = vand.u32 %v3609, 4294901760
    %3847 = vmatmul.mubr.f32.gmra.mrb[0].mxu0 %v3846
    %v3848 = vpop.f32.mrb[0].mxu0
    %v3849 = vadd.f32 %v3698, %v3848
    %v3850 = vpop.f32.mrb[0].mxu0
    %3851 = vdwg.mxu0
    %3852 = vmatprep.subr.mxu0 0.0
    %v3853 = vand.u32 %v1035, 4294901760
    %v3854 = vsub.f32 %v1035, %v3853
    %3855 = vmatpush1.msra.mxu0 %v3854
    %3856 = vmatprep.subr.mxu0 0.0
    %v3857 = vand.u32 %v1036, 4294901760
    %v3858 = vsub.f32 %v1036, %v3857
    %3859 = vmatpush1.msra.mxu0 %v3858
    %3860 = vmatprep.subr.mxu0 0.0
    %v3861 = vand.u32 %v1037, 4294901760
    %v3862 = vsub.f32 %v1037, %v3861
    %3863 = vmatpush1.msra.mxu0 %v3862
    %3864 = vmatprep.subr.mxu0 0.0
    %v3865 = vand.u32 %v1038, 4294901760
    %v3866 = vsub.f32 %v1038, %v3865
    %3867 = vmatpush1.msra.mxu0 %v3866
    %3868 = vmatprep.subr.mxu0 0.0
    %v3869 = vand.u32 %v1039, 4294901760
    %v3870 = vsub.f32 %v1039, %v3869
    %3871 = vmatpush1.msra.mxu0 %v3870
    %3872 = vmatprep.subr.mxu0 0.0
    %v3873 = vand.u32 %v1040, 4294901760
    %v3874 = vsub.f32 %v1040, %v3873
    %3875 = vmatpush1.msra.mxu0 %v3874
    %3876 = vmatprep.subr.mxu0 0.0
    %v3877 = vand.u32 %v1041, 4294901760
    %v3878 = vsub.f32 %v1041, %v3877
    %3879 = vmatpush1.msra.mxu0 %v3878
    %3880 = vmatprep.subr.mxu0 0.0
    %v3881 = vand.u32 %v1042, 4294901760
    %v3882 = vsub.f32 %v1042, %v3881
    %3883 = vmatpush1.msra.mxu0 %v3882
    %3884 = vmatprep.subr.mxu0 0.0
    %v3885 = vand.u32 %v1043, 4294901760
    %v3886 = vsub.f32 %v1043, %v3885
    %3887 = vmatpush1.msra.mxu0 %v3886
    %3888 = vmatprep.subr.mxu0 0.0
    %v3889 = vand.u32 %v1044, 4294901760
    %v3890 = vsub.f32 %v1044, %v3889
    %3891 = vmatpush1.msra.mxu0 %v3890
    %3892 = vmatprep.subr.mxu0 0.0
    %v3893 = vand.u32 %v1045, 4294901760
    %v3894 = vsub.f32 %v1045, %v3893
    %3895 = vmatpush1.msra.mxu0 %v3894
    %3896 = vmatprep.subr.mxu0 0.0
    %v3897 = vand.u32 %v1046, 4294901760
    %v3898 = vsub.f32 %v1046, %v3897
    %3899 = vmatpush1.msra.mxu0 %v3898
    %3900 = vmatprep.subr.mxu0 0.0
    %v3901 = vand.u32 %v1047, 4294901760
    %v3902 = vsub.f32 %v1047, %v3901
    %3903 = vmatpush1.msra.mxu0 %v3902
    %3904 = vmatprep.subr.mxu0 0.0
    %v3905 = vand.u32 %v1048, 4294901760
    %v3906 = vsub.f32 %v1048, %v3905
    %3907 = vmatpush1.msra.mxu0 %v3906
    %3908 = vmatprep.subr.mxu0 0.0
    %v3909 = vand.u32 %v1049, 4294901760
    %v3910 = vsub.f32 %v1049, %v3909
    %3911 = vmatpush1.msra.mxu0 %v3910
    %3912 = vmatprep.subr.mxu0 0.0
    %v3913 = vand.u32 %v1050, 4294901760
    %v3914 = vsub.f32 %v1050, %v3913
    %3915 = vmatpush1.msra.mxu0 %v3914
    %3916 = vmatprep.subr.mxu0 0.0
    %3917 = vmatpush1.msra.mxu0 0.0
    %3918 = vmatprep.subr.mxu0 0.0
    %3919 = vmatpush1.msra.mxu0 0.0
    %3920 = vmatprep.subr.mxu0 0.0
    %3921 = vmatpush1.msra.mxu0 0.0
    %3922 = vmatprep.subr.mxu0 0.0
    %3923 = vmatpush1.msra.mxu0 0.0
    %3924 = vmatprep.subr.mxu0 0.0
    %3925 = vmatpush1.msra.mxu0 0.0
    %3926 = vmatprep.subr.mxu0 0.0
    %3927 = vmatpush1.msra.mxu0 0.0
    %3928 = vmatprep.subr.mxu0 0.0
    %3929 = vmatpush1.msra.mxu0 0.0
    %3930 = vmatprep.subr.mxu0 0.0
    %3931 = vmatpush1.msra.mxu0 0.0
    %3932 = vmatprep.subr.mxu0 0.0
    %3933 = vmatpush1.msra.mxu0 0.0
    %3934 = vmatprep.subr.mxu0 0.0
    %3935 = vmatpush1.msra.mxu0 0.0
    %3936 = vmatprep.subr.mxu0 0.0
    %3937 = vmatpush1.msra.mxu0 0.0
    %3938 = vmatprep.subr.mxu0 0.0
    %3939 = vmatpush1.msra.mxu0 0.0
    %3940 = vmatprep.subr.mxu0 0.0
    %3941 = vmatpush1.msra.mxu0 0.0
    %3942 = vmatprep.subr.mxu0 0.0
    %3943 = vmatpush1.msra.mxu0 0.0
    %3944 = vmatprep.subr.mxu0 0.0
    %3945 = vmatpush1.msra.mxu0 0.0
    %3946 = vmatprep.subr.mxu0 0.0
    %3947 = vmatpush1.msra.mxu0 0.0
    %3948 = vmatprep.mubr.f32.mxu0 0.0
    %v3949 = vand.u32 %v3609, 4294901760
    %v3950 = vsub.f32 %v3609, %v3949
    %3951 = vmatmul.mubr.f32.gmra.mrb[0].mxu0 %v3950
    %v3952 = vpop.f32.mrb[0].mxu0
    %v3953 = vadd.f32 %v3849, %v3952
    %v3954 = vpop.f32.mrb[0].mxu0
    %3955 = vdwg.mxu0
    %3956 = vmatprep.subr.mxu0 0.0
    %v3957 = vand.u32 %v1035, 4294901760
    %3958 = vmatpush1.msra.mxu0 %v3957
    %3959 = vmatprep.subr.mxu0 0.0
    %v3960 = vand.u32 %v1036, 4294901760
    %3961 = vmatpush1.msra.mxu0 %v3960
    %3962 = vmatprep.subr.mxu0 0.0
    %v3963 = vand.u32 %v1037, 4294901760
    %3964 = vmatpush1.msra.mxu0 %v3963
    %3965 = vmatprep.subr.mxu0 0.0
    %v3966 = vand.u32 %v1038, 4294901760
    %3967 = vmatpush1.msra.mxu0 %v3966
    %3968 = vmatprep.subr.mxu0 0.0
    %v3969 = vand.u32 %v1039, 4294901760
    %3970 = vmatpush1.msra.mxu0 %v3969
    %3971 = vmatprep.subr.mxu0 0.0
    %v3972 = vand.u32 %v1040, 4294901760
    %3973 = vmatpush1.msra.mxu0 %v3972
    %3974 = vmatprep.subr.mxu0 0.0
    %v3975 = vand.u32 %v1041, 4294901760
    %3976 = vmatpush1.msra.mxu0 %v3975
    %3977 = vmatprep.subr.mxu0 0.0
    %v3978 = vand.u32 %v1042, 4294901760
    %3979 = vmatpush1.msra.mxu0 %v3978
    %3980 = vmatprep.subr.mxu0 0.0
    %v3981 = vand.u32 %v1043, 4294901760
    %3982 = vmatpush1.msra.mxu0 %v3981
    %3983 = vmatprep.subr.mxu0 0.0
    %v3984 = vand.u32 %v1044, 4294901760
    %3985 = vmatpush1.msra.mxu0 %v3984
    %3986 = vmatprep.subr.mxu0 0.0
    %v3987 = vand.u32 %v1045, 4294901760
    %3988 = vmatpush1.msra.mxu0 %v3987
    %3989 = vmatprep.subr.mxu0 0.0
    %v3990 = vand.u32 %v1046, 4294901760
    %3991 = vmatpush1.msra.mxu0 %v3990
    %3992 = vmatprep.subr.mxu0 0.0
    %v3993 = vand.u32 %v1047, 4294901760
    %3994 = vmatpush1.msra.mxu0 %v3993
    %3995 = vmatprep.subr.mxu0 0.0
    %v3996 = vand.u32 %v1048, 4294901760
    %3997 = vmatpush1.msra.mxu0 %v3996
    %3998 = vmatprep.subr.mxu0 0.0
    %v3999 = vand.u32 %v1049, 4294901760
    %4000 = vmatpush1.msra.mxu0 %v3999
    %4001 = vmatprep.subr.mxu0 0.0
    %v4002 = vand.u32 %v1050, 4294901760
    %4003 = vmatpush1.msra.mxu0 %v4002
    %4004 = vmatprep.subr.mxu0 0.0
    %4005 = vmatpush1.msra.mxu0 0.0
    %4006 = vmatprep.subr.mxu0 0.0
    %4007 = vmatpush1.msra.mxu0 0.0
    %4008 = vmatprep.subr.mxu0 0.0
    %4009 = vmatpush1.msra.mxu0 0.0
    %4010 = vmatprep.subr.mxu0 0.0
    %4011 = vmatpush1.msra.mxu0 0.0
    %4012 = vmatprep.subr.mxu0 0.0
    %4013 = vmatpush1.msra.mxu0 0.0
    %4014 = vmatprep.subr.mxu0 0.0
    %4015 = vmatpush1.msra.mxu0 0.0
    %4016 = vmatprep.subr.mxu0 0.0
    %4017 = vmatpush1.msra.mxu0 0.0
    %4018 = vmatprep.subr.mxu0 0.0
    %4019 = vmatpush1.msra.mxu0 0.0
    %4020 = vmatprep.subr.mxu0 0.0
    %4021 = vmatpush1.msra.mxu0 0.0
    %4022 = vmatprep.subr.mxu0 0.0
    %4023 = vmatpush1.msra.mxu0 0.0
    %4024 = vmatprep.subr.mxu0 0.0
    %4025 = vmatpush1.msra.mxu0 0.0
    %4026 = vmatprep.subr.mxu0 0.0
    %4027 = vmatpush1.msra.mxu0 0.0
    %4028 = vmatprep.subr.mxu0 0.0
    %4029 = vmatpush1.msra.mxu0 0.0
    %4030 = vmatprep.subr.mxu0 0.0
    %4031 = vmatpush1.msra.mxu0 0.0
    %4032 = vmatprep.subr.mxu0 0.0
    %4033 = vmatpush1.msra.mxu0 0.0
    %4034 = vmatprep.subr.mxu0 0.0
    %4035 = vmatpush1.msra.mxu0 0.0
    %4036 = vmatprep.mubr.f32.mxu0 0.0
    %v4037 = vand.u32 %v3609, 4294901760
    %v4038 = vsub.f32 %v3609, %v4037
    %v4039 = vand.u32 %v4038, 4294901760
    %4040 = vmatmul.mubr.f32.gmra.mrb[0].mxu0 %v4039
    %v4041 = vpop.f32.mrb[0].mxu0
    %v4042 = vadd.f32 %v3953, %v4041
    %v4043 = vpop.f32.mrb[0].mxu0
    %4044 = vdwg.mxu0
    %4045 = vmatprep.subr.mxu0 0.0
    %v4046 = vand.u32 %v1035, 4294901760
    %v4047 = vsub.f32 %v1035, %v4046
    %v4048 = vand.u32 %v4047, 4294901760
    %4049 = vmatpush1.msra.mxu0 %v4048
    %4050 = vmatprep.subr.mxu0 0.0
    %v4051 = vand.u32 %v1036, 4294901760
    %v4052 = vsub.f32 %v1036, %v4051
    %v4053 = vand.u32 %v4052, 4294901760
    %4054 = vmatpush1.msra.mxu0 %v4053
    %4055 = vmatprep.subr.mxu0 0.0
    %v4056 = vand.u32 %v1037, 4294901760
    %v4057 = vsub.f32 %v1037, %v4056
    %v4058 = vand.u32 %v4057, 4294901760
    %4059 = vmatpush1.msra.mxu0 %v4058
    %4060 = vmatprep.subr.mxu0 0.0
    %v4061 = vand.u32 %v1038, 4294901760
    %v4062 = vsub.f32 %v1038, %v4061
    %v4063 = vand.u32 %v4062, 4294901760
    %4064 = vmatpush1.msra.mxu0 %v4063
    %4065 = vmatprep.subr.mxu0 0.0
    %v4066 = vand.u32 %v1039, 4294901760
    %v4067 = vsub.f32 %v1039, %v4066
    %v4068 = vand.u32 %v4067, 4294901760
    %4069 = vmatpush1.msra.mxu0 %v4068
    %4070 = vmatprep.subr.mxu0 0.0
    %v4071 = vand.u32 %v1040, 4294901760
    %v4072 = vsub.f32 %v1040, %v4071
    %v4073 = vand.u32 %v4072, 4294901760
    %4074 = vmatpush1.msra.mxu0 %v4073
    %4075 = vmatprep.subr.mxu0 0.0
    %v4076 = vand.u32 %v1041, 4294901760
    %v4077 = vsub.f32 %v1041, %v4076
    %v4078 = vand.u32 %v4077, 4294901760
    %4079 = vmatpush1.msra.mxu0 %v4078
    %4080 = vmatprep.subr.mxu0 0.0
    %v4081 = vand.u32 %v1042, 4294901760
    %v4082 = vsub.f32 %v1042, %v4081
    %v4083 = vand.u32 %v4082, 4294901760
    %4084 = vmatpush1.msra.mxu0 %v4083
    %4085 = vmatprep.subr.mxu0 0.0
    %v4086 = vand.u32 %v1043, 4294901760
    %v4087 = vsub.f32 %v1043, %v4086
    %v4088 = vand.u32 %v4087, 4294901760
    %4089 = vmatpush1.msra.mxu0 %v4088
    %4090 = vmatprep.subr.mxu0 0.0
    %v4091 = vand.u32 %v1044, 4294901760
    %v4092 = vsub.f32 %v1044, %v4091
    %v4093 = vand.u32 %v4092, 4294901760
    %4094 = vmatpush1.msra.mxu0 %v4093
    %4095 = vmatprep.subr.mxu0 0.0
    %v4096 = vand.u32 %v1045, 4294901760
    %v4097 = vsub.f32 %v1045, %v4096
    %v4098 = vand.u32 %v4097, 4294901760
    %4099 = vmatpush1.msra.mxu0 %v4098
    %4100 = vmatprep.subr.mxu0 0.0
    %v4101 = vand.u32 %v1046, 4294901760
    %v4102 = vsub.f32 %v1046, %v4101
    %v4103 = vand.u32 %v4102, 4294901760
    %4104 = vmatpush1.msra.mxu0 %v4103
    %4105 = vmatprep.subr.mxu0 0.0
    %v4106 = vand.u32 %v1047, 4294901760
    %v4107 = vsub.f32 %v1047, %v4106
    %v4108 = vand.u32 %v4107, 4294901760
    %4109 = vmatpush1.msra.mxu0 %v4108
    %4110 = vmatprep.subr.mxu0 0.0
    %v4111 = vand.u32 %v1048, 4294901760
    %v4112 = vsub.f32 %v1048, %v4111
    %v4113 = vand.u32 %v4112, 4294901760
    %4114 = vmatpush1.msra.mxu0 %v4113
    %4115 = vmatprep.subr.mxu0 0.0
    %v4116 = vand.u32 %v1049, 4294901760
    %v4117 = vsub.f32 %v1049, %v4116
    %v4118 = vand.u32 %v4117, 4294901760
    %4119 = vmatpush1.msra.mxu0 %v4118
    %4120 = vmatprep.subr.mxu0 0.0
    %v4121 = vand.u32 %v1050, 4294901760
    %v4122 = vsub.f32 %v1050, %v4121
    %v4123 = vand.u32 %v4122, 4294901760
    %4124 = vmatpush1.msra.mxu0 %v4123
    %4125 = vmatprep.subr.mxu0 0.0
    %4126 = vmatpush1.msra.mxu0 0.0
    %4127 = vmatprep.subr.mxu0 0.0
    %4128 = vmatpush1.msra.mxu0 0.0
    %4129 = vmatprep.subr.mxu0 0.0
    %4130 = vmatpush1.msra.mxu0 0.0
    %4131 = vmatprep.subr.mxu0 0.0
    %4132 = vmatpush1.msra.mxu0 0.0
    %4133 = vmatprep.subr.mxu0 0.0
    %4134 = vmatpush1.msra.mxu0 0.0
    %4135 = vmatprep.subr.mxu0 0.0
    %4136 = vmatpush1.msra.mxu0 0.0
    %4137 = vmatprep.subr.mxu0 0.0
    %4138 = vmatpush1.msra.mxu0 0.0
    %4139 = vmatprep.subr.mxu0 0.0
    %4140 = vmatpush1.msra.mxu0 0.0
    %4141 = vmatprep.subr.mxu0 0.0
    %4142 = vmatpush1.msra.mxu0 0.0
    %4143 = vmatprep.subr.mxu0 0.0
    %4144 = vmatpush1.msra.mxu0 0.0
    %4145 = vmatprep.subr.mxu0 0.0
    %4146 = vmatpush1.msra.mxu0 0.0
    %4147 = vmatprep.subr.mxu0 0.0
    %4148 = vmatpush1.msra.mxu0 0.0
    %4149 = vmatprep.subr.mxu0 0.0
    %4150 = vmatpush1.msra.mxu0 0.0
    %4151 = vmatprep.subr.mxu0 0.0
    %4152 = vmatpush1.msra.mxu0 0.0
    %4153 = vmatprep.subr.mxu0 0.0
    %4154 = vmatpush1.msra.mxu0 0.0
    %4155 = vmatprep.subr.mxu0 0.0
    %4156 = vmatpush1.msra.mxu0 0.0
    %4157 = vmatprep.mubr.f32.mxu0 0.0
    %v4158 = vand.u32 %v3609, 4294901760
    %4159 = vmatmul.mubr.f32.gmra.mrb[0].mxu0 %v4158
    %v4160 = vpop.f32.mrb[0].mxu0
    %v4161 = vadd.f32 %v4042, %v4160
    %v4162 = vpop.f32.mrb[0].mxu0
    %4163 = vdwg.mxu0
    %4164 = vmatprep.subr.mxu0 0.0
    %v4165 = vand.u32 %v1035, 4294901760
    %4166 = vmatpush1.msra.mxu0 %v4165
    %4167 = vmatprep.subr.mxu0 0.0
    %v4168 = vand.u32 %v1036, 4294901760
    %4169 = vmatpush1.msra.mxu0 %v4168
    %4170 = vmatprep.subr.mxu0 0.0
    %v4171 = vand.u32 %v1037, 4294901760
    %4172 = vmatpush1.msra.mxu0 %v4171
    %4173 = vmatprep.subr.mxu0 0.0
    %v4174 = vand.u32 %v1038, 4294901760
    %4175 = vmatpush1.msra.mxu0 %v4174
    %4176 = vmatprep.subr.mxu0 0.0
    %v4177 = vand.u32 %v1039, 4294901760
    %4178 = vmatpush1.msra.mxu0 %v4177
    %4179 = vmatprep.subr.mxu0 0.0
    %v4180 = vand.u32 %v1040, 4294901760
    %4181 = vmatpush1.msra.mxu0 %v4180
    %4182 = vmatprep.subr.mxu0 0.0
    %v4183 = vand.u32 %v1041, 4294901760
    %4184 = vmatpush1.msra.mxu0 %v4183
    %4185 = vmatprep.subr.mxu0 0.0
    %v4186 = vand.u32 %v1042, 4294901760
    %4187 = vmatpush1.msra.mxu0 %v4186
    %4188 = vmatprep.subr.mxu0 0.0
    %v4189 = vand.u32 %v1043, 4294901760
    %4190 = vmatpush1.msra.mxu0 %v4189
    %4191 = vmatprep.subr.mxu0 0.0
    %v4192 = vand.u32 %v1044, 4294901760
    %4193 = vmatpush1.msra.mxu0 %v4192
    %4194 = vmatprep.subr.mxu0 0.0
    %v4195 = vand.u32 %v1045, 4294901760
    %4196 = vmatpush1.msra.mxu0 %v4195
    %4197 = vmatprep.subr.mxu0 0.0
    %v4198 = vand.u32 %v1046, 4294901760
    %4199 = vmatpush1.msra.mxu0 %v4198
    %4200 = vmatprep.subr.mxu0 0.0
    %v4201 = vand.u32 %v1047, 4294901760
    %4202 = vmatpush1.msra.mxu0 %v4201
    %4203 = vmatprep.subr.mxu0 0.0
    %v4204 = vand.u32 %v1048, 4294901760
    %4205 = vmatpush1.msra.mxu0 %v4204
    %4206 = vmatprep.subr.mxu0 0.0
    %v4207 = vand.u32 %v1049, 4294901760
    %4208 = vmatpush1.msra.mxu0 %v4207
    %4209 = vmatprep.subr.mxu0 0.0
    %v4210 = vand.u32 %v1050, 4294901760
    %4211 = vmatpush1.msra.mxu0 %v4210
    %4212 = vmatprep.subr.mxu0 0.0
    %4213 = vmatpush1.msra.mxu0 0.0
    %4214 = vmatprep.subr.mxu0 0.0
    %4215 = vmatpush1.msra.mxu0 0.0
    %4216 = vmatprep.subr.mxu0 0.0
    %4217 = vmatpush1.msra.mxu0 0.0
    %4218 = vmatprep.subr.mxu0 0.0
    %4219 = vmatpush1.msra.mxu0 0.0
    %4220 = vmatprep.subr.mxu0 0.0
    %4221 = vmatpush1.msra.mxu0 0.0
    %4222 = vmatprep.subr.mxu0 0.0
    %4223 = vmatpush1.msra.mxu0 0.0
    %4224 = vmatprep.subr.mxu0 0.0
    %4225 = vmatpush1.msra.mxu0 0.0
    %4226 = vmatprep.subr.mxu0 0.0
    %4227 = vmatpush1.msra.mxu0 0.0
    %4228 = vmatprep.subr.mxu0 0.0
    %4229 = vmatpush1.msra.mxu0 0.0
    %4230 = vmatprep.subr.mxu0 0.0
    %4231 = vmatpush1.msra.mxu0 0.0
    %4232 = vmatprep.subr.mxu0 0.0
    %4233 = vmatpush1.msra.mxu0 0.0
    %4234 = vmatprep.subr.mxu0 0.0
    %4235 = vmatpush1.msra.mxu0 0.0
    %4236 = vmatprep.subr.mxu0 0.0
    %4237 = vmatpush1.msra.mxu0 0.0
    %4238 = vmatprep.subr.mxu0 0.0
    %4239 = vmatpush1.msra.mxu0 0.0
    %4240 = vmatprep.subr.mxu0 0.0
    %4241 = vmatpush1.msra.mxu0 0.0
    %4242 = vmatprep.subr.mxu0 0.0
    %4243 = vmatpush1.msra.mxu0 0.0
    %4244 = vmatprep.mubr.f32.mxu0 0.0
    %v4245 = vand.u32 %v3609, 4294901760
    %4246 = vmatmul.mubr.f32.gmra.mrb[0].mxu0 %v4245
    %v4247 = vpop.f32.mrb[0].mxu0
    %v4248 = vadd.f32 %v4161, %v4247
    %v4249 = vpop.f32.mrb[0].mxu0
    %4250 = vdwg.mxu0
    %v4251 = vadd.f32 %v1014, %v4248
    %v4252 = vtanh.pop %v4251
    %4253 = vmatprep.subr.mxu0 0.0
    %v4254 = vand.u32 %v1035, 4294901760
    %4255 = vmatpush1.msra.mxu0 %v4254
    %4256 = vmatprep.subr.mxu0 0.0
    %v4257 = vand.u32 %v1036, 4294901760
    %4258 = vmatpush1.msra.mxu0 %v4257
    %4259 = vmatprep.subr.mxu0 0.0
    %v4260 = vand.u32 %v1037, 4294901760
    %4261 = vmatpush1.msra.mxu0 %v4260
    %4262 = vmatprep.subr.mxu0 0.0
    %v4263 = vand.u32 %v1038, 4294901760
    %4264 = vmatpush1.msra.mxu0 %v4263
    %4265 = vmatprep.subr.mxu0 0.0
    %v4266 = vand.u32 %v1039, 4294901760
    %4267 = vmatpush1.msra.mxu0 %v4266
    %4268 = vmatprep.subr.mxu0 0.0
    %v4269 = vand.u32 %v1040, 4294901760
    %4270 = vmatpush1.msra.mxu0 %v4269
    %4271 = vmatprep.subr.mxu0 0.0
    %v4272 = vand.u32 %v1041, 4294901760
    %4273 = vmatpush1.msra.mxu0 %v4272
    %4274 = vmatprep.subr.mxu0 0.0
    %v4275 = vand.u32 %v1042, 4294901760
    %4276 = vmatpush1.msra.mxu0 %v4275
    %4277 = vmatprep.subr.mxu0 0.0
    %v4278 = vand.u32 %v1043, 4294901760
    %4279 = vmatpush1.msra.mxu0 %v4278
    %4280 = vmatprep.subr.mxu0 0.0
    %v4281 = vand.u32 %v1044, 4294901760
    %4282 = vmatpush1.msra.mxu0 %v4281
    %4283 = vmatprep.subr.mxu0 0.0
    %v4284 = vand.u32 %v1045, 4294901760
    %4285 = vmatpush1.msra.mxu0 %v4284
    %4286 = vmatprep.subr.mxu0 0.0
    %v4287 = vand.u32 %v1046, 4294901760
    %4288 = vmatpush1.msra.mxu0 %v4287
    %4289 = vmatprep.subr.mxu0 0.0
    %v4290 = vand.u32 %v1047, 4294901760
    %4291 = vmatpush1.msra.mxu0 %v4290
    %4292 = vmatprep.subr.mxu0 0.0
    %v4293 = vand.u32 %v1048, 4294901760
    %4294 = vmatpush1.msra.mxu0 %v4293
    %4295 = vmatprep.subr.mxu0 0.0
    %v4296 = vand.u32 %v1049, 4294901760
    %4297 = vmatpush1.msra.mxu0 %v4296
    %4298 = vmatprep.subr.mxu0 0.0
    %v4299 = vand.u32 %v1050, 4294901760
    %4300 = vmatpush1.msra.mxu0 %v4299
    %4301 = vmatprep.subr.mxu0 0.0
    %4302 = vmatpush1.msra.mxu0 0.0
    %4303 = vmatprep.subr.mxu0 0.0
    %4304 = vmatpush1.msra.mxu0 0.0
    %4305 = vmatprep.subr.mxu0 0.0
    %4306 = vmatpush1.msra.mxu0 0.0
    %4307 = vmatprep.subr.mxu0 0.0
    %4308 = vmatpush1.msra.mxu0 0.0
    %4309 = vmatprep.subr.mxu0 0.0
    %4310 = vmatpush1.msra.mxu0 0.0
    %4311 = vmatprep.subr.mxu0 0.0
    %4312 = vmatpush1.msra.mxu0 0.0
    %4313 = vmatprep.subr.mxu0 0.0
    %4314 = vmatpush1.msra.mxu0 0.0
    %4315 = vmatprep.subr.mxu0 0.0
    %4316 = vmatpush1.msra.mxu0 0.0
    %4317 = vmatprep.subr.mxu0 0.0
    %4318 = vmatpush1.msra.mxu0 0.0
    %4319 = vmatprep.subr.mxu0 0.0
    %4320 = vmatpush1.msra.mxu0 0.0
    %4321 = vmatprep.subr.mxu0 0.0
    %4322 = vmatpush1.msra.mxu0 0.0
    %4323 = vmatprep.subr.mxu0 0.0
    %4324 = vmatpush1.msra.mxu0 0.0
    %4325 = vmatprep.subr.mxu0 0.0
    %4326 = vmatpush1.msra.mxu0 0.0
    %4327 = vmatprep.subr.mxu0 0.0
    %4328 = vmatpush1.msra.mxu0 0.0
    %4329 = vmatprep.subr.mxu0 0.0
    %4330 = vmatpush1.msra.mxu0 0.0
    %4331 = vmatprep.subr.mxu0 0.0
    %4332 = vmatpush1.msra.mxu0 0.0
    %4333 = vmatprep.mubr.f32.mxu0 0.0
    %v4334 = vand.u32 %v4252, 4294901760
    %v4335 = vsub.f32 %v4252, %v4334
    %v4336 = vand.u32 %v4335, 4294901760
    %v4337 = vsub.f32 %v4335, %v4336
    %v4338 = vand.u32 %v4337, 4294901760
    %4339 = vmatmul.mubr.f32.gmra.mrb[0].mxu0 %v4338
    %v4340 = vpop.f32.mrb[0].mxu0
    %v4341 = vadd.f32 0.0, %v4340
    %v4342 = vpop.f32.mrb[0].mxu0
    %4343 = vdwg.mxu0
    %4344 = vmatprep.subr.mxu0 0.0
    %v4345 = vand.u32 %v1035, 4294901760
    %v4346 = vsub.f32 %v1035, %v4345
    %v4347 = vand.u32 %v4346, 4294901760
    %v4348 = vsub.f32 %v4346, %v4347
    %v4349 = vand.u32 %v4348, 4294901760
    %4350 = vmatpush1.msra.mxu0 %v4349
    %4351 = vmatprep.subr.mxu0 0.0
    %v4352 = vand.u32 %v1036, 4294901760
    %v4353 = vsub.f32 %v1036, %v4352
    %v4354 = vand.u32 %v4353, 4294901760
    %v4355 = vsub.f32 %v4353, %v4354
    %v4356 = vand.u32 %v4355, 4294901760
    %4357 = vmatpush1.msra.mxu0 %v4356
    %4358 = vmatprep.subr.mxu0 0.0
    %v4359 = vand.u32 %v1037, 4294901760
    %v4360 = vsub.f32 %v1037, %v4359
    %v4361 = vand.u32 %v4360, 4294901760
    %v4362 = vsub.f32 %v4360, %v4361
    %v4363 = vand.u32 %v4362, 4294901760
    %4364 = vmatpush1.msra.mxu0 %v4363
    %4365 = vmatprep.subr.mxu0 0.0
    %v4366 = vand.u32 %v1038, 4294901760
    %v4367 = vsub.f32 %v1038, %v4366
    %v4368 = vand.u32 %v4367, 4294901760
    %v4369 = vsub.f32 %v4367, %v4368
    %v4370 = vand.u32 %v4369, 4294901760
    %4371 = vmatpush1.msra.mxu0 %v4370
    %4372 = vmatprep.subr.mxu0 0.0
    %v4373 = vand.u32 %v1039, 4294901760
    %v4374 = vsub.f32 %v1039, %v4373
    %v4375 = vand.u32 %v4374, 4294901760
    %v4376 = vsub.f32 %v4374, %v4375
    %v4377 = vand.u32 %v4376, 4294901760
    %4378 = vmatpush1.msra.mxu0 %v4377
    %4379 = vmatprep.subr.mxu0 0.0
    %v4380 = vand.u32 %v1040, 4294901760
    %v4381 = vsub.f32 %v1040, %v4380
    %v4382 = vand.u32 %v4381, 4294901760
    %v4383 = vsub.f32 %v4381, %v4382
    %v4384 = vand.u32 %v4383, 4294901760
    %4385 = vmatpush1.msra.mxu0 %v4384
    %4386 = vmatprep.subr.mxu0 0.0
    %v4387 = vand.u32 %v1041, 4294901760
    %v4388 = vsub.f32 %v1041, %v4387
    %v4389 = vand.u32 %v4388, 4294901760
    %v4390 = vsub.f32 %v4388, %v4389
    %v4391 = vand.u32 %v4390, 4294901760
    %4392 = vmatpush1.msra.mxu0 %v4391
    %4393 = vmatprep.subr.mxu0 0.0
    %v4394 = vand.u32 %v1042, 4294901760
    %v4395 = vsub.f32 %v1042, %v4394
    %v4396 = vand.u32 %v4395, 4294901760
    %v4397 = vsub.f32 %v4395, %v4396
    %v4398 = vand.u32 %v4397, 4294901760
    %4399 = vmatpush1.msra.mxu0 %v4398
    %4400 = vmatprep.subr.mxu0 0.0
    %v4401 = vand.u32 %v1043, 4294901760
    %v4402 = vsub.f32 %v1043, %v4401
    %v4403 = vand.u32 %v4402, 4294901760
    %v4404 = vsub.f32 %v4402, %v4403
    %v4405 = vand.u32 %v4404, 4294901760
    %4406 = vmatpush1.msra.mxu0 %v4405
    %4407 = vmatprep.subr.mxu0 0.0
    %v4408 = vand.u32 %v1044, 4294901760
    %v4409 = vsub.f32 %v1044, %v4408
    %v4410 = vand.u32 %v4409, 4294901760
    %v4411 = vsub.f32 %v4409, %v4410
    %v4412 = vand.u32 %v4411, 4294901760
    %4413 = vmatpush1.msra.mxu0 %v4412
    %4414 = vmatprep.subr.mxu0 0.0
    %v4415 = vand.u32 %v1045, 4294901760
    %v4416 = vsub.f32 %v1045, %v4415
    %v4417 = vand.u32 %v4416, 4294901760
    %v4418 = vsub.f32 %v4416, %v4417
    %v4419 = vand.u32 %v4418, 4294901760
    %4420 = vmatpush1.msra.mxu0 %v4419
    %4421 = vmatprep.subr.mxu0 0.0
    %v4422 = vand.u32 %v1046, 4294901760
    %v4423 = vsub.f32 %v1046, %v4422
    %v4424 = vand.u32 %v4423, 4294901760
    %v4425 = vsub.f32 %v4423, %v4424
    %v4426 = vand.u32 %v4425, 4294901760
    %4427 = vmatpush1.msra.mxu0 %v4426
    %4428 = vmatprep.subr.mxu0 0.0
    %v4429 = vand.u32 %v1047, 4294901760
    %v4430 = vsub.f32 %v1047, %v4429
    %v4431 = vand.u32 %v4430, 4294901760
    %v4432 = vsub.f32 %v4430, %v4431
    %v4433 = vand.u32 %v4432, 4294901760
    %4434 = vmatpush1.msra.mxu0 %v4433
    %4435 = vmatprep.subr.mxu0 0.0
    %v4436 = vand.u32 %v1048, 4294901760
    %v4437 = vsub.f32 %v1048, %v4436
    %v4438 = vand.u32 %v4437, 4294901760
    %v4439 = vsub.f32 %v4437, %v4438
    %v4440 = vand.u32 %v4439, 4294901760
    %4441 = vmatpush1.msra.mxu0 %v4440
    %4442 = vmatprep.subr.mxu0 0.0
    %v4443 = vand.u32 %v1049, 4294901760
    %v4444 = vsub.f32 %v1049, %v4443
    %v4445 = vand.u32 %v4444, 4294901760
    %v4446 = vsub.f32 %v4444, %v4445
    %v4447 = vand.u32 %v4446, 4294901760
    %4448 = vmatpush1.msra.mxu0 %v4447
    %4449 = vmatprep.subr.mxu0 0.0
    %v4450 = vand.u32 %v1050, 4294901760
    %v4451 = vsub.f32 %v1050, %v4450
    %v4452 = vand.u32 %v4451, 4294901760
    %v4453 = vsub.f32 %v4451, %v4452
    %v4454 = vand.u32 %v4453, 4294901760
    %4455 = vmatpush1.msra.mxu0 %v4454
    %4456 = vmatprep.subr.mxu0 0.0
    %4457 = vmatpush1.msra.mxu0 0.0
    %4458 = vmatprep.subr.mxu0 0.0
    %4459 = vmatpush1.msra.mxu0 0.0
    %4460 = vmatprep.subr.mxu0 0.0
    %4461 = vmatpush1.msra.mxu0 0.0
    %4462 = vmatprep.subr.mxu0 0.0
    %4463 = vmatpush1.msra.mxu0 0.0
    %4464 = vmatprep.subr.mxu0 0.0
    %4465 = vmatpush1.msra.mxu0 0.0
    %4466 = vmatprep.subr.mxu0 0.0
    %4467 = vmatpush1.msra.mxu0 0.0
    %4468 = vmatprep.subr.mxu0 0.0
    %4469 = vmatpush1.msra.mxu0 0.0
    %4470 = vmatprep.subr.mxu0 0.0
    %4471 = vmatpush1.msra.mxu0 0.0
    %4472 = vmatprep.subr.mxu0 0.0
    %4473 = vmatpush1.msra.mxu0 0.0
    %4474 = vmatprep.subr.mxu0 0.0
    %4475 = vmatpush1.msra.mxu0 0.0
    %4476 = vmatprep.subr.mxu0 0.0
    %4477 = vmatpush1.msra.mxu0 0.0
    %4478 = vmatprep.subr.mxu0 0.0
    %4479 = vmatpush1.msra.mxu0 0.0
    %4480 = vmatprep.subr.mxu0 0.0
    %4481 = vmatpush1.msra.mxu0 0.0
    %4482 = vmatprep.subr.mxu0 0.0
    %4483 = vmatpush1.msra.mxu0 0.0
    %4484 = vmatprep.subr.mxu0 0.0
    %4485 = vmatpush1.msra.mxu0 0.0
    %4486 = vmatprep.subr.mxu0 0.0
    %4487 = vmatpush1.msra.mxu0 0.0
    %4488 = vmatprep.mubr.f32.mxu0 0.0
    %v4489 = vand.u32 %v4252, 4294901760
    %4490 = vmatmul.mubr.f32.gmra.mrb[0].mxu0 %v4489
    %v4491 = vpop.f32.mrb[0].mxu0
    %v4492 = vadd.f32 %v4341, %v4491
    %v4493 = vpop.f32.mrb[0].mxu0
    %4494 = vdwg.mxu0
    %4495 = vmatprep.subr.mxu0 0.0
    %v4496 = vand.u32 %v1035, 4294901760
    %v4497 = vsub.f32 %v1035, %v4496
    %4498 = vmatpush1.msra.mxu0 %v4497
    %4499 = vmatprep.subr.mxu0 0.0
    %v4500 = vand.u32 %v1036, 4294901760
    %v4501 = vsub.f32 %v1036, %v4500
    %4502 = vmatpush1.msra.mxu0 %v4501
    %4503 = vmatprep.subr.mxu0 0.0
    %v4504 = vand.u32 %v1037, 4294901760
    %v4505 = vsub.f32 %v1037, %v4504
    %4506 = vmatpush1.msra.mxu0 %v4505
    %4507 = vmatprep.subr.mxu0 0.0
    %v4508 = vand.u32 %v1038, 4294901760
    %v4509 = vsub.f32 %v1038, %v4508
    %4510 = vmatpush1.msra.mxu0 %v4509
    %4511 = vmatprep.subr.mxu0 0.0
    %v4512 = vand.u32 %v1039, 4294901760
    %v4513 = vsub.f32 %v1039, %v4512
    %4514 = vmatpush1.msra.mxu0 %v4513
    %4515 = vmatprep.subr.mxu0 0.0
    %v4516 = vand.u32 %v1040, 4294901760
    %v4517 = vsub.f32 %v1040, %v4516
    %4518 = vmatpush1.msra.mxu0 %v4517
    %4519 = vmatprep.subr.mxu0 0.0
    %v4520 = vand.u32 %v1041, 4294901760
    %v4521 = vsub.f32 %v1041, %v4520
    %4522 = vmatpush1.msra.mxu0 %v4521
    %4523 = vmatprep.subr.mxu0 0.0
    %v4524 = vand.u32 %v1042, 4294901760
    %v4525 = vsub.f32 %v1042, %v4524
    %4526 = vmatpush1.msra.mxu0 %v4525
    %4527 = vmatprep.subr.mxu0 0.0
    %v4528 = vand.u32 %v1043, 4294901760
    %v4529 = vsub.f32 %v1043, %v4528
    %4530 = vmatpush1.msra.mxu0 %v4529
    %4531 = vmatprep.subr.mxu0 0.0
    %v4532 = vand.u32 %v1044, 4294901760
    %v4533 = vsub.f32 %v1044, %v4532
    %4534 = vmatpush1.msra.mxu0 %v4533
    %4535 = vmatprep.subr.mxu0 0.0
    %v4536 = vand.u32 %v1045, 4294901760
    %v4537 = vsub.f32 %v1045, %v4536
    %4538 = vmatpush1.msra.mxu0 %v4537
    %4539 = vmatprep.subr.mxu0 0.0
    %v4540 = vand.u32 %v1046, 4294901760
    %v4541 = vsub.f32 %v1046, %v4540
    %4542 = vmatpush1.msra.mxu0 %v4541
    %4543 = vmatprep.subr.mxu0 0.0
    %v4544 = vand.u32 %v1047, 4294901760
    %v4545 = vsub.f32 %v1047, %v4544
    %4546 = vmatpush1.msra.mxu0 %v4545
    %4547 = vmatprep.subr.mxu0 0.0
    %v4548 = vand.u32 %v1048, 4294901760
    %v4549 = vsub.f32 %v1048, %v4548
    %4550 = vmatpush1.msra.mxu0 %v4549
    %4551 = vmatprep.subr.mxu0 0.0
    %v4552 = vand.u32 %v1049, 4294901760
    %v4553 = vsub.f32 %v1049, %v4552
    %4554 = vmatpush1.msra.mxu0 %v4553
    %4555 = vmatprep.subr.mxu0 0.0
    %v4556 = vand.u32 %v1050, 4294901760
    %v4557 = vsub.f32 %v1050, %v4556
    %4558 = vmatpush1.msra.mxu0 %v4557
    %4559 = vmatprep.subr.mxu0 0.0
    %4560 = vmatpush1.msra.mxu0 0.0
    %4561 = vmatprep.subr.mxu0 0.0
    %4562 = vmatpush1.msra.mxu0 0.0
    %4563 = vmatprep.subr.mxu0 0.0
    %4564 = vmatpush1.msra.mxu0 0.0
    %4565 = vmatprep.subr.mxu0 0.0
    %4566 = vmatpush1.msra.mxu0 0.0
    %4567 = vmatprep.subr.mxu0 0.0
    %4568 = vmatpush1.msra.mxu0 0.0
    %4569 = vmatprep.subr.mxu0 0.0
    %4570 = vmatpush1.msra.mxu0 0.0
    %4571 = vmatprep.subr.mxu0 0.0
    %4572 = vmatpush1.msra.mxu0 0.0
    %4573 = vmatprep.subr.mxu0 0.0
    %4574 = vmatpush1.msra.mxu0 0.0
    %4575 = vmatprep.subr.mxu0 0.0
    %4576 = vmatpush1.msra.mxu0 0.0
    %4577 = vmatprep.subr.mxu0 0.0
    %4578 = vmatpush1.msra.mxu0 0.0
    %4579 = vmatprep.subr.mxu0 0.0
    %4580 = vmatpush1.msra.mxu0 0.0
    %4581 = vmatprep.subr.mxu0 0.0
    %4582 = vmatpush1.msra.mxu0 0.0
    %4583 = vmatprep.subr.mxu0 0.0
    %4584 = vmatpush1.msra.mxu0 0.0
    %4585 = vmatprep.subr.mxu0 0.0
    %4586 = vmatpush1.msra.mxu0 0.0
    %4587 = vmatprep.subr.mxu0 0.0
    %4588 = vmatpush1.msra.mxu0 0.0
    %4589 = vmatprep.subr.mxu0 0.0
    %4590 = vmatpush1.msra.mxu0 0.0
    %4591 = vmatprep.mubr.f32.mxu0 0.0
    %v4592 = vand.u32 %v4252, 4294901760
    %v4593 = vsub.f32 %v4252, %v4592
    %4594 = vmatmul.mubr.f32.gmra.mrb[0].mxu0 %v4593
    %v4595 = vpop.f32.mrb[0].mxu0
    %v4596 = vadd.f32 %v4492, %v4595
    %v4597 = vpop.f32.mrb[0].mxu0
    %4598 = vdwg.mxu0
    %4599 = vmatprep.subr.mxu0 0.0
    %v4600 = vand.u32 %v1035, 4294901760
    %4601 = vmatpush1.msra.mxu0 %v4600
    %4602 = vmatprep.subr.mxu0 0.0
    %v4603 = vand.u32 %v1036, 4294901760
    %4604 = vmatpush1.msra.mxu0 %v4603
    %4605 = vmatprep.subr.mxu0 0.0
    %v4606 = vand.u32 %v1037, 4294901760
    %4607 = vmatpush1.msra.mxu0 %v4606
    %4608 = vmatprep.subr.mxu0 0.0
    %v4609 = vand.u32 %v1038, 4294901760
    %4610 = vmatpush1.msra.mxu0 %v4609
    %4611 = vmatprep.subr.mxu0 0.0
    %v4612 = vand.u32 %v1039, 4294901760
    %4613 = vmatpush1.msra.mxu0 %v4612
    %4614 = vmatprep.subr.mxu0 0.0
    %v4615 = vand.u32 %v1040, 4294901760
    %4616 = vmatpush1.msra.mxu0 %v4615
    %4617 = vmatprep.subr.mxu0 0.0
    %v4618 = vand.u32 %v1041, 4294901760
    %4619 = vmatpush1.msra.mxu0 %v4618
    %4620 = vmatprep.subr.mxu0 0.0
    %v4621 = vand.u32 %v1042, 4294901760
    %4622 = vmatpush1.msra.mxu0 %v4621
    %4623 = vmatprep.subr.mxu0 0.0
    %v4624 = vand.u32 %v1043, 4294901760
    %4625 = vmatpush1.msra.mxu0 %v4624
    %4626 = vmatprep.subr.mxu0 0.0
    %v4627 = vand.u32 %v1044, 4294901760
    %4628 = vmatpush1.msra.mxu0 %v4627
    %4629 = vmatprep.subr.mxu0 0.0
    %v4630 = vand.u32 %v1045, 4294901760
    %4631 = vmatpush1.msra.mxu0 %v4630
    %4632 = vmatprep.subr.mxu0 0.0
    %v4633 = vand.u32 %v1046, 4294901760
    %4634 = vmatpush1.msra.mxu0 %v4633
    %4635 = vmatprep.subr.mxu0 0.0
    %v4636 = vand.u32 %v1047, 4294901760
    %4637 = vmatpush1.msra.mxu0 %v4636
    %4638 = vmatprep.subr.mxu0 0.0
    %v4639 = vand.u32 %v1048, 4294901760
    %4640 = vmatpush1.msra.mxu0 %v4639
    %4641 = vmatprep.subr.mxu0 0.0
    %v4642 = vand.u32 %v1049, 4294901760
    %4643 = vmatpush1.msra.mxu0 %v4642
    %4644 = vmatprep.subr.mxu0 0.0
    %v4645 = vand.u32 %v1050, 4294901760
    %4646 = vmatpush1.msra.mxu0 %v4645
    %4647 = vmatprep.subr.mxu0 0.0
    %4648 = vmatpush1.msra.mxu0 0.0
    %4649 = vmatprep.subr.mxu0 0.0
    %4650 = vmatpush1.msra.mxu0 0.0
    %4651 = vmatprep.subr.mxu0 0.0
    %4652 = vmatpush1.msra.mxu0 0.0
    %4653 = vmatprep.subr.mxu0 0.0
    %4654 = vmatpush1.msra.mxu0 0.0
    %4655 = vmatprep.subr.mxu0 0.0
    %4656 = vmatpush1.msra.mxu0 0.0
    %4657 = vmatprep.subr.mxu0 0.0
    %4658 = vmatpush1.msra.mxu0 0.0
    %4659 = vmatprep.subr.mxu0 0.0
    %4660 = vmatpush1.msra.mxu0 0.0
    %4661 = vmatprep.subr.mxu0 0.0
    %4662 = vmatpush1.msra.mxu0 0.0
    %4663 = vmatprep.subr.mxu0 0.0
    %4664 = vmatpush1.msra.mxu0 0.0
    %4665 = vmatprep.subr.mxu0 0.0
    %4666 = vmatpush1.msra.mxu0 0.0
    %4667 = vmatprep.subr.mxu0 0.0
    %4668 = vmatpush1.msra.mxu0 0.0
    %4669 = vmatprep.subr.mxu0 0.0
    %4670 = vmatpush1.msra.mxu0 0.0
    %4671 = vmatprep.subr.mxu0 0.0
    %4672 = vmatpush1.msra.mxu0 0.0
    %4673 = vmatprep.subr.mxu0 0.0
    %4674 = vmatpush1.msra.mxu0 0.0
    %4675 = vmatprep.subr.mxu0 0.0
    %4676 = vmatpush1.msra.mxu0 0.0
    %4677 = vmatprep.subr.mxu0 0.0
    %4678 = vmatpush1.msra.mxu0 0.0
    %4679 = vmatprep.mubr.f32.mxu0 0.0
    %v4680 = vand.u32 %v4252, 4294901760
    %v4681 = vsub.f32 %v4252, %v4680
    %v4682 = vand.u32 %v4681, 4294901760
    %4683 = vmatmul.mubr.f32.gmra.mrb[0].mxu0 %v4682
    %v4684 = vpop.f32.mrb[0].mxu0
    %v4685 = vadd.f32 %v4596, %v4684
    %v4686 = vpop.f32.mrb[0].mxu0
    %4687 = vdwg.mxu0
    %4688 = vmatprep.subr.mxu0 0.0
    %v4689 = vand.u32 %v1035, 4294901760
    %v4690 = vsub.f32 %v1035, %v4689
    %v4691 = vand.u32 %v4690, 4294901760
    %4692 = vmatpush1.msra.mxu0 %v4691
    %4693 = vmatprep.subr.mxu0 0.0
    %v4694 = vand.u32 %v1036, 4294901760
    %v4695 = vsub.f32 %v1036, %v4694
    %v4696 = vand.u32 %v4695, 4294901760
    %4697 = vmatpush1.msra.mxu0 %v4696
    %4698 = vmatprep.subr.mxu0 0.0
    %v4699 = vand.u32 %v1037, 4294901760
    %v4700 = vsub.f32 %v1037, %v4699
    %v4701 = vand.u32 %v4700, 4294901760
    %4702 = vmatpush1.msra.mxu0 %v4701
    %4703 = vmatprep.subr.mxu0 0.0
    %v4704 = vand.u32 %v1038, 4294901760
    %v4705 = vsub.f32 %v1038, %v4704
    %v4706 = vand.u32 %v4705, 4294901760
    %4707 = vmatpush1.msra.mxu0 %v4706
    %4708 = vmatprep.subr.mxu0 0.0
    %v4709 = vand.u32 %v1039, 4294901760
    %v4710 = vsub.f32 %v1039, %v4709
    %v4711 = vand.u32 %v4710, 4294901760
    %4712 = vmatpush1.msra.mxu0 %v4711
    %4713 = vmatprep.subr.mxu0 0.0
    %v4714 = vand.u32 %v1040, 4294901760
    %v4715 = vsub.f32 %v1040, %v4714
    %v4716 = vand.u32 %v4715, 4294901760
    %4717 = vmatpush1.msra.mxu0 %v4716
    %4718 = vmatprep.subr.mxu0 0.0
    %v4719 = vand.u32 %v1041, 4294901760
    %v4720 = vsub.f32 %v1041, %v4719
    %v4721 = vand.u32 %v4720, 4294901760
    %4722 = vmatpush1.msra.mxu0 %v4721
    %4723 = vmatprep.subr.mxu0 0.0
    %v4724 = vand.u32 %v1042, 4294901760
    %v4725 = vsub.f32 %v1042, %v4724
    %v4726 = vand.u32 %v4725, 4294901760
    %4727 = vmatpush1.msra.mxu0 %v4726
    %4728 = vmatprep.subr.mxu0 0.0
    %v4729 = vand.u32 %v1043, 4294901760
    %v4730 = vsub.f32 %v1043, %v4729
    %v4731 = vand.u32 %v4730, 4294901760
    %4732 = vmatpush1.msra.mxu0 %v4731
    %4733 = vmatprep.subr.mxu0 0.0
    %v4734 = vand.u32 %v1044, 4294901760
    %v4735 = vsub.f32 %v1044, %v4734
    %v4736 = vand.u32 %v4735, 4294901760
    %4737 = vmatpush1.msra.mxu0 %v4736
    %4738 = vmatprep.subr.mxu0 0.0
    %v4739 = vand.u32 %v1045, 4294901760
    %v4740 = vsub.f32 %v1045, %v4739
    %v4741 = vand.u32 %v4740, 4294901760
    %4742 = vmatpush1.msra.mxu0 %v4741
    %4743 = vmatprep.subr.mxu0 0.0
    %v4744 = vand.u32 %v1046, 4294901760
    %v4745 = vsub.f32 %v1046, %v4744
    %v4746 = vand.u32 %v4745, 4294901760
    %4747 = vmatpush1.msra.mxu0 %v4746
    %4748 = vmatprep.subr.mxu0 0.0
    %v4749 = vand.u32 %v1047, 4294901760
    %v4750 = vsub.f32 %v1047, %v4749
    %v4751 = vand.u32 %v4750, 4294901760
    %4752 = vmatpush1.msra.mxu0 %v4751
    %4753 = vmatprep.subr.mxu0 0.0
    %v4754 = vand.u32 %v1048, 4294901760
    %v4755 = vsub.f32 %v1048, %v4754
    %v4756 = vand.u32 %v4755, 4294901760
    %4757 = vmatpush1.msra.mxu0 %v4756
    %4758 = vmatprep.subr.mxu0 0.0
    %v4759 = vand.u32 %v1049, 4294901760
    %v4760 = vsub.f32 %v1049, %v4759
    %v4761 = vand.u32 %v4760, 4294901760
    %4762 = vmatpush1.msra.mxu0 %v4761
    %4763 = vmatprep.subr.mxu0 0.0
    %v4764 = vand.u32 %v1050, 4294901760
    %v4765 = vsub.f32 %v1050, %v4764
    %v4766 = vand.u32 %v4765, 4294901760
    %4767 = vmatpush1.msra.mxu0 %v4766
    %4768 = vmatprep.subr.mxu0 0.0
    %4769 = vmatpush1.msra.mxu0 0.0
    %4770 = vmatprep.subr.mxu0 0.0
    %4771 = vmatpush1.msra.mxu0 0.0
    %4772 = vmatprep.subr.mxu0 0.0
    %4773 = vmatpush1.msra.mxu0 0.0
    %4774 = vmatprep.subr.mxu0 0.0
    %4775 = vmatpush1.msra.mxu0 0.0
    %4776 = vmatprep.subr.mxu0 0.0
    %4777 = vmatpush1.msra.mxu0 0.0
    %4778 = vmatprep.subr.mxu0 0.0
    %4779 = vmatpush1.msra.mxu0 0.0
    %4780 = vmatprep.subr.mxu0 0.0
    %4781 = vmatpush1.msra.mxu0 0.0
    %4782 = vmatprep.subr.mxu0 0.0
    %4783 = vmatpush1.msra.mxu0 0.0
    %4784 = vmatprep.subr.mxu0 0.0
    %4785 = vmatpush1.msra.mxu0 0.0
    %4786 = vmatprep.subr.mxu0 0.0
    %4787 = vmatpush1.msra.mxu0 0.0
    %4788 = vmatprep.subr.mxu0 0.0
    %4789 = vmatpush1.msra.mxu0 0.0
    %4790 = vmatprep.subr.mxu0 0.0
    %4791 = vmatpush1.msra.mxu0 0.0
    %4792 = vmatprep.subr.mxu0 0.0
    %4793 = vmatpush1.msra.mxu0 0.0
    %4794 = vmatprep.subr.mxu0 0.0
    %4795 = vmatpush1.msra.mxu0 0.0
    %4796 = vmatprep.subr.mxu0 0.0
    %4797 = vmatpush1.msra.mxu0 0.0
    %4798 = vmatprep.subr.mxu0 0.0
    %4799 = vmatpush1.msra.mxu0 0.0
    %4800 = vmatprep.mubr.f32.mxu0 0.0
    %v4801 = vand.u32 %v4252, 4294901760
    %4802 = vmatmul.mubr.f32.gmra.mrb[0].mxu0 %v4801
    %v4803 = vpop.f32.mrb[0].mxu0
    %v4804 = vadd.f32 %v4685, %v4803
    %v4805 = vpop.f32.mrb[0].mxu0
    %4806 = vdwg.mxu0
    %4807 = vmatprep.subr.mxu0 0.0
    %v4808 = vand.u32 %v1035, 4294901760
    %4809 = vmatpush1.msra.mxu0 %v4808
    %4810 = vmatprep.subr.mxu0 0.0
    %v4811 = vand.u32 %v1036, 4294901760
    %4812 = vmatpush1.msra.mxu0 %v4811
    %4813 = vmatprep.subr.mxu0 0.0
    %v4814 = vand.u32 %v1037, 4294901760
    %4815 = vmatpush1.msra.mxu0 %v4814
    %4816 = vmatprep.subr.mxu0 0.0
    %v4817 = vand.u32 %v1038, 4294901760
    %4818 = vmatpush1.msra.mxu0 %v4817
    %4819 = vmatprep.subr.mxu0 0.0
    %v4820 = vand.u32 %v1039, 4294901760
    %4821 = vmatpush1.msra.mxu0 %v4820
    %4822 = vmatprep.subr.mxu0 0.0
    %v4823 = vand.u32 %v1040, 4294901760
    %4824 = vmatpush1.msra.mxu0 %v4823
    %4825 = vmatprep.subr.mxu0 0.0
    %v4826 = vand.u32 %v1041, 4294901760
    %4827 = vmatpush1.msra.mxu0 %v4826
    %4828 = vmatprep.subr.mxu0 0.0
    %v4829 = vand.u32 %v1042, 4294901760
    %4830 = vmatpush1.msra.mxu0 %v4829
    %4831 = vmatprep.subr.mxu0 0.0
    %v4832 = vand.u32 %v1043, 4294901760
    %4833 = vmatpush1.msra.mxu0 %v4832
    %4834 = vmatprep.subr.mxu0 0.0
    %v4835 = vand.u32 %v1044, 4294901760
    %4836 = vmatpush1.msra.mxu0 %v4835
    %4837 = vmatprep.subr.mxu0 0.0
    %v4838 = vand.u32 %v1045, 4294901760
    %4839 = vmatpush1.msra.mxu0 %v4838
    %4840 = vmatprep.subr.mxu0 0.0
    %v4841 = vand.u32 %v1046, 4294901760
    %4842 = vmatpush1.msra.mxu0 %v4841
    %4843 = vmatprep.subr.mxu0 0.0
    %v4844 = vand.u32 %v1047, 4294901760
    %4845 = vmatpush1.msra.mxu0 %v4844
    %4846 = vmatprep.subr.mxu0 0.0
    %v4847 = vand.u32 %v1048, 4294901760
    %4848 = vmatpush1.msra.mxu0 %v4847
    %4849 = vmatprep.subr.mxu0 0.0
    %v4850 = vand.u32 %v1049, 4294901760
    %4851 = vmatpush1.msra.mxu0 %v4850
    %4852 = vmatprep.subr.mxu0 0.0
    %v4853 = vand.u32 %v1050, 4294901760
    %4854 = vmatpush1.msra.mxu0 %v4853
    %4855 = vmatprep.subr.mxu0 0.0
    %4856 = vmatpush1.msra.mxu0 0.0
    %4857 = vmatprep.subr.mxu0 0.0
    %4858 = vmatpush1.msra.mxu0 0.0
    %4859 = vmatprep.subr.mxu0 0.0
    %4860 = vmatpush1.msra.mxu0 0.0
    %4861 = vmatprep.subr.mxu0 0.0
    %4862 = vmatpush1.msra.mxu0 0.0
    %4863 = vmatprep.subr.mxu0 0.0
    %4864 = vmatpush1.msra.mxu0 0.0
    %4865 = vmatprep.subr.mxu0 0.0
    %4866 = vmatpush1.msra.mxu0 0.0
    %4867 = vmatprep.subr.mxu0 0.0
    %4868 = vmatpush1.msra.mxu0 0.0
    %4869 = vmatprep.subr.mxu0 0.0
    %4870 = vmatpush1.msra.mxu0 0.0
    %4871 = vmatprep.subr.mxu0 0.0
    %4872 = vmatpush1.msra.mxu0 0.0
    %4873 = vmatprep.subr.mxu0 0.0
    %4874 = vmatpush1.msra.mxu0 0.0
    %4875 = vmatprep.subr.mxu0 0.0
    %4876 = vmatpush1.msra.mxu0 0.0
    %4877 = vmatprep.subr.mxu0 0.0
    %4878 = vmatpush1.msra.mxu0 0.0
    %4879 = vmatprep.subr.mxu0 0.0
    %4880 = vmatpush1.msra.mxu0 0.0
    %4881 = vmatprep.subr.mxu0 0.0
    %4882 = vmatpush1.msra.mxu0 0.0
    %4883 = vmatprep.subr.mxu0 0.0
    %4884 = vmatpush1.msra.mxu0 0.0
    %4885 = vmatprep.subr.mxu0 0.0
    %4886 = vmatpush1.msra.mxu0 0.0
    %4887 = vmatprep.mubr.f32.mxu0 0.0
    %v4888 = vand.u32 %v4252, 4294901760
    %4889 = vmatmul.mubr.f32.gmra.mrb[0].mxu0 %v4888
    %v4890 = vpop.f32.mrb[0].mxu0
    %v4891 = vadd.f32 %v4804, %v4890
    %v4892 = vpop.f32.mrb[0].mxu0
    %4893 = vdwg.mxu0
    %v4894 = vadd.f32 %v1020, %v4891
    %v4895 = vtanh.pop %v4894
    %4896 = vmatprep.subr.mxu0 0.0
    %v4897 = vand.u32 %v1035, 4294901760
    %4898 = vmatpush1.msra.mxu0 %v4897
    %4899 = vmatprep.subr.mxu0 0.0
    %v4900 = vand.u32 %v1036, 4294901760
    %4901 = vmatpush1.msra.mxu0 %v4900
    %4902 = vmatprep.subr.mxu0 0.0
    %v4903 = vand.u32 %v1037, 4294901760
    %4904 = vmatpush1.msra.mxu0 %v4903
    %4905 = vmatprep.subr.mxu0 0.0
    %v4906 = vand.u32 %v1038, 4294901760
    %4907 = vmatpush1.msra.mxu0 %v4906
    %4908 = vmatprep.subr.mxu0 0.0
    %v4909 = vand.u32 %v1039, 4294901760
    %4910 = vmatpush1.msra.mxu0 %v4909
    %4911 = vmatprep.subr.mxu0 0.0
    %v4912 = vand.u32 %v1040, 4294901760
    %4913 = vmatpush1.msra.mxu0 %v4912
    %4914 = vmatprep.subr.mxu0 0.0
    %v4915 = vand.u32 %v1041, 4294901760
    %4916 = vmatpush1.msra.mxu0 %v4915
    %4917 = vmatprep.subr.mxu0 0.0
    %v4918 = vand.u32 %v1042, 4294901760
    %4919 = vmatpush1.msra.mxu0 %v4918
    %4920 = vmatprep.subr.mxu0 0.0
    %v4921 = vand.u32 %v1043, 4294901760
    %4922 = vmatpush1.msra.mxu0 %v4921
    %4923 = vmatprep.subr.mxu0 0.0
    %v4924 = vand.u32 %v1044, 4294901760
    %4925 = vmatpush1.msra.mxu0 %v4924
    %4926 = vmatprep.subr.mxu0 0.0
    %v4927 = vand.u32 %v1045, 4294901760
    %4928 = vmatpush1.msra.mxu0 %v4927
    %4929 = vmatprep.subr.mxu0 0.0
    %v4930 = vand.u32 %v1046, 4294901760
    %4931 = vmatpush1.msra.mxu0 %v4930
    %4932 = vmatprep.subr.mxu0 0.0
    %v4933 = vand.u32 %v1047, 4294901760
    %4934 = vmatpush1.msra.mxu0 %v4933
    %4935 = vmatprep.subr.mxu0 0.0
    %v4936 = vand.u32 %v1048, 4294901760
    %4937 = vmatpush1.msra.mxu0 %v4936
    %4938 = vmatprep.subr.mxu0 0.0
    %v4939 = vand.u32 %v1049, 4294901760
    %4940 = vmatpush1.msra.mxu0 %v4939
    %4941 = vmatprep.subr.mxu0 0.0
    %v4942 = vand.u32 %v1050, 4294901760
    %4943 = vmatpush1.msra.mxu0 %v4942
    %4944 = vmatprep.subr.mxu0 0.0
    %4945 = vmatpush1.msra.mxu0 0.0
    %4946 = vmatprep.subr.mxu0 0.0
    %4947 = vmatpush1.msra.mxu0 0.0
    %4948 = vmatprep.subr.mxu0 0.0
    %4949 = vmatpush1.msra.mxu0 0.0
    %4950 = vmatprep.subr.mxu0 0.0
    %4951 = vmatpush1.msra.mxu0 0.0
    %4952 = vmatprep.subr.mxu0 0.0
    %4953 = vmatpush1.msra.mxu0 0.0
    %4954 = vmatprep.subr.mxu0 0.0
    %4955 = vmatpush1.msra.mxu0 0.0
    %4956 = vmatprep.subr.mxu0 0.0
    %4957 = vmatpush1.msra.mxu0 0.0
    %4958 = vmatprep.subr.mxu0 0.0
    %4959 = vmatpush1.msra.mxu0 0.0
    %4960 = vmatprep.subr.mxu0 0.0
    %4961 = vmatpush1.msra.mxu0 0.0
    %4962 = vmatprep.subr.mxu0 0.0
    %4963 = vmatpush1.msra.mxu0 0.0
    %4964 = vmatprep.subr.mxu0 0.0
    %4965 = vmatpush1.msra.mxu0 0.0
    %4966 = vmatprep.subr.mxu0 0.0
    %4967 = vmatpush1.msra.mxu0 0.0
    %4968 = vmatprep.subr.mxu0 0.0
    %4969 = vmatpush1.msra.mxu0 0.0
    %4970 = vmatprep.subr.mxu0 0.0
    %4971 = vmatpush1.msra.mxu0 0.0
    %4972 = vmatprep.subr.mxu0 0.0
    %4973 = vmatpush1.msra.mxu0 0.0
    %4974 = vmatprep.subr.mxu0 0.0
    %4975 = vmatpush1.msra.mxu0 0.0
    %4976 = vmatprep.mubr.f32.mxu0 0.0
    %v4977 = vand.u32 %v4895, 4294901760
    %v4978 = vsub.f32 %v4895, %v4977
    %v4979 = vand.u32 %v4978, 4294901760
    %v4980 = vsub.f32 %v4978, %v4979
    %v4981 = vand.u32 %v4980, 4294901760
    %4982 = vmatmul.mubr.f32.gmra.mrb[0].mxu0 %v4981
    %v4983 = vpop.f32.mrb[0].mxu0
    %v4984 = vadd.f32 0.0, %v4983
    %v4985 = vpop.f32.mrb[0].mxu0
    %4986 = vdwg.mxu0
    %4987 = vmatprep.subr.mxu0 0.0
    %v4988 = vand.u32 %v1035, 4294901760
    %v4989 = vsub.f32 %v1035, %v4988
    %v4990 = vand.u32 %v4989, 4294901760
    %v4991 = vsub.f32 %v4989, %v4990
    %v4992 = vand.u32 %v4991, 4294901760
    %4993 = vmatpush1.msra.mxu0 %v4992
    %4994 = vmatprep.subr.mxu0 0.0
    %v4995 = vand.u32 %v1036, 4294901760
    %v4996 = vsub.f32 %v1036, %v4995
    %v4997 = vand.u32 %v4996, 4294901760
    %v4998 = vsub.f32 %v4996, %v4997
    %v4999 = vand.u32 %v4998, 4294901760
    %5000 = vmatpush1.msra.mxu0 %v4999
    %5001 = vmatprep.subr.mxu0 0.0
    %v5002 = vand.u32 %v1037, 4294901760
    %v5003 = vsub.f32 %v1037, %v5002
    %v5004 = vand.u32 %v5003, 4294901760
    %v5005 = vsub.f32 %v5003, %v5004
    %v5006 = vand.u32 %v5005, 4294901760
    %5007 = vmatpush1.msra.mxu0 %v5006
    %5008 = vmatprep.subr.mxu0 0.0
    %v5009 = vand.u32 %v1038, 4294901760
    %v5010 = vsub.f32 %v1038, %v5009
    %v5011 = vand.u32 %v5010, 4294901760
    %v5012 = vsub.f32 %v5010, %v5011
    %v5013 = vand.u32 %v5012, 4294901760
    %5014 = vmatpush1.msra.mxu0 %v5013
    %5015 = vmatprep.subr.mxu0 0.0
    %v5016 = vand.u32 %v1039, 4294901760
    %v5017 = vsub.f32 %v1039, %v5016
    %v5018 = vand.u32 %v5017, 4294901760
    %v5019 = vsub.f32 %v5017, %v5018
    %v5020 = vand.u32 %v5019, 4294901760
    %5021 = vmatpush1.msra.mxu0 %v5020
    %5022 = vmatprep.subr.mxu0 0.0
    %v5023 = vand.u32 %v1040, 4294901760
    %v5024 = vsub.f32 %v1040, %v5023
    %v5025 = vand.u32 %v5024, 4294901760
    %v5026 = vsub.f32 %v5024, %v5025
    %v5027 = vand.u32 %v5026, 4294901760
    %5028 = vmatpush1.msra.mxu0 %v5027
    %5029 = vmatprep.subr.mxu0 0.0
    %v5030 = vand.u32 %v1041, 4294901760
    %v5031 = vsub.f32 %v1041, %v5030
    %v5032 = vand.u32 %v5031, 4294901760
    %v5033 = vsub.f32 %v5031, %v5032
    %v5034 = vand.u32 %v5033, 4294901760
    %5035 = vmatpush1.msra.mxu0 %v5034
    %5036 = vmatprep.subr.mxu0 0.0
    %v5037 = vand.u32 %v1042, 4294901760
    %v5038 = vsub.f32 %v1042, %v5037
    %v5039 = vand.u32 %v5038, 4294901760
    %v5040 = vsub.f32 %v5038, %v5039
    %v5041 = vand.u32 %v5040, 4294901760
    %5042 = vmatpush1.msra.mxu0 %v5041
    %5043 = vmatprep.subr.mxu0 0.0
    %v5044 = vand.u32 %v1043, 4294901760
    %v5045 = vsub.f32 %v1043, %v5044
    %v5046 = vand.u32 %v5045, 4294901760
    %v5047 = vsub.f32 %v5045, %v5046
    %v5048 = vand.u32 %v5047, 4294901760
    %5049 = vmatpush1.msra.mxu0 %v5048
    %5050 = vmatprep.subr.mxu0 0.0
    %v5051 = vand.u32 %v1044, 4294901760
    %v5052 = vsub.f32 %v1044, %v5051
    %v5053 = vand.u32 %v5052, 4294901760
    %v5054 = vsub.f32 %v5052, %v5053
    %v5055 = vand.u32 %v5054, 4294901760
    %5056 = vmatpush1.msra.mxu0 %v5055
    %5057 = vmatprep.subr.mxu0 0.0
    %v5058 = vand.u32 %v1045, 4294901760
    %v5059 = vsub.f32 %v1045, %v5058
    %v5060 = vand.u32 %v5059, 4294901760
    %v5061 = vsub.f32 %v5059, %v5060
    %v5062 = vand.u32 %v5061, 4294901760
    %5063 = vmatpush1.msra.mxu0 %v5062
    %5064 = vmatprep.subr.mxu0 0.0
    %v5065 = vand.u32 %v1046, 4294901760
    %v5066 = vsub.f32 %v1046, %v5065
    %v5067 = vand.u32 %v5066, 4294901760
    %v5068 = vsub.f32 %v5066, %v5067
    %v5069 = vand.u32 %v5068, 4294901760
    %5070 = vmatpush1.msra.mxu0 %v5069
    %5071 = vmatprep.subr.mxu0 0.0
    %v5072 = vand.u32 %v1047, 4294901760
    %v5073 = vsub.f32 %v1047, %v5072
    %v5074 = vand.u32 %v5073, 4294901760
    %v5075 = vsub.f32 %v5073, %v5074
    %v5076 = vand.u32 %v5075, 4294901760
    %5077 = vmatpush1.msra.mxu0 %v5076
    %5078 = vmatprep.subr.mxu0 0.0
    %v5079 = vand.u32 %v1048, 4294901760
    %v5080 = vsub.f32 %v1048, %v5079
    %v5081 = vand.u32 %v5080, 4294901760
    %v5082 = vsub.f32 %v5080, %v5081
    %v5083 = vand.u32 %v5082, 4294901760
    %5084 = vmatpush1.msra.mxu0 %v5083
    %5085 = vmatprep.subr.mxu0 0.0
    %v5086 = vand.u32 %v1049, 4294901760
    %v5087 = vsub.f32 %v1049, %v5086
    %v5088 = vand.u32 %v5087, 4294901760
    %v5089 = vsub.f32 %v5087, %v5088
    %v5090 = vand.u32 %v5089, 4294901760
    %5091 = vmatpush1.msra.mxu0 %v5090
    %5092 = vmatprep.subr.mxu0 0.0
    %v5093 = vand.u32 %v1050, 4294901760
    %v5094 = vsub.f32 %v1050, %v5093
    %v5095 = vand.u32 %v5094, 4294901760
    %v5096 = vsub.f32 %v5094, %v5095
    %v5097 = vand.u32 %v5096, 4294901760
    %5098 = vmatpush1.msra.mxu0 %v5097
    %5099 = vmatprep.subr.mxu0 0.0
    %5100 = vmatpush1.msra.mxu0 0.0
    %5101 = vmatprep.subr.mxu0 0.0
    %5102 = vmatpush1.msra.mxu0 0.0
    %5103 = vmatprep.subr.mxu0 0.0
    %5104 = vmatpush1.msra.mxu0 0.0
    %5105 = vmatprep.subr.mxu0 0.0
    %5106 = vmatpush1.msra.mxu0 0.0
    %5107 = vmatprep.subr.mxu0 0.0
    %5108 = vmatpush1.msra.mxu0 0.0
    %5109 = vmatprep.subr.mxu0 0.0
    %5110 = vmatpush1.msra.mxu0 0.0
    %5111 = vmatprep.subr.mxu0 0.0
    %5112 = vmatpush1.msra.mxu0 0.0
    %5113 = vmatprep.subr.mxu0 0.0
    %5114 = vmatpush1.msra.mxu0 0.0
    %5115 = vmatprep.subr.mxu0 0.0
    %5116 = vmatpush1.msra.mxu0 0.0
    %5117 = vmatprep.subr.mxu0 0.0
    %5118 = vmatpush1.msra.mxu0 0.0
    %5119 = vmatprep.subr.mxu0 0.0
    %5120 = vmatpush1.msra.mxu0 0.0
    %5121 = vmatprep.subr.mxu0 0.0
    %5122 = vmatpush1.msra.mxu0 0.0
    %5123 = vmatprep.subr.mxu0 0.0
    %5124 = vmatpush1.msra.mxu0 0.0
    %5125 = vmatprep.subr.mxu0 0.0
    %5126 = vmatpush1.msra.mxu0 0.0
    %5127 = vmatprep.subr.mxu0 0.0
    %5128 = vmatpush1.msra.mxu0 0.0
    %5129 = vmatprep.subr.mxu0 0.0
    %5130 = vmatpush1.msra.mxu0 0.0
    %5131 = vmatprep.mubr.f32.mxu0 0.0
    %v5132 = vand.u32 %v4895, 4294901760
    %5133 = vmatmul.mubr.f32.gmra.mrb[0].mxu0 %v5132
    %v5134 = vpop.f32.mrb[0].mxu0
    %v5135 = vadd.f32 %v4984, %v5134
    %v5136 = vpop.f32.mrb[0].mxu0
    %5137 = vdwg.mxu0
    %5138 = vmatprep.subr.mxu0 0.0
    %v5139 = vand.u32 %v1035, 4294901760
    %v5140 = vsub.f32 %v1035, %v5139
    %5141 = vmatpush1.msra.mxu0 %v5140
    %5142 = vmatprep.subr.mxu0 0.0
    %v5143 = vand.u32 %v1036, 4294901760
    %v5144 = vsub.f32 %v1036, %v5143
    %5145 = vmatpush1.msra.mxu0 %v5144
    %5146 = vmatprep.subr.mxu0 0.0
    %v5147 = vand.u32 %v1037, 4294901760
    %v5148 = vsub.f32 %v1037, %v5147
    %5149 = vmatpush1.msra.mxu0 %v5148
    %5150 = vmatprep.subr.mxu0 0.0
    %v5151 = vand.u32 %v1038, 4294901760
    %v5152 = vsub.f32 %v1038, %v5151
    %5153 = vmatpush1.msra.mxu0 %v5152
    %5154 = vmatprep.subr.mxu0 0.0
    %v5155 = vand.u32 %v1039, 4294901760
    %v5156 = vsub.f32 %v1039, %v5155
    %5157 = vmatpush1.msra.mxu0 %v5156
    %5158 = vmatprep.subr.mxu0 0.0
    %v5159 = vand.u32 %v1040, 4294901760
    %v5160 = vsub.f32 %v1040, %v5159
    %5161 = vmatpush1.msra.mxu0 %v5160
    %5162 = vmatprep.subr.mxu0 0.0
    %v5163 = vand.u32 %v1041, 4294901760
    %v5164 = vsub.f32 %v1041, %v5163
    %5165 = vmatpush1.msra.mxu0 %v5164
    %5166 = vmatprep.subr.mxu0 0.0
    %v5167 = vand.u32 %v1042, 4294901760
    %v5168 = vsub.f32 %v1042, %v5167
    %5169 = vmatpush1.msra.mxu0 %v5168
    %5170 = vmatprep.subr.mxu0 0.0
    %v5171 = vand.u32 %v1043, 4294901760
    %v5172 = vsub.f32 %v1043, %v5171
    %5173 = vmatpush1.msra.mxu0 %v5172
    %5174 = vmatprep.subr.mxu0 0.0
    %v5175 = vand.u32 %v1044, 4294901760
    %v5176 = vsub.f32 %v1044, %v5175
    %5177 = vmatpush1.msra.mxu0 %v5176
    %5178 = vmatprep.subr.mxu0 0.0
    %v5179 = vand.u32 %v1045, 4294901760
    %v5180 = vsub.f32 %v1045, %v5179
    %5181 = vmatpush1.msra.mxu0 %v5180
    %5182 = vmatprep.subr.mxu0 0.0
    %v5183 = vand.u32 %v1046, 4294901760
    %v5184 = vsub.f32 %v1046, %v5183
    %5185 = vmatpush1.msra.mxu0 %v5184
    %5186 = vmatprep.subr.mxu0 0.0
    %v5187 = vand.u32 %v1047, 4294901760
    %v5188 = vsub.f32 %v1047, %v5187
    %5189 = vmatpush1.msra.mxu0 %v5188
    %5190 = vmatprep.subr.mxu0 0.0
    %v5191 = vand.u32 %v1048, 4294901760
    %v5192 = vsub.f32 %v1048, %v5191
    %5193 = vmatpush1.msra.mxu0 %v5192
    %5194 = vmatprep.subr.mxu0 0.0
    %v5195 = vand.u32 %v1049, 4294901760
    %v5196 = vsub.f32 %v1049, %v5195
    %5197 = vmatpush1.msra.mxu0 %v5196
    %5198 = vmatprep.subr.mxu0 0.0
    %v5199 = vand.u32 %v1050, 4294901760
    %v5200 = vsub.f32 %v1050, %v5199
    %5201 = vmatpush1.msra.mxu0 %v5200
    %5202 = vmatprep.subr.mxu0 0.0
    %5203 = vmatpush1.msra.mxu0 0.0
    %5204 = vmatprep.subr.mxu0 0.0
    %5205 = vmatpush1.msra.mxu0 0.0
    %5206 = vmatprep.subr.mxu0 0.0
    %5207 = vmatpush1.msra.mxu0 0.0
    %5208 = vmatprep.subr.mxu0 0.0
    %5209 = vmatpush1.msra.mxu0 0.0
    %5210 = vmatprep.subr.mxu0 0.0
    %5211 = vmatpush1.msra.mxu0 0.0
    %5212 = vmatprep.subr.mxu0 0.0
    %5213 = vmatpush1.msra.mxu0 0.0
    %5214 = vmatprep.subr.mxu0 0.0
    %5215 = vmatpush1.msra.mxu0 0.0
    %5216 = vmatprep.subr.mxu0 0.0
    %5217 = vmatpush1.msra.mxu0 0.0
    %5218 = vmatprep.subr.mxu0 0.0
    %5219 = vmatpush1.msra.mxu0 0.0
    %5220 = vmatprep.subr.mxu0 0.0
    %5221 = vmatpush1.msra.mxu0 0.0
    %5222 = vmatprep.subr.mxu0 0.0
    %5223 = vmatpush1.msra.mxu0 0.0
    %5224 = vmatprep.subr.mxu0 0.0
    %5225 = vmatpush1.msra.mxu0 0.0
    %5226 = vmatprep.subr.mxu0 0.0
    %5227 = vmatpush1.msra.mxu0 0.0
    %5228 = vmatprep.subr.mxu0 0.0
    %5229 = vmatpush1.msra.mxu0 0.0
    %5230 = vmatprep.subr.mxu0 0.0
    %5231 = vmatpush1.msra.mxu0 0.0
    %5232 = vmatprep.subr.mxu0 0.0
    %5233 = vmatpush1.msra.mxu0 0.0
    %5234 = vmatprep.mubr.f32.mxu0 0.0
    %v5235 = vand.u32 %v4895, 4294901760
    %v5236 = vsub.f32 %v4895, %v5235
    %5237 = vmatmul.mubr.f32.gmra.mrb[0].mxu0 %v5236
    %v5238 = vpop.f32.mrb[0].mxu0
    %v5239 = vadd.f32 %v5135, %v5238
    %v5240 = vpop.f32.mrb[0].mxu0
    %5241 = vdwg.mxu0
    %5242 = vmatprep.subr.mxu0 0.0
    %v5243 = vand.u32 %v1035, 4294901760
    %5244 = vmatpush1.msra.mxu0 %v5243
    %5245 = vmatprep.subr.mxu0 0.0
    %v5246 = vand.u32 %v1036, 4294901760
    %5247 = vmatpush1.msra.mxu0 %v5246
    %5248 = vmatprep.subr.mxu0 0.0
    %v5249 = vand.u32 %v1037, 4294901760
    %5250 = vmatpush1.msra.mxu0 %v5249
    %5251 = vmatprep.subr.mxu0 0.0
    %v5252 = vand.u32 %v1038, 4294901760
    %5253 = vmatpush1.msra.mxu0 %v5252
    %5254 = vmatprep.subr.mxu0 0.0
    %v5255 = vand.u32 %v1039, 4294901760
    %5256 = vmatpush1.msra.mxu0 %v5255
    %5257 = vmatprep.subr.mxu0 0.0
    %v5258 = vand.u32 %v1040, 4294901760
    %5259 = vmatpush1.msra.mxu0 %v5258
    %5260 = vmatprep.subr.mxu0 0.0
    %v5261 = vand.u32 %v1041, 4294901760
    %5262 = vmatpush1.msra.mxu0 %v5261
    %5263 = vmatprep.subr.mxu0 0.0
    %v5264 = vand.u32 %v1042, 4294901760
    %5265 = vmatpush1.msra.mxu0 %v5264
    %5266 = vmatprep.subr.mxu0 0.0
    %v5267 = vand.u32 %v1043, 4294901760
    %5268 = vmatpush1.msra.mxu0 %v5267
    %5269 = vmatprep.subr.mxu0 0.0
    %v5270 = vand.u32 %v1044, 4294901760
    %5271 = vmatpush1.msra.mxu0 %v5270
    %5272 = vmatprep.subr.mxu0 0.0
    %v5273 = vand.u32 %v1045, 4294901760
    %5274 = vmatpush1.msra.mxu0 %v5273
    %5275 = vmatprep.subr.mxu0 0.0
    %v5276 = vand.u32 %v1046, 4294901760
    %5277 = vmatpush1.msra.mxu0 %v5276
    %5278 = vmatprep.subr.mxu0 0.0
    %v5279 = vand.u32 %v1047, 4294901760
    %5280 = vmatpush1.msra.mxu0 %v5279
    %5281 = vmatprep.subr.mxu0 0.0
    %v5282 = vand.u32 %v1048, 4294901760
    %5283 = vmatpush1.msra.mxu0 %v5282
    %5284 = vmatprep.subr.mxu0 0.0
    %v5285 = vand.u32 %v1049, 4294901760
    %5286 = vmatpush1.msra.mxu0 %v5285
    %5287 = vmatprep.subr.mxu0 0.0
    %v5288 = vand.u32 %v1050, 4294901760
    %5289 = vmatpush1.msra.mxu0 %v5288
    %5290 = vmatprep.subr.mxu0 0.0
    %5291 = vmatpush1.msra.mxu0 0.0
    %5292 = vmatprep.subr.mxu0 0.0
    %5293 = vmatpush1.msra.mxu0 0.0
    %5294 = vmatprep.subr.mxu0 0.0
    %5295 = vmatpush1.msra.mxu0 0.0
    %5296 = vmatprep.subr.mxu0 0.0
    %5297 = vmatpush1.msra.mxu0 0.0
    %5298 = vmatprep.subr.mxu0 0.0
    %5299 = vmatpush1.msra.mxu0 0.0
    %5300 = vmatprep.subr.mxu0 0.0
    %5301 = vmatpush1.msra.mxu0 0.0
    %5302 = vmatprep.subr.mxu0 0.0
    %5303 = vmatpush1.msra.mxu0 0.0
    %5304 = vmatprep.subr.mxu0 0.0
    %5305 = vmatpush1.msra.mxu0 0.0
    %5306 = vmatprep.subr.mxu0 0.0
    %5307 = vmatpush1.msra.mxu0 0.0
    %5308 = vmatprep.subr.mxu0 0.0
    %5309 = vmatpush1.msra.mxu0 0.0
    %5310 = vmatprep.subr.mxu0 0.0
    %5311 = vmatpush1.msra.mxu0 0.0
    %5312 = vmatprep.subr.mxu0 0.0
    %5313 = vmatpush1.msra.mxu0 0.0
    %5314 = vmatprep.subr.mxu0 0.0
    %5315 = vmatpush1.msra.mxu0 0.0
    %5316 = vmatprep.subr.mxu0 0.0
    %5317 = vmatpush1.msra.mxu0 0.0
    %5318 = vmatprep.subr.mxu0 0.0
    %5319 = vmatpush1.msra.mxu0 0.0
    %5320 = vmatprep.subr.mxu0 0.0
    %5321 = vmatpush1.msra.mxu0 0.0
    %5322 = vmatprep.mubr.f32.mxu0 0.0
    %v5323 = vand.u32 %v4895, 4294901760
    %v5324 = vsub.f32 %v4895, %v5323
    %v5325 = vand.u32 %v5324, 4294901760
    %5326 = vmatmul.mubr.f32.gmra.mrb[0].mxu0 %v5325
    %v5327 = vpop.f32.mrb[0].mxu0
    %v5328 = vadd.f32 %v5239, %v5327
    %v5329 = vpop.f32.mrb[0].mxu0
    %5330 = vdwg.mxu0
    %5331 = vmatprep.subr.mxu0 0.0
    %v5332 = vand.u32 %v1035, 4294901760
    %v5333 = vsub.f32 %v1035, %v5332
    %v5334 = vand.u32 %v5333, 4294901760
    %5335 = vmatpush1.msra.mxu0 %v5334
    %5336 = vmatprep.subr.mxu0 0.0
    %v5337 = vand.u32 %v1036, 4294901760
    %v5338 = vsub.f32 %v1036, %v5337
    %v5339 = vand.u32 %v5338, 4294901760
    %5340 = vmatpush1.msra.mxu0 %v5339
    %5341 = vmatprep.subr.mxu0 0.0
    %v5342 = vand.u32 %v1037, 4294901760
    %v5343 = vsub.f32 %v1037, %v5342
    %v5344 = vand.u32 %v5343, 4294901760
    %5345 = vmatpush1.msra.mxu0 %v5344
    %5346 = vmatprep.subr.mxu0 0.0
    %v5347 = vand.u32 %v1038, 4294901760
    %v5348 = vsub.f32 %v1038, %v5347
    %v5349 = vand.u32 %v5348, 4294901760
    %5350 = vmatpush1.msra.mxu0 %v5349
    %5351 = vmatprep.subr.mxu0 0.0
    %v5352 = vand.u32 %v1039, 4294901760
    %v5353 = vsub.f32 %v1039, %v5352
    %v5354 = vand.u32 %v5353, 4294901760
    %5355 = vmatpush1.msra.mxu0 %v5354
    %5356 = vmatprep.subr.mxu0 0.0
    %v5357 = vand.u32 %v1040, 4294901760
    %v5358 = vsub.f32 %v1040, %v5357
    %v5359 = vand.u32 %v5358, 4294901760
    %5360 = vmatpush1.msra.mxu0 %v5359
    %5361 = vmatprep.subr.mxu0 0.0
    %v5362 = vand.u32 %v1041, 4294901760
    %v5363 = vsub.f32 %v1041, %v5362
    %v5364 = vand.u32 %v5363, 4294901760
    %5365 = vmatpush1.msra.mxu0 %v5364
    %5366 = vmatprep.subr.mxu0 0.0
    %v5367 = vand.u32 %v1042, 4294901760
    %v5368 = vsub.f32 %v1042, %v5367
    %v5369 = vand.u32 %v5368, 4294901760
    %5370 = vmatpush1.msra.mxu0 %v5369
    %5371 = vmatprep.subr.mxu0 0.0
    %v5372 = vand.u32 %v1043, 4294901760
    %v5373 = vsub.f32 %v1043, %v5372
    %v5374 = vand.u32 %v5373, 4294901760
    %5375 = vmatpush1.msra.mxu0 %v5374
    %5376 = vmatprep.subr.mxu0 0.0
    %v5377 = vand.u32 %v1044, 4294901760
    %v5378 = vsub.f32 %v1044, %v5377
    %v5379 = vand.u32 %v5378, 4294901760
    %5380 = vmatpush1.msra.mxu0 %v5379
    %5381 = vmatprep.subr.mxu0 0.0
    %v5382 = vand.u32 %v1045, 4294901760
    %v5383 = vsub.f32 %v1045, %v5382
    %v5384 = vand.u32 %v5383, 4294901760
    %5385 = vmatpush1.msra.mxu0 %v5384
    %5386 = vmatprep.subr.mxu0 0.0
    %v5387 = vand.u32 %v1046, 4294901760
    %v5388 = vsub.f32 %v1046, %v5387
    %v5389 = vand.u32 %v5388, 4294901760
    %5390 = vmatpush1.msra.mxu0 %v5389
    %5391 = vmatprep.subr.mxu0 0.0
    %v5392 = vand.u32 %v1047, 4294901760
    %v5393 = vsub.f32 %v1047, %v5392
    %v5394 = vand.u32 %v5393, 4294901760
    %5395 = vmatpush1.msra.mxu0 %v5394
    %5396 = vmatprep.subr.mxu0 0.0
    %v5397 = vand.u32 %v1048, 4294901760
    %v5398 = vsub.f32 %v1048, %v5397
    %v5399 = vand.u32 %v5398, 4294901760
    %5400 = vmatpush1.msra.mxu0 %v5399
    %5401 = vmatprep.subr.mxu0 0.0
    %v5402 = vand.u32 %v1049, 4294901760
    %v5403 = vsub.f32 %v1049, %v5402
    %v5404 = vand.u32 %v5403, 4294901760
    %5405 = vmatpush1.msra.mxu0 %v5404
    %5406 = vmatprep.subr.mxu0 0.0
    %v5407 = vand.u32 %v1050, 4294901760
    %v5408 = vsub.f32 %v1050, %v5407
    %v5409 = vand.u32 %v5408, 4294901760
    %5410 = vmatpush1.msra.mxu0 %v5409
    %5411 = vmatprep.subr.mxu0 0.0
    %5412 = vmatpush1.msra.mxu0 0.0
    %5413 = vmatprep.subr.mxu0 0.0
    %5414 = vmatpush1.msra.mxu0 0.0
    %5415 = vmatprep.subr.mxu0 0.0
    %5416 = vmatpush1.msra.mxu0 0.0
    %5417 = vmatprep.subr.mxu0 0.0
    %5418 = vmatpush1.msra.mxu0 0.0
    %5419 = vmatprep.subr.mxu0 0.0
    %5420 = vmatpush1.msra.mxu0 0.0
    %5421 = vmatprep.subr.mxu0 0.0
    %5422 = vmatpush1.msra.mxu0 0.0
    %5423 = vmatprep.subr.mxu0 0.0
    %5424 = vmatpush1.msra.mxu0 0.0
    %5425 = vmatprep.subr.mxu0 0.0
    %5426 = vmatpush1.msra.mxu0 0.0
    %5427 = vmatprep.subr.mxu0 0.0
    %5428 = vmatpush1.msra.mxu0 0.0
    %5429 = vmatprep.subr.mxu0 0.0
    %5430 = vmatpush1.msra.mxu0 0.0
    %5431 = vmatprep.subr.mxu0 0.0
    %5432 = vmatpush1.msra.mxu0 0.0
    %5433 = vmatprep.subr.mxu0 0.0
    %5434 = vmatpush1.msra.mxu0 0.0
    %5435 = vmatprep.subr.mxu0 0.0
    %5436 = vmatpush1.msra.mxu0 0.0
    %5437 = vmatprep.subr.mxu0 0.0
    %5438 = vmatpush1.msra.mxu0 0.0
    %5439 = vmatprep.subr.mxu0 0.0
    %5440 = vmatpush1.msra.mxu0 0.0
    %5441 = vmatprep.subr.mxu0 0.0
    %5442 = vmatpush1.msra.mxu0 0.0
    %5443 = vmatprep.mubr.f32.mxu0 0.0
    %v5444 = vand.u32 %v4895, 4294901760
    %5445 = vmatmul.mubr.f32.gmra.mrb[0].mxu0 %v5444
    %v5446 = vpop.f32.mrb[0].mxu0
    %v5447 = vadd.f32 %v5328, %v5446
    %v5448 = vpop.f32.mrb[0].mxu0
    %5449 = vdwg.mxu0
    %5450 = vmatprep.subr.mxu0 0.0
    %v5451 = vand.u32 %v1035, 4294901760
    %5452 = vmatpush1.msra.mxu0 %v5451
    %5453 = vmatprep.subr.mxu0 0.0
    %v5454 = vand.u32 %v1036, 4294901760
    %5455 = vmatpush1.msra.mxu0 %v5454
    %5456 = vmatprep.subr.mxu0 0.0
    %v5457 = vand.u32 %v1037, 4294901760
    %5458 = vmatpush1.msra.mxu0 %v5457
    %5459 = vmatprep.subr.mxu0 0.0
    %v5460 = vand.u32 %v1038, 4294901760
    %5461 = vmatpush1.msra.mxu0 %v5460
    %5462 = vmatprep.subr.mxu0 0.0
    %v5463 = vand.u32 %v1039, 4294901760
    %5464 = vmatpush1.msra.mxu0 %v5463
    %5465 = vmatprep.subr.mxu0 0.0
    %v5466 = vand.u32 %v1040, 4294901760
    %5467 = vmatpush1.msra.mxu0 %v5466
    %5468 = vmatprep.subr.mxu0 0.0
    %v5469 = vand.u32 %v1041, 4294901760
    %5470 = vmatpush1.msra.mxu0 %v5469
    %5471 = vmatprep.subr.mxu0 0.0
    %v5472 = vand.u32 %v1042, 4294901760
    %5473 = vmatpush1.msra.mxu0 %v5472
    %5474 = vmatprep.subr.mxu0 0.0
    %v5475 = vand.u32 %v1043, 4294901760
    %5476 = vmatpush1.msra.mxu0 %v5475
    %5477 = vmatprep.subr.mxu0 0.0
    %v5478 = vand.u32 %v1044, 4294901760
    %5479 = vmatpush1.msra.mxu0 %v5478
    %5480 = vmatprep.subr.mxu0 0.0
    %v5481 = vand.u32 %v1045, 4294901760
    %5482 = vmatpush1.msra.mxu0 %v5481
    %5483 = vmatprep.subr.mxu0 0.0
    %v5484 = vand.u32 %v1046, 4294901760
    %5485 = vmatpush1.msra.mxu0 %v5484
    %5486 = vmatprep.subr.mxu0 0.0
    %v5487 = vand.u32 %v1047, 4294901760
    %5488 = vmatpush1.msra.mxu0 %v5487
    %5489 = vmatprep.subr.mxu0 0.0
    %v5490 = vand.u32 %v1048, 4294901760
    %5491 = vmatpush1.msra.mxu0 %v5490
    %5492 = vmatprep.subr.mxu0 0.0
    %v5493 = vand.u32 %v1049, 4294901760
    %5494 = vmatpush1.msra.mxu0 %v5493
    %5495 = vmatprep.subr.mxu0 0.0
    %v5496 = vand.u32 %v1050, 4294901760
    %5497 = vmatpush1.msra.mxu0 %v5496
    %5498 = vmatprep.subr.mxu0 0.0
    %5499 = vmatpush1.msra.mxu0 0.0
    %5500 = vmatprep.subr.mxu0 0.0
    %5501 = vmatpush1.msra.mxu0 0.0
    %5502 = vmatprep.subr.mxu0 0.0
    %5503 = vmatpush1.msra.mxu0 0.0
    %5504 = vmatprep.subr.mxu0 0.0
    %5505 = vmatpush1.msra.mxu0 0.0
    %5506 = vmatprep.subr.mxu0 0.0
    %5507 = vmatpush1.msra.mxu0 0.0
    %5508 = vmatprep.subr.mxu0 0.0
    %5509 = vmatpush1.msra.mxu0 0.0
    %5510 = vmatprep.subr.mxu0 0.0
    %5511 = vmatpush1.msra.mxu0 0.0
    %5512 = vmatprep.subr.mxu0 0.0
    %5513 = vmatpush1.msra.mxu0 0.0
    %5514 = vmatprep.subr.mxu0 0.0
    %5515 = vmatpush1.msra.mxu0 0.0
    %5516 = vmatprep.subr.mxu0 0.0
    %5517 = vmatpush1.msra.mxu0 0.0
    %5518 = vmatprep.subr.mxu0 0.0
    %5519 = vmatpush1.msra.mxu0 0.0
    %5520 = vmatprep.subr.mxu0 0.0
    %5521 = vmatpush1.msra.mxu0 0.0
    %5522 = vmatprep.subr.mxu0 0.0
    %5523 = vmatpush1.msra.mxu0 0.0
    %5524 = vmatprep.subr.mxu0 0.0
    %5525 = vmatpush1.msra.mxu0 0.0
    %5526 = vmatprep.subr.mxu0 0.0
    %5527 = vmatpush1.msra.mxu0 0.0
    %5528 = vmatprep.subr.mxu0 0.0
    %5529 = vmatpush1.msra.mxu0 0.0
    %5530 = vmatprep.mubr.f32.mxu0 0.0
    %v5531 = vand.u32 %v4895, 4294901760
    %5532 = vmatmul.mubr.f32.gmra.mrb[0].mxu0 %v5531
    %v5533 = vpop.f32.mrb[0].mxu0
    %v5534 = vadd.f32 %v5447, %v5533
    %v5535 = vpop.f32.mrb[0].mxu0
    %5536 = vdwg.mxu0
    %v5537 = vadd.f32 %v1026, %v5534
    %v5538 = vtanh.pop %v5537
    %5539 = vmatprep.subr.mxu0 0.0
    %v5540 = vand.u32 %v1035, 4294901760
    %5541 = vmatpush1.msra.mxu0 %v5540
    %5542 = vmatprep.subr.mxu0 0.0
    %v5543 = vand.u32 %v1036, 4294901760
    %5544 = vmatpush1.msra.mxu0 %v5543
    %5545 = vmatprep.subr.mxu0 0.0
    %v5546 = vand.u32 %v1037, 4294901760
    %5547 = vmatpush1.msra.mxu0 %v5546
    %5548 = vmatprep.subr.mxu0 0.0
    %v5549 = vand.u32 %v1038, 4294901760
    %5550 = vmatpush1.msra.mxu0 %v5549
    %5551 = vmatprep.subr.mxu0 0.0
    %v5552 = vand.u32 %v1039, 4294901760
    %5553 = vmatpush1.msra.mxu0 %v5552
    %5554 = vmatprep.subr.mxu0 0.0
    %v5555 = vand.u32 %v1040, 4294901760
    %5556 = vmatpush1.msra.mxu0 %v5555
    %5557 = vmatprep.subr.mxu0 0.0
    %v5558 = vand.u32 %v1041, 4294901760
    %5559 = vmatpush1.msra.mxu0 %v5558
    %5560 = vmatprep.subr.mxu0 0.0
    %v5561 = vand.u32 %v1042, 4294901760
    %5562 = vmatpush1.msra.mxu0 %v5561
    %5563 = vmatprep.subr.mxu0 0.0
    %v5564 = vand.u32 %v1043, 4294901760
    %5565 = vmatpush1.msra.mxu0 %v5564
    %5566 = vmatprep.subr.mxu0 0.0
    %v5567 = vand.u32 %v1044, 4294901760
    %5568 = vmatpush1.msra.mxu0 %v5567
    %5569 = vmatprep.subr.mxu0 0.0
    %v5570 = vand.u32 %v1045, 4294901760
    %5571 = vmatpush1.msra.mxu0 %v5570
    %5572 = vmatprep.subr.mxu0 0.0
    %v5573 = vand.u32 %v1046, 4294901760
    %5574 = vmatpush1.msra.mxu0 %v5573
    %5575 = vmatprep.subr.mxu0 0.0
    %v5576 = vand.u32 %v1047, 4294901760
    %5577 = vmatpush1.msra.mxu0 %v5576
    %5578 = vmatprep.subr.mxu0 0.0
    %v5579 = vand.u32 %v1048, 4294901760
    %5580 = vmatpush1.msra.mxu0 %v5579
    %5581 = vmatprep.subr.mxu0 0.0
    %v5582 = vand.u32 %v1049, 4294901760
    %5583 = vmatpush1.msra.mxu0 %v5582
    %5584 = vmatprep.subr.mxu0 0.0
    %v5585 = vand.u32 %v1050, 4294901760
    %5586 = vmatpush1.msra.mxu0 %v5585
    %5587 = vmatprep.subr.mxu0 0.0
    %5588 = vmatpush1.msra.mxu0 0.0
    %5589 = vmatprep.subr.mxu0 0.0
    %5590 = vmatpush1.msra.mxu0 0.0
    %5591 = vmatprep.subr.mxu0 0.0
    %5592 = vmatpush1.msra.mxu0 0.0
    %5593 = vmatprep.subr.mxu0 0.0
    %5594 = vmatpush1.msra.mxu0 0.0
    %5595 = vmatprep.subr.mxu0 0.0
    %5596 = vmatpush1.msra.mxu0 0.0
    %5597 = vmatprep.subr.mxu0 0.0
    %5598 = vmatpush1.msra.mxu0 0.0
    %5599 = vmatprep.subr.mxu0 0.0
    %5600 = vmatpush1.msra.mxu0 0.0
    %5601 = vmatprep.subr.mxu0 0.0
    %5602 = vmatpush1.msra.mxu0 0.0
    %5603 = vmatprep.subr.mxu0 0.0
    %5604 = vmatpush1.msra.mxu0 0.0
    %5605 = vmatprep.subr.mxu0 0.0
    %5606 = vmatpush1.msra.mxu0 0.0
    %5607 = vmatprep.subr.mxu0 0.0
    %5608 = vmatpush1.msra.mxu0 0.0
    %5609 = vmatprep.subr.mxu0 0.0
    %5610 = vmatpush1.msra.mxu0 0.0
    %5611 = vmatprep.subr.mxu0 0.0
    %5612 = vmatpush1.msra.mxu0 0.0
    %5613 = vmatprep.subr.mxu0 0.0
    %5614 = vmatpush1.msra.mxu0 0.0
    %5615 = vmatprep.subr.mxu0 0.0
    %5616 = vmatpush1.msra.mxu0 0.0
    %5617 = vmatprep.subr.mxu0 0.0
    %5618 = vmatpush1.msra.mxu0 0.0
    %5619 = vmatprep.mubr.f32.mxu0 0.0
    %v5620 = vand.u32 %v5538, 4294901760
    %v5621 = vsub.f32 %v5538, %v5620
    %v5622 = vand.u32 %v5621, 4294901760
    %v5623 = vsub.f32 %v5621, %v5622
    %v5624 = vand.u32 %v5623, 4294901760
    %5625 = vmatmul.mubr.f32.gmra.mrb[0].mxu0 %v5624
    %v5626 = vpop.f32.mrb[0].mxu0
    %v5627 = vadd.f32 0.0, %v5626
    %v5628 = vpop.f32.mrb[0].mxu0
    %5629 = vdwg.mxu0
    %5630 = vmatprep.subr.mxu0 0.0
    %v5631 = vand.u32 %v1035, 4294901760
    %v5632 = vsub.f32 %v1035, %v5631
    %v5633 = vand.u32 %v5632, 4294901760
    %v5634 = vsub.f32 %v5632, %v5633
    %v5635 = vand.u32 %v5634, 4294901760
    %5636 = vmatpush1.msra.mxu0 %v5635
    %5637 = vmatprep.subr.mxu0 0.0
    %v5638 = vand.u32 %v1036, 4294901760
    %v5639 = vsub.f32 %v1036, %v5638
    %v5640 = vand.u32 %v5639, 4294901760
    %v5641 = vsub.f32 %v5639, %v5640
    %v5642 = vand.u32 %v5641, 4294901760
    %5643 = vmatpush1.msra.mxu0 %v5642
    %5644 = vmatprep.subr.mxu0 0.0
    %v5645 = vand.u32 %v1037, 4294901760
    %v5646 = vsub.f32 %v1037, %v5645
    %v5647 = vand.u32 %v5646, 4294901760
    %v5648 = vsub.f32 %v5646, %v5647
    %v5649 = vand.u32 %v5648, 4294901760
    %5650 = vmatpush1.msra.mxu0 %v5649
    %5651 = vmatprep.subr.mxu0 0.0
    %v5652 = vand.u32 %v1038, 4294901760
    %v5653 = vsub.f32 %v1038, %v5652
    %v5654 = vand.u32 %v5653, 4294901760
    %v5655 = vsub.f32 %v5653, %v5654
    %v5656 = vand.u32 %v5655, 4294901760
    %5657 = vmatpush1.msra.mxu0 %v5656
    %5658 = vmatprep.subr.mxu0 0.0
    %v5659 = vand.u32 %v1039, 4294901760
    %v5660 = vsub.f32 %v1039, %v5659
    %v5661 = vand.u32 %v5660, 4294901760
    %v5662 = vsub.f32 %v5660, %v5661
    %v5663 = vand.u32 %v5662, 4294901760
    %5664 = vmatpush1.msra.mxu0 %v5663
    %5665 = vmatprep.subr.mxu0 0.0
    %v5666 = vand.u32 %v1040, 4294901760
    %v5667 = vsub.f32 %v1040, %v5666
    %v5668 = vand.u32 %v5667, 4294901760
    %v5669 = vsub.f32 %v5667, %v5668
    %v5670 = vand.u32 %v5669, 4294901760
    %5671 = vmatpush1.msra.mxu0 %v5670
    %5672 = vmatprep.subr.mxu0 0.0
    %v5673 = vand.u32 %v1041, 4294901760
    %v5674 = vsub.f32 %v1041, %v5673
    %v5675 = vand.u32 %v5674, 4294901760
    %v5676 = vsub.f32 %v5674, %v5675
    %v5677 = vand.u32 %v5676, 4294901760
    %5678 = vmatpush1.msra.mxu0 %v5677
    %5679 = vmatprep.subr.mxu0 0.0
    %v5680 = vand.u32 %v1042, 4294901760
    %v5681 = vsub.f32 %v1042, %v5680
    %v5682 = vand.u32 %v5681, 4294901760
    %v5683 = vsub.f32 %v5681, %v5682
    %v5684 = vand.u32 %v5683, 4294901760
    %5685 = vmatpush1.msra.mxu0 %v5684
    %5686 = vmatprep.subr.mxu0 0.0
    %v5687 = vand.u32 %v1043, 4294901760
    %v5688 = vsub.f32 %v1043, %v5687
    %v5689 = vand.u32 %v5688, 4294901760
    %v5690 = vsub.f32 %v5688, %v5689
    %v5691 = vand.u32 %v5690, 4294901760
    %5692 = vmatpush1.msra.mxu0 %v5691
    %5693 = vmatprep.subr.mxu0 0.0
    %v5694 = vand.u32 %v1044, 4294901760
    %v5695 = vsub.f32 %v1044, %v5694
    %v5696 = vand.u32 %v5695, 4294901760
    %v5697 = vsub.f32 %v5695, %v5696
    %v5698 = vand.u32 %v5697, 4294901760
    %5699 = vmatpush1.msra.mxu0 %v5698
    %5700 = vmatprep.subr.mxu0 0.0
    %v5701 = vand.u32 %v1045, 4294901760
    %v5702 = vsub.f32 %v1045, %v5701
    %v5703 = vand.u32 %v5702, 4294901760
    %v5704 = vsub.f32 %v5702, %v5703
    %v5705 = vand.u32 %v5704, 4294901760
    %5706 = vmatpush1.msra.mxu0 %v5705
    %5707 = vmatprep.subr.mxu0 0.0
    %v5708 = vand.u32 %v1046, 4294901760
    %v5709 = vsub.f32 %v1046, %v5708
    %v5710 = vand.u32 %v5709, 4294901760
    %v5711 = vsub.f32 %v5709, %v5710
    %v5712 = vand.u32 %v5711, 4294901760
    %5713 = vmatpush1.msra.mxu0 %v5712
    %5714 = vmatprep.subr.mxu0 0.0
    %v5715 = vand.u32 %v1047, 4294901760
    %v5716 = vsub.f32 %v1047, %v5715
    %v5717 = vand.u32 %v5716, 4294901760
    %v5718 = vsub.f32 %v5716, %v5717
    %v5719 = vand.u32 %v5718, 4294901760
    %5720 = vmatpush1.msra.mxu0 %v5719
    %5721 = vmatprep.subr.mxu0 0.0
    %v5722 = vand.u32 %v1048, 4294901760
    %v5723 = vsub.f32 %v1048, %v5722
    %v5724 = vand.u32 %v5723, 4294901760
    %v5725 = vsub.f32 %v5723, %v5724
    %v5726 = vand.u32 %v5725, 4294901760
    %5727 = vmatpush1.msra.mxu0 %v5726
    %5728 = vmatprep.subr.mxu0 0.0
    %v5729 = vand.u32 %v1049, 4294901760
    %v5730 = vsub.f32 %v1049, %v5729
    %v5731 = vand.u32 %v5730, 4294901760
    %v5732 = vsub.f32 %v5730, %v5731
    %v5733 = vand.u32 %v5732, 4294901760
    %5734 = vmatpush1.msra.mxu0 %v5733
    %5735 = vmatprep.subr.mxu0 0.0
    %v5736 = vand.u32 %v1050, 4294901760
    %v5737 = vsub.f32 %v1050, %v5736
    %v5738 = vand.u32 %v5737, 4294901760
    %v5739 = vsub.f32 %v5737, %v5738
    %v5740 = vand.u32 %v5739, 4294901760
    %5741 = vmatpush1.msra.mxu0 %v5740
    %5742 = vmatprep.subr.mxu0 0.0
    %5743 = vmatpush1.msra.mxu0 0.0
    %5744 = vmatprep.subr.mxu0 0.0
    %5745 = vmatpush1.msra.mxu0 0.0
    %5746 = vmatprep.subr.mxu0 0.0
    %5747 = vmatpush1.msra.mxu0 0.0
    %5748 = vmatprep.subr.mxu0 0.0
    %5749 = vmatpush1.msra.mxu0 0.0
    %5750 = vmatprep.subr.mxu0 0.0
    %5751 = vmatpush1.msra.mxu0 0.0
    %5752 = vmatprep.subr.mxu0 0.0
    %5753 = vmatpush1.msra.mxu0 0.0
    %5754 = vmatprep.subr.mxu0 0.0
    %5755 = vmatpush1.msra.mxu0 0.0
    %5756 = vmatprep.subr.mxu0 0.0
    %5757 = vmatpush1.msra.mxu0 0.0
    %5758 = vmatprep.subr.mxu0 0.0
    %5759 = vmatpush1.msra.mxu0 0.0
    %5760 = vmatprep.subr.mxu0 0.0
    %5761 = vmatpush1.msra.mxu0 0.0
    %5762 = vmatprep.subr.mxu0 0.0
    %5763 = vmatpush1.msra.mxu0 0.0
    %5764 = vmatprep.subr.mxu0 0.0
    %5765 = vmatpush1.msra.mxu0 0.0
    %5766 = vmatprep.subr.mxu0 0.0
    %5767 = vmatpush1.msra.mxu0 0.0
    %5768 = vmatprep.subr.mxu0 0.0
    %5769 = vmatpush1.msra.mxu0 0.0
    %5770 = vmatprep.subr.mxu0 0.0
    %5771 = vmatpush1.msra.mxu0 0.0
    %5772 = vmatprep.subr.mxu0 0.0
    %5773 = vmatpush1.msra.mxu0 0.0
    %5774 = vmatprep.mubr.f32.mxu0 0.0
    %v5775 = vand.u32 %v5538, 4294901760
    %5776 = vmatmul.mubr.f32.gmra.mrb[0].mxu0 %v5775
    %v5777 = vpop.f32.mrb[0].mxu0
    %v5778 = vadd.f32 %v5627, %v5777
    %v5779 = vpop.f32.mrb[0].mxu0
    %5780 = vdwg.mxu0
    %5781 = vmatprep.subr.mxu0 0.0
    %v5782 = vand.u32 %v1035, 4294901760
    %v5783 = vsub.f32 %v1035, %v5782
    %5784 = vmatpush1.msra.mxu0 %v5783
    %5785 = vmatprep.subr.mxu0 0.0
    %v5786 = vand.u32 %v1036, 4294901760
    %v5787 = vsub.f32 %v1036, %v5786
    %5788 = vmatpush1.msra.mxu0 %v5787
    %5789 = vmatprep.subr.mxu0 0.0
    %v5790 = vand.u32 %v1037, 4294901760
    %v5791 = vsub.f32 %v1037, %v5790
    %5792 = vmatpush1.msra.mxu0 %v5791
    %5793 = vmatprep.subr.mxu0 0.0
    %v5794 = vand.u32 %v1038, 4294901760
    %v5795 = vsub.f32 %v1038, %v5794
    %5796 = vmatpush1.msra.mxu0 %v5795
    %5797 = vmatprep.subr.mxu0 0.0
    %v5798 = vand.u32 %v1039, 4294901760
    %v5799 = vsub.f32 %v1039, %v5798
    %5800 = vmatpush1.msra.mxu0 %v5799
    %5801 = vmatprep.subr.mxu0 0.0
    %v5802 = vand.u32 %v1040, 4294901760
    %v5803 = vsub.f32 %v1040, %v5802
    %5804 = vmatpush1.msra.mxu0 %v5803
    %5805 = vmatprep.subr.mxu0 0.0
    %v5806 = vand.u32 %v1041, 4294901760
    %v5807 = vsub.f32 %v1041, %v5806
    %5808 = vmatpush1.msra.mxu0 %v5807
    %5809 = vmatprep.subr.mxu0 0.0
    %v5810 = vand.u32 %v1042, 4294901760
    %v5811 = vsub.f32 %v1042, %v5810
    %5812 = vmatpush1.msra.mxu0 %v5811
    %5813 = vmatprep.subr.mxu0 0.0
    %v5814 = vand.u32 %v1043, 4294901760
    %v5815 = vsub.f32 %v1043, %v5814
    %5816 = vmatpush1.msra.mxu0 %v5815
    %5817 = vmatprep.subr.mxu0 0.0
    %v5818 = vand.u32 %v1044, 4294901760
    %v5819 = vsub.f32 %v1044, %v5818
    %5820 = vmatpush1.msra.mxu0 %v5819
    %5821 = vmatprep.subr.mxu0 0.0
    %v5822 = vand.u32 %v1045, 4294901760
    %v5823 = vsub.f32 %v1045, %v5822
    %5824 = vmatpush1.msra.mxu0 %v5823
    %5825 = vmatprep.subr.mxu0 0.0
    %v5826 = vand.u32 %v1046, 4294901760
    %v5827 = vsub.f32 %v1046, %v5826
    %5828 = vmatpush1.msra.mxu0 %v5827
    %5829 = vmatprep.subr.mxu0 0.0
    %v5830 = vand.u32 %v1047, 4294901760
    %v5831 = vsub.f32 %v1047, %v5830
    %5832 = vmatpush1.msra.mxu0 %v5831
    %5833 = vmatprep.subr.mxu0 0.0
    %v5834 = vand.u32 %v1048, 4294901760
    %v5835 = vsub.f32 %v1048, %v5834
    %5836 = vmatpush1.msra.mxu0 %v5835
    %5837 = vmatprep.subr.mxu0 0.0
    %v5838 = vand.u32 %v1049, 4294901760
    %v5839 = vsub.f32 %v1049, %v5838
    %5840 = vmatpush1.msra.mxu0 %v5839
    %5841 = vmatprep.subr.mxu0 0.0
    %v5842 = vand.u32 %v1050, 4294901760
    %v5843 = vsub.f32 %v1050, %v5842
    %5844 = vmatpush1.msra.mxu0 %v5843
    %5845 = vmatprep.subr.mxu0 0.0
    %5846 = vmatpush1.msra.mxu0 0.0
    %5847 = vmatprep.subr.mxu0 0.0
    %5848 = vmatpush1.msra.mxu0 0.0
    %5849 = vmatprep.subr.mxu0 0.0
    %5850 = vmatpush1.msra.mxu0 0.0
    %5851 = vmatprep.subr.mxu0 0.0
    %5852 = vmatpush1.msra.mxu0 0.0
    %5853 = vmatprep.subr.mxu0 0.0
    %5854 = vmatpush1.msra.mxu0 0.0
    %5855 = vmatprep.subr.mxu0 0.0
    %5856 = vmatpush1.msra.mxu0 0.0
    %5857 = vmatprep.subr.mxu0 0.0
    %5858 = vmatpush1.msra.mxu0 0.0
    %5859 = vmatprep.subr.mxu0 0.0
    %5860 = vmatpush1.msra.mxu0 0.0
    %5861 = vmatprep.subr.mxu0 0.0
    %5862 = vmatpush1.msra.mxu0 0.0
    %5863 = vmatprep.subr.mxu0 0.0
    %5864 = vmatpush1.msra.mxu0 0.0
    %5865 = vmatprep.subr.mxu0 0.0
    %5866 = vmatpush1.msra.mxu0 0.0
    %5867 = vmatprep.subr.mxu0 0.0
    %5868 = vmatpush1.msra.mxu0 0.0
    %5869 = vmatprep.subr.mxu0 0.0
    %5870 = vmatpush1.msra.mxu0 0.0
    %5871 = vmatprep.subr.mxu0 0.0
    %5872 = vmatpush1.msra.mxu0 0.0
    %5873 = vmatprep.subr.mxu0 0.0
    %5874 = vmatpush1.msra.mxu0 0.0
    %5875 = vmatprep.subr.mxu0 0.0
    %5876 = vmatpush1.msra.mxu0 0.0
    %5877 = vmatprep.mubr.f32.mxu0 0.0
    %v5878 = vand.u32 %v5538, 4294901760
    %v5879 = vsub.f32 %v5538, %v5878
    %5880 = vmatmul.mubr.f32.gmra.mrb[0].mxu0 %v5879
    %v5881 = vpop.f32.mrb[0].mxu0
    %v5882 = vadd.f32 %v5778, %v5881
    %v5883 = vpop.f32.mrb[0].mxu0
    %5884 = vdwg.mxu0
    %5885 = vmatprep.subr.mxu0 0.0
    %v5886 = vand.u32 %v1035, 4294901760
    %5887 = vmatpush1.msra.mxu0 %v5886
    %5888 = vmatprep.subr.mxu0 0.0
    %v5889 = vand.u32 %v1036, 4294901760
    %5890 = vmatpush1.msra.mxu0 %v5889
    %5891 = vmatprep.subr.mxu0 0.0
    %v5892 = vand.u32 %v1037, 4294901760
    %5893 = vmatpush1.msra.mxu0 %v5892
    %5894 = vmatprep.subr.mxu0 0.0
    %v5895 = vand.u32 %v1038, 4294901760
    %5896 = vmatpush1.msra.mxu0 %v5895
    %5897 = vmatprep.subr.mxu0 0.0
    %v5898 = vand.u32 %v1039, 4294901760
    %5899 = vmatpush1.msra.mxu0 %v5898
    %5900 = vmatprep.subr.mxu0 0.0
    %v5901 = vand.u32 %v1040, 4294901760
    %5902 = vmatpush1.msra.mxu0 %v5901
    %5903 = vmatprep.subr.mxu0 0.0
    %v5904 = vand.u32 %v1041, 4294901760
    %5905 = vmatpush1.msra.mxu0 %v5904
    %5906 = vmatprep.subr.mxu0 0.0
    %v5907 = vand.u32 %v1042, 4294901760
    %5908 = vmatpush1.msra.mxu0 %v5907
    %5909 = vmatprep.subr.mxu0 0.0
    %v5910 = vand.u32 %v1043, 4294901760
    %5911 = vmatpush1.msra.mxu0 %v5910
    %5912 = vmatprep.subr.mxu0 0.0
    %v5913 = vand.u32 %v1044, 4294901760
    %5914 = vmatpush1.msra.mxu0 %v5913
    %5915 = vmatprep.subr.mxu0 0.0
    %v5916 = vand.u32 %v1045, 4294901760
    %5917 = vmatpush1.msra.mxu0 %v5916
    %5918 = vmatprep.subr.mxu0 0.0
    %v5919 = vand.u32 %v1046, 4294901760
    %5920 = vmatpush1.msra.mxu0 %v5919
    %5921 = vmatprep.subr.mxu0 0.0
    %v5922 = vand.u32 %v1047, 4294901760
    %5923 = vmatpush1.msra.mxu0 %v5922
    %5924 = vmatprep.subr.mxu0 0.0
    %v5925 = vand.u32 %v1048, 4294901760
    %5926 = vmatpush1.msra.mxu0 %v5925
    %5927 = vmatprep.subr.mxu0 0.0
    %v5928 = vand.u32 %v1049, 4294901760
    %5929 = vmatpush1.msra.mxu0 %v5928
    %5930 = vmatprep.subr.mxu0 0.0
    %v5931 = vand.u32 %v1050, 4294901760
    %5932 = vmatpush1.msra.mxu0 %v5931
    %5933 = vmatprep.subr.mxu0 0.0
    %5934 = vmatpush1.msra.mxu0 0.0
    %5935 = vmatprep.subr.mxu0 0.0
    %5936 = vmatpush1.msra.mxu0 0.0
    %5937 = vmatprep.subr.mxu0 0.0
    %5938 = vmatpush1.msra.mxu0 0.0
    %5939 = vmatprep.subr.mxu0 0.0
    %5940 = vmatpush1.msra.mxu0 0.0
    %5941 = vmatprep.subr.mxu0 0.0
    %5942 = vmatpush1.msra.mxu0 0.0
    %5943 = vmatprep.subr.mxu0 0.0
    %5944 = vmatpush1.msra.mxu0 0.0
    %5945 = vmatprep.subr.mxu0 0.0
    %5946 = vmatpush1.msra.mxu0 0.0
    %5947 = vmatprep.subr.mxu0 0.0
    %5948 = vmatpush1.msra.mxu0 0.0
    %5949 = vmatprep.subr.mxu0 0.0
    %5950 = vmatpush1.msra.mxu0 0.0
    %5951 = vmatprep.subr.mxu0 0.0
    %5952 = vmatpush1.msra.mxu0 0.0
    %5953 = vmatprep.subr.mxu0 0.0
    %5954 = vmatpush1.msra.mxu0 0.0
    %5955 = vmatprep.subr.mxu0 0.0
    %5956 = vmatpush1.msra.mxu0 0.0
    %5957 = vmatprep.subr.mxu0 0.0
    %5958 = vmatpush1.msra.mxu0 0.0
    %5959 = vmatprep.subr.mxu0 0.0
    %5960 = vmatpush1.msra.mxu0 0.0
    %5961 = vmatprep.subr.mxu0 0.0
    %5962 = vmatpush1.msra.mxu0 0.0
    %5963 = vmatprep.subr.mxu0 0.0
    %5964 = vmatpush1.msra.mxu0 0.0
    %5965 = vmatprep.mubr.f32.mxu0 0.0
    %v5966 = vand.u32 %v5538, 4294901760
    %v5967 = vsub.f32 %v5538, %v5966
    %v5968 = vand.u32 %v5967, 4294901760
    %5969 = vmatmul.mubr.f32.gmra.mrb[0].mxu0 %v5968
    %v5970 = vpop.f32.mrb[0].mxu0
    %v5971 = vadd.f32 %v5882, %v5970
    %v5972 = vpop.f32.mrb[0].mxu0
    %5973 = vdwg.mxu0
    %5974 = vmatprep.subr.mxu0 0.0
    %v5975 = vand.u32 %v1035, 4294901760
    %v5976 = vsub.f32 %v1035, %v5975
    %v5977 = vand.u32 %v5976, 4294901760
    %5978 = vmatpush1.msra.mxu0 %v5977
    %5979 = vmatprep.subr.mxu0 0.0
    %v5980 = vand.u32 %v1036, 4294901760
    %v5981 = vsub.f32 %v1036, %v5980
    %v5982 = vand.u32 %v5981, 4294901760
    %5983 = vmatpush1.msra.mxu0 %v5982
    %5984 = vmatprep.subr.mxu0 0.0
    %v5985 = vand.u32 %v1037, 4294901760
    %v5986 = vsub.f32 %v1037, %v5985
    %v5987 = vand.u32 %v5986, 4294901760
    %5988 = vmatpush1.msra.mxu0 %v5987
    %5989 = vmatprep.subr.mxu0 0.0
    %v5990 = vand.u32 %v1038, 4294901760
    %v5991 = vsub.f32 %v1038, %v5990
    %v5992 = vand.u32 %v5991, 4294901760
    %5993 = vmatpush1.msra.mxu0 %v5992
    %5994 = vmatprep.subr.mxu0 0.0
    %v5995 = vand.u32 %v1039, 4294901760
    %v5996 = vsub.f32 %v1039, %v5995
    %v5997 = vand.u32 %v5996, 4294901760
    %5998 = vmatpush1.msra.mxu0 %v5997
    %5999 = vmatprep.subr.mxu0 0.0
    %v6000 = vand.u32 %v1040, 4294901760
    %v6001 = vsub.f32 %v1040, %v6000
    %v6002 = vand.u32 %v6001, 4294901760
    %6003 = vmatpush1.msra.mxu0 %v6002
    %6004 = vmatprep.subr.mxu0 0.0
    %v6005 = vand.u32 %v1041, 4294901760
    %v6006 = vsub.f32 %v1041, %v6005
    %v6007 = vand.u32 %v6006, 4294901760
    %6008 = vmatpush1.msra.mxu0 %v6007
    %6009 = vmatprep.subr.mxu0 0.0
    %v6010 = vand.u32 %v1042, 4294901760
    %v6011 = vsub.f32 %v1042, %v6010
    %v6012 = vand.u32 %v6011, 4294901760
    %6013 = vmatpush1.msra.mxu0 %v6012
    %6014 = vmatprep.subr.mxu0 0.0
    %v6015 = vand.u32 %v1043, 4294901760
    %v6016 = vsub.f32 %v1043, %v6015
    %v6017 = vand.u32 %v6016, 4294901760
    %6018 = vmatpush1.msra.mxu0 %v6017
    %6019 = vmatprep.subr.mxu0 0.0
    %v6020 = vand.u32 %v1044, 4294901760
    %v6021 = vsub.f32 %v1044, %v6020
    %v6022 = vand.u32 %v6021, 4294901760
    %6023 = vmatpush1.msra.mxu0 %v6022
    %6024 = vmatprep.subr.mxu0 0.0
    %v6025 = vand.u32 %v1045, 4294901760
    %v6026 = vsub.f32 %v1045, %v6025
    %v6027 = vand.u32 %v6026, 4294901760
    %6028 = vmatpush1.msra.mxu0 %v6027
    %6029 = vmatprep.subr.mxu0 0.0
    %v6030 = vand.u32 %v1046, 4294901760
    %v6031 = vsub.f32 %v1046, %v6030
    %v6032 = vand.u32 %v6031, 4294901760
    %6033 = vmatpush1.msra.mxu0 %v6032
    %6034 = vmatprep.subr.mxu0 0.0
    %v6035 = vand.u32 %v1047, 4294901760
    %v6036 = vsub.f32 %v1047, %v6035
    %v6037 = vand.u32 %v6036, 4294901760
    %6038 = vmatpush1.msra.mxu0 %v6037
    %6039 = vmatprep.subr.mxu0 0.0
    %v6040 = vand.u32 %v1048, 4294901760
    %v6041 = vsub.f32 %v1048, %v6040
    %v6042 = vand.u32 %v6041, 4294901760
    %6043 = vmatpush1.msra.mxu0 %v6042
    %6044 = vmatprep.subr.mxu0 0.0
    %v6045 = vand.u32 %v1049, 4294901760
    %v6046 = vsub.f32 %v1049, %v6045
    %v6047 = vand.u32 %v6046, 4294901760
    %6048 = vmatpush1.msra.mxu0 %v6047
    %6049 = vmatprep.subr.mxu0 0.0
    %v6050 = vand.u32 %v1050, 4294901760
    %v6051 = vsub.f32 %v1050, %v6050
    %v6052 = vand.u32 %v6051, 4294901760
    %6053 = vmatpush1.msra.mxu0 %v6052
    %6054 = vmatprep.subr.mxu0 0.0
    %6055 = vmatpush1.msra.mxu0 0.0
    %6056 = vmatprep.subr.mxu0 0.0
    %6057 = vmatpush1.msra.mxu0 0.0
    %6058 = vmatprep.subr.mxu0 0.0
    %6059 = vmatpush1.msra.mxu0 0.0
    %6060 = vmatprep.subr.mxu0 0.0
    %6061 = vmatpush1.msra.mxu0 0.0
    %6062 = vmatprep.subr.mxu0 0.0
    %6063 = vmatpush1.msra.mxu0 0.0
    %6064 = vmatprep.subr.mxu0 0.0
    %6065 = vmatpush1.msra.mxu0 0.0
    %6066 = vmatprep.subr.mxu0 0.0
    %6067 = vmatpush1.msra.mxu0 0.0
    %6068 = vmatprep.subr.mxu0 0.0
    %6069 = vmatpush1.msra.mxu0 0.0
    %6070 = vmatprep.subr.mxu0 0.0
    %6071 = vmatpush1.msra.mxu0 0.0
    %6072 = vmatprep.subr.mxu0 0.0
    %6073 = vmatpush1.msra.mxu0 0.0
    %6074 = vmatprep.subr.mxu0 0.0
    %6075 = vmatpush1.msra.mxu0 0.0
    %6076 = vmatprep.subr.mxu0 0.0
    %6077 = vmatpush1.msra.mxu0 0.0
    %6078 = vmatprep.subr.mxu0 0.0
    %6079 = vmatpush1.msra.mxu0 0.0
    %6080 = vmatprep.subr.mxu0 0.0
    %6081 = vmatpush1.msra.mxu0 0.0
    %6082 = vmatprep.subr.mxu0 0.0
    %6083 = vmatpush1.msra.mxu0 0.0
    %6084 = vmatprep.subr.mxu0 0.0
    %6085 = vmatpush1.msra.mxu0 0.0
    %6086 = vmatprep.mubr.f32.mxu0 0.0
    %v6087 = vand.u32 %v5538, 4294901760
    %6088 = vmatmul.mubr.f32.gmra.mrb[0].mxu0 %v6087
    %v6089 = vpop.f32.mrb[0].mxu0
    %v6090 = vadd.f32 %v5971, %v6089
    %v6091 = vpop.f32.mrb[0].mxu0
    %6092 = vdwg.mxu0
    %6093 = vmatprep.subr.mxu0 0.0
    %v6094 = vand.u32 %v1035, 4294901760
    %6095 = vmatpush1.msra.mxu0 %v6094
    %6096 = vmatprep.subr.mxu0 0.0
    %v6097 = vand.u32 %v1036, 4294901760
    %6098 = vmatpush1.msra.mxu0 %v6097
    %6099 = vmatprep.subr.mxu0 0.0
    %v6100 = vand.u32 %v1037, 4294901760
    %6101 = vmatpush1.msra.mxu0 %v6100
    %6102 = vmatprep.subr.mxu0 0.0
    %v6103 = vand.u32 %v1038, 4294901760
    %6104 = vmatpush1.msra.mxu0 %v6103
    %6105 = vmatprep.subr.mxu0 0.0
    %v6106 = vand.u32 %v1039, 4294901760
    %6107 = vmatpush1.msra.mxu0 %v6106
    %6108 = vmatprep.subr.mxu0 0.0
    %v6109 = vand.u32 %v1040, 4294901760
    %6110 = vmatpush1.msra.mxu0 %v6109
    %6111 = vmatprep.subr.mxu0 0.0
    %v6112 = vand.u32 %v1041, 4294901760
    %6113 = vmatpush1.msra.mxu0 %v6112
    %6114 = vmatprep.subr.mxu0 0.0
    %v6115 = vand.u32 %v1042, 4294901760
    %6116 = vmatpush1.msra.mxu0 %v6115
    %6117 = vmatprep.subr.mxu0 0.0
    %v6118 = vand.u32 %v1043, 4294901760
    %6119 = vmatpush1.msra.mxu0 %v6118
    %6120 = vmatprep.subr.mxu0 0.0
    %v6121 = vand.u32 %v1044, 4294901760
    %6122 = vmatpush1.msra.mxu0 %v6121
    %6123 = vmatprep.subr.mxu0 0.0
    %v6124 = vand.u32 %v1045, 4294901760
    %6125 = vmatpush1.msra.mxu0 %v6124
    %6126 = vmatprep.subr.mxu0 0.0
    %v6127 = vand.u32 %v1046, 4294901760
    %6128 = vmatpush1.msra.mxu0 %v6127
    %6129 = vmatprep.subr.mxu0 0.0
    %v6130 = vand.u32 %v1047, 4294901760
    %6131 = vmatpush1.msra.mxu0 %v6130
    %6132 = vmatprep.subr.mxu0 0.0
    %v6133 = vand.u32 %v1048, 4294901760
    %6134 = vmatpush1.msra.mxu0 %v6133
    %6135 = vmatprep.subr.mxu0 0.0
    %v6136 = vand.u32 %v1049, 4294901760
    %6137 = vmatpush1.msra.mxu0 %v6136
    %6138 = vmatprep.subr.mxu0 0.0
    %v6139 = vand.u32 %v1050, 4294901760
    %6140 = vmatpush1.msra.mxu0 %v6139
    %6141 = vmatprep.subr.mxu0 0.0
    %6142 = vmatpush1.msra.mxu0 0.0
    %6143 = vmatprep.subr.mxu0 0.0
    %6144 = vmatpush1.msra.mxu0 0.0
    %6145 = vmatprep.subr.mxu0 0.0
    %6146 = vmatpush1.msra.mxu0 0.0
    %6147 = vmatprep.subr.mxu0 0.0
    %6148 = vmatpush1.msra.mxu0 0.0
    %6149 = vmatprep.subr.mxu0 0.0
    %6150 = vmatpush1.msra.mxu0 0.0
    %6151 = vmatprep.subr.mxu0 0.0
    %6152 = vmatpush1.msra.mxu0 0.0
    %6153 = vmatprep.subr.mxu0 0.0
    %6154 = vmatpush1.msra.mxu0 0.0
    %6155 = vmatprep.subr.mxu0 0.0
    %6156 = vmatpush1.msra.mxu0 0.0
    %6157 = vmatprep.subr.mxu0 0.0
    %6158 = vmatpush1.msra.mxu0 0.0
    %6159 = vmatprep.subr.mxu0 0.0
    %6160 = vmatpush1.msra.mxu0 0.0
    %6161 = vmatprep.subr.mxu0 0.0
    %6162 = vmatpush1.msra.mxu0 0.0
    %6163 = vmatprep.subr.mxu0 0.0
    %6164 = vmatpush1.msra.mxu0 0.0
    %6165 = vmatprep.subr.mxu0 0.0
    %6166 = vmatpush1.msra.mxu0 0.0
    %6167 = vmatprep.subr.mxu0 0.0
    %6168 = vmatpush1.msra.mxu0 0.0
    %6169 = vmatprep.subr.mxu0 0.0
    %6170 = vmatpush1.msra.mxu0 0.0
    %6171 = vmatprep.subr.mxu0 0.0
    %6172 = vmatpush1.msra.mxu0 0.0
    %6173 = vmatprep.mubr.f32.mxu0 0.0
    %v6174 = vand.u32 %v5538, 4294901760
    %6175 = vmatmul.mubr.f32.gmra.mrb[0].mxu0 %v6174
    %v6176 = vpop.f32.mrb[0].mxu0
    %v6177 = vadd.f32 %v6090, %v6176
    %v6178 = vpop.f32.mrb[0].mxu0
    %6179 = vdwg.mxu0
    %v6180 = vadd.f32 %v1032, %v6177
    %v6181 = vtanh.pop %v6180
    %v6182 = vld [vmem:[%s4] sm:$0xff]
    %v6183 = vld [vmem:[%s4 + $0x8] sm:$0xff]
    %v6184 = vld [vmem:[%s4 + $0x10] sm:$0xff]
    %v6185 = vld [vmem:[%s4 + $0x18] sm:$0xff]
    %v6186 = vld [vmem:[%s4 + $0x20] sm:$0xff]
    %v6187 = vld [vmem:[%s4 + $0x28] sm:$0xff]
    %v6188 = vld [vmem:[%s4 + $0x30] sm:$0xff]
    %v6189 = vld [vmem:[%s4 + $0x38] sm:$0xff]
    %v6190 = vld [vmem:[%s4 + $0x40] sm:$0xff]
    %v6191 = vld [vmem:[%s4 + $0x48] sm:$0xff]
    %v6192 = vld [vmem:[%s4 + $0x50] sm:$0xff]
    %v6193 = vld [vmem:[%s4 + $0x58] sm:$0xff]
    %v6194 = vld [vmem:[%s4 + $0x60] sm:$0xff]
    %v6195 = vld [vmem:[%s4 + $0x68] sm:$0xff]
    %v6196 = vld [vmem:[%s4 + $0x70] sm:$0xff]
    %v6197 = vld [vmem:[%s4 + $0x78] sm:$0xff]
    %v6198 = vld [vmem:[%s5] sm:$0x1]
    %v6200 = vlaneseq
    %v6201 = vshrl.u32 %v6200, 7
    %v6202 = vsub.s32 0, %v6201
    %v6203 = vrot.slane %v6198, %v6202
    %6205 = vmatprep.subr.mxu0 0.0
    %v6206 = vand.u32 %v6182, 4294901760
    %6207 = vmatpush1.msra.mxu0 %v6206
    %6208 = vmatprep.subr.mxu0 0.0
    %v6209 = vand.u32 %v6183, 4294901760
    %6210 = vmatpush1.msra.mxu0 %v6209
    %6211 = vmatprep.subr.mxu0 0.0
    %v6212 = vand.u32 %v6184, 4294901760
    %6213 = vmatpush1.msra.mxu0 %v6212
    %6214 = vmatprep.subr.mxu0 0.0
    %v6215 = vand.u32 %v6185, 4294901760
    %6216 = vmatpush1.msra.mxu0 %v6215
    %6217 = vmatprep.subr.mxu0 0.0
    %v6218 = vand.u32 %v6186, 4294901760
    %6219 = vmatpush1.msra.mxu0 %v6218
    %6220 = vmatprep.subr.mxu0 0.0
    %v6221 = vand.u32 %v6187, 4294901760
    %6222 = vmatpush1.msra.mxu0 %v6221
    %6223 = vmatprep.subr.mxu0 0.0
    %v6224 = vand.u32 %v6188, 4294901760
    %6225 = vmatpush1.msra.mxu0 %v6224
    %6226 = vmatprep.subr.mxu0 0.0
    %v6227 = vand.u32 %v6189, 4294901760
    %6228 = vmatpush1.msra.mxu0 %v6227
    %6229 = vmatprep.subr.mxu0 0.0
    %v6230 = vand.u32 %v6190, 4294901760
    %6231 = vmatpush1.msra.mxu0 %v6230
    %6232 = vmatprep.subr.mxu0 0.0
    %v6233 = vand.u32 %v6191, 4294901760
    %6234 = vmatpush1.msra.mxu0 %v6233
    %6235 = vmatprep.subr.mxu0 0.0
    %v6236 = vand.u32 %v6192, 4294901760
    %6237 = vmatpush1.msra.mxu0 %v6236
    %6238 = vmatprep.subr.mxu0 0.0
    %v6239 = vand.u32 %v6193, 4294901760
    %6240 = vmatpush1.msra.mxu0 %v6239
    %6241 = vmatprep.subr.mxu0 0.0
    %v6242 = vand.u32 %v6194, 4294901760
    %6243 = vmatpush1.msra.mxu0 %v6242
    %6244 = vmatprep.subr.mxu0 0.0
    %v6245 = vand.u32 %v6195, 4294901760
    %6246 = vmatpush1.msra.mxu0 %v6245
    %6247 = vmatprep.subr.mxu0 0.0
    %v6248 = vand.u32 %v6196, 4294901760
    %6249 = vmatpush1.msra.mxu0 %v6248
    %6250 = vmatprep.subr.mxu0 0.0
    %v6251 = vand.u32 %v6197, 4294901760
    %6252 = vmatpush1.msra.mxu0 %v6251
    %6253 = vmatprep.subr.mxu0 0.0
    %6254 = vmatpush1.msra.mxu0 0.0
    %6255 = vmatprep.subr.mxu0 0.0
    %6256 = vmatpush1.msra.mxu0 0.0
    %6257 = vmatprep.subr.mxu0 0.0
    %6258 = vmatpush1.msra.mxu0 0.0
    %6259 = vmatprep.subr.mxu0 0.0
    %6260 = vmatpush1.msra.mxu0 0.0
    %6261 = vmatprep.subr.mxu0 0.0
    %6262 = vmatpush1.msra.mxu0 0.0
    %6263 = vmatprep.subr.mxu0 0.0
    %6264 = vmatpush1.msra.mxu0 0.0
    %6265 = vmatprep.subr.mxu0 0.0
    %6266 = vmatpush1.msra.mxu0 0.0
    %6267 = vmatprep.subr.mxu0 0.0
    %6268 = vmatpush1.msra.mxu0 0.0
    %6269 = vmatprep.subr.mxu0 0.0
    %6270 = vmatpush1.msra.mxu0 0.0
    %6271 = vmatprep.subr.mxu0 0.0
    %6272 = vmatpush1.msra.mxu0 0.0
    %6273 = vmatprep.subr.mxu0 0.0
    %6274 = vmatpush1.msra.mxu0 0.0
    %6275 = vmatprep.subr.mxu0 0.0
    %6276 = vmatpush1.msra.mxu0 0.0
    %6277 = vmatprep.subr.mxu0 0.0
    %6278 = vmatpush1.msra.mxu0 0.0
    %6279 = vmatprep.subr.mxu0 0.0
    %6280 = vmatpush1.msra.mxu0 0.0
    %6281 = vmatprep.subr.mxu0 0.0
    %6282 = vmatpush1.msra.mxu0 0.0
    %6283 = vmatprep.subr.mxu0 0.0
    %6284 = vmatpush1.msra.mxu0 0.0
    %6285 = vmatprep.mubr.f32.mxu0 0.0
    %v6286 = vand.u32 %v6181, 4294901760
    %v6287 = vsub.f32 %v6181, %v6286
    %v6288 = vand.u32 %v6287, 4294901760
    %v6289 = vsub.f32 %v6287, %v6288
    %v6290 = vand.u32 %v6289, 4294901760
    %6291 = vmatmul.mubr.f32.gmra.mrb[0].mxu0 %v6290
    %v6292 = vpop.f32.mrb[0].mxu0
    %v6293 = vadd.f32 %v6203, %v6292
    %v6294 = vpop.f32.mrb[0].mxu0
    %6295 = vdwg.mxu0
    %6296 = vmatprep.subr.mxu0 0.0
    %v6297 = vand.u32 %v6182, 4294901760
    %v6298 = vsub.f32 %v6182, %v6297
    %v6299 = vand.u32 %v6298, 4294901760
    %v6300 = vsub.f32 %v6298, %v6299
    %v6301 = vand.u32 %v6300, 4294901760
    %6302 = vmatpush1.msra.mxu0 %v6301
    %6303 = vmatprep.subr.mxu0 0.0
    %v6304 = vand.u32 %v6183, 4294901760
    %v6305 = vsub.f32 %v6183, %v6304
    %v6306 = vand.u32 %v6305, 4294901760
    %v6307 = vsub.f32 %v6305, %v6306
    %v6308 = vand.u32 %v6307, 4294901760
    %6309 = vmatpush1.msra.mxu0 %v6308
    %6310 = vmatprep.subr.mxu0 0.0
    %v6311 = vand.u32 %v6184, 4294901760
    %v6312 = vsub.f32 %v6184, %v6311
    %v6313 = vand.u32 %v6312, 4294901760
    %v6314 = vsub.f32 %v6312, %v6313
    %v6315 = vand.u32 %v6314, 4294901760
    %6316 = vmatpush1.msra.mxu0 %v6315
    %6317 = vmatprep.subr.mxu0 0.0
    %v6318 = vand.u32 %v6185, 4294901760
    %v6319 = vsub.f32 %v6185, %v6318
    %v6320 = vand.u32 %v6319, 4294901760
    %v6321 = vsub.f32 %v6319, %v6320
    %v6322 = vand.u32 %v6321, 4294901760
    %6323 = vmatpush1.msra.mxu0 %v6322
    %6324 = vmatprep.subr.mxu0 0.0
    %v6325 = vand.u32 %v6186, 4294901760
    %v6326 = vsub.f32 %v6186, %v6325
    %v6327 = vand.u32 %v6326, 4294901760
    %v6328 = vsub.f32 %v6326, %v6327
    %v6329 = vand.u32 %v6328, 4294901760
    %6330 = vmatpush1.msra.mxu0 %v6329
    %6331 = vmatprep.subr.mxu0 0.0
    %v6332 = vand.u32 %v6187, 4294901760
    %v6333 = vsub.f32 %v6187, %v6332
    %v6334 = vand.u32 %v6333, 4294901760
    %v6335 = vsub.f32 %v6333, %v6334
    %v6336 = vand.u32 %v6335, 4294901760
    %6337 = vmatpush1.msra.mxu0 %v6336
    %6338 = vmatprep.subr.mxu0 0.0
    %v6339 = vand.u32 %v6188, 4294901760
    %v6340 = vsub.f32 %v6188, %v6339
    %v6341 = vand.u32 %v6340, 4294901760
    %v6342 = vsub.f32 %v6340, %v6341
    %v6343 = vand.u32 %v6342, 4294901760
    %6344 = vmatpush1.msra.mxu0 %v6343
    %6345 = vmatprep.subr.mxu0 0.0
    %v6346 = vand.u32 %v6189, 4294901760
    %v6347 = vsub.f32 %v6189, %v6346
    %v6348 = vand.u32 %v6347, 4294901760
    %v6349 = vsub.f32 %v6347, %v6348
    %v6350 = vand.u32 %v6349, 4294901760
    %6351 = vmatpush1.msra.mxu0 %v6350
    %6352 = vmatprep.subr.mxu0 0.0
    %v6353 = vand.u32 %v6190, 4294901760
    %v6354 = vsub.f32 %v6190, %v6353
    %v6355 = vand.u32 %v6354, 4294901760
    %v6356 = vsub.f32 %v6354, %v6355
    %v6357 = vand.u32 %v6356, 4294901760
    %6358 = vmatpush1.msra.mxu0 %v6357
    %6359 = vmatprep.subr.mxu0 0.0
    %v6360 = vand.u32 %v6191, 4294901760
    %v6361 = vsub.f32 %v6191, %v6360
    %v6362 = vand.u32 %v6361, 4294901760
    %v6363 = vsub.f32 %v6361, %v6362
    %v6364 = vand.u32 %v6363, 4294901760
    %6365 = vmatpush1.msra.mxu0 %v6364
    %6366 = vmatprep.subr.mxu0 0.0
    %v6367 = vand.u32 %v6192, 4294901760
    %v6368 = vsub.f32 %v6192, %v6367
    %v6369 = vand.u32 %v6368, 4294901760
    %v6370 = vsub.f32 %v6368, %v6369
    %v6371 = vand.u32 %v6370, 4294901760
    %6372 = vmatpush1.msra.mxu0 %v6371
    %6373 = vmatprep.subr.mxu0 0.0
    %v6374 = vand.u32 %v6193, 4294901760
    %v6375 = vsub.f32 %v6193, %v6374
    %v6376 = vand.u32 %v6375, 4294901760
    %v6377 = vsub.f32 %v6375, %v6376
    %v6378 = vand.u32 %v6377, 4294901760
    %6379 = vmatpush1.msra.mxu0 %v6378
    %6380 = vmatprep.subr.mxu0 0.0
    %v6381 = vand.u32 %v6194, 4294901760
    %v6382 = vsub.f32 %v6194, %v6381
    %v6383 = vand.u32 %v6382, 4294901760
    %v6384 = vsub.f32 %v6382, %v6383
    %v6385 = vand.u32 %v6384, 4294901760
    %6386 = vmatpush1.msra.mxu0 %v6385
    %6387 = vmatprep.subr.mxu0 0.0
    %v6388 = vand.u32 %v6195, 4294901760
    %v6389 = vsub.f32 %v6195, %v6388
    %v6390 = vand.u32 %v6389, 4294901760
    %v6391 = vsub.f32 %v6389, %v6390
    %v6392 = vand.u32 %v6391, 4294901760
    %6393 = vmatpush1.msra.mxu0 %v6392
    %6394 = vmatprep.subr.mxu0 0.0
    %v6395 = vand.u32 %v6196, 4294901760
    %v6396 = vsub.f32 %v6196, %v6395
    %v6397 = vand.u32 %v6396, 4294901760
    %v6398 = vsub.f32 %v6396, %v6397
    %v6399 = vand.u32 %v6398, 4294901760
    %6400 = vmatpush1.msra.mxu0 %v6399
    %6401 = vmatprep.subr.mxu0 0.0
    %v6402 = vand.u32 %v6197, 4294901760
    %v6403 = vsub.f32 %v6197, %v6402
    %v6404 = vand.u32 %v6403, 4294901760
    %v6405 = vsub.f32 %v6403, %v6404
    %v6406 = vand.u32 %v6405, 4294901760
    %6407 = vmatpush1.msra.mxu0 %v6406
    %6408 = vmatprep.subr.mxu0 0.0
    %6409 = vmatpush1.msra.mxu0 0.0
    %6410 = vmatprep.subr.mxu0 0.0
    %6411 = vmatpush1.msra.mxu0 0.0
    %6412 = vmatprep.subr.mxu0 0.0
    %6413 = vmatpush1.msra.mxu0 0.0
    %6414 = vmatprep.subr.mxu0 0.0
    %6415 = vmatpush1.msra.mxu0 0.0
    %6416 = vmatprep.subr.mxu0 0.0
    %6417 = vmatpush1.msra.mxu0 0.0
    %6418 = vmatprep.subr.mxu0 0.0
    %6419 = vmatpush1.msra.mxu0 0.0
    %6420 = vmatprep.subr.mxu0 0.0
    %6421 = vmatpush1.msra.mxu0 0.0
    %6422 = vmatprep.subr.mxu0 0.0
    %6423 = vmatpush1.msra.mxu0 0.0
    %6424 = vmatprep.subr.mxu0 0.0
    %6425 = vmatpush1.msra.mxu0 0.0
    %6426 = vmatprep.subr.mxu0 0.0
    %6427 = vmatpush1.msra.mxu0 0.0
    %6428 = vmatprep.subr.mxu0 0.0
    %6429 = vmatpush1.msra.mxu0 0.0
    %6430 = vmatprep.subr.mxu0 0.0
    %6431 = vmatpush1.msra.mxu0 0.0
    %6432 = vmatprep.subr.mxu0 0.0
    %6433 = vmatpush1.msra.mxu0 0.0
    %6434 = vmatprep.subr.mxu0 0.0
    %6435 = vmatpush1.msra.mxu0 0.0
    %6436 = vmatprep.subr.mxu0 0.0
    %6437 = vmatpush1.msra.mxu0 0.0
    %6438 = vmatprep.subr.mxu0 0.0
    %6439 = vmatpush1.msra.mxu0 0.0
    %6440 = vmatprep.mubr.f32.mxu0 0.0
    %v6441 = vand.u32 %v6181, 4294901760
    %6442 = vmatmul.mubr.f32.gmra.mrb[0].mxu0 %v6441
    %v6443 = vpop.f32.mrb[0].mxu0
    %v6444 = vadd.f32 %v6293, %v6443
    %v6445 = vpop.f32.mrb[0].mxu0
    %6446 = vdwg.mxu0
    %6447 = vmatprep.subr.mxu0 0.0
    %v6448 = vand.u32 %v6182, 4294901760
    %v6449 = vsub.f32 %v6182, %v6448
    %6450 = vmatpush1.msra.mxu0 %v6449
    %6451 = vmatprep.subr.mxu0 0.0
    %v6452 = vand.u32 %v6183, 4294901760
    %v6453 = vsub.f32 %v6183, %v6452
    %6454 = vmatpush1.msra.mxu0 %v6453
    %6455 = vmatprep.subr.mxu0 0.0
    %v6456 = vand.u32 %v6184, 4294901760
    %v6457 = vsub.f32 %v6184, %v6456
    %6458 = vmatpush1.msra.mxu0 %v6457
    %6459 = vmatprep.subr.mxu0 0.0
    %v6460 = vand.u32 %v6185, 4294901760
    %v6461 = vsub.f32 %v6185, %v6460
    %6462 = vmatpush1.msra.mxu0 %v6461
    %6463 = vmatprep.subr.mxu0 0.0
    %v6464 = vand.u32 %v6186, 4294901760
    %v6465 = vsub.f32 %v6186, %v6464
    %6466 = vmatpush1.msra.mxu0 %v6465
    %6467 = vmatprep.subr.mxu0 0.0
    %v6468 = vand.u32 %v6187, 4294901760
    %v6469 = vsub.f32 %v6187, %v6468
    %6470 = vmatpush1.msra.mxu0 %v6469
    %6471 = vmatprep.subr.mxu0 0.0
    %v6472 = vand.u32 %v6188, 4294901760
    %v6473 = vsub.f32 %v6188, %v6472
    %6474 = vmatpush1.msra.mxu0 %v6473
    %6475 = vmatprep.subr.mxu0 0.0
    %v6476 = vand.u32 %v6189, 4294901760
    %v6477 = vsub.f32 %v6189, %v6476
    %6478 = vmatpush1.msra.mxu0 %v6477
    %6479 = vmatprep.subr.mxu0 0.0
    %v6480 = vand.u32 %v6190, 4294901760
    %v6481 = vsub.f32 %v6190, %v6480
    %6482 = vmatpush1.msra.mxu0 %v6481
    %6483 = vmatprep.subr.mxu0 0.0
    %v6484 = vand.u32 %v6191, 4294901760
    %v6485 = vsub.f32 %v6191, %v6484
    %6486 = vmatpush1.msra.mxu0 %v6485
    %6487 = vmatprep.subr.mxu0 0.0
    %v6488 = vand.u32 %v6192, 4294901760
    %v6489 = vsub.f32 %v6192, %v6488
    %6490 = vmatpush1.msra.mxu0 %v6489
    %6491 = vmatprep.subr.mxu0 0.0
    %v6492 = vand.u32 %v6193, 4294901760
    %v6493 = vsub.f32 %v6193, %v6492
    %6494 = vmatpush1.msra.mxu0 %v6493
    %6495 = vmatprep.subr.mxu0 0.0
    %v6496 = vand.u32 %v6194, 4294901760
    %v6497 = vsub.f32 %v6194, %v6496
    %6498 = vmatpush1.msra.mxu0 %v6497
    %6499 = vmatprep.subr.mxu0 0.0
    %v6500 = vand.u32 %v6195, 4294901760
    %v6501 = vsub.f32 %v6195, %v6500
    %6502 = vmatpush1.msra.mxu0 %v6501
    %6503 = vmatprep.subr.mxu0 0.0
    %v6504 = vand.u32 %v6196, 4294901760
    %v6505 = vsub.f32 %v6196, %v6504
    %6506 = vmatpush1.msra.mxu0 %v6505
    %6507 = vmatprep.subr.mxu0 0.0
    %v6508 = vand.u32 %v6197, 4294901760
    %v6509 = vsub.f32 %v6197, %v6508
    %6510 = vmatpush1.msra.mxu0 %v6509
    %6511 = vmatprep.subr.mxu0 0.0
    %6512 = vmatpush1.msra.mxu0 0.0
    %6513 = vmatprep.subr.mxu0 0.0
    %6514 = vmatpush1.msra.mxu0 0.0
    %6515 = vmatprep.subr.mxu0 0.0
    %6516 = vmatpush1.msra.mxu0 0.0
    %6517 = vmatprep.subr.mxu0 0.0
    %6518 = vmatpush1.msra.mxu0 0.0
    %6519 = vmatprep.subr.mxu0 0.0
    %6520 = vmatpush1.msra.mxu0 0.0
    %6521 = vmatprep.subr.mxu0 0.0
    %6522 = vmatpush1.msra.mxu0 0.0
    %6523 = vmatprep.subr.mxu0 0.0
    %6524 = vmatpush1.msra.mxu0 0.0
    %6525 = vmatprep.subr.mxu0 0.0
    %6526 = vmatpush1.msra.mxu0 0.0
    %6527 = vmatprep.subr.mxu0 0.0
    %6528 = vmatpush1.msra.mxu0 0.0
    %6529 = vmatprep.subr.mxu0 0.0
    %6530 = vmatpush1.msra.mxu0 0.0
    %6531 = vmatprep.subr.mxu0 0.0
    %6532 = vmatpush1.msra.mxu0 0.0
    %6533 = vmatprep.subr.mxu0 0.0
    %6534 = vmatpush1.msra.mxu0 0.0
    %6535 = vmatprep.subr.mxu0 0.0
    %6536 = vmatpush1.msra.mxu0 0.0
    %6537 = vmatprep.subr.mxu0 0.0
    %6538 = vmatpush1.msra.mxu0 0.0
    %6539 = vmatprep.subr.mxu0 0.0
    %6540 = vmatpush1.msra.mxu0 0.0
    %6541 = vmatprep.subr.mxu0 0.0
    %6542 = vmatpush1.msra.mxu0 0.0
    %6543 = vmatprep.mubr.f32.mxu0 0.0
    %v6544 = vand.u32 %v6181, 4294901760
    %v6545 = vsub.f32 %v6181, %v6544
    %6546 = vmatmul.mubr.f32.gmra.mrb[0].mxu0 %v6545
    %v6547 = vpop.f32.mrb[0].mxu0
    %v6548 = vadd.f32 %v6444, %v6547
    %v6549 = vpop.f32.mrb[0].mxu0
    %6550 = vdwg.mxu0
    %6551 = vmatprep.subr.mxu0 0.0
    %v6552 = vand.u32 %v6182, 4294901760
    %6553 = vmatpush1.msra.mxu0 %v6552
    %6554 = vmatprep.subr.mxu0 0.0
    %v6555 = vand.u32 %v6183, 4294901760
    %6556 = vmatpush1.msra.mxu0 %v6555
    %6557 = vmatprep.subr.mxu0 0.0
    %v6558 = vand.u32 %v6184, 4294901760
    %6559 = vmatpush1.msra.mxu0 %v6558
    %6560 = vmatprep.subr.mxu0 0.0
    %v6561 = vand.u32 %v6185, 4294901760
    %6562 = vmatpush1.msra.mxu0 %v6561
    %6563 = vmatprep.subr.mxu0 0.0
    %v6564 = vand.u32 %v6186, 4294901760
    %6565 = vmatpush1.msra.mxu0 %v6564
    %6566 = vmatprep.subr.mxu0 0.0
    %v6567 = vand.u32 %v6187, 4294901760
    %6568 = vmatpush1.msra.mxu0 %v6567
    %6569 = vmatprep.subr.mxu0 0.0
    %v6570 = vand.u32 %v6188, 4294901760
    %6571 = vmatpush1.msra.mxu0 %v6570
    %6572 = vmatprep.subr.mxu0 0.0
    %v6573 = vand.u32 %v6189, 4294901760
    %6574 = vmatpush1.msra.mxu0 %v6573
    %6575 = vmatprep.subr.mxu0 0.0
    %v6576 = vand.u32 %v6190, 4294901760
    %6577 = vmatpush1.msra.mxu0 %v6576
    %6578 = vmatprep.subr.mxu0 0.0
    %v6579 = vand.u32 %v6191, 4294901760
    %6580 = vmatpush1.msra.mxu0 %v6579
    %6581 = vmatprep.subr.mxu0 0.0
    %v6582 = vand.u32 %v6192, 4294901760
    %6583 = vmatpush1.msra.mxu0 %v6582
    %6584 = vmatprep.subr.mxu0 0.0
    %v6585 = vand.u32 %v6193, 4294901760
    %6586 = vmatpush1.msra.mxu0 %v6585
    %6587 = vmatprep.subr.mxu0 0.0
    %v6588 = vand.u32 %v6194, 4294901760
    %6589 = vmatpush1.msra.mxu0 %v6588
    %6590 = vmatprep.subr.mxu0 0.0
    %v6591 = vand.u32 %v6195, 4294901760
    %6592 = vmatpush1.msra.mxu0 %v6591
    %6593 = vmatprep.subr.mxu0 0.0
    %v6594 = vand.u32 %v6196, 4294901760
    %6595 = vmatpush1.msra.mxu0 %v6594
    %6596 = vmatprep.subr.mxu0 0.0
    %v6597 = vand.u32 %v6197, 4294901760
    %6598 = vmatpush1.msra.mxu0 %v6597
    %6599 = vmatprep.subr.mxu0 0.0
    %6600 = vmatpush1.msra.mxu0 0.0
    %6601 = vmatprep.subr.mxu0 0.0
    %6602 = vmatpush1.msra.mxu0 0.0
    %6603 = vmatprep.subr.mxu0 0.0
    %6604 = vmatpush1.msra.mxu0 0.0
    %6605 = vmatprep.subr.mxu0 0.0
    %6606 = vmatpush1.msra.mxu0 0.0
    %6607 = vmatprep.subr.mxu0 0.0
    %6608 = vmatpush1.msra.mxu0 0.0
    %6609 = vmatprep.subr.mxu0 0.0
    %6610 = vmatpush1.msra.mxu0 0.0
    %6611 = vmatprep.subr.mxu0 0.0
    %6612 = vmatpush1.msra.mxu0 0.0
    %6613 = vmatprep.subr.mxu0 0.0
    %6614 = vmatpush1.msra.mxu0 0.0
    %6615 = vmatprep.subr.mxu0 0.0
    %6616 = vmatpush1.msra.mxu0 0.0
    %6617 = vmatprep.subr.mxu0 0.0
    %6618 = vmatpush1.msra.mxu0 0.0
    %6619 = vmatprep.subr.mxu0 0.0
    %6620 = vmatpush1.msra.mxu0 0.0
    %6621 = vmatprep.subr.mxu0 0.0
    %6622 = vmatpush1.msra.mxu0 0.0
    %6623 = vmatprep.subr.mxu0 0.0
    %6624 = vmatpush1.msra.mxu0 0.0
    %6625 = vmatprep.subr.mxu0 0.0
    %6626 = vmatpush1.msra.mxu0 0.0
    %6627 = vmatprep.subr.mxu0 0.0
    %6628 = vmatpush1.msra.mxu0 0.0
    %6629 = vmatprep.subr.mxu0 0.0
    %6630 = vmatpush1.msra.mxu0 0.0
    %6631 = vmatprep.mubr.f32.mxu0 0.0
    %v6632 = vand.u32 %v6181, 4294901760
    %v6633 = vsub.f32 %v6181, %v6632
    %v6634 = vand.u32 %v6633, 4294901760
    %6635 = vmatmul.mubr.f32.gmra.mrb[0].mxu0 %v6634
    %v6636 = vpop.f32.mrb[0].mxu0
    %v6637 = vadd.f32 %v6548, %v6636
    %v6638 = vpop.f32.mrb[0].mxu0
    %6639 = vdwg.mxu0
    %6640 = vmatprep.subr.mxu0 0.0
    %v6641 = vand.u32 %v6182, 4294901760
    %v6642 = vsub.f32 %v6182, %v6641
    %v6643 = vand.u32 %v6642, 4294901760
    %6644 = vmatpush1.msra.mxu0 %v6643
    %6645 = vmatprep.subr.mxu0 0.0
    %v6646 = vand.u32 %v6183, 4294901760
    %v6647 = vsub.f32 %v6183, %v6646
    %v6648 = vand.u32 %v6647, 4294901760
    %6649 = vmatpush1.msra.mxu0 %v6648
    %6650 = vmatprep.subr.mxu0 0.0
    %v6651 = vand.u32 %v6184, 4294901760
    %v6652 = vsub.f32 %v6184, %v6651
    %v6653 = vand.u32 %v6652, 4294901760
    %6654 = vmatpush1.msra.mxu0 %v6653
    %6655 = vmatprep.subr.mxu0 0.0
    %v6656 = vand.u32 %v6185, 4294901760
    %v6657 = vsub.f32 %v6185, %v6656
    %v6658 = vand.u32 %v6657, 4294901760
    %6659 = vmatpush1.msra.mxu0 %v6658
    %6660 = vmatprep.subr.mxu0 0.0
    %v6661 = vand.u32 %v6186, 4294901760
    %v6662 = vsub.f32 %v6186, %v6661
    %v6663 = vand.u32 %v6662, 4294901760
    %6664 = vmatpush1.msra.mxu0 %v6663
    %6665 = vmatprep.subr.mxu0 0.0
    %v6666 = vand.u32 %v6187, 4294901760
    %v6667 = vsub.f32 %v6187, %v6666
    %v6668 = vand.u32 %v6667, 4294901760
    %6669 = vmatpush1.msra.mxu0 %v6668
    %6670 = vmatprep.subr.mxu0 0.0
    %v6671 = vand.u32 %v6188, 4294901760
    %v6672 = vsub.f32 %v6188, %v6671
    %v6673 = vand.u32 %v6672, 4294901760
    %6674 = vmatpush1.msra.mxu0 %v6673
    %6675 = vmatprep.subr.mxu0 0.0
    %v6676 = vand.u32 %v6189, 4294901760
    %v6677 = vsub.f32 %v6189, %v6676
    %v6678 = vand.u32 %v6677, 4294901760
    %6679 = vmatpush1.msra.mxu0 %v6678
    %6680 = vmatprep.subr.mxu0 0.0
    %v6681 = vand.u32 %v6190, 4294901760
    %v6682 = vsub.f32 %v6190, %v6681
    %v6683 = vand.u32 %v6682, 4294901760
    %6684 = vmatpush1.msra.mxu0 %v6683
    %6685 = vmatprep.subr.mxu0 0.0
    %v6686 = vand.u32 %v6191, 4294901760
    %v6687 = vsub.f32 %v6191, %v6686
    %v6688 = vand.u32 %v6687, 4294901760
    %6689 = vmatpush1.msra.mxu0 %v6688
    %6690 = vmatprep.subr.mxu0 0.0
    %v6691 = vand.u32 %v6192, 4294901760
    %v6692 = vsub.f32 %v6192, %v6691
    %v6693 = vand.u32 %v6692, 4294901760
    %6694 = vmatpush1.msra.mxu0 %v6693
    %6695 = vmatprep.subr.mxu0 0.0
    %v6696 = vand.u32 %v6193, 4294901760
    %v6697 = vsub.f32 %v6193, %v6696
    %v6698 = vand.u32 %v6697, 4294901760
    %6699 = vmatpush1.msra.mxu0 %v6698
    %6700 = vmatprep.subr.mxu0 0.0
    %v6701 = vand.u32 %v6194, 4294901760
    %v6702 = vsub.f32 %v6194, %v6701
    %v6703 = vand.u32 %v6702, 4294901760
    %6704 = vmatpush1.msra.mxu0 %v6703
    %6705 = vmatprep.subr.mxu0 0.0
    %v6706 = vand.u32 %v6195, 4294901760
    %v6707 = vsub.f32 %v6195, %v6706
    %v6708 = vand.u32 %v6707, 4294901760
    %6709 = vmatpush1.msra.mxu0 %v6708
    %6710 = vmatprep.subr.mxu0 0.0
    %v6711 = vand.u32 %v6196, 4294901760
    %v6712 = vsub.f32 %v6196, %v6711
    %v6713 = vand.u32 %v6712, 4294901760
    %6714 = vmatpush1.msra.mxu0 %v6713
    %6715 = vmatprep.subr.mxu0 0.0
    %v6716 = vand.u32 %v6197, 4294901760
    %v6717 = vsub.f32 %v6197, %v6716
    %v6718 = vand.u32 %v6717, 4294901760
    %6719 = vmatpush1.msra.mxu0 %v6718
    %6720 = vmatprep.subr.mxu0 0.0
    %6721 = vmatpush1.msra.mxu0 0.0
    %6722 = vmatprep.subr.mxu0 0.0
    %6723 = vmatpush1.msra.mxu0 0.0
    %6724 = vmatprep.subr.mxu0 0.0
    %6725 = vmatpush1.msra.mxu0 0.0
    %6726 = vmatprep.subr.mxu0 0.0
    %6727 = vmatpush1.msra.mxu0 0.0
    %6728 = vmatprep.subr.mxu0 0.0
    %6729 = vmatpush1.msra.mxu0 0.0
    %6730 = vmatprep.subr.mxu0 0.0
    %6731 = vmatpush1.msra.mxu0 0.0
    %6732 = vmatprep.subr.mxu0 0.0
    %6733 = vmatpush1.msra.mxu0 0.0
    %6734 = vmatprep.subr.mxu0 0.0
    %6735 = vmatpush1.msra.mxu0 0.0
    %6736 = vmatprep.subr.mxu0 0.0
    %6737 = vmatpush1.msra.mxu0 0.0
    %6738 = vmatprep.subr.mxu0 0.0
    %6739 = vmatpush1.msra.mxu0 0.0
    %6740 = vmatprep.subr.mxu0 0.0
    %6741 = vmatpush1.msra.mxu0 0.0
    %6742 = vmatprep.subr.mxu0 0.0
    %6743 = vmatpush1.msra.mxu0 0.0
    %6744 = vmatprep.subr.mxu0 0.0
    %6745 = vmatpush1.msra.mxu0 0.0
    %6746 = vmatprep.subr.mxu0 0.0
    %6747 = vmatpush1.msra.mxu0 0.0
    %6748 = vmatprep.subr.mxu0 0.0
    %6749 = vmatpush1.msra.mxu0 0.0
    %6750 = vmatprep.subr.mxu0 0.0
    %6751 = vmatpush1.msra.mxu0 0.0
    %6752 = vmatprep.mubr.f32.mxu0 0.0
    %v6753 = vand.u32 %v6181, 4294901760
    %6754 = vmatmul.mubr.f32.gmra.mrb[0].mxu0 %v6753
    %v6755 = vpop.f32.mrb[0].mxu0
    %v6756 = vadd.f32 %v6637, %v6755
    %v6757 = vpop.f32.mrb[0].mxu0
    %6758 = vdwg.mxu0
    %6759 = vmatprep.subr.mxu0 0.0
    %v6760 = vand.u32 %v6182, 4294901760
    %6761 = vmatpush1.msra.mxu0 %v6760
    %6762 = vmatprep.subr.mxu0 0.0
    %v6763 = vand.u32 %v6183, 4294901760
    %6764 = vmatpush1.msra.mxu0 %v6763
    %6765 = vmatprep.subr.mxu0 0.0
    %v6766 = vand.u32 %v6184, 4294901760
    %6767 = vmatpush1.msra.mxu0 %v6766
    %6768 = vmatprep.subr.mxu0 0.0
    %v6769 = vand.u32 %v6185, 4294901760
    %6770 = vmatpush1.msra.mxu0 %v6769
    %6771 = vmatprep.subr.mxu0 0.0
    %v6772 = vand.u32 %v6186, 4294901760
    %6773 = vmatpush1.msra.mxu0 %v6772
    %6774 = vmatprep.subr.mxu0 0.0
    %v6775 = vand.u32 %v6187, 4294901760
    %6776 = vmatpush1.msra.mxu0 %v6775
    %6777 = vmatprep.subr.mxu0 0.0
    %v6778 = vand.u32 %v6188, 4294901760
    %6779 = vmatpush1.msra.mxu0 %v6778
    %6780 = vmatprep.subr.mxu0 0.0
    %v6781 = vand.u32 %v6189, 4294901760
    %6782 = vmatpush1.msra.mxu0 %v6781
    %6783 = vmatprep.subr.mxu0 0.0
    %v6784 = vand.u32 %v6190, 4294901760
    %6785 = vmatpush1.msra.mxu0 %v6784
    %6786 = vmatprep.subr.mxu0 0.0
    %v6787 = vand.u32 %v6191, 4294901760
    %6788 = vmatpush1.msra.mxu0 %v6787
    %6789 = vmatprep.subr.mxu0 0.0
    %v6790 = vand.u32 %v6192, 4294901760
    %6791 = vmatpush1.msra.mxu0 %v6790
    %6792 = vmatprep.subr.mxu0 0.0
    %v6793 = vand.u32 %v6193, 4294901760
    %6794 = vmatpush1.msra.mxu0 %v6793
    %6795 = vmatprep.subr.mxu0 0.0
    %v6796 = vand.u32 %v6194, 4294901760
    %6797 = vmatpush1.msra.mxu0 %v6796
    %6798 = vmatprep.subr.mxu0 0.0
    %v6799 = vand.u32 %v6195, 4294901760
    %6800 = vmatpush1.msra.mxu0 %v6799
    %6801 = vmatprep.subr.mxu0 0.0
    %v6802 = vand.u32 %v6196, 4294901760
    %6803 = vmatpush1.msra.mxu0 %v6802
    %6804 = vmatprep.subr.mxu0 0.0
    %v6805 = vand.u32 %v6197, 4294901760
    %6806 = vmatpush1.msra.mxu0 %v6805
    %6807 = vmatprep.subr.mxu0 0.0
    %6808 = vmatpush1.msra.mxu0 0.0
    %6809 = vmatprep.subr.mxu0 0.0
    %6810 = vmatpush1.msra.mxu0 0.0
    %6811 = vmatprep.subr.mxu0 0.0
    %6812 = vmatpush1.msra.mxu0 0.0
    %6813 = vmatprep.subr.mxu0 0.0
    %6814 = vmatpush1.msra.mxu0 0.0
    %6815 = vmatprep.subr.mxu0 0.0
    %6816 = vmatpush1.msra.mxu0 0.0
    %6817 = vmatprep.subr.mxu0 0.0
    %6818 = vmatpush1.msra.mxu0 0.0
    %6819 = vmatprep.subr.mxu0 0.0
    %6820 = vmatpush1.msra.mxu0 0.0
    %6821 = vmatprep.subr.mxu0 0.0
    %6822 = vmatpush1.msra.mxu0 0.0
    %6823 = vmatprep.subr.mxu0 0.0
    %6824 = vmatpush1.msra.mxu0 0.0
    %6825 = vmatprep.subr.mxu0 0.0
    %6826 = vmatpush1.msra.mxu0 0.0
    %6827 = vmatprep.subr.mxu0 0.0
    %6828 = vmatpush1.msra.mxu0 0.0
    %6829 = vmatprep.subr.mxu0 0.0
    %6830 = vmatpush1.msra.mxu0 0.0
    %6831 = vmatprep.subr.mxu0 0.0
    %6832 = vmatpush1.msra.mxu0 0.0
    %6833 = vmatprep.subr.mxu0 0.0
    %6834 = vmatpush1.msra.mxu0 0.0
    %6835 = vmatprep.subr.mxu0 0.0
    %6836 = vmatpush1.msra.mxu0 0.0
    %6837 = vmatprep.subr.mxu0 0.0
    %6838 = vmatpush1.msra.mxu0 0.0
    %6839 = vmatprep.mubr.f32.mxu0 0.0
    %v6840 = vand.u32 %v6181, 4294901760
    %6841 = vmatmul.mubr.f32.gmra.mrb[0].mxu0 %v6840
    %v6842 = vpop.f32.mrb[0].mxu0
    %v6843 = vadd.f32 %v6756, %v6842
    %v6844 = vpop.f32.mrb[0].mxu0
    %6845 = vdwg.mxu0
    %6846 = vst [vmem:[%s6] sm:$0xff] %v6843
    // Predicated region
    $region38: #{forward.1} parent=1 // pred_check
      _
    $region39: #{forward.1} parent=1 // pred_check_branch
      %6848 = sbr.rel (0) target = $region41
    $region40: #{forward.1} parent=1 // pred_region
      _
    $region41: #{forward.1} parent=1 // pred_fallthru
      _
    // Predicated region
    $region42: #{forward.1} parent=1 // pred_check
      _
    $region43: #{forward.1} parent=1 // pred_check_branch
      %6850 = sbr.rel (0) target = $region45
    $region44: #{forward.1} parent=1 // pred_region
      _
    $region45: #{forward.1} parent=1 // pred_fallthru
      _
    %6851 = vsyncpa [#allocation3], 1
    %6852 = vsyncpa [#allocation5], 1

</llo_original>
